<compile_context>
chip_gen: v6e
topology: v6e:2x2x1
jax: 0.10.0
libtpu: 0.0.40
codegen_flags: <defaults>
</compile_context>

<pallas_src>
import jax
import jax.numpy as jnp
import numpy as np
from jax.experimental import pallas as pl
from jax.experimental.pallas import tpu as pltpu


# ---------------------------------------------------------------------------
# Fused kernel: conv1->pool1->conv2->pool2->conv3->pool3->merge->1x1->ReLU
# ---------------------------------------------------------------------------
def _fused_fcn_kernel(x0p_ref, x1_ref,
                      w1_ref, b1_ref, w2_ref, b2_ref, w3_ref, b3_ref,
                      w4m_ref, w4x_ref, b4_ref,
                      o_ref,
                      convp_ref, actp_ref):
    """
    x0p_ref : (H+2, W+2, C0p)  bf16  zero-padded (halo + channel pad) x0
    x1_ref  : (H,   W,   C1p)  f32   second channel group (channel padded)
    w1_ref  : (9*C0p, 64) bf16    b1_ref: (1, 64) f32
    w2_ref  : (9*64, 64)  bf16    b2_ref: (1, 64) f32
    w3_ref  : (9*64, 64)  bf16    b3_ref: (1, 64) f32
    w4m_ref : (1, 1, 64) f32      w4x_ref: (1, 1, C1p) f32   b4_ref: (1, 1) f32
    o_ref   : (H, W) f32
    convp_ref: (H+1, W+1, 64) f32   zero-bordered staging for the avg-pool
    actp_ref : (H+2, W+2, 64) bf16  zero-haloed pooled activation (conv input)
    """
    Hp, Wp, _ = x0p_ref.shape
    H, W = Hp - 2, Wp - 2
    C = b1_ref.shape[-1]                       # 64
    f32, bf16 = jnp.float32, jnp.bfloat16

    # Zero only the thin halo strips, once per image (interiors are fully
    # overwritten every stage; borders are never written again).
    convp_ref[pl.ds(H, 1), :, :] = jnp.zeros((1, W + 1, C), f32)
    convp_ref[:, pl.ds(W, 1), :] = jnp.zeros((H + 1, 1, C), f32)
    actp_ref[pl.ds(0, 1), :, :] = jnp.zeros((1, W + 2, C), bf16)
    actp_ref[pl.ds(H + 1, 1), :, :] = jnp.zeros((1, W + 2, C), bf16)
    actp_ref[:, pl.ds(0, 1), :] = jnp.zeros((H + 2, 1, C), bf16)
    actp_ref[:, pl.ds(W + 1, 1), :] = jnp.zeros((H + 2, 1, C), bf16)

    def conv3x3_relu(src_ref, w_ref, b_ref):
        """3x3 same-conv + ReLU as a single (H*W, 9*Cin)@(9*Cin, Cout) matmul."""
        taps = [src_ref[pl.ds(dy, H), pl.ds(dx, W), :]
                for dy in range(3) for dx in range(3)]
        patches = jnp.concatenate(taps, axis=-1).reshape(H * W, -1)   # bf16
        acc = jnp.dot(patches, w_ref[...], preferred_element_type=f32)
        return jnp.maximum(acc + b_ref[...], 0.0).reshape(H, W, C)    # f32

    def pad_pool(conv):
        """ZeroPad2d((0,1,0,1)) + AvgPool2d(2, stride=1); result stays in regs.

        One interior store into the zero-bordered scratch, three shifted
        reads (bottom/right neighbours fall on the zero strips)."""
        convp_ref[pl.ds(0, H), pl.ds(0, W), :] = conv
        right = convp_ref[pl.ds(0, H), pl.ds(1, W), :]
        down = convp_ref[pl.ds(1, H), pl.ds(0, W), :]
        down_right = convp_ref[pl.ds(1, H), pl.ds(1, W), :]
        return 0.25 * (conv + right + down + down_right)

    # Stage 1 (input comes pre-padded + bf16 from the wrapper).
    c1 = conv3x3_relu(x0p_ref, w1_ref, b1_ref)
    p1 = pad_pool(c1)
    actp_ref[pl.ds(1, H), pl.ds(1, W), :] = p1.astype(bf16)

    # Stage 2 (reads the zero-haloed pooled activation straight from VMEM).
    c2 = conv3x3_relu(actp_ref, w2_ref, b2_ref)
    p2 = pad_pool(c2)
    actp_ref[pl.ds(1, H), pl.ds(1, W), :] = p2.astype(bf16)

    # Stage 3 (p3 never leaves registers).
    c3 = conv3x3_relu(actp_ref, w3_ref, b3_ref)
    p3 = pad_pool(c3)

    # merged = p1 + p2 + p3, then 1x1 conv over concat([merged, x1]) + ReLU.
    # The 1x1 conv is split by channel group (no in-kernel concat needed);
    # output is only H*W floats per image so the reduce/store cost is noise.
    merged = p1 + p2 + p3
    s = jnp.sum(merged * w4m_ref[...], axis=-1)
    s = s + jnp.sum(x1_ref[...] * w4x_ref[...], axis=-1)
    o_ref[...] = jnp.maximum(s + b4_ref[...], 0.0)


# ---------------------------------------------------------------------------
# Wrapper
# ---------------------------------------------------------------------------
def fusion_fcn_forward(x_nchw, kp, img0_size):
    """x_nchw: (N, img0+img1, H, W).  kp: output of prepare_kernel_params."""
    x = jnp.transpose(x_nchw, (0, 2, 3, 1)).astype(jnp.float32)   # NCHW -> NHWC
    x0 = x[..., :img0_size]
    x1 = x[..., img0_size:]
    c0p, c1p = kp["c0p"], kp["c1p"]

    # One pad for x0 (spatial halo + channel pad), then bf16 for the MXU.
    x0p = jnp.pad(
        x0, ((0, 0), (1, 1), (1, 1), (0, c0p - x0.shape[-1]))).astype(jnp.bfloat16)
    x1p = jnp.pad(x1, ((0, 0), (0, 0), (0, 0), (0, c1p - x1.shape[-1])))

    N, Hp, Wp, _ = x0p.shape
    H, W = Hp - 2, Wp - 2

    out = pl.pallas_call(
        _fused_fcn_kernel,
        out_shape=jax.ShapeDtypeStruct((N, H, W), jnp.float32),
        grid=(N,),
        in_specs=[
            pl.BlockSpec((None, Hp, Wp, c0p), lambda n: (n, 0, 0, 0)),
            pl.BlockSpec((None, H, W, c1p), lambda n: (n, 0, 0, 0)),
            pl.BlockSpec(kp["w1"].shape, lambda n: (0, 0)),
            pl.BlockSpec(kp["b1"].shape, lambda n: (0, 0)),
            pl.BlockSpec(kp["w2"].shape, lambda n: (0, 0)),
            pl.BlockSpec(kp["b2"].shape, lambda n: (0, 0)),
            pl.BlockSpec(kp["w3"].shape, lambda n: (0, 0)),
            pl.BlockSpec(kp["b3"].shape, lambda n: (0, 0)),
            pl.BlockSpec(kp["w4m"].shape, lambda n: (0, 0, 0)),
            pl.BlockSpec(kp["w4x"].shape, lambda n: (0, 0, 0)),
            pl.BlockSpec(kp["b4"].shape, lambda n: (0, 0)),
        ],
        out_specs=pl.BlockSpec((None, H, W), lambda n: (n, 0, 0)),
        scratch_shapes=[
            pltpu.VMEM((H + 1, W + 1, 64), jnp.float32),    # pool staging
            pltpu.VMEM((H + 2, W + 2, 64), jnp.bfloat16),   # haloed pooled act
        ],
        compiler_params=pltpu.CompilerParams(dimension_semantics=("parallel",)),
    )(x0p, x1p, kp["w1"], kp["b1"], kp["w2"], kp["b2"], kp["w3"], kp["b3"],
      kp["w4m"], kp["w4x"], kp["b4"])
    return out[:, None, :, :]                                  # (N, 1, H, W)


# ---------------------------------------------------------------------------
# Parameters: raw HWIO weights (for the reference) + one-time kernel prep.
# initialize_weights() is external in the PyTorch source; a deterministic
# Kaiming-style init is used here.
# ---------------------------------------------------------------------------
def init_params(key, img0, img1):
    k1, k2, k3, k4 = jax.random.split(key, 4)

    def conv_w(k, kh, kw, cin, cout):
        std = (2.0 / (kh * kw * cin)) ** 0.5
        return std * jax.random.normal(k, (kh, kw, cin, cout), jnp.float32)

    return {
        "w1": conv_w(k1, 3, 3, img0, 64), "b1": jnp.full((64,), 0.01, jnp.float32),
        "w2": conv_w(k2, 3, 3, 64, 64),   "b2": jnp.full((64,), 0.01, jnp.float32),
        "w3": conv_w(k3, 3, 3, 64, 64),   "b3": jnp.full((64,), 0.01, jnp.float32),
        "w4": conv_w(k4, 1, 1, 64 + img1, 1),
        "b4": jnp.full((1,), 0.01, jnp.float32),
    }


def prepare_kernel_params(p, img0, img1):
    """One-time: pad channels, flatten 3x3 weights to (9*Cin, Cout), cast bf16."""
    c0p = ((img0 + 7) // 8) * 8
    c1p = ((img1 + 7) // 8) * 8
    w1 = jnp.pad(p["w1"], ((0, 0), (0, 0), (0, c0p - img0), (0, 0)))
    return {
        "c0p": c0p, "c1p": c1p,
        "w1": w1.reshape(9 * c0p, 64).astype(jnp.bfloat16),
        "b1": p["b1"].reshape(1, 64).astype(jnp.float32),
        "w2": p["w2"].reshape(9 * 64, 64).astype(jnp.bfloat16),
        "b2": p["b2"].reshape(1, 64).astype(jnp.float32),
        "w3": p["w3"].reshape(9 * 64, 64).astype(jnp.bfloat16),
        "b3": p["b3"].reshape(1, 64).astype(jnp.float32),
        "w4m": p["w4"][0, 0, :64, 0].reshape(1, 1, 64).astype(jnp.float32),
        "w4x": jnp.pad(p["w4"][0, 0, 64:, 0],
                       (0, c1p - img1)).reshape(1, 1, c1p).astype(jnp.float32),
        "b4": p["b4"].reshape(1, 1).astype(jnp.float32),
    }


# ---------------------------------------------------------------------------
# Pure-JAX f32 reference (same semantics as the PyTorch module)
# ---------------------------------------------------------------------------
def ref_forward(x_nchw, p, img0):
    x = jnp.transpose(x_nchw, (0, 2, 3, 1)).astype(jnp.float32)
    x0, x1 = x[..., :img0], x[..., img0:]

    def conv_relu(inp, w, b):
        out = jax.lax.conv_general_dilated(
            inp, w, window_strides=(1, 1), padding=((1, 1), (1, 1)),
            dimension_numbers=("NHWC", "HWIO", "NHWC"))
        return jnp.maximum(out + b, 0.0)

    def pad_pool(c):
        H, W = c.shape[1], c.shape[2]
        cp = jnp.pad(c, ((0, 0), (0, 1), (0, 1), (0, 0)))
        return 0.25 * (cp[:, :H, :W] + cp[:, :H, 1:]
                       + cp[:, 1:, :W] + cp[:, 1:, 1:])

    p1 = pad_pool(conv_relu(x0, p["w1"], p["b1"]))
    p2 = pad_pool(conv_relu(p1, p["w2"], p["b2"]))
    p3 = pad_pool(conv_relu(p2, p["w3"], p["b3"]))
    merged = p1 + p2 + p3
    feats = jnp.concatenate([merged, x1], axis=-1)
    s = jnp.tensordot(feats, p["w4"][0, 0, :, 0], axes=[[-1], [0]])[..., None]
    out = jnp.maximum(s + p["b4"], 0.0)
    return jnp.transpose(out, (0, 3, 1, 2))


if __name__ == "__main__":
    IMG0, IMG1 = 4, 3
    N, H, W = 2, 16, 16

    key = jax.random.PRNGKey(0)
    kx, kw = jax.random.split(key)
    x = jax.random.normal(kx, (N, IMG0 + IMG1, H, W), jnp.float32)   # NCHW input

    raw_params = init_params(kw, IMG0, IMG1)
    kparams = prepare_kernel_params(raw_params, IMG0, IMG1)          # one-time prep

    out = jax.block_until_ready(fusion_fcn_forward(x, kparams, IMG0))
    assert out.shape == (N, 1, H, W), out.shape

    ref = jax.block_until_ready(ref_forward(x, raw_params, IMG0))
    err = float(np.max(np.abs(np.asarray(out) - np.asarray(ref))))
    # bf16 MXU inputs (f32 accumulation) -> loosened tolerance vs f32 reference.
    assert np.allclose(np.asarray(out), np.asarray(ref), atol=5e-2, rtol=5e-2), err

    print("KERNEL_OK")
</pallas_src>

<mosaic_0001>
module attributes {stable_mosaic.version = 11 : i64} {
  func.func @_fused_fcn_kernel(%arg0: i32, %arg1: memref<1x18x18x8xbf16, #tpu.memory_space<vmem>>, %arg2: memref<1x16x16x8xf32, #tpu.memory_space<vmem>>, %arg3: memref<72x64xbf16, #tpu.memory_space<vmem>>, %arg4: memref<1x64xf32, #tpu.memory_space<vmem>>, %arg5: memref<576x64xbf16, #tpu.memory_space<vmem>>, %arg6: memref<1x64xf32, #tpu.memory_space<vmem>>, %arg7: memref<576x64xbf16, #tpu.memory_space<vmem>>, %arg8: memref<1x64xf32, #tpu.memory_space<vmem>>, %arg9: memref<1x1x64xf32, #tpu.memory_space<vmem>>, %arg10: memref<1x1x8xf32, #tpu.memory_space<vmem>>, %arg11: memref<1x1xf32, #tpu.memory_space<vmem>>, %arg12: memref<1x16x16xf32, #tpu.memory_space<vmem>>, %arg13: memref<17x17x64xf32, #tpu.memory_space<vmem>>, %arg14: memref<18x18x64xbf16, #tpu.memory_space<vmem>>) attributes {dimension_semantics = [#tpu.dimension_semantics<parallel>], iteration_bounds = array<i64: 2>, scalar_prefetch = 0 : i64, scratch_operands = 2 : i64, tpu.core_type = #tpu.core_type<tc>, window_params = [{transform_indices = @transform_0, window_bounds = array<i64: 1, 18, 18, 8>}, {transform_indices = @transform_1, window_bounds = array<i64: 1, 16, 16, 8>}, {pipeline_mode = #tpu.pipeline_mode<synchronous>, transform_indices = @transform_2, window_bounds = array<i64: 72, 64>}, {pipeline_mode = #tpu.pipeline_mode<synchronous>, transform_indices = @transform_3, window_bounds = array<i64: 1, 64>}, {pipeline_mode = #tpu.pipeline_mode<synchronous>, transform_indices = @transform_4, window_bounds = array<i64: 576, 64>}, {pipeline_mode = #tpu.pipeline_mode<synchronous>, transform_indices = @transform_5, window_bounds = array<i64: 1, 64>}, {pipeline_mode = #tpu.pipeline_mode<synchronous>, transform_indices = @transform_6, window_bounds = array<i64: 576, 64>}, {pipeline_mode = #tpu.pipeline_mode<synchronous>, transform_indices = @transform_7, window_bounds = array<i64: 1, 64>}, {pipeline_mode = #tpu.pipeline_mode<synchronous>, transform_indices = @transform_8, window_bounds = array<i64: 1, 1, 64>}, {pipeline_mode = #tpu.pipeline_mode<synchronous>, transform_indices = @transform_9, window_bounds = array<i64: 1, 1, 8>}, {pipeline_mode = #tpu.pipeline_mode<synchronous>, transform_indices = @transform_10, window_bounds = array<i64: 1, 1>}, {transform_indices = @transform_11, window_bounds = array<i64: 1, 16, 16>}]} {
    %cst = arith.constant 0.000000e+00 : f32
    %0 = vector.broadcast %cst : f32 to vector<1x17x64xf32>
    %c16 = arith.constant 16 : index
    %c0 = arith.constant 0 : index
    %c0_0 = arith.constant 0 : index
    %1 = vector.load %arg13[%c16, %c0, %c0_0] : memref<17x17x64xf32, #tpu.memory_space<vmem>>, vector<1x17x64xf32>
    tpu.vector_store %arg13[%c16, %c0, %c0_0], %0 {strides = array<i32>} : memref<17x17x64xf32, #tpu.memory_space<vmem>>, vector<1x17x64xf32>,
    %cst_1 = arith.constant 0.000000e+00 : f32
    %2 = vector.broadcast %cst_1 : f32 to vector<17x1x64xf32>
    %c0_2 = arith.constant 0 : index
    %c16_3 = arith.constant 16 : index
    %c0_4 = arith.constant 0 : index
    %3 = vector.load %arg13[%c0_2, %c16_3, %c0_4] : memref<17x17x64xf32, #tpu.memory_space<vmem>>, vector<17x1x64xf32>
    tpu.vector_store %arg13[%c0_2, %c16_3, %c0_4], %2 {strides = array<i32>} : memref<17x17x64xf32, #tpu.memory_space<vmem>>, vector<17x1x64xf32>,
    %cst_5 = arith.constant 0.000000e+00 : bf16
    %4 = vector.broadcast %cst_5 : bf16 to vector<1x18x64xbf16>
    %c0_6 = arith.constant 0 : index
    %c0_7 = arith.constant 0 : index
    %c0_8 = arith.constant 0 : index
    %5 = vector.load %arg14[%c0_6, %c0_7, %c0_8] : memref<18x18x64xbf16, #tpu.memory_space<vmem>>, vector<1x18x64xbf16>
    tpu.vector_store %arg14[%c0_6, %c0_7, %c0_8], %4 {strides = array<i32>} : memref<18x18x64xbf16, #tpu.memory_space<vmem>>, vector<1x18x64xbf16>,
    %cst_9 = arith.constant 0.000000e+00 : bf16
    %6 = vector.broadcast %cst_9 : bf16 to vector<1x18x64xbf16>
    %c17 = arith.constant 17 : index
    %c0_10 = arith.constant 0 : index
    %c0_11 = arith.constant 0 : index
    %7 = vector.load %arg14[%c17, %c0_10, %c0_11] : memref<18x18x64xbf16, #tpu.memory_space<vmem>>, vector<1x18x64xbf16>
    tpu.vector_store %arg14[%c17, %c0_10, %c0_11], %6 {strides = array<i32>} : memref<18x18x64xbf16, #tpu.memory_space<vmem>>, vector<1x18x64xbf16>,
    %cst_12 = arith.constant 0.000000e+00 : bf16
    %8 = vector.broadcast %cst_12 : bf16 to vector<18x1x64xbf16>
    %c0_13 = arith.constant 0 : index
    %c0_14 = arith.constant 0 : index
    %c0_15 = arith.constant 0 : index
    %9 = vector.load %arg14[%c0_13, %c0_14, %c0_15] : memref<18x18x64xbf16, #tpu.memory_space<vmem>>, vector<18x1x64xbf16>
    tpu.vector_store %arg14[%c0_13, %c0_14, %c0_15], %8 {strides = array<i32>} : memref<18x18x64xbf16, #tpu.memory_space<vmem>>, vector<18x1x64xbf16>,
    %cst_16 = arith.constant 0.000000e+00 : bf16
    %10 = vector.broadcast %cst_16 : bf16 to vector<18x1x64xbf16>
    %c0_17 = arith.constant 0 : index
    %c17_18 = arith.constant 17 : index
    %c0_19 = arith.constant 0 : index
    %11 = vector.load %arg14[%c0_17, %c17_18, %c0_19] : memref<18x18x64xbf16, #tpu.memory_space<vmem>>, vector<18x1x64xbf16>
    tpu.vector_store %arg14[%c0_17, %c17_18, %c0_19], %10 {strides = array<i32>} : memref<18x18x64xbf16, #tpu.memory_space<vmem>>, vector<18x1x64xbf16>,
    %c0_20 = arith.constant 0 : index
    %c0_21 = arith.constant 0 : index
    %c0_22 = arith.constant 0 : index
    %c0_23 = arith.constant 0 : index
    %12 = vector.load %arg1[%c0_20, %c0_21, %c0_22, %c0_23] : memref<1x18x18x8xbf16, #tpu.memory_space<vmem>>, vector<1x16x16x8xbf16>
    %13 = vector.shape_cast %12 : vector<1x16x16x8xbf16> to vector<16x16x8xbf16>
    %c0_24 = arith.constant 0 : index
    %c0_25 = arith.constant 0 : index
    %c1 = arith.constant 1 : index
    %c0_26 = arith.constant 0 : index
    %14 = vector.load %arg1[%c0_24, %c0_25, %c1, %c0_26] : memref<1x18x18x8xbf16, #tpu.memory_space<vmem>>, vector<1x16x16x8xbf16>
    %15 = vector.shape_cast %14 : vector<1x16x16x8xbf16> to vector<16x16x8xbf16>
    %c0_27 = arith.constant 0 : index
    %c0_28 = arith.constant 0 : index
    %c2 = arith.constant 2 : index
    %c0_29 = arith.constant 0 : index
    %16 = vector.load %arg1[%c0_27, %c0_28, %c2, %c0_29] : memref<1x18x18x8xbf16, #tpu.memory_space<vmem>>, vector<1x16x16x8xbf16>
    %17 = vector.shape_cast %16 : vector<1x16x16x8xbf16> to vector<16x16x8xbf16>
    %c0_30 = arith.constant 0 : index
    %c1_31 = arith.constant 1 : index
    %c0_32 = arith.constant 0 : index
    %c0_33 = arith.constant 0 : index
    %18 = vector.load %arg1[%c0_30, %c1_31, %c0_32, %c0_33] : memref<1x18x18x8xbf16, #tpu.memory_space<vmem>>, vector<1x16x16x8xbf16>
    %19 = vector.shape_cast %18 : vector<1x16x16x8xbf16> to vector<16x16x8xbf16>
    %c0_34 = arith.constant 0 : index
    %c1_35 = arith.constant 1 : index
    %c1_36 = arith.constant 1 : index
    %c0_37 = arith.constant 0 : index
    %20 = vector.load %arg1[%c0_34, %c1_35, %c1_36, %c0_37] : memref<1x18x18x8xbf16, #tpu.memory_space<vmem>>, vector<1x16x16x8xbf16>
    %21 = vector.shape_cast %20 : vector<1x16x16x8xbf16> to vector<16x16x8xbf16>
    %c0_38 = arith.constant 0 : index
    %c1_39 = arith.constant 1 : index
    %c2_40 = arith.constant 2 : index
    %c0_41 = arith.constant 0 : index
    %22 = vector.load %arg1[%c0_38, %c1_39, %c2_40, %c0_41] : memref<1x18x18x8xbf16, #tpu.memory_space<vmem>>, vector<1x16x16x8xbf16>
    %23 = vector.shape_cast %22 : vector<1x16x16x8xbf16> to vector<16x16x8xbf16>
    %c0_42 = arith.constant 0 : index
    %c2_43 = arith.constant 2 : index
    %c0_44 = arith.constant 0 : index
    %c0_45 = arith.constant 0 : index
    %24 = vector.load %arg1[%c0_42, %c2_43, %c0_44, %c0_45] : memref<1x18x18x8xbf16, #tpu.memory_space<vmem>>, vector<1x16x16x8xbf16>
    %25 = vector.shape_cast %24 : vector<1x16x16x8xbf16> to vector<16x16x8xbf16>
    %c0_46 = arith.constant 0 : index
    %c2_47 = arith.constant 2 : index
    %c1_48 = arith.constant 1 : index
    %c0_49 = arith.constant 0 : index
    %26 = vector.load %arg1[%c0_46, %c2_47, %c1_48, %c0_49] : memref<1x18x18x8xbf16, #tpu.memory_space<vmem>>, vector<1x16x16x8xbf16>
    %27 = vector.shape_cast %26 : vector<1x16x16x8xbf16> to vector<16x16x8xbf16>
    %c0_50 = arith.constant 0 : index
    %c2_51 = arith.constant 2 : index
    %c2_52 = arith.constant 2 : index
    %c0_53 = arith.constant 0 : index
    %28 = vector.load %arg1[%c0_50, %c2_51, %c2_52, %c0_53] : memref<1x18x18x8xbf16, #tpu.memory_space<vmem>>, vector<1x16x16x8xbf16>
    %29 = vector.shape_cast %28 : vector<1x16x16x8xbf16> to vector<16x16x8xbf16>
    %30 = tpu.concatenate %13, %15, %17, %19, %21, %23, %25, %27, %29 in 2 : vector<16x16x8xbf16>, vector<16x16x8xbf16>, vector<16x16x8xbf16>, vector<16x16x8xbf16>, vector<16x16x8xbf16>, vector<16x16x8xbf16>, vector<16x16x8xbf16>, vector<16x16x8xbf16>, vector<16x16x8xbf16> -> vector<16x16x72xbf16>
    %31 = vector.shape_cast %30 : vector<16x16x72xbf16> to vector<256x72xbf16>
    %c0_54 = arith.constant 0 : index
    %c0_55 = arith.constant 0 : index
    %32 = vector.load %arg3[%c0_54, %c0_55] : memref<72x64xbf16, #tpu.memory_space<vmem>>, vector<72x64xbf16>
    %cst_56 = arith.constant dense<0.000000e+00> : vector<256x64xf32>
    %33 = tpu.matmul %31, %32, %cst_56 {dimension_numbers = #tpu.dot_dimension_numbers<[1], [0], [0], [1], [0, 0, 1, 1], [], []>} : vector<256x72xbf16>, vector<72x64xbf16>, vector<256x64xf32> -> vector<256x64xf32>
    %c0_57 = arith.constant 0 : index
    %c0_58 = arith.constant 0 : index
    %34 = vector.load %arg4[%c0_57, %c0_58] : memref<1x64xf32, #tpu.memory_space<vmem>>, vector<1x64xf32>
    %35 = vector.broadcast %34 : vector<1x64xf32> to vector<256x64xf32>
    %36 = arith.addf %33, %35 : vector<256x64xf32>
    %cst_59 = arith.constant 0.000000e+00 : f32
    %37 = vector.broadcast %cst_59 : f32 to vector<256x64xf32>
    %38 = arith.maximumf %36, %37 : vector<256x64xf32>
    %39 = vector.shape_cast %38 : vector<256x64xf32> to vector<16x16x64xf32>
    %c0_60 = arith.constant 0 : index
    %c0_61 = arith.constant 0 : index
    %c0_62 = arith.constant 0 : index
    %40 = vector.load %arg13[%c0_60, %c0_61, %c0_62] : memref<17x17x64xf32, #tpu.memory_space<vmem>>, vector<16x16x64xf32>
    tpu.vector_store %arg13[%c0_60, %c0_61, %c0_62], %39 {strides = array<i32>} : memref<17x17x64xf32, #tpu.memory_space<vmem>>, vector<16x16x64xf32>,
    %c0_63 = arith.constant 0 : index
    %c1_64 = arith.constant 1 : index
    %c0_65 = arith.constant 0 : index
    %41 = vector.load %arg13[%c0_63, %c1_64, %c0_65] : memref<17x17x64xf32, #tpu.memory_space<vmem>>, vector<16x16x64xf32>
    %c1_66 = arith.constant 1 : index
    %c0_67 = arith.constant 0 : index
    %c0_68 = arith.constant 0 : index
    %42 = vector.load %arg13[%c1_66, %c0_67, %c0_68] : memref<17x17x64xf32, #tpu.memory_space<vmem>>, vector<16x16x64xf32>
    %c1_69 = arith.constant 1 : index
    %c1_70 = arith.constant 1 : index
    %c0_71 = arith.constant 0 : index
    %43 = vector.load %arg13[%c1_69, %c1_70, %c0_71] : memref<17x17x64xf32, #tpu.memory_space<vmem>>, vector<16x16x64xf32>
    %44 = arith.addf %39, %41 : vector<16x16x64xf32>
    %45 = arith.addf %44, %42 : vector<16x16x64xf32>
    %46 = arith.addf %45, %43 : vector<16x16x64xf32>
    %cst_72 = arith.constant 2.500000e-01 : f32
    %47 = vector.broadcast %cst_72 : f32 to vector<16x16x64xf32>
    %48 = arith.mulf %47, %46 : vector<16x16x64xf32>
    %49 = arith.truncf %48 : vector<16x16x64xf32> to vector<16x16x64xbf16>
    %c1_73 = arith.constant 1 : index
    %c1_74 = arith.constant 1 : index
    %c0_75 = arith.constant 0 : index
    %50 = vector.load %arg14[%c1_73, %c1_74, %c0_75] : memref<18x18x64xbf16, #tpu.memory_space<vmem>>, vector<16x16x64xbf16>
    tpu.vector_store %arg14[%c1_73, %c1_74, %c0_75], %49 {strides = array<i32>} : memref<18x18x64xbf16, #tpu.memory_space<vmem>>, vector<16x16x64xbf16>,
    %c0_76 = arith.constant 0 : index
    %c0_77 = arith.constant 0 : index
    %c0_78 = arith.constant 0 : index
    %51 = vector.load %arg14[%c0_76, %c0_77, %c0_78] : memref<18x18x64xbf16, #tpu.memory_space<vmem>>, vector<16x16x64xbf16>
    %c0_79 = arith.constant 0 : index
    %c1_80 = arith.constant 1 : index
    %c0_81 = arith.constant 0 : index
    %52 = vector.load %arg14[%c0_79, %c1_80, %c0_81] : memref<18x18x64xbf16, #tpu.memory_space<vmem>>, vector<16x16x64xbf16>
    %c0_82 = arith.constant 0 : index
    %c2_83 = arith.constant 2 : index
    %c0_84 = arith.constant 0 : index
    %53 = vector.load %arg14[%c0_82, %c2_83, %c0_84] : memref<18x18x64xbf16, #tpu.memory_space<vmem>>, vector<16x16x64xbf16>
    %c1_85 = arith.constant 1 : index
    %c0_86 = arith.constant 0 : index
    %c0_87 = arith.constant 0 : index
    %54 = vector.load %arg14[%c1_85, %c0_86, %c0_87] : memref<18x18x64xbf16, #tpu.memory_space<vmem>>, vector<16x16x64xbf16>
    %c1_88 = arith.constant 1 : index
    %c1_89 = arith.constant 1 : index
    %c0_90 = arith.constant 0 : index
    %55 = vector.load %arg14[%c1_88, %c1_89, %c0_90] : memref<18x18x64xbf16, #tpu.memory_space<vmem>>, vector<16x16x64xbf16>
    %c1_91 = arith.constant 1 : index
    %c2_92 = arith.constant 2 : index
    %c0_93 = arith.constant 0 : index
    %56 = vector.load %arg14[%c1_91, %c2_92, %c0_93] : memref<18x18x64xbf16, #tpu.memory_space<vmem>>, vector<16x16x64xbf16>
    %c2_94 = arith.constant 2 : index
    %c0_95 = arith.constant 0 : index
    %c0_96 = arith.constant 0 : index
    %57 = vector.load %arg14[%c2_94, %c0_95, %c0_96] : memref<18x18x64xbf16, #tpu.memory_space<vmem>>, vector<16x16x64xbf16>
    %c2_97 = arith.constant 2 : index
    %c1_98 = arith.constant 1 : index
    %c0_99 = arith.constant 0 : index
    %58 = vector.load %arg14[%c2_97, %c1_98, %c0_99] : memref<18x18x64xbf16, #tpu.memory_space<vmem>>, vector<16x16x64xbf16>
    %c2_100 = arith.constant 2 : index
    %c2_101 = arith.constant 2 : index
    %c0_102 = arith.constant 0 : index
    %59 = vector.load %arg14[%c2_100, %c2_101, %c0_102] : memref<18x18x64xbf16, #tpu.memory_space<vmem>>, vector<16x16x64xbf16>
    %60 = tpu.concatenate %51, %52, %53, %54, %55, %56, %57, %58, %59 in 2 : vector<16x16x64xbf16>, vector<16x16x64xbf16>, vector<16x16x64xbf16>, vector<16x16x64xbf16>, vector<16x16x64xbf16>, vector<16x16x64xbf16>, vector<16x16x64xbf16>, vector<16x16x64xbf16>, vector<16x16x64xbf16> -> vector<16x16x576xbf16>
    %61 = vector.shape_cast %60 : vector<16x16x576xbf16> to vector<256x576xbf16>
    %c0_103 = arith.constant 0 : index
    %c0_104 = arith.constant 0 : index
    %62 = vector.load %arg5[%c0_103, %c0_104] : memref<576x64xbf16, #tpu.memory_space<vmem>>, vector<576x64xbf16>
    %cst_105 = arith.constant dense<0.000000e+00> : vector<256x64xf32>
    %63 = tpu.matmul %61, %62, %cst_105 {dimension_numbers = #tpu.dot_dimension_numbers<[1], [0], [0], [1], [0, 0, 1, 1], [], []>} : vector<256x576xbf16>, vector<576x64xbf16>, vector<256x64xf32> -> vector<256x64xf32>
    %c0_106 = arith.constant 0 : index
    %c0_107 = arith.constant 0 : index
    %64 = vector.load %arg6[%c0_106, %c0_107] : memref<1x64xf32, #tpu.memory_space<vmem>>, vector<1x64xf32>
    %65 = vector.broadcast %64 : vector<1x64xf32> to vector<256x64xf32>
    %66 = arith.addf %63, %65 : vector<256x64xf32>
    %cst_108 = arith.constant 0.000000e+00 : f32
    %67 = vector.broadcast %cst_108 : f32 to vector<256x64xf32>
    %68 = arith.maximumf %66, %67 : vector<256x64xf32>
    %69 = vector.shape_cast %68 : vector<256x64xf32> to vector<16x16x64xf32>
    %c0_109 = arith.constant 0 : index
    %c0_110 = arith.constant 0 : index
    %c0_111 = arith.constant 0 : index
    %70 = vector.load %arg13[%c0_109, %c0_110, %c0_111] : memref<17x17x64xf32, #tpu.memory_space<vmem>>, vector<16x16x64xf32>
    tpu.vector_store %arg13[%c0_109, %c0_110, %c0_111], %69 {strides = array<i32>} : memref<17x17x64xf32, #tpu.memory_space<vmem>>, vector<16x16x64xf32>,
    %c0_112 = arith.constant 0 : index
    %c1_113 = arith.constant 1 : index
    %c0_114 = arith.constant 0 : index
    %71 = vector.load %arg13[%c0_112, %c1_113, %c0_114] : memref<17x17x64xf32, #tpu.memory_space<vmem>>, vector<16x16x64xf32>
    %c1_115 = arith.constant 1 : index
    %c0_116 = arith.constant 0 : index
    %c0_117 = arith.constant 0 : index
    %72 = vector.load %arg13[%c1_115, %c0_116, %c0_117] : memref<17x17x64xf32, #tpu.memory_space<vmem>>, vector<16x16x64xf32>
    %c1_118 = arith.constant 1 : index
    %c1_119 = arith.constant 1 : index
    %c0_120 = arith.constant 0 : index
    %73 = vector.load %arg13[%c1_118, %c1_119, %c0_120] : memref<17x17x64xf32, #tpu.memory_space<vmem>>, vector<16x16x64xf32>
    %74 = arith.addf %69, %71 : vector<16x16x64xf32>
    %75 = arith.addf %74, %72 : vector<16x16x64xf32>
    %76 = arith.addf %75, %73 : vector<16x16x64xf32>
    %cst_121 = arith.constant 2.500000e-01 : f32
    %77 = vector.broadcast %cst_121 : f32 to vector<16x16x64xf32>
    %78 = arith.mulf %77, %76 : vector<16x16x64xf32>
    %79 = arith.truncf %78 : vector<16x16x64xf32> to vector<16x16x64xbf16>
    %c1_122 = arith.constant 1 : index
    %c1_123 = arith.constant 1 : index
    %c0_124 = arith.constant 0 : index
    %80 = vector.load %arg14[%c1_122, %c1_123, %c0_124] : memref<18x18x64xbf16, #tpu.memory_space<vmem>>, vector<16x16x64xbf16>
    tpu.vector_store %arg14[%c1_122, %c1_123, %c0_124], %79 {strides = array<i32>} : memref<18x18x64xbf16, #tpu.memory_space<vmem>>, vector<16x16x64xbf16>,
    %c0_125 = arith.constant 0 : index
    %c0_126 = arith.constant 0 : index
    %c0_127 = arith.constant 0 : index
    %81 = vector.load %arg14[%c0_125, %c0_126, %c0_127] : memref<18x18x64xbf16, #tpu.memory_space<vmem>>, vector<16x16x64xbf16>
    %c0_128 = arith.constant 0 : index
    %c1_129 = arith.constant 1 : index
    %c0_130 = arith.constant 0 : index
    %82 = vector.load %arg14[%c0_128, %c1_129, %c0_130] : memref<18x18x64xbf16, #tpu.memory_space<vmem>>, vector<16x16x64xbf16>
    %c0_131 = arith.constant 0 : index
    %c2_132 = arith.constant 2 : index
    %c0_133 = arith.constant 0 : index
    %83 = vector.load %arg14[%c0_131, %c2_132, %c0_133] : memref<18x18x64xbf16, #tpu.memory_space<vmem>>, vector<16x16x64xbf16>
    %c1_134 = arith.constant 1 : index
    %c0_135 = arith.constant 0 : index
    %c0_136 = arith.constant 0 : index
    %84 = vector.load %arg14[%c1_134, %c0_135, %c0_136] : memref<18x18x64xbf16, #tpu.memory_space<vmem>>, vector<16x16x64xbf16>
    %c1_137 = arith.constant 1 : index
    %c1_138 = arith.constant 1 : index
    %c0_139 = arith.constant 0 : index
    %85 = vector.load %arg14[%c1_137, %c1_138, %c0_139] : memref<18x18x64xbf16, #tpu.memory_space<vmem>>, vector<16x16x64xbf16>
    %c1_140 = arith.constant 1 : index
    %c2_141 = arith.constant 2 : index
    %c0_142 = arith.constant 0 : index
    %86 = vector.load %arg14[%c1_140, %c2_141, %c0_142] : memref<18x18x64xbf16, #tpu.memory_space<vmem>>, vector<16x16x64xbf16>
    %c2_143 = arith.constant 2 : index
    %c0_144 = arith.constant 0 : index
    %c0_145 = arith.constant 0 : index
    %87 = vector.load %arg14[%c2_143, %c0_144, %c0_145] : memref<18x18x64xbf16, #tpu.memory_space<vmem>>, vector<16x16x64xbf16>
    %c2_146 = arith.constant 2 : index
    %c1_147 = arith.constant 1 : index
    %c0_148 = arith.constant 0 : index
    %88 = vector.load %arg14[%c2_146, %c1_147, %c0_148] : memref<18x18x64xbf16, #tpu.memory_space<vmem>>, vector<16x16x64xbf16>
    %c2_149 = arith.constant 2 : index
    %c2_150 = arith.constant 2 : index
    %c0_151 = arith.constant 0 : index
    %89 = vector.load %arg14[%c2_149, %c2_150, %c0_151] : memref<18x18x64xbf16, #tpu.memory_space<vmem>>, vector<16x16x64xbf16>
    %90 = tpu.concatenate %81, %82, %83, %84, %85, %86, %87, %88, %89 in 2 : vector<16x16x64xbf16>, vector<16x16x64xbf16>, vector<16x16x64xbf16>, vector<16x16x64xbf16>, vector<16x16x64xbf16>, vector<16x16x64xbf16>, vector<16x16x64xbf16>, vector<16x16x64xbf16>, vector<16x16x64xbf16> -> vector<16x16x576xbf16>
    %91 = vector.shape_cast %90 : vector<16x16x576xbf16> to vector<256x576xbf16>
    %c0_152 = arith.constant 0 : index
    %c0_153 = arith.constant 0 : index
    %92 = vector.load %arg7[%c0_152, %c0_153] : memref<576x64xbf16, #tpu.memory_space<vmem>>, vector<576x64xbf16>
    %cst_154 = arith.constant dense<0.000000e+00> : vector<256x64xf32>
    %93 = tpu.matmul %91, %92, %cst_154 {dimension_numbers = #tpu.dot_dimension_numbers<[1], [0], [0], [1], [0, 0, 1, 1], [], []>} : vector<256x576xbf16>, vector<576x64xbf16>, vector<256x64xf32> -> vector<256x64xf32>
    %c0_155 = arith.constant 0 : index
    %c0_156 = arith.constant 0 : index
    %94 = vector.load %arg8[%c0_155, %c0_156] : memref<1x64xf32, #tpu.memory_space<vmem>>, vector<1x64xf32>
    %95 = vector.broadcast %94 : vector<1x64xf32> to vector<256x64xf32>
    %96 = arith.addf %93, %95 : vector<256x64xf32>
    %cst_157 = arith.constant 0.000000e+00 : f32
    %97 = vector.broadcast %cst_157 : f32 to vector<256x64xf32>
    %98 = arith.maximumf %96, %97 : vector<256x64xf32>
    %99 = vector.shape_cast %98 : vector<256x64xf32> to vector<16x16x64xf32>
    %c0_158 = arith.constant 0 : index
    %c0_159 = arith.constant 0 : index
    %c0_160 = arith.constant 0 : index
    %100 = vector.load %arg13[%c0_158, %c0_159, %c0_160] : memref<17x17x64xf32, #tpu.memory_space<vmem>>, vector<16x16x64xf32>
    tpu.vector_store %arg13[%c0_158, %c0_159, %c0_160], %99 {strides = array<i32>} : memref<17x17x64xf32, #tpu.memory_space<vmem>>, vector<16x16x64xf32>,
    %c0_161 = arith.constant 0 : index
    %c1_162 = arith.constant 1 : index
    %c0_163 = arith.constant 0 : index
    %101 = vector.load %arg13[%c0_161, %c1_162, %c0_163] : memref<17x17x64xf32, #tpu.memory_space<vmem>>, vector<16x16x64xf32>
    %c1_164 = arith.constant 1 : index
    %c0_165 = arith.constant 0 : index
    %c0_166 = arith.constant 0 : index
    %102 = vector.load %arg13[%c1_164, %c0_165, %c0_166] : memref<17x17x64xf32, #tpu.memory_space<vmem>>, vector<16x16x64xf32>
    %c1_167 = arith.constant 1 : index
    %c1_168 = arith.constant 1 : index
    %c0_169 = arith.constant 0 : index
    %103 = vector.load %arg13[%c1_167, %c1_168, %c0_169] : memref<17x17x64xf32, #tpu.memory_space<vmem>>, vector<16x16x64xf32>
    %104 = arith.addf %99, %101 : vector<16x16x64xf32>
    %105 = arith.addf %104, %102 : vector<16x16x64xf32>
    %106 = arith.addf %105, %103 : vector<16x16x64xf32>
    %cst_170 = arith.constant 2.500000e-01 : f32
    %107 = vector.broadcast %cst_170 : f32 to vector<16x16x64xf32>
    %108 = arith.mulf %107, %106 : vector<16x16x64xf32>
    %109 = arith.addf %48, %78 : vector<16x16x64xf32>
    %110 = arith.addf %109, %108 : vector<16x16x64xf32>
    %c0_171 = arith.constant 0 : index
    %c0_172 = arith.constant 0 : index
    %c0_173 = arith.constant 0 : index
    %111 = vector.load %arg9[%c0_171, %c0_172, %c0_173] : memref<1x1x64xf32, #tpu.memory_space<vmem>>, vector<1x1x64xf32>
    %112 = vector.broadcast %111 : vector<1x1x64xf32> to vector<16x16x64xf32>
    %113 = arith.mulf %110, %112 : vector<16x16x64xf32>
    %cst_174 = arith.constant dense<0.000000e+00> : vector<16x16xf32>
    %114 = vector.multi_reduction <add>, %113, %cst_174 [2] : vector<16x16x64xf32> to vector<16x16xf32>
    %c0_175 = arith.constant 0 : index
    %c0_176 = arith.constant 0 : index
    %c0_177 = arith.constant 0 : index
    %c0_178 = arith.constant 0 : index
    %115 = vector.load %arg2[%c0_175, %c0_176, %c0_177, %c0_178] : memref<1x16x16x8xf32, #tpu.memory_space<vmem>>, vector<1x16x16x8xf32>
    %116 = vector.shape_cast %115 : vector<1x16x16x8xf32> to vector<16x16x8xf32>
    %c0_179 = arith.constant 0 : index
    %c0_180 = arith.constant 0 : index
    %c0_181 = arith.constant 0 : index
    %117 = vector.load %arg10[%c0_179, %c0_180, %c0_181] : memref<1x1x8xf32, #tpu.memory_space<vmem>>, vector<1x1x8xf32>
    %118 = vector.broadcast %117 : vector<1x1x8xf32> to vector<16x16x8xf32>
    %119 = arith.mulf %116, %118 : vector<16x16x8xf32>
    %cst_182 = arith.constant dense<0.000000e+00> : vector<16x16xf32>
    %120 = vector.multi_reduction <add>, %119, %cst_182 [2] : vector<16x16x8xf32> to vector<16x16xf32>
    %121 = arith.addf %114, %120 : vector<16x16xf32>
    %c0_183 = arith.constant 0 : index
    %c0_184 = arith.constant 0 : index
    %122 = vector.load %arg11[%c0_183, %c0_184] : memref<1x1xf32, #tpu.memory_space<vmem>>, vector<1x1xf32>
    %123 = vector.broadcast %122 : vector<1x1xf32> to vector<16x16xf32>
    %124 = arith.addf %121, %123 : vector<16x16xf32>
    %cst_185 = arith.constant 0.000000e+00 : f32
    %125 = vector.broadcast %cst_185 : f32 to vector<16x16xf32>
    %126 = arith.maximumf %124, %125 : vector<16x16xf32>
    %c0_186 = arith.constant 0 : index
    %c0_187 = arith.constant 0 : index
    %c0_188 = arith.constant 0 : index
    %127 = vector.load %arg12[%c0_186, %c0_187, %c0_188] : memref<1x16x16xf32, #tpu.memory_space<vmem>>, vector<1x16x16xf32>
    %128 = vector.shape_cast %127 : vector<1x16x16xf32> to vector<16x16xf32>
    %129 = vector.shape_cast %126 : vector<16x16xf32> to vector<1x16x16xf32>
    tpu.vector_store %arg12[%c0_186, %c0_187, %c0_188], %129 {strides = array<i32>} : memref<1x16x16xf32, #tpu.memory_space<vmem>>, vector<1x16x16xf32>,
    return
  }
  func.func @transform_0(%arg0: i32) -> (i32, i32, i32, i32) {
    %c0_i32 = arith.constant 0 : i32
    %c0_i32_0 = arith.constant 0 : i32
    %c0_i32_1 = arith.constant 0 : i32
    %c0_i32_2 = arith.constant 0 : i32
    return %arg0, %c0_i32, %c0_i32_0, %c0_i32_1 : i32, i32, i32, i32
  }
  func.func @transform_1(%arg0: i32) -> (i32, i32, i32, i32) {
    %c0_i32 = arith.constant 0 : i32
    %c0_i32_0 = arith.constant 0 : i32
    %c0_i32_1 = arith.constant 0 : i32
    %c0_i32_2 = arith.constant 0 : i32
    return %arg0, %c0_i32, %c0_i32_0, %c0_i32_1 : i32, i32, i32, i32
  }
  func.func @transform_2(%arg0: i32) -> (i32, i32) {
    %c0_i32 = arith.constant 0 : i32
    %c0_i32_0 = arith.constant 0 : i32
    %c0_i32_1 = arith.constant 0 : i32
    return %c0_i32, %c0_i32_0 : i32, i32
  }
  func.func @transform_3(%arg0: i32) -> (i32, i32) {
    %c0_i32 = arith.constant 0 : i32
    %c0_i32_0 = arith.constant 0 : i32
    %c0_i32_1 = arith.constant 0 : i32
    return %c0_i32, %c0_i32_0 : i32, i32
  }
  func.func @transform_4(%arg0: i32) -> (i32, i32) {
    %c0_i32 = arith.constant 0 : i32
    %c0_i32_0 = arith.constant 0 : i32
    %c0_i32_1 = arith.constant 0 : i32
    return %c0_i32, %c0_i32_0 : i32, i32
  }
  func.func @transform_5(%arg0: i32) -> (i32, i32) {
    %c0_i32 = arith.constant 0 : i32
    %c0_i32_0 = arith.constant 0 : i32
    %c0_i32_1 = arith.constant 0 : i32
    return %c0_i32, %c0_i32_0 : i32, i32
  }
  func.func @transform_6(%arg0: i32) -> (i32, i32) {
    %c0_i32 = arith.constant 0 : i32
    %c0_i32_0 = arith.constant 0 : i32
    %c0_i32_1 = arith.constant 0 : i32
    return %c0_i32, %c0_i32_0 : i32, i32
  }
  func.func @transform_7(%arg0: i32) -> (i32, i32) {
    %c0_i32 = arith.constant 0 : i32
    %c0_i32_0 = arith.constant 0 : i32
    %c0_i32_1 = arith.constant 0 : i32
    return %c0_i32, %c0_i32_0 : i32, i32
  }
  func.func @transform_8(%arg0: i32) -> (i32, i32, i32) {
    %c0_i32 = arith.constant 0 : i32
    %c0_i32_0 = arith.constant 0 : i32
    %c0_i32_1 = arith.constant 0 : i32
    %c0_i32_2 = arith.constant 0 : i32
    return %c0_i32, %c0_i32_0, %c0_i32_1 : i32, i32, i32
  }
  func.func @transform_9(%arg0: i32) -> (i32, i32, i32) {
    %c0_i32 = arith.constant 0 : i32
    %c0_i32_0 = arith.constant 0 : i32
    %c0_i32_1 = arith.constant 0 : i32
    %c0_i32_2 = arith.constant 0 : i32
    return %c0_i32, %c0_i32_0, %c0_i32_1 : i32, i32, i32
  }
  func.func @transform_10(%arg0: i32) -> (i32, i32) {
    %c0_i32 = arith.constant 0 : i32
    %c0_i32_0 = arith.constant 0 : i32
    %c0_i32_1 = arith.constant 0 : i32
    return %c0_i32, %c0_i32_0 : i32, i32
  }
  func.func @transform_11(%arg0: i32) -> (i32, i32, i32) {
    %c0_i32 = arith.constant 0 : i32
    %c0_i32_0 = arith.constant 0 : i32
    %c0_i32_1 = arith.constant 0 : i32
    return %arg0, %c0_i32, %c0_i32_0 : i32, i32, i32
  }
}

</mosaic_0001>

<llo_original>
// kernel: tpu_custom_call.1
$region0: #{tpu_custom_call.1}
  #allocation0 [shape = 'u32[]', space=smem, size = 0x4, offset = 0x4, fixed_abs, tag = 'smem constant byte address 0x4 - core index']
  #allocation1 [shape = 'u32[144,128]{1,0:T(1,128)}', space=vmem, size = 0x12000, scoped, tag = 'internal scratch']
  #allocation2 [shape = 'f32[17,17,64]{2,1,0:T(8,128)}', space=vmem, size = 0x33000, scoped, tag = 'scratch operand']
  #allocation3 [shape = 'bf16[18,18,64]{2,1,0:T(8,128)(2,1)}', space=vmem, size = 0x1b000, scoped, tag = 'scratch operand']
  #allocation4 [shape = 'f32[1,1]{1,0:T(1,128)S(1)}', space=vmem, size = 0x200, scoped, tag = 'scoped memory for tpu_custom_call.1']
  %s0 = inlined_call_operand.vmem [shape: bf16[2,18,18,8], index: 0, kind: input, shape index: {}]
  %s1 = inlined_call_operand.vmem [shape: f32[2,16,16,8], index: 1, kind: input, shape index: {}]
  %s2 = inlined_call_operand.vmem [shape: bf16[72,64], index: 2, kind: input, shape index: {}]
  %s3 = inlined_call_operand.vmem [shape: f32[1,64], index: 3, kind: input, shape index: {}]
  %s4 = inlined_call_operand.vmem [shape: bf16[576,64], index: 4, kind: input, shape index: {}]
  %s5 = inlined_call_operand.vmem [shape: f32[1,64], index: 5, kind: input, shape index: {}]
  %s6 = inlined_call_operand.vmem [shape: bf16[576,64], index: 6, kind: input, shape index: {}]
  %s7 = inlined_call_operand.vmem [shape: f32[1,64], index: 7, kind: input, shape index: {}]
  %s8 = inlined_call_operand.vmem [shape: f32[1,1,64], index: 8, kind: input, shape index: {}]
  %s9 = inlined_call_operand.vmem [shape: f32[1,1,8], index: 9, kind: input, shape index: {}]
  %s10 = inlined_call_operand.<no memory space> [shape: f32[1,1], index: 10, kind: input, shape index: {}]
  %s11 = inlined_call_operand.hbm [shape: f32[2,16,16], index: 11, kind: output, shape index: {}]
  %s12 = sld [smem:[#allocation0]]
  $region77: #{tpu_custom_call.1} parent=0
    _
  %s14 = ssub.s32 1, %s12
  %s15 = scalar_select 0, %s14, %s12
  %v16 = vstv %s10
  %17 = vst [vmem:[#allocation4] sm:$0x1] %v16
  $region1: #{tpu_custom_call.1} parent=0
    #allocation5 [shape = 'u8[16384]{0}', space=vmem, size = 0x4000, scoped, tag = 'output window, operand 0']
    #allocation6 [shape = 's32[2]{0}', space=sflag, size = 0x8, scoped, tag = 'scoped memory for tpu_custom_call.1']
    %18 = vsyncpa [#allocation6], 0
    %s19 = scalar_lea.sflag [#allocation6], 1
    %20 = vsyncpa %s19, 0
    loop: start=0, step=1, limit=4
    $region2: #{tpu_custom_call.1} parent=1 // loop_pre_header
      _
    $region3: #{tpu_custom_call.1} parent=1 // loop_header
      %s22 = sphi 0, %s26
      %p23 = scmp.ge.s32.totalorder %s22, 4
      %s32 = sphi 0, %s34
      %s35 = sphi 0, %s32
      %s36 = sphi 0, %s35
      %s52 = sphi 0, %s36
      %s58 = sphi 0, %s60
      %s61 = sphi 0, %s58
      %s62 = sphi 0, %s61
      %s78 = sphi 0, %s62
      %s82 = sphi 0, %s82
      %s84 = sphi 0, %s82
      %s85 = sphi 0, %s84
      %s99 = sphi 0, %s85
      %s103 = sphi 0, %s103
      %s105 = sphi 0, %s103
      %s106 = sphi 0, %s105
      %s120 = sphi 0, %s106
      %s124 = sphi 0, %s124
      %s126 = sphi 0, %s124
      %s127 = sphi 0, %s126
      %s141 = sphi 0, %s127
      %s145 = sphi 0, %s145
      %s147 = sphi 0, %s145
      %s148 = sphi 0, %s147
      %s162 = sphi 0, %s148
      %s166 = sphi 0, %s166
      %s168 = sphi 0, %s166
      %s169 = sphi 0, %s168
      %s183 = sphi 0, %s169
      %s187 = sphi 0, %s187
      %s189 = sphi 0, %s187
      %s190 = sphi 0, %s189
      %s204 = sphi 0, %s190
      %s208 = sphi 0, %s208
      %s210 = sphi 0, %s208
      %s211 = sphi 0, %s210
      %s225 = sphi 0, %s211
      %s229 = sphi 0, %s229
      %s231 = sphi 0, %s229
      %s232 = sphi 0, %s231
      %s246 = sphi 0, %s232
      %s250 = sphi 0, %s250
      %s252 = sphi 0, %s250
      %s253 = sphi 0, %s252
      %s267 = sphi 0, %s253
      %s273 = sphi 0, %s275
      %s276 = sphi 0, %s273
      %s277 = sphi 0, %s276
      %s293 = sphi 0, %s277
    $region4: #{tpu_custom_call.1} parent=1 // loop_header_branch
      %25 = sbr.rel (%p23) target = $region8
    $region5: #{tpu_custom_call.1} parent=1 // loop_body
      %s27 = ssub.s32 %s22, 1
      %s28 = ssub.s32 %s22, 2
      %s29 = sadd.s32 %s22, 1
      %s30 = ssub.s32 %s22, %s29
      %p31 = scmp.eq.s32.totalorder %s30, 0
      %s33 = sadd.s32 %s32, 1
      %s34 = scalar_select %p31, %s32, %s33
      %p37 = pneg %p31
      %p38 = scmp.eq.s32.totalorder %s22, 1
      %p39 = por %p37, %p38
      %p40 = scmp.ne.s32.totalorder %s32, %s35
      %p41 = scmp.eq.s32.totalorder %s22, 0
      %p42 = por %p40, %p41
      %p43 = scmp.ne.s32.totalorder %s32, %s35
      %p44 = scmp.eq.s32.totalorder %s27, 1
      %p45 = por %p43, %p44
      %p46 = scmp.ne.s32.totalorder %s35, %s36
      %p47 = scmp.eq.s32.totalorder %s27, 0
      %p48 = por %p46, %p47
      %p49 = scmp.ne.s32.totalorder %s35, %s36
      %p50 = scmp.eq.s32.totalorder %s28, 1
      %p51 = por %p49, %p50
      %p53 = scmp.ne.s32.totalorder %s36, %s52
      %p54 = scmp.eq.s32.totalorder %s28, 0
      %p55 = por %p53, %p54
      %s56 = ssub.s32 %s22, %s29
      %p57 = scmp.eq.s32.totalorder %s56, 0
      %s59 = sadd.s32 %s58, 1
      %s60 = scalar_select %p57, %s58, %s59
      %p63 = pneg %p57
      %p64 = scmp.eq.s32.totalorder %s22, 1
      %p65 = por %p63, %p64
      %p66 = scmp.ne.s32.totalorder %s58, %s61
      %p67 = scmp.eq.s32.totalorder %s22, 0
      %p68 = por %p66, %p67
      %p69 = scmp.ne.s32.totalorder %s58, %s61
      %p70 = scmp.eq.s32.totalorder %s27, 1
      %p71 = por %p69, %p70
      %p72 = scmp.ne.s32.totalorder %s61, %s62
      %p73 = scmp.eq.s32.totalorder %s27, 0
      %p74 = por %p72, %p73
      %p75 = scmp.ne.s32.totalorder %s61, %s62
      %p76 = scmp.eq.s32.totalorder %s28, 1
      %p77 = por %p75, %p76
      %p79 = scmp.ne.s32.totalorder %s62, %s78
      %p80 = scmp.eq.s32.totalorder %s28, 0
      %p81 = por %p79, %p80
      %s83 = sadd.s32 %s82, 1
      %p86 = scmp.eq.s32.totalorder %s22, 1
      %p87 = scmp.ne.s32.totalorder %s82, %s84
      %p88 = scmp.eq.s32.totalorder %s22, 0
      %p89 = por %p87, %p88
      %p90 = scmp.ne.s32.totalorder %s82, %s84
      %p91 = scmp.eq.s32.totalorder %s27, 1
      %p92 = por %p90, %p91
      %p93 = scmp.ne.s32.totalorder %s84, %s85
      %p94 = scmp.eq.s32.totalorder %s27, 0
      %p95 = por %p93, %p94
      %p96 = scmp.ne.s32.totalorder %s84, %s85
      %p97 = scmp.eq.s32.totalorder %s28, 1
      %p98 = por %p96, %p97
      %p100 = scmp.ne.s32.totalorder %s85, %s99
      %p101 = scmp.eq.s32.totalorder %s28, 0
      %p102 = por %p100, %p101
      %s104 = sadd.s32 %s103, 1
      %p107 = scmp.eq.s32.totalorder %s22, 1
      %p108 = scmp.ne.s32.totalorder %s103, %s105
      %p109 = scmp.eq.s32.totalorder %s22, 0
      %p110 = por %p108, %p109
      %p111 = scmp.ne.s32.totalorder %s103, %s105
      %p112 = scmp.eq.s32.totalorder %s27, 1
      %p113 = por %p111, %p112
      %p114 = scmp.ne.s32.totalorder %s105, %s106
      %p115 = scmp.eq.s32.totalorder %s27, 0
      %p116 = por %p114, %p115
      %p117 = scmp.ne.s32.totalorder %s105, %s106
      %p118 = scmp.eq.s32.totalorder %s28, 1
      %p119 = por %p117, %p118
      %p121 = scmp.ne.s32.totalorder %s106, %s120
      %p122 = scmp.eq.s32.totalorder %s28, 0
      %p123 = por %p121, %p122
      %s125 = sadd.s32 %s124, 1
      %p128 = scmp.eq.s32.totalorder %s22, 1
      %p129 = scmp.ne.s32.totalorder %s124, %s126
      %p130 = scmp.eq.s32.totalorder %s22, 0
      %p131 = por %p129, %p130
      %p132 = scmp.ne.s32.totalorder %s124, %s126
      %p133 = scmp.eq.s32.totalorder %s27, 1
      %p134 = por %p132, %p133
      %p135 = scmp.ne.s32.totalorder %s126, %s127
      %p136 = scmp.eq.s32.totalorder %s27, 0
      %p137 = por %p135, %p136
      %p138 = scmp.ne.s32.totalorder %s126, %s127
      %p139 = scmp.eq.s32.totalorder %s28, 1
      %p140 = por %p138, %p139
      %p142 = scmp.ne.s32.totalorder %s127, %s141
      %p143 = scmp.eq.s32.totalorder %s28, 0
      %p144 = por %p142, %p143
      %s146 = sadd.s32 %s145, 1
      %p149 = scmp.eq.s32.totalorder %s22, 1
      %p150 = scmp.ne.s32.totalorder %s145, %s147
      %p151 = scmp.eq.s32.totalorder %s22, 0
      %p152 = por %p150, %p151
      %p153 = scmp.ne.s32.totalorder %s145, %s147
      %p154 = scmp.eq.s32.totalorder %s27, 1
      %p155 = por %p153, %p154
      %p156 = scmp.ne.s32.totalorder %s147, %s148
      %p157 = scmp.eq.s32.totalorder %s27, 0
      %p158 = por %p156, %p157
      %p159 = scmp.ne.s32.totalorder %s147, %s148
      %p160 = scmp.eq.s32.totalorder %s28, 1
      %p161 = por %p159, %p160
      %p163 = scmp.ne.s32.totalorder %s148, %s162
      %p164 = scmp.eq.s32.totalorder %s28, 0
      %p165 = por %p163, %p164
      %s167 = sadd.s32 %s166, 1
      %p170 = scmp.eq.s32.totalorder %s22, 1
      %p171 = scmp.ne.s32.totalorder %s166, %s168
      %p172 = scmp.eq.s32.totalorder %s22, 0
      %p173 = por %p171, %p172
      %p174 = scmp.ne.s32.totalorder %s166, %s168
      %p175 = scmp.eq.s32.totalorder %s27, 1
      %p176 = por %p174, %p175
      %p177 = scmp.ne.s32.totalorder %s168, %s169
      %p178 = scmp.eq.s32.totalorder %s27, 0
      %p179 = por %p177, %p178
      %p180 = scmp.ne.s32.totalorder %s168, %s169
      %p181 = scmp.eq.s32.totalorder %s28, 1
      %p182 = por %p180, %p181
      %p184 = scmp.ne.s32.totalorder %s169, %s183
      %p185 = scmp.eq.s32.totalorder %s28, 0
      %p186 = por %p184, %p185
      %s188 = sadd.s32 %s187, 1
      %p191 = scmp.eq.s32.totalorder %s22, 1
      %p192 = scmp.ne.s32.totalorder %s187, %s189
      %p193 = scmp.eq.s32.totalorder %s22, 0
      %p194 = por %p192, %p193
      %p195 = scmp.ne.s32.totalorder %s187, %s189
      %p196 = scmp.eq.s32.totalorder %s27, 1
      %p197 = por %p195, %p196
      %p198 = scmp.ne.s32.totalorder %s189, %s190
      %p199 = scmp.eq.s32.totalorder %s27, 0
      %p200 = por %p198, %p199
      %p201 = scmp.ne.s32.totalorder %s189, %s190
      %p202 = scmp.eq.s32.totalorder %s28, 1
      %p203 = por %p201, %p202
      %p205 = scmp.ne.s32.totalorder %s190, %s204
      %p206 = scmp.eq.s32.totalorder %s28, 0
      %p207 = por %p205, %p206
      %s209 = sadd.s32 %s208, 1
      %p212 = scmp.eq.s32.totalorder %s22, 1
      %p213 = scmp.ne.s32.totalorder %s208, %s210
      %p214 = scmp.eq.s32.totalorder %s22, 0
      %p215 = por %p213, %p214
      %p216 = scmp.ne.s32.totalorder %s208, %s210
      %p217 = scmp.eq.s32.totalorder %s27, 1
      %p218 = por %p216, %p217
      %p219 = scmp.ne.s32.totalorder %s210, %s211
      %p220 = scmp.eq.s32.totalorder %s27, 0
      %p221 = por %p219, %p220
      %p222 = scmp.ne.s32.totalorder %s210, %s211
      %p223 = scmp.eq.s32.totalorder %s28, 1
      %p224 = por %p222, %p223
      %p226 = scmp.ne.s32.totalorder %s211, %s225
      %p227 = scmp.eq.s32.totalorder %s28, 0
      %p228 = por %p226, %p227
      %s230 = sadd.s32 %s229, 1
      %p233 = scmp.eq.s32.totalorder %s22, 1
      %p234 = scmp.ne.s32.totalorder %s229, %s231
      %p235 = scmp.eq.s32.totalorder %s22, 0
      %p236 = por %p234, %p235
      %p237 = scmp.ne.s32.totalorder %s229, %s231
      %p238 = scmp.eq.s32.totalorder %s27, 1
      %p239 = por %p237, %p238
      %p240 = scmp.ne.s32.totalorder %s231, %s232
      %p241 = scmp.eq.s32.totalorder %s27, 0
      %p242 = por %p240, %p241
      %p243 = scmp.ne.s32.totalorder %s231, %s232
      %p244 = scmp.eq.s32.totalorder %s28, 1
      %p245 = por %p243, %p244
      %p247 = scmp.ne.s32.totalorder %s232, %s246
      %p248 = scmp.eq.s32.totalorder %s28, 0
      %p249 = por %p247, %p248
      %s251 = sadd.s32 %s250, 1
      %p254 = scmp.eq.s32.totalorder %s22, 1
      %p255 = scmp.ne.s32.totalorder %s250, %s252
      %p256 = scmp.eq.s32.totalorder %s22, 0
      %p257 = por %p255, %p256
      %p258 = scmp.ne.s32.totalorder %s250, %s252
      %p259 = scmp.eq.s32.totalorder %s27, 1
      %p260 = por %p258, %p259
      %p261 = scmp.ne.s32.totalorder %s252, %s253
      %p262 = scmp.eq.s32.totalorder %s27, 0
      %p263 = por %p261, %p262
      %p264 = scmp.ne.s32.totalorder %s252, %s253
      %p265 = scmp.eq.s32.totalorder %s28, 1
      %p266 = por %p264, %p265
      %p268 = scmp.ne.s32.totalorder %s253, %s267
      %p269 = scmp.eq.s32.totalorder %s28, 0
      %p270 = por %p268, %p269
      %s271 = ssub.s32 %s22, %s29
      %p272 = scmp.eq.s32.totalorder %s271, 0
      %s274 = sadd.s32 %s273, 1
      %s275 = scalar_select %p272, %s273, %s274
      %p278 = pneg %p272
      %p279 = scmp.eq.s32.totalorder %s22, 1
      %p280 = por %p278, %p279
      %p281 = scmp.ne.s32.totalorder %s273, %s276
      %p282 = scmp.eq.s32.totalorder %s22, 0
      %p283 = por %p281, %p282
      %p284 = scmp.ne.s32.totalorder %s273, %s276
      %p285 = scmp.eq.s32.totalorder %s27, 1
      %p286 = por %p284, %p285
      %p287 = scmp.ne.s32.totalorder %s276, %s277
      %p288 = scmp.eq.s32.totalorder %s27, 0
      %p289 = por %p287, %p288
      %p290 = scmp.ne.s32.totalorder %s276, %s277
      %p291 = scmp.eq.s32.totalorder %s28, 1
      %p292 = por %p290, %p291
      %p294 = scmp.ne.s32.totalorder %s277, %s293
      %p295 = scmp.eq.s32.totalorder %s28, 0
      %p296 = por %p294, %p295
      %p297 = scmp.le.s32.totalorder 1, %s22
      %p298 = scmp.lt.s32.totalorder %s22, 3
      %p299 = pnand %p297, %p298
      %p300 = pneg %p299
      // Predicated region
      $region9: #{tpu_custom_call.1} parent=5 // pred_check
        _
      $region10: #{tpu_custom_call.1} parent=5 // pred_check_branch
        %302 = sbr.rel (%p299) target = $region12
      $region11: #{tpu_custom_call.1} parent=5 // pred_region
        %s303 = ssub.s32 %s22, 1
        // Predicated region
        $region13: #{tpu_custom_call.1} parent=11 // pred_check
          %p304 = pneg %p95
        $region14: #{tpu_custom_call.1} parent=11 // pred_check_branch
          %306 = sbr.rel (%p304) target = $region16
        $region15: #{tpu_custom_call.1} parent=11 // pred_region
          _
        $region16: #{tpu_custom_call.1} parent=11 // pred_fallthru
          _
        // Predicated region
        $region17: #{tpu_custom_call.1} parent=11 // pred_check
          %p307 = pneg %p116
        $region18: #{tpu_custom_call.1} parent=11 // pred_check_branch
          %309 = sbr.rel (%p307) target = $region20
        $region19: #{tpu_custom_call.1} parent=11 // pred_region
          _
        $region20: #{tpu_custom_call.1} parent=11 // pred_fallthru
          _
        // Predicated region
        $region21: #{tpu_custom_call.1} parent=11 // pred_check
          %p310 = pneg %p137
        $region22: #{tpu_custom_call.1} parent=11 // pred_check_branch
          %312 = sbr.rel (%p310) target = $region24
        $region23: #{tpu_custom_call.1} parent=11 // pred_region
          _
        $region24: #{tpu_custom_call.1} parent=11 // pred_fallthru
          _
        // Predicated region
        $region25: #{tpu_custom_call.1} parent=11 // pred_check
          %p313 = pneg %p158
        $region26: #{tpu_custom_call.1} parent=11 // pred_check_branch
          %315 = sbr.rel (%p313) target = $region28
        $region27: #{tpu_custom_call.1} parent=11 // pred_region
          _
        $region28: #{tpu_custom_call.1} parent=11 // pred_fallthru
          _
        // Predicated region
        $region29: #{tpu_custom_call.1} parent=11 // pred_check
          %p316 = pneg %p179
        $region30: #{tpu_custom_call.1} parent=11 // pred_check_branch
          %318 = sbr.rel (%p316) target = $region32
        $region31: #{tpu_custom_call.1} parent=11 // pred_region
          _
        $region32: #{tpu_custom_call.1} parent=11 // pred_fallthru
          _
        // Predicated region
        $region33: #{tpu_custom_call.1} parent=11 // pred_check
          %p319 = pneg %p200
        $region34: #{tpu_custom_call.1} parent=11 // pred_check_branch
          %321 = sbr.rel (%p319) target = $region36
        $region35: #{tpu_custom_call.1} parent=11 // pred_region
          _
        $region36: #{tpu_custom_call.1} parent=11 // pred_fallthru
          _
        // Predicated region
        $region37: #{tpu_custom_call.1} parent=11 // pred_check
          %p322 = pneg %p221
        $region38: #{tpu_custom_call.1} parent=11 // pred_check_branch
          %324 = sbr.rel (%p322) target = $region40
        $region39: #{tpu_custom_call.1} parent=11 // pred_region
          _
        $region40: #{tpu_custom_call.1} parent=11 // pred_fallthru
          _
        // Predicated region
        $region41: #{tpu_custom_call.1} parent=11 // pred_check
          %p325 = pneg %p242
        $region42: #{tpu_custom_call.1} parent=11 // pred_check_branch
          %327 = sbr.rel (%p325) target = $region44
        $region43: #{tpu_custom_call.1} parent=11 // pred_region
          _
        $region44: #{tpu_custom_call.1} parent=11 // pred_fallthru
          _
        // Predicated region
        $region45: #{tpu_custom_call.1} parent=11 // pred_check
          %p328 = pneg %p263
        $region46: #{tpu_custom_call.1} parent=11 // pred_check_branch
          %330 = sbr.rel (%p328) target = $region48
        $region47: #{tpu_custom_call.1} parent=11 // pred_region
          _
        $region48: #{tpu_custom_call.1} parent=11 // pred_fallthru
          _
      $region12: #{tpu_custom_call.1} parent=5 // pred_fallthru
        _
      %p331 = scmp.lt.s32.totalorder %s22, 2
      // Predicated region
      $region49: #{tpu_custom_call.1} parent=5 // pred_check
        %p332 = pneg %p331
      $region50: #{tpu_custom_call.1} parent=5 // pred_check_branch
        %334 = sbr.rel (%p332) target = $region52
      $region51: #{tpu_custom_call.1} parent=5 // pred_region
        // Predicated region
        $region53: #{tpu_custom_call.1} parent=51 // pred_check
          %p335 = pneg %p42
        $region54: #{tpu_custom_call.1} parent=51 // pred_check_branch
          %337 = sbr.rel (%p335) target = $region56
        $region55: #{tpu_custom_call.1} parent=51 // pred_region
          %p338 = scmp.lt.s32.totalorder %s22, 1
          %s339 = scalar_select %p338, %s22, 1
          %s340 = smul.addr %s339, 54
          %s341 = smul.addr %s340, 4
          %s342 = scalar_lea.vmem %s0, %s341
        $region56: #{tpu_custom_call.1} parent=51 // pred_fallthru
          _
        // Predicated region
        $region57: #{tpu_custom_call.1} parent=51 // pred_check
          %p343 = pneg %p68
        $region58: #{tpu_custom_call.1} parent=51 // pred_check_branch
          %345 = sbr.rel (%p343) target = $region60
        $region59: #{tpu_custom_call.1} parent=51 // pred_region
          %p346 = scmp.lt.s32.totalorder %s22, 1
          %s347 = scalar_select %p346, %s22, 1
          %s348 = smul.addr %s347, 32
          %s349 = smul.addr %s348, 8
          %s350 = scalar_lea.vmem %s1, %s349
        $region60: #{tpu_custom_call.1} parent=51 // pred_fallthru
          _
      $region52: #{tpu_custom_call.1} parent=5 // pred_fallthru
        _
      %p351 = scmp.le.s32.totalorder 1, %s22
      %p352 = scmp.lt.s32.totalorder %s22, 3
      %p353 = pnand %p351, %p352
      %p354 = pneg %p353
      // Predicated region
      $region61: #{tpu_custom_call.1} parent=5 // pred_check
        _
      $region62: #{tpu_custom_call.1} parent=5 // pred_check_branch
        %356 = sbr.rel (%p353) target = $region64
      $region63: #{tpu_custom_call.1} parent=5 // pred_region
        %s357 = ssub.s32 %s22, 1
        %p358 = scmp.lt.s32.totalorder %s27, 1
        %s359 = scalar_select %p358, %s27, 1
        %s360 = smul.addr %s359, 54
        %s361 = smul.addr %s360, 4
        %s362 = scalar_lea.vmem %s0, %s361
        %p363 = pneg %p48
        %p364 = pneg %p45
        %p365 = scmp.lt.s32.totalorder %s27, 1
        %s366 = scalar_select %p365, %s27, 1
        %s367 = smul.addr %s366, 32
        %s368 = smul.addr %s367, 8
        %s369 = scalar_lea.vmem %s1, %s368
        %p370 = pneg %p74
        %p371 = pneg %p71
        %p372 = pneg %p95
        %p373 = pneg %p92
        %p374 = pneg %p116
        %p375 = pneg %p113
        %p376 = pneg %p137
        %p377 = pneg %p134
        %p378 = pneg %p158
        %p379 = pneg %p155
        %p380 = pneg %p179
        %p381 = pneg %p176
        %p382 = pneg %p200
        %p383 = pneg %p197
        %p384 = pneg %p221
        %p385 = pneg %p218
        %p386 = pneg %p242
        %p387 = pneg %p239
        %p388 = pneg %p263
        %p389 = pneg %p260
        %p390 = pneg %p289
        %p391 = pneg %p286
        %s392 = sand.u32 %s276, 1
        %s393 = scalar_lea.sflag [#allocation6], %s392
        %s394 = sand.u32 %s276, 1
        %s395 = smul.addr %s394, 16
        %s396 = scalar_lea.vmem [#allocation5], %s395
        %p397 = scmp.lt.s32.totalorder %s27, 1
        %s398 = scalar_select %p397, %s27, 1
        %s399 = smul.addr %s398, 54
        %s400 = smul.addr %s399, 4
        %s401 = scalar_lea.vmem %s0, %s400
        %p402 = scmp.lt.s32.totalorder %s27, 1
        %s403 = scalar_select %p402, %s27, 1
        %s404 = smul.addr %s403, 32
        %s405 = smul.addr %s404, 8
        %s406 = scalar_lea.vmem %s1, %s405
        %s408 = scalar_lea.vmem [#allocation2], 384
        %vm409 = vcmask 523264
        %410 = vst.msk [vmem:[%s408] sm:$0xff] %vm409, 0.0
        %411 = vst.msk [vmem:[%s408 + $0x8] sm:$0xff] %vm409, 0.0
        %vm412 = vcmask 516096
        %413 = vst.msk [vmem:[%s408 + $0x10] sm:$0x1] %vm412, 0.0
        %414 = vst.msk [vmem:[#allocation2 + $0x10] sm:$0x1] %vm412, 0.0
        %415 = vst.msk [vmem:[#allocation2 + $0x28] sm:$0x1] %vm412, 0.0
        %416 = vst.msk [vmem:[#allocation2 + $0x40] sm:$0x1] %vm412, 0.0
        %417 = vst.msk [vmem:[#allocation2 + $0x58] sm:$0x1] %vm412, 0.0
        %418 = vst.msk [vmem:[#allocation2 + $0x70] sm:$0x1] %vm412, 0.0
        %419 = vst.msk [vmem:[#allocation2 + $0x88] sm:$0x1] %vm412, 0.0
        %420 = vst.msk [vmem:[#allocation2 + $0xa0] sm:$0x1] %vm412, 0.0
        %421 = vst.msk [vmem:[#allocation2 + $0xb8] sm:$0x1] %vm412, 0.0
        %422 = vst.msk [vmem:[#allocation2 + $0xd0] sm:$0x1] %vm412, 0.0
        %423 = vst.msk [vmem:[#allocation2 + $0xe8] sm:$0x1] %vm412, 0.0
        %424 = vst.msk [vmem:[#allocation2 + $0x100] sm:$0x1] %vm412, 0.0
        %425 = vst.msk [vmem:[#allocation2 + $0x118] sm:$0x1] %vm412, 0.0
        %426 = vst.msk [vmem:[#allocation2 + $0x130] sm:$0x1] %vm412, 0.0
        %427 = vst.msk [vmem:[#allocation2 + $0x148] sm:$0x1] %vm412, 0.0
        %428 = vst.msk [vmem:[#allocation2 + $0x160] sm:$0x1] %vm412, 0.0
        %429 = vst.msk [vmem:[#allocation2 + $0x178] sm:$0x1] %vm412, 0.0
        %430 = vst.msk [vmem:[#allocation2 + $0x190] sm:$0x1] %vm412, 0.0
        %vm431 = vcmask 519168
        %432 = vst.msk [vmem:[#allocation3] sm:$0xf] %vm431, 0
        %433 = vst.msk [vmem:[#allocation3 + $0x4] sm:$0xf] %vm431, 0
        %434 = vst.msk [vmem:[#allocation3 + $0x8] sm:$0x1] %vm412, 0
        %s435 = scalar_lea.vmem [#allocation3], 204
        %436 = vst.msk [vmem:[%s435] sm:$0xf] %vm431, 0
        %437 = vst.msk [vmem:[%s435 + $0x4] sm:$0xf] %vm431, 0
        %438 = vst.msk [vmem:[%s435 + $0x8] sm:$0x1] %vm412, 0
        %vm439 = vcmask 516096
        %vm440 = vsmask.f32 256
        %vm441 = vmand %vm439, %vm440
        %v442 = vld [vmem:[#allocation3] sm:$0x1]
        %v443 = vsel %vm441, 0, %v442
        %444 = vst [vmem:[#allocation3] sm:$0x1] %v443
        %v445 = vld [vmem:[#allocation3 + $0xc] sm:$0x1]
        %v446 = vsel %vm441, 0, %v445
        %447 = vst [vmem:[#allocation3 + $0xc] sm:$0x1] %v446
        %v448 = vld [vmem:[#allocation3 + $0x18] sm:$0x1]
        %v449 = vsel %vm441, 0, %v448
        %450 = vst [vmem:[#allocation3 + $0x18] sm:$0x1] %v449
        %v451 = vld [vmem:[#allocation3 + $0x24] sm:$0x1]
        %v452 = vsel %vm441, 0, %v451
        %453 = vst [vmem:[#allocation3 + $0x24] sm:$0x1] %v452
        %v454 = vld [vmem:[#allocation3 + $0x30] sm:$0x1]
        %v455 = vsel %vm441, 0, %v454
        %456 = vst [vmem:[#allocation3 + $0x30] sm:$0x1] %v455
        %v457 = vld [vmem:[#allocation3 + $0x3c] sm:$0x1]
        %v458 = vsel %vm441, 0, %v457
        %459 = vst [vmem:[#allocation3 + $0x3c] sm:$0x1] %v458
        %v460 = vld [vmem:[#allocation3 + $0x48] sm:$0x1]
        %v461 = vsel %vm441, 0, %v460
        %462 = vst [vmem:[#allocation3 + $0x48] sm:$0x1] %v461
        %v463 = vld [vmem:[#allocation3 + $0x54] sm:$0x1]
        %v464 = vsel %vm441, 0, %v463
        %465 = vst [vmem:[#allocation3 + $0x54] sm:$0x1] %v464
        %v466 = vld [vmem:[#allocation3 + $0x60] sm:$0x1]
        %v467 = vsel %vm441, 0, %v466
        %468 = vst [vmem:[#allocation3 + $0x60] sm:$0x1] %v467
        %v469 = vld [vmem:[#allocation3 + $0x6c] sm:$0x1]
        %v470 = vsel %vm441, 0, %v469
        %471 = vst [vmem:[#allocation3 + $0x6c] sm:$0x1] %v470
        %v472 = vld [vmem:[#allocation3 + $0x78] sm:$0x1]
        %v473 = vsel %vm441, 0, %v472
        %474 = vst [vmem:[#allocation3 + $0x78] sm:$0x1] %v473
        %v475 = vld [vmem:[#allocation3 + $0x84] sm:$0x1]
        %v476 = vsel %vm441, 0, %v475
        %477 = vst [vmem:[#allocation3 + $0x84] sm:$0x1] %v476
        %v478 = vld [vmem:[#allocation3 + $0x90] sm:$0x1]
        %v479 = vsel %vm441, 0, %v478
        %480 = vst [vmem:[#allocation3 + $0x90] sm:$0x1] %v479
        %v481 = vld [vmem:[#allocation3 + $0x9c] sm:$0x1]
        %v482 = vsel %vm441, 0, %v481
        %483 = vst [vmem:[#allocation3 + $0x9c] sm:$0x1] %v482
        %v484 = vld [vmem:[#allocation3 + $0xa8] sm:$0x1]
        %v485 = vsel %vm441, 0, %v484
        %486 = vst [vmem:[#allocation3 + $0xa8] sm:$0x1] %v485
        %v487 = vld [vmem:[#allocation3 + $0xb4] sm:$0x1]
        %v488 = vsel %vm441, 0, %v487
        %489 = vst [vmem:[#allocation3 + $0xb4] sm:$0x1] %v488
        %v490 = vld [vmem:[#allocation3 + $0xc0] sm:$0x1]
        %v491 = vsel %vm441, 0, %v490
        %492 = vst [vmem:[#allocation3 + $0xc0] sm:$0x1] %v491
        %v493 = vld [vmem:[#allocation3 + $0xcc] sm:$0x1]
        %v494 = vsel %vm441, 0, %v493
        %495 = vst [vmem:[#allocation3 + $0xcc] sm:$0x1] %v494
        %vm496 = vsmask.f32 7938
        %vm497 = vmand %vm439, %vm496
        %v498 = vld [vmem:[#allocation3 + $0x8] sm:$0x1]
        %v499 = vsel %vm497, 0, %v498
        %500 = vst [vmem:[#allocation3 + $0x8] sm:$0x1] %v499
        %v501 = vld [vmem:[#allocation3 + $0x14] sm:$0x1]
        %v502 = vsel %vm497, 0, %v501
        %503 = vst [vmem:[#allocation3 + $0x14] sm:$0x1] %v502
        %v504 = vld [vmem:[#allocation3 + $0x20] sm:$0x1]
        %v505 = vsel %vm497, 0, %v504
        %506 = vst [vmem:[#allocation3 + $0x20] sm:$0x1] %v505
        %v507 = vld [vmem:[#allocation3 + $0x2c] sm:$0x1]
        %v508 = vsel %vm497, 0, %v507
        %509 = vst [vmem:[#allocation3 + $0x2c] sm:$0x1] %v508
        %v510 = vld [vmem:[#allocation3 + $0x38] sm:$0x1]
        %v511 = vsel %vm497, 0, %v510
        %512 = vst [vmem:[#allocation3 + $0x38] sm:$0x1] %v511
        %v513 = vld [vmem:[#allocation3 + $0x44] sm:$0x1]
        %v514 = vsel %vm497, 0, %v513
        %515 = vst [vmem:[#allocation3 + $0x44] sm:$0x1] %v514
        %v516 = vld [vmem:[#allocation3 + $0x50] sm:$0x1]
        %v517 = vsel %vm497, 0, %v516
        %518 = vst [vmem:[#allocation3 + $0x50] sm:$0x1] %v517
        %v519 = vld [vmem:[#allocation3 + $0x5c] sm:$0x1]
        %v520 = vsel %vm497, 0, %v519
        %521 = vst [vmem:[#allocation3 + $0x5c] sm:$0x1] %v520
        %v522 = vld [vmem:[#allocation3 + $0x68] sm:$0x1]
        %v523 = vsel %vm497, 0, %v522
        %524 = vst [vmem:[#allocation3 + $0x68] sm:$0x1] %v523
        %v525 = vld [vmem:[#allocation3 + $0x74] sm:$0x1]
        %v526 = vsel %vm497, 0, %v525
        %527 = vst [vmem:[#allocation3 + $0x74] sm:$0x1] %v526
        %v528 = vld [vmem:[#allocation3 + $0x80] sm:$0x1]
        %v529 = vsel %vm497, 0, %v528
        %530 = vst [vmem:[#allocation3 + $0x80] sm:$0x1] %v529
        %v531 = vld [vmem:[#allocation3 + $0x8c] sm:$0x1]
        %v532 = vsel %vm497, 0, %v531
        %533 = vst [vmem:[#allocation3 + $0x8c] sm:$0x1] %v532
        %v534 = vld [vmem:[#allocation3 + $0x98] sm:$0x1]
        %v535 = vsel %vm497, 0, %v534
        %536 = vst [vmem:[#allocation3 + $0x98] sm:$0x1] %v535
        %v537 = vld [vmem:[#allocation3 + $0xa4] sm:$0x1]
        %v538 = vsel %vm497, 0, %v537
        %539 = vst [vmem:[#allocation3 + $0xa4] sm:$0x1] %v538
        %v540 = vld [vmem:[#allocation3 + $0xb0] sm:$0x1]
        %v541 = vsel %vm497, 0, %v540
        %542 = vst [vmem:[#allocation3 + $0xb0] sm:$0x1] %v541
        %v543 = vld [vmem:[#allocation3 + $0xbc] sm:$0x1]
        %v544 = vsel %vm497, 0, %v543
        %545 = vst [vmem:[#allocation3 + $0xbc] sm:$0x1] %v544
        %v546 = vld [vmem:[#allocation3 + $0xc8] sm:$0x1]
        %v547 = vsel %vm497, 0, %v546
        %548 = vst [vmem:[#allocation3 + $0xc8] sm:$0x1] %v547
        %v549 = vld [vmem:[#allocation3 + $0xd4] sm:$0x1]
        %v550 = vsel %vm497, 0, %v549
        %551 = vst [vmem:[#allocation3 + $0xd4] sm:$0x1] %v550
        %v552 = vld [vmem:[%s401] sm:$0xf]
        %v553 = vld [vmem:[%s401 + $0x4] sm:$0xf]
        %v554 = vld [vmem:[%s401 + $0xc] sm:$0xf]
        %v555 = vld [vmem:[%s401 + $0x10] sm:$0xf]
        %v556 = vld [vmem:[%s401 + $0x18] sm:$0xf]
        %v557 = vld [vmem:[%s401 + $0x1c] sm:$0xf]
        %v558 = vld [vmem:[%s401 + $0x24] sm:$0xf]
        %v559 = vld [vmem:[%s401 + $0x28] sm:$0xf]
        %v560 = vld [vmem:[%s401 + $0x30] sm:$0xf]
        %v561 = vld [vmem:[%s401 + $0x34] sm:$0xf]
        %v562 = vld [vmem:[%s401 + $0x3c] sm:$0xf]
        %v563 = vld [vmem:[%s401 + $0x40] sm:$0xf]
        %v564 = vld [vmem:[%s401 + $0x48] sm:$0xf]
        %v565 = vld [vmem:[%s401 + $0x4c] sm:$0xf]
        %v566 = vld [vmem:[%s401 + $0x54] sm:$0xf]
        %v567 = vld [vmem:[%s401 + $0x58] sm:$0xf]
        %v568 = vld [vmem:[%s401 + $0x60] sm:$0xf]
        %v569 = vld [vmem:[%s401 + $0x64] sm:$0xf]
        %v570 = vld [vmem:[%s401 + $0x6c] sm:$0xf]
        %v571 = vld [vmem:[%s401 + $0x70] sm:$0xf]
        %v572 = vld [vmem:[%s401 + $0x78] sm:$0xf]
        %v573 = vld [vmem:[%s401 + $0x7c] sm:$0xf]
        %v574 = vld [vmem:[%s401 + $0x84] sm:$0xf]
        %v575 = vld [vmem:[%s401 + $0x88] sm:$0xf]
        %v576 = vld [vmem:[%s401 + $0x90] sm:$0xf]
        %v577 = vld [vmem:[%s401 + $0x94] sm:$0xf]
        %v578 = vld [vmem:[%s401 + $0x9c] sm:$0xf]
        %v579 = vld [vmem:[%s401 + $0xa0] sm:$0xf]
        %v580 = vld [vmem:[%s401 + $0xa8] sm:$0xf]
        %v581 = vld [vmem:[%s401 + $0xac] sm:$0xf]
        %v582 = vld [vmem:[%s401 + $0xb4] sm:$0xf]
        %v583 = vld [vmem:[%s401 + $0xb8] sm:$0xf]
        %v584 = vld [vmem:[%s401 + $0x8] sm:$0x1]
        %v585 = vld [vmem:[%s401 + $0x14] sm:$0x1]
        %v586 = vld [vmem:[%s401 + $0x20] sm:$0x1]
        %v587 = vld [vmem:[%s401 + $0x2c] sm:$0x1]
        %v588 = vld [vmem:[%s401 + $0x38] sm:$0x1]
        %v589 = vld [vmem:[%s401 + $0x44] sm:$0x1]
        %v590 = vld [vmem:[%s401 + $0x50] sm:$0x1]
        %v591 = vld [vmem:[%s401 + $0x5c] sm:$0x1]
        %v592 = vld [vmem:[%s401 + $0x68] sm:$0x1]
        %v593 = vld [vmem:[%s401 + $0x74] sm:$0x1]
        %v594 = vld [vmem:[%s401 + $0x80] sm:$0x1]
        %v595 = vld [vmem:[%s401 + $0x8c] sm:$0x1]
        %v596 = vld [vmem:[%s401 + $0x98] sm:$0x1]
        %v597 = vld [vmem:[%s401 + $0xa4] sm:$0x1]
        %v598 = vld [vmem:[%s401 + $0xb0] sm:$0x1]
        %v599 = vld [vmem:[%s401 + $0xbc] sm:$0x1]
        %v600 = vld [vmem:[%s401] sm:$0xe]
        %v601 = vld [vmem:[%s401 + $0xc] sm:$0xe]
        %v602 = vld [vmem:[%s401 + $0x18] sm:$0xe]
        %v603 = vld [vmem:[%s401 + $0x24] sm:$0xe]
        %v604 = vld [vmem:[%s401 + $0x30] sm:$0xe]
        %v605 = vld [vmem:[%s401 + $0x3c] sm:$0xe]
        %v606 = vld [vmem:[%s401 + $0x48] sm:$0xe]
        %v607 = vld [vmem:[%s401 + $0x54] sm:$0xe]
        %v608 = vld [vmem:[%s401 + $0x60] sm:$0xe]
        %v609 = vld [vmem:[%s401 + $0x6c] sm:$0xe]
        %v610 = vld [vmem:[%s401 + $0x78] sm:$0xe]
        %v611 = vld [vmem:[%s401 + $0x84] sm:$0xe]
        %v612 = vld [vmem:[%s401 + $0x90] sm:$0xe]
        %v613 = vld [vmem:[%s401 + $0x9c] sm:$0xe]
        %v614 = vld [vmem:[%s401 + $0xa8] sm:$0xe]
        %v615 = vld [vmem:[%s401 + $0xb4] sm:$0xe]
        %s616 = scalar_lea.vmem %s401, 12
        %v617 = vld [vmem:[%s616] sm:$0xf]
        %v618 = vld [vmem:[%s616 + $0x4] sm:$0xf]
        %v619 = vld [vmem:[%s616 + $0xc] sm:$0xf]
        %v620 = vld [vmem:[%s616 + $0x10] sm:$0xf]
        %v621 = vld [vmem:[%s616 + $0x18] sm:$0xf]
        %v622 = vld [vmem:[%s616 + $0x1c] sm:$0xf]
        %v623 = vld [vmem:[%s616 + $0x24] sm:$0xf]
        %v624 = vld [vmem:[%s616 + $0x28] sm:$0xf]
        %v625 = vld [vmem:[%s616 + $0x30] sm:$0xf]
        %v626 = vld [vmem:[%s616 + $0x34] sm:$0xf]
        %v627 = vld [vmem:[%s616 + $0x3c] sm:$0xf]
        %v628 = vld [vmem:[%s616 + $0x40] sm:$0xf]
        %v629 = vld [vmem:[%s616 + $0x48] sm:$0xf]
        %v630 = vld [vmem:[%s616 + $0x4c] sm:$0xf]
        %v631 = vld [vmem:[%s616 + $0x54] sm:$0xf]
        %v632 = vld [vmem:[%s616 + $0x58] sm:$0xf]
        %v633 = vld [vmem:[%s616 + $0x60] sm:$0xf]
        %v634 = vld [vmem:[%s616 + $0x64] sm:$0xf]
        %v635 = vld [vmem:[%s616 + $0x6c] sm:$0xf]
        %v636 = vld [vmem:[%s616 + $0x70] sm:$0xf]
        %v637 = vld [vmem:[%s616 + $0x78] sm:$0xf]
        %v638 = vld [vmem:[%s616 + $0x7c] sm:$0xf]
        %v639 = vld [vmem:[%s616 + $0x84] sm:$0xf]
        %v640 = vld [vmem:[%s616 + $0x88] sm:$0xf]
        %v641 = vld [vmem:[%s616 + $0x90] sm:$0xf]
        %v642 = vld [vmem:[%s616 + $0x94] sm:$0xf]
        %v643 = vld [vmem:[%s616 + $0x9c] sm:$0xf]
        %v644 = vld [vmem:[%s616 + $0xa0] sm:$0xf]
        %v645 = vld [vmem:[%s616 + $0xa8] sm:$0xf]
        %v646 = vld [vmem:[%s616 + $0xac] sm:$0xf]
        %v647 = vld [vmem:[%s616 + $0xb4] sm:$0xf]
        %v648 = vld [vmem:[%s616 + $0xb8] sm:$0xf]
        %v649 = vld [vmem:[%s616 + $0x8] sm:$0x1]
        %v650 = vld [vmem:[%s616 + $0x14] sm:$0x1]
        %v651 = vld [vmem:[%s616 + $0x20] sm:$0x1]
        %v652 = vld [vmem:[%s616 + $0x2c] sm:$0x1]
        %v653 = vld [vmem:[%s616 + $0x38] sm:$0x1]
        %v654 = vld [vmem:[%s616 + $0x44] sm:$0x1]
        %v655 = vld [vmem:[%s616 + $0x50] sm:$0x1]
        %v656 = vld [vmem:[%s616 + $0x5c] sm:$0x1]
        %v657 = vld [vmem:[%s616 + $0x68] sm:$0x1]
        %v658 = vld [vmem:[%s616 + $0x74] sm:$0x1]
        %v659 = vld [vmem:[%s616 + $0x80] sm:$0x1]
        %v660 = vld [vmem:[%s616 + $0x8c] sm:$0x1]
        %v661 = vld [vmem:[%s616 + $0x98] sm:$0x1]
        %v662 = vld [vmem:[%s616 + $0xa4] sm:$0x1]
        %v663 = vld [vmem:[%s616 + $0xb0] sm:$0x1]
        %v664 = vld [vmem:[%s616 + $0xbc] sm:$0x1]
        %v665 = vld [vmem:[%s616] sm:$0xe]
        %v666 = vld [vmem:[%s616 + $0xc] sm:$0xe]
        %v667 = vld [vmem:[%s616 + $0x18] sm:$0xe]
        %v668 = vld [vmem:[%s616 + $0x24] sm:$0xe]
        %v669 = vld [vmem:[%s616 + $0x30] sm:$0xe]
        %v670 = vld [vmem:[%s616 + $0x3c] sm:$0xe]
        %v671 = vld [vmem:[%s616 + $0x48] sm:$0xe]
        %v672 = vld [vmem:[%s616 + $0x54] sm:$0xe]
        %v673 = vld [vmem:[%s616 + $0x60] sm:$0xe]
        %v674 = vld [vmem:[%s616 + $0x6c] sm:$0xe]
        %v675 = vld [vmem:[%s616 + $0x78] sm:$0xe]
        %v676 = vld [vmem:[%s616 + $0x84] sm:$0xe]
        %v677 = vld [vmem:[%s616 + $0x90] sm:$0xe]
        %v678 = vld [vmem:[%s616 + $0x9c] sm:$0xe]
        %v679 = vld [vmem:[%s616 + $0xa8] sm:$0xe]
        %v680 = vld [vmem:[%s616 + $0xb4] sm:$0xe]
        %s681 = scalar_lea.vmem %s401, 24
        %v682 = vld [vmem:[%s681] sm:$0xf]
        %v683 = vld [vmem:[%s681 + $0x4] sm:$0xf]
        %v684 = vld [vmem:[%s681 + $0xc] sm:$0xf]
        %v685 = vld [vmem:[%s681 + $0x10] sm:$0xf]
        %v686 = vld [vmem:[%s681 + $0x18] sm:$0xf]
        %v687 = vld [vmem:[%s681 + $0x1c] sm:$0xf]
        %v688 = vld [vmem:[%s681 + $0x24] sm:$0xf]
        %v689 = vld [vmem:[%s681 + $0x28] sm:$0xf]
        %v690 = vld [vmem:[%s681 + $0x30] sm:$0xf]
        %v691 = vld [vmem:[%s681 + $0x34] sm:$0xf]
        %v692 = vld [vmem:[%s681 + $0x3c] sm:$0xf]
        %v693 = vld [vmem:[%s681 + $0x40] sm:$0xf]
        %v694 = vld [vmem:[%s681 + $0x48] sm:$0xf]
        %v695 = vld [vmem:[%s681 + $0x4c] sm:$0xf]
        %v696 = vld [vmem:[%s681 + $0x54] sm:$0xf]
        %v697 = vld [vmem:[%s681 + $0x58] sm:$0xf]
        %v698 = vld [vmem:[%s681 + $0x60] sm:$0xf]
        %v699 = vld [vmem:[%s681 + $0x64] sm:$0xf]
        %v700 = vld [vmem:[%s681 + $0x6c] sm:$0xf]
        %v701 = vld [vmem:[%s681 + $0x70] sm:$0xf]
        %v702 = vld [vmem:[%s681 + $0x78] sm:$0xf]
        %v703 = vld [vmem:[%s681 + $0x7c] sm:$0xf]
        %v704 = vld [vmem:[%s681 + $0x84] sm:$0xf]
        %v705 = vld [vmem:[%s681 + $0x88] sm:$0xf]
        %v706 = vld [vmem:[%s681 + $0x90] sm:$0xf]
        %v707 = vld [vmem:[%s681 + $0x94] sm:$0xf]
        %v708 = vld [vmem:[%s681 + $0x9c] sm:$0xf]
        %v709 = vld [vmem:[%s681 + $0xa0] sm:$0xf]
        %v710 = vld [vmem:[%s681 + $0xa8] sm:$0xf]
        %v711 = vld [vmem:[%s681 + $0xac] sm:$0xf]
        %v712 = vld [vmem:[%s681 + $0xb4] sm:$0xf]
        %v713 = vld [vmem:[%s681 + $0xb8] sm:$0xf]
        %v714 = vld [vmem:[%s681 + $0x8] sm:$0x1]
        %v715 = vld [vmem:[%s681 + $0x14] sm:$0x1]
        %v716 = vld [vmem:[%s681 + $0x20] sm:$0x1]
        %v717 = vld [vmem:[%s681 + $0x2c] sm:$0x1]
        %v718 = vld [vmem:[%s681 + $0x38] sm:$0x1]
        %v719 = vld [vmem:[%s681 + $0x44] sm:$0x1]
        %v720 = vld [vmem:[%s681 + $0x50] sm:$0x1]
        %v721 = vld [vmem:[%s681 + $0x5c] sm:$0x1]
        %v722 = vld [vmem:[%s681 + $0x68] sm:$0x1]
        %v723 = vld [vmem:[%s681 + $0x74] sm:$0x1]
        %v724 = vld [vmem:[%s681 + $0x80] sm:$0x1]
        %v725 = vld [vmem:[%s681 + $0x8c] sm:$0x1]
        %v726 = vld [vmem:[%s681 + $0x98] sm:$0x1]
        %v727 = vld [vmem:[%s681 + $0xa4] sm:$0x1]
        %v728 = vld [vmem:[%s681 + $0xb0] sm:$0x1]
        %v729 = vld [vmem:[%s681 + $0xbc] sm:$0x1]
        %v730 = vld [vmem:[%s681] sm:$0xe]
        %v731 = vld [vmem:[%s681 + $0xc] sm:$0xe]
        %v732 = vld [vmem:[%s681 + $0x18] sm:$0xe]
        %v733 = vld [vmem:[%s681 + $0x24] sm:$0xe]
        %v734 = vld [vmem:[%s681 + $0x30] sm:$0xe]
        %v735 = vld [vmem:[%s681 + $0x3c] sm:$0xe]
        %v736 = vld [vmem:[%s681 + $0x48] sm:$0xe]
        %v737 = vld [vmem:[%s681 + $0x54] sm:$0xe]
        %v738 = vld [vmem:[%s681 + $0x60] sm:$0xe]
        %v739 = vld [vmem:[%s681 + $0x6c] sm:$0xe]
        %v740 = vld [vmem:[%s681 + $0x78] sm:$0xe]
        %v741 = vld [vmem:[%s681 + $0x84] sm:$0xe]
        %v742 = vld [vmem:[%s681 + $0x90] sm:$0xe]
        %v743 = vld [vmem:[%s681 + $0x9c] sm:$0xe]
        %v744 = vld [vmem:[%s681 + $0xa8] sm:$0xe]
        %v745 = vld [vmem:[%s681 + $0xb4] sm:$0xe]
        %v778 = vunpack.c.l.b16 %v552
        %v779 = vunpack.c.l.b16 %v553
        %v780 = vunpack.c.l.b16 %v554
        %v781 = vunpack.c.l.b16 %v555
        %v782 = vunpack.c.l.b16 %v556
        %v783 = vunpack.c.l.b16 %v557
        %v784 = vunpack.c.l.b16 %v558
        %v785 = vunpack.c.l.b16 %v559
        %v786 = vunpack.c.l.b16 %v560
        %v787 = vunpack.c.l.b16 %v561
        %v788 = vunpack.c.l.b16 %v562
        %v789 = vunpack.c.l.b16 %v563
        %v790 = vunpack.c.l.b16 %v564
        %v791 = vunpack.c.l.b16 %v565
        %v792 = vunpack.c.l.b16 %v566
        %v793 = vunpack.c.l.b16 %v567
        %v794 = vunpack.c.l.b16 %v568
        %v795 = vunpack.c.l.b16 %v569
        %v796 = vunpack.c.l.b16 %v570
        %v797 = vunpack.c.l.b16 %v571
        %v798 = vunpack.c.l.b16 %v572
        %v799 = vunpack.c.l.b16 %v573
        %v800 = vunpack.c.l.b16 %v574
        %v801 = vunpack.c.l.b16 %v575
        %v802 = vunpack.c.l.b16 %v576
        %v803 = vunpack.c.l.b16 %v577
        %v804 = vunpack.c.l.b16 %v578
        %v805 = vunpack.c.l.b16 %v579
        %v806 = vunpack.c.l.b16 %v580
        %v807 = vunpack.c.l.b16 %v581
        %v808 = vunpack.c.l.b16 %v582
        %v809 = vunpack.c.l.b16 %v583
        %v810 = vpack.c.b16 %v779, %v778
        %v811 = vpack.c.b16 %v781, %v780
        %v812 = vpack.c.b16 %v783, %v782
        %v813 = vpack.c.b16 %v785, %v784
        %v814 = vpack.c.b16 %v787, %v786
        %v815 = vpack.c.b16 %v789, %v788
        %v816 = vpack.c.b16 %v791, %v790
        %v817 = vpack.c.b16 %v793, %v792
        %v818 = vpack.c.b16 %v795, %v794
        %v819 = vpack.c.b16 %v797, %v796
        %v820 = vpack.c.b16 %v799, %v798
        %v821 = vpack.c.b16 %v801, %v800
        %v822 = vpack.c.b16 %v803, %v802
        %v823 = vpack.c.b16 %v805, %v804
        %v824 = vpack.c.b16 %v807, %v806
        %v825 = vpack.c.b16 %v809, %v808
        %v842 = vunpack.c.l.b16 %v584
        %v843 = vunpack.c.l.b16 %v585
        %v844 = vunpack.c.l.b16 %v586
        %v845 = vunpack.c.l.b16 %v587
        %v846 = vunpack.c.l.b16 %v588
        %v847 = vunpack.c.l.b16 %v589
        %v848 = vunpack.c.l.b16 %v590
        %v849 = vunpack.c.l.b16 %v591
        %v850 = vunpack.c.l.b16 %v592
        %v851 = vunpack.c.l.b16 %v593
        %v852 = vunpack.c.l.b16 %v594
        %v853 = vunpack.c.l.b16 %v595
        %v854 = vunpack.c.l.b16 %v596
        %v855 = vunpack.c.l.b16 %v597
        %v856 = vunpack.c.l.b16 %v598
        %v857 = vunpack.c.l.b16 %v599
        %v858 = vpack.c.b16 %v842, %v842
        %v859 = vpack.c.b16 %v843, %v843
        %v860 = vpack.c.b16 %v844, %v844
        %v861 = vpack.c.b16 %v845, %v845
        %v862 = vpack.c.b16 %v846, %v846
        %v863 = vpack.c.b16 %v847, %v847
        %v864 = vpack.c.b16 %v848, %v848
        %v865 = vpack.c.b16 %v849, %v849
        %v866 = vpack.c.b16 %v850, %v850
        %v867 = vpack.c.b16 %v851, %v851
        %v868 = vpack.c.b16 %v852, %v852
        %v869 = vpack.c.b16 %v853, %v853
        %v870 = vpack.c.b16 %v854, %v854
        %v871 = vpack.c.b16 %v855, %v855
        %v872 = vpack.c.b16 %v856, %v856
        %v873 = vpack.c.b16 %v857, %v857
        %vm874 = vsmask.f32 7424
        %v876 = vshrl.u32 %v810, 16
        %v878 = vshll.u32 %v810, 16
        %v880 = vrot.slane %v878, 1
        %v881 = vor.u32 %v876, %v880
        %v883 = vshll.u32 %v858, 16
        %v885 = vrot.slane %v883, 1
        %v886 = vsel %vm874, %v881, %v885
        %v888 = vshrl.u32 %v811, 16
        %v890 = vshll.u32 %v811, 16
        %v892 = vrot.slane %v890, 1
        %v893 = vor.u32 %v888, %v892
        %v895 = vshll.u32 %v859, 16
        %v897 = vrot.slane %v895, 1
        %v898 = vsel %vm874, %v893, %v897
        %v900 = vshrl.u32 %v812, 16
        %v902 = vshll.u32 %v812, 16
        %v904 = vrot.slane %v902, 1
        %v905 = vor.u32 %v900, %v904
        %v907 = vshll.u32 %v860, 16
        %v909 = vrot.slane %v907, 1
        %v910 = vsel %vm874, %v905, %v909
        %v912 = vshrl.u32 %v813, 16
        %v914 = vshll.u32 %v813, 16
        %v916 = vrot.slane %v914, 1
        %v917 = vor.u32 %v912, %v916
        %v919 = vshll.u32 %v861, 16
        %v921 = vrot.slane %v919, 1
        %v922 = vsel %vm874, %v917, %v921
        %v924 = vshrl.u32 %v814, 16
        %v926 = vshll.u32 %v814, 16
        %v928 = vrot.slane %v926, 1
        %v929 = vor.u32 %v924, %v928
        %v931 = vshll.u32 %v862, 16
        %v933 = vrot.slane %v931, 1
        %v934 = vsel %vm874, %v929, %v933
        %v936 = vshrl.u32 %v815, 16
        %v938 = vshll.u32 %v815, 16
        %v940 = vrot.slane %v938, 1
        %v941 = vor.u32 %v936, %v940
        %v943 = vshll.u32 %v863, 16
        %v945 = vrot.slane %v943, 1
        %v946 = vsel %vm874, %v941, %v945
        %v948 = vshrl.u32 %v816, 16
        %v950 = vshll.u32 %v816, 16
        %v952 = vrot.slane %v950, 1
        %v953 = vor.u32 %v948, %v952
        %v955 = vshll.u32 %v864, 16
        %v957 = vrot.slane %v955, 1
        %v958 = vsel %vm874, %v953, %v957
        %v960 = vshrl.u32 %v817, 16
        %v962 = vshll.u32 %v817, 16
        %v964 = vrot.slane %v962, 1
        %v965 = vor.u32 %v960, %v964
        %v967 = vshll.u32 %v865, 16
        %v969 = vrot.slane %v967, 1
        %v970 = vsel %vm874, %v965, %v969
        %v972 = vshrl.u32 %v818, 16
        %v974 = vshll.u32 %v818, 16
        %v976 = vrot.slane %v974, 1
        %v977 = vor.u32 %v972, %v976
        %v979 = vshll.u32 %v866, 16
        %v981 = vrot.slane %v979, 1
        %v982 = vsel %vm874, %v977, %v981
        %v984 = vshrl.u32 %v819, 16
        %v986 = vshll.u32 %v819, 16
        %v988 = vrot.slane %v986, 1
        %v989 = vor.u32 %v984, %v988
        %v991 = vshll.u32 %v867, 16
        %v993 = vrot.slane %v991, 1
        %v994 = vsel %vm874, %v989, %v993
        %v996 = vshrl.u32 %v820, 16
        %v998 = vshll.u32 %v820, 16
        %v1000 = vrot.slane %v998, 1
        %v1001 = vor.u32 %v996, %v1000
        %v1003 = vshll.u32 %v868, 16
        %v1005 = vrot.slane %v1003, 1
        %v1006 = vsel %vm874, %v1001, %v1005
        %v1008 = vshrl.u32 %v821, 16
        %v1010 = vshll.u32 %v821, 16
        %v1012 = vrot.slane %v1010, 1
        %v1013 = vor.u32 %v1008, %v1012
        %v1015 = vshll.u32 %v869, 16
        %v1017 = vrot.slane %v1015, 1
        %v1018 = vsel %vm874, %v1013, %v1017
        %v1020 = vshrl.u32 %v822, 16
        %v1022 = vshll.u32 %v822, 16
        %v1024 = vrot.slane %v1022, 1
        %v1025 = vor.u32 %v1020, %v1024
        %v1027 = vshll.u32 %v870, 16
        %v1029 = vrot.slane %v1027, 1
        %v1030 = vsel %vm874, %v1025, %v1029
        %v1032 = vshrl.u32 %v823, 16
        %v1034 = vshll.u32 %v823, 16
        %v1036 = vrot.slane %v1034, 1
        %v1037 = vor.u32 %v1032, %v1036
        %v1039 = vshll.u32 %v871, 16
        %v1041 = vrot.slane %v1039, 1
        %v1042 = vsel %vm874, %v1037, %v1041
        %v1044 = vshrl.u32 %v824, 16
        %v1046 = vshll.u32 %v824, 16
        %v1048 = vrot.slane %v1046, 1
        %v1049 = vor.u32 %v1044, %v1048
        %v1051 = vshll.u32 %v872, 16
        %v1053 = vrot.slane %v1051, 1
        %v1054 = vsel %vm874, %v1049, %v1053
        %v1056 = vshrl.u32 %v825, 16
        %v1058 = vshll.u32 %v825, 16
        %v1060 = vrot.slane %v1058, 1
        %v1061 = vor.u32 %v1056, %v1060
        %v1063 = vshll.u32 %v873, 16
        %v1065 = vrot.slane %v1063, 1
        %v1066 = vsel %vm874, %v1061, %v1065
        %1067 = vrot.lane.b32.xlu0 %v886, 8
        %v1068 = vpop.permute.xlu0 %1067
        %1069 = vrot.lane.b32.xlu0 %v898, 8
        %v1070 = vpop.permute.xlu0 %1069
        %1071 = vrot.lane.b32.xlu0 %v910, 8
        %v1072 = vpop.permute.xlu0 %1071
        %1073 = vrot.lane.b32.xlu0 %v922, 8
        %v1074 = vpop.permute.xlu0 %1073
        %1075 = vrot.lane.b32.xlu0 %v934, 8
        %v1076 = vpop.permute.xlu0 %1075
        %1077 = vrot.lane.b32.xlu0 %v946, 8
        %v1078 = vpop.permute.xlu0 %1077
        %1079 = vrot.lane.b32.xlu0 %v958, 8
        %v1080 = vpop.permute.xlu0 %1079
        %1081 = vrot.lane.b32.xlu0 %v970, 8
        %v1082 = vpop.permute.xlu0 %1081
        %1083 = vrot.lane.b32.xlu0 %v982, 8
        %v1084 = vpop.permute.xlu0 %1083
        %1085 = vrot.lane.b32.xlu0 %v994, 8
        %v1086 = vpop.permute.xlu0 %1085
        %1087 = vrot.lane.b32.xlu0 %v1006, 8
        %v1088 = vpop.permute.xlu0 %1087
        %1089 = vrot.lane.b32.xlu0 %v1018, 8
        %v1090 = vpop.permute.xlu0 %1089
        %1091 = vrot.lane.b32.xlu0 %v1030, 8
        %v1092 = vpop.permute.xlu0 %1091
        %1093 = vrot.lane.b32.xlu0 %v1042, 8
        %v1094 = vpop.permute.xlu0 %1093
        %1095 = vrot.lane.b32.xlu0 %v1054, 8
        %v1096 = vpop.permute.xlu0 %1095
        %1097 = vrot.lane.b32.xlu0 %v1066, 8
        %v1098 = vpop.permute.xlu0 %1097
        %v1115 = vunpack.c.l.b16 %v600
        %v1116 = vunpack.c.l.b16 %v601
        %v1117 = vunpack.c.l.b16 %v602
        %v1118 = vunpack.c.l.b16 %v603
        %v1119 = vunpack.c.l.b16 %v604
        %v1120 = vunpack.c.l.b16 %v605
        %v1121 = vunpack.c.l.b16 %v606
        %v1122 = vunpack.c.l.b16 %v607
        %v1123 = vunpack.c.l.b16 %v608
        %v1124 = vunpack.c.l.b16 %v609
        %v1125 = vunpack.c.l.b16 %v610
        %v1126 = vunpack.c.l.b16 %v611
        %v1127 = vunpack.c.l.b16 %v612
        %v1128 = vunpack.c.l.b16 %v613
        %v1129 = vunpack.c.l.b16 %v614
        %v1130 = vunpack.c.l.b16 %v615
        %v1131 = vpack.c.b16 %v779, %v1115
        %v1132 = vpack.c.b16 %v781, %v1116
        %v1133 = vpack.c.b16 %v783, %v1117
        %v1134 = vpack.c.b16 %v785, %v1118
        %v1135 = vpack.c.b16 %v787, %v1119
        %v1136 = vpack.c.b16 %v789, %v1120
        %v1137 = vpack.c.b16 %v791, %v1121
        %v1138 = vpack.c.b16 %v793, %v1122
        %v1139 = vpack.c.b16 %v795, %v1123
        %v1140 = vpack.c.b16 %v797, %v1124
        %v1141 = vpack.c.b16 %v799, %v1125
        %v1142 = vpack.c.b16 %v801, %v1126
        %v1143 = vpack.c.b16 %v803, %v1127
        %v1144 = vpack.c.b16 %v805, %v1128
        %v1145 = vpack.c.b16 %v807, %v1129
        %v1146 = vpack.c.b16 %v809, %v1130
        %vm1147 = vcmask 1046528
        %v1148 = vrot.slane %v1131, 1
        %v1149 = vrot.slane %v858, 1
        %v1150 = vsel %vm1147, %v1148, %v1149
        %v1151 = vrot.slane %v1132, 1
        %v1152 = vrot.slane %v859, 1
        %v1153 = vsel %vm1147, %v1151, %v1152
        %v1154 = vrot.slane %v1133, 1
        %v1155 = vrot.slane %v860, 1
        %v1156 = vsel %vm1147, %v1154, %v1155
        %v1157 = vrot.slane %v1134, 1
        %v1158 = vrot.slane %v861, 1
        %v1159 = vsel %vm1147, %v1157, %v1158
        %v1160 = vrot.slane %v1135, 1
        %v1161 = vrot.slane %v862, 1
        %v1162 = vsel %vm1147, %v1160, %v1161
        %v1163 = vrot.slane %v1136, 1
        %v1164 = vrot.slane %v863, 1
        %v1165 = vsel %vm1147, %v1163, %v1164
        %v1166 = vrot.slane %v1137, 1
        %v1167 = vrot.slane %v864, 1
        %v1168 = vsel %vm1147, %v1166, %v1167
        %v1169 = vrot.slane %v1138, 1
        %v1170 = vrot.slane %v865, 1
        %v1171 = vsel %vm1147, %v1169, %v1170
        %v1172 = vrot.slane %v1139, 1
        %v1173 = vrot.slane %v866, 1
        %v1174 = vsel %vm1147, %v1172, %v1173
        %v1175 = vrot.slane %v1140, 1
        %v1176 = vrot.slane %v867, 1
        %v1177 = vsel %vm1147, %v1175, %v1176
        %v1178 = vrot.slane %v1141, 1
        %v1179 = vrot.slane %v868, 1
        %v1180 = vsel %vm1147, %v1178, %v1179
        %v1181 = vrot.slane %v1142, 1
        %v1182 = vrot.slane %v869, 1
        %v1183 = vsel %vm1147, %v1181, %v1182
        %v1184 = vrot.slane %v1143, 1
        %v1185 = vrot.slane %v870, 1
        %v1186 = vsel %vm1147, %v1184, %v1185
        %v1187 = vrot.slane %v1144, 1
        %v1188 = vrot.slane %v871, 1
        %v1189 = vsel %vm1147, %v1187, %v1188
        %v1190 = vrot.slane %v1145, 1
        %v1191 = vrot.slane %v872, 1
        %v1192 = vsel %vm1147, %v1190, %v1191
        %v1193 = vrot.slane %v1146, 1
        %v1194 = vrot.slane %v873, 1
        %v1195 = vsel %vm1147, %v1193, %v1194
        %1196 = vrot.lane.b32.xlu0 %v1150, 16
        %v1197 = vpop.permute.xlu0 %1196
        %1198 = vrot.lane.b32.xlu0 %v1153, 16
        %v1199 = vpop.permute.xlu0 %1198
        %1200 = vrot.lane.b32.xlu0 %v1156, 16
        %v1201 = vpop.permute.xlu0 %1200
        %1202 = vrot.lane.b32.xlu0 %v1159, 16
        %v1203 = vpop.permute.xlu0 %1202
        %1204 = vrot.lane.b32.xlu0 %v1162, 16
        %v1205 = vpop.permute.xlu0 %1204
        %1206 = vrot.lane.b32.xlu0 %v1165, 16
        %v1207 = vpop.permute.xlu0 %1206
        %1208 = vrot.lane.b32.xlu0 %v1168, 16
        %v1209 = vpop.permute.xlu0 %1208
        %1210 = vrot.lane.b32.xlu0 %v1171, 16
        %v1211 = vpop.permute.xlu0 %1210
        %1212 = vrot.lane.b32.xlu0 %v1174, 16
        %v1213 = vpop.permute.xlu0 %1212
        %1214 = vrot.lane.b32.xlu0 %v1177, 16
        %v1215 = vpop.permute.xlu0 %1214
        %1216 = vrot.lane.b32.xlu0 %v1180, 16
        %v1217 = vpop.permute.xlu0 %1216
        %1218 = vrot.lane.b32.xlu0 %v1183, 16
        %v1219 = vpop.permute.xlu0 %1218
        %1220 = vrot.lane.b32.xlu0 %v1186, 16
        %v1221 = vpop.permute.xlu0 %1220
        %1222 = vrot.lane.b32.xlu0 %v1189, 16
        %v1223 = vpop.permute.xlu0 %1222
        %1224 = vrot.lane.b32.xlu0 %v1192, 16
        %v1225 = vpop.permute.xlu0 %1224
        %1226 = vrot.lane.b32.xlu0 %v1195, 16
        %v1227 = vpop.permute.xlu0 %1226
        %v1260 = vunpack.c.l.b16 %v617
        %v1261 = vunpack.c.l.b16 %v618
        %v1262 = vunpack.c.l.b16 %v619
        %v1263 = vunpack.c.l.b16 %v620
        %v1264 = vunpack.c.l.b16 %v621
        %v1265 = vunpack.c.l.b16 %v622
        %v1266 = vunpack.c.l.b16 %v623
        %v1267 = vunpack.c.l.b16 %v624
        %v1268 = vunpack.c.l.b16 %v625
        %v1269 = vunpack.c.l.b16 %v626
        %v1270 = vunpack.c.l.b16 %v627
        %v1271 = vunpack.c.l.b16 %v628
        %v1272 = vunpack.c.l.b16 %v629
        %v1273 = vunpack.c.l.b16 %v630
        %v1274 = vunpack.c.l.b16 %v631
        %v1275 = vunpack.c.l.b16 %v632
        %v1276 = vunpack.c.l.b16 %v633
        %v1277 = vunpack.c.l.b16 %v634
        %v1278 = vunpack.c.l.b16 %v635
        %v1279 = vunpack.c.l.b16 %v636
        %v1280 = vunpack.c.l.b16 %v637
        %v1281 = vunpack.c.l.b16 %v638
        %v1282 = vunpack.c.l.b16 %v639
        %v1283 = vunpack.c.l.b16 %v640
        %v1284 = vunpack.c.l.b16 %v641
        %v1285 = vunpack.c.l.b16 %v642
        %v1286 = vunpack.c.l.b16 %v643
        %v1287 = vunpack.c.l.b16 %v644
        %v1288 = vunpack.c.l.b16 %v645
        %v1289 = vunpack.c.l.b16 %v646
        %v1290 = vunpack.c.l.b16 %v647
        %v1291 = vunpack.c.l.b16 %v648
        %v1292 = vpack.c.b16 %v1261, %v1260
        %v1293 = vpack.c.b16 %v1263, %v1262
        %v1294 = vpack.c.b16 %v1265, %v1264
        %v1295 = vpack.c.b16 %v1267, %v1266
        %v1296 = vpack.c.b16 %v1269, %v1268
        %v1297 = vpack.c.b16 %v1271, %v1270
        %v1298 = vpack.c.b16 %v1273, %v1272
        %v1299 = vpack.c.b16 %v1275, %v1274
        %v1300 = vpack.c.b16 %v1277, %v1276
        %v1301 = vpack.c.b16 %v1279, %v1278
        %v1302 = vpack.c.b16 %v1281, %v1280
        %v1303 = vpack.c.b16 %v1283, %v1282
        %v1304 = vpack.c.b16 %v1285, %v1284
        %v1305 = vpack.c.b16 %v1287, %v1286
        %v1306 = vpack.c.b16 %v1289, %v1288
        %v1307 = vpack.c.b16 %v1291, %v1290
        %1308 = vrot.lane.b32.xlu0 %v1292, 24
        %v1309 = vpop.permute.xlu0 %1308
        %1310 = vrot.lane.b32.xlu0 %v1293, 24
        %v1311 = vpop.permute.xlu0 %1310
        %1312 = vrot.lane.b32.xlu0 %v1294, 24
        %v1313 = vpop.permute.xlu0 %1312
        %1314 = vrot.lane.b32.xlu0 %v1295, 24
        %v1315 = vpop.permute.xlu0 %1314
        %1316 = vrot.lane.b32.xlu0 %v1296, 24
        %v1317 = vpop.permute.xlu0 %1316
        %1318 = vrot.lane.b32.xlu0 %v1297, 24
        %v1319 = vpop.permute.xlu0 %1318
        %1320 = vrot.lane.b32.xlu0 %v1298, 24
        %v1321 = vpop.permute.xlu0 %1320
        %1322 = vrot.lane.b32.xlu0 %v1299, 24
        %v1323 = vpop.permute.xlu0 %1322
        %1324 = vrot.lane.b32.xlu0 %v1300, 24
        %v1325 = vpop.permute.xlu0 %1324
        %1326 = vrot.lane.b32.xlu0 %v1301, 24
        %v1327 = vpop.permute.xlu0 %1326
        %1328 = vrot.lane.b32.xlu0 %v1302, 24
        %v1329 = vpop.permute.xlu0 %1328
        %1330 = vrot.lane.b32.xlu0 %v1303, 24
        %v1331 = vpop.permute.xlu0 %1330
        %1332 = vrot.lane.b32.xlu0 %v1304, 24
        %v1333 = vpop.permute.xlu0 %1332
        %1334 = vrot.lane.b32.xlu0 %v1305, 24
        %v1335 = vpop.permute.xlu0 %1334
        %1336 = vrot.lane.b32.xlu0 %v1306, 24
        %v1337 = vpop.permute.xlu0 %1336
        %1338 = vrot.lane.b32.xlu0 %v1307, 24
        %v1339 = vpop.permute.xlu0 %1338
        %v1356 = vunpack.c.l.b16 %v649
        %v1357 = vunpack.c.l.b16 %v650
        %v1358 = vunpack.c.l.b16 %v651
        %v1359 = vunpack.c.l.b16 %v652
        %v1360 = vunpack.c.l.b16 %v653
        %v1361 = vunpack.c.l.b16 %v654
        %v1362 = vunpack.c.l.b16 %v655
        %v1363 = vunpack.c.l.b16 %v656
        %v1364 = vunpack.c.l.b16 %v657
        %v1365 = vunpack.c.l.b16 %v658
        %v1366 = vunpack.c.l.b16 %v659
        %v1367 = vunpack.c.l.b16 %v660
        %v1368 = vunpack.c.l.b16 %v661
        %v1369 = vunpack.c.l.b16 %v662
        %v1370 = vunpack.c.l.b16 %v663
        %v1371 = vunpack.c.l.b16 %v664
        %v1372 = vpack.c.b16 %v1356, %v1356
        %v1373 = vpack.c.b16 %v1357, %v1357
        %v1374 = vpack.c.b16 %v1358, %v1358
        %v1375 = vpack.c.b16 %v1359, %v1359
        %v1376 = vpack.c.b16 %v1360, %v1360
        %v1377 = vpack.c.b16 %v1361, %v1361
        %v1378 = vpack.c.b16 %v1362, %v1362
        %v1379 = vpack.c.b16 %v1363, %v1363
        %v1380 = vpack.c.b16 %v1364, %v1364
        %v1381 = vpack.c.b16 %v1365, %v1365
        %v1382 = vpack.c.b16 %v1366, %v1366
        %v1383 = vpack.c.b16 %v1367, %v1367
        %v1384 = vpack.c.b16 %v1368, %v1368
        %v1385 = vpack.c.b16 %v1369, %v1369
        %v1386 = vpack.c.b16 %v1370, %v1370
        %v1387 = vpack.c.b16 %v1371, %v1371
        %v1389 = vshrl.u32 %v1292, 16
        %v1391 = vshll.u32 %v1292, 16
        %v1393 = vrot.slane %v1391, 1
        %v1394 = vor.u32 %v1389, %v1393
        %v1396 = vshll.u32 %v1372, 16
        %v1398 = vrot.slane %v1396, 1
        %v1399 = vsel %vm874, %v1394, %v1398
        %v1401 = vshrl.u32 %v1293, 16
        %v1403 = vshll.u32 %v1293, 16
        %v1405 = vrot.slane %v1403, 1
        %v1406 = vor.u32 %v1401, %v1405
        %v1408 = vshll.u32 %v1373, 16
        %v1410 = vrot.slane %v1408, 1
        %v1411 = vsel %vm874, %v1406, %v1410
        %v1413 = vshrl.u32 %v1294, 16
        %v1415 = vshll.u32 %v1294, 16
        %v1417 = vrot.slane %v1415, 1
        %v1418 = vor.u32 %v1413, %v1417
        %v1420 = vshll.u32 %v1374, 16
        %v1422 = vrot.slane %v1420, 1
        %v1423 = vsel %vm874, %v1418, %v1422
        %v1425 = vshrl.u32 %v1295, 16
        %v1427 = vshll.u32 %v1295, 16
        %v1429 = vrot.slane %v1427, 1
        %v1430 = vor.u32 %v1425, %v1429
        %v1432 = vshll.u32 %v1375, 16
        %v1434 = vrot.slane %v1432, 1
        %v1435 = vsel %vm874, %v1430, %v1434
        %v1437 = vshrl.u32 %v1296, 16
        %v1439 = vshll.u32 %v1296, 16
        %v1441 = vrot.slane %v1439, 1
        %v1442 = vor.u32 %v1437, %v1441
        %v1444 = vshll.u32 %v1376, 16
        %v1446 = vrot.slane %v1444, 1
        %v1447 = vsel %vm874, %v1442, %v1446
        %v1449 = vshrl.u32 %v1297, 16
        %v1451 = vshll.u32 %v1297, 16
        %v1453 = vrot.slane %v1451, 1
        %v1454 = vor.u32 %v1449, %v1453
        %v1456 = vshll.u32 %v1377, 16
        %v1458 = vrot.slane %v1456, 1
        %v1459 = vsel %vm874, %v1454, %v1458
        %v1461 = vshrl.u32 %v1298, 16
        %v1463 = vshll.u32 %v1298, 16
        %v1465 = vrot.slane %v1463, 1
        %v1466 = vor.u32 %v1461, %v1465
        %v1468 = vshll.u32 %v1378, 16
        %v1470 = vrot.slane %v1468, 1
        %v1471 = vsel %vm874, %v1466, %v1470
        %v1473 = vshrl.u32 %v1299, 16
        %v1475 = vshll.u32 %v1299, 16
        %v1477 = vrot.slane %v1475, 1
        %v1478 = vor.u32 %v1473, %v1477
        %v1480 = vshll.u32 %v1379, 16
        %v1482 = vrot.slane %v1480, 1
        %v1483 = vsel %vm874, %v1478, %v1482
        %v1485 = vshrl.u32 %v1300, 16
        %v1487 = vshll.u32 %v1300, 16
        %v1489 = vrot.slane %v1487, 1
        %v1490 = vor.u32 %v1485, %v1489
        %v1492 = vshll.u32 %v1380, 16
        %v1494 = vrot.slane %v1492, 1
        %v1495 = vsel %vm874, %v1490, %v1494
        %v1497 = vshrl.u32 %v1301, 16
        %v1499 = vshll.u32 %v1301, 16
        %v1501 = vrot.slane %v1499, 1
        %v1502 = vor.u32 %v1497, %v1501
        %v1504 = vshll.u32 %v1381, 16
        %v1506 = vrot.slane %v1504, 1
        %v1507 = vsel %vm874, %v1502, %v1506
        %v1509 = vshrl.u32 %v1302, 16
        %v1511 = vshll.u32 %v1302, 16
        %v1513 = vrot.slane %v1511, 1
        %v1514 = vor.u32 %v1509, %v1513
        %v1516 = vshll.u32 %v1382, 16
        %v1518 = vrot.slane %v1516, 1
        %v1519 = vsel %vm874, %v1514, %v1518
        %v1521 = vshrl.u32 %v1303, 16
        %v1523 = vshll.u32 %v1303, 16
        %v1525 = vrot.slane %v1523, 1
        %v1526 = vor.u32 %v1521, %v1525
        %v1528 = vshll.u32 %v1383, 16
        %v1530 = vrot.slane %v1528, 1
        %v1531 = vsel %vm874, %v1526, %v1530
        %v1533 = vshrl.u32 %v1304, 16
        %v1535 = vshll.u32 %v1304, 16
        %v1537 = vrot.slane %v1535, 1
        %v1538 = vor.u32 %v1533, %v1537
        %v1540 = vshll.u32 %v1384, 16
        %v1542 = vrot.slane %v1540, 1
        %v1543 = vsel %vm874, %v1538, %v1542
        %v1545 = vshrl.u32 %v1305, 16
        %v1547 = vshll.u32 %v1305, 16
        %v1549 = vrot.slane %v1547, 1
        %v1550 = vor.u32 %v1545, %v1549
        %v1552 = vshll.u32 %v1385, 16
        %v1554 = vrot.slane %v1552, 1
        %v1555 = vsel %vm874, %v1550, %v1554
        %v1557 = vshrl.u32 %v1306, 16
        %v1559 = vshll.u32 %v1306, 16
        %v1561 = vrot.slane %v1559, 1
        %v1562 = vor.u32 %v1557, %v1561
        %v1564 = vshll.u32 %v1386, 16
        %v1566 = vrot.slane %v1564, 1
        %v1567 = vsel %vm874, %v1562, %v1566
        %v1569 = vshrl.u32 %v1307, 16
        %v1571 = vshll.u32 %v1307, 16
        %v1573 = vrot.slane %v1571, 1
        %v1574 = vor.u32 %v1569, %v1573
        %v1576 = vshll.u32 %v1387, 16
        %v1578 = vrot.slane %v1576, 1
        %v1579 = vsel %vm874, %v1574, %v1578
        %1580 = vrot.lane.b32.xlu0 %v1399, 32
        %v1581 = vpop.permute.xlu0 %1580
        %1582 = vrot.lane.b32.xlu0 %v1411, 32
        %v1583 = vpop.permute.xlu0 %1582
        %1584 = vrot.lane.b32.xlu0 %v1423, 32
        %v1585 = vpop.permute.xlu0 %1584
        %1586 = vrot.lane.b32.xlu0 %v1435, 32
        %v1587 = vpop.permute.xlu0 %1586
        %1588 = vrot.lane.b32.xlu0 %v1447, 32
        %v1589 = vpop.permute.xlu0 %1588
        %1590 = vrot.lane.b32.xlu0 %v1459, 32
        %v1591 = vpop.permute.xlu0 %1590
        %1592 = vrot.lane.b32.xlu0 %v1471, 32
        %v1593 = vpop.permute.xlu0 %1592
        %1594 = vrot.lane.b32.xlu0 %v1483, 32
        %v1595 = vpop.permute.xlu0 %1594
        %1596 = vrot.lane.b32.xlu0 %v1495, 32
        %v1597 = vpop.permute.xlu0 %1596
        %1598 = vrot.lane.b32.xlu0 %v1507, 32
        %v1599 = vpop.permute.xlu0 %1598
        %1600 = vrot.lane.b32.xlu0 %v1519, 32
        %v1601 = vpop.permute.xlu0 %1600
        %1602 = vrot.lane.b32.xlu0 %v1531, 32
        %v1603 = vpop.permute.xlu0 %1602
        %1604 = vrot.lane.b32.xlu0 %v1543, 32
        %v1605 = vpop.permute.xlu0 %1604
        %1606 = vrot.lane.b32.xlu0 %v1555, 32
        %v1607 = vpop.permute.xlu0 %1606
        %1608 = vrot.lane.b32.xlu0 %v1567, 32
        %v1609 = vpop.permute.xlu0 %1608
        %1610 = vrot.lane.b32.xlu0 %v1579, 32
        %v1611 = vpop.permute.xlu0 %1610
        %v1628 = vunpack.c.l.b16 %v665
        %v1629 = vunpack.c.l.b16 %v666
        %v1630 = vunpack.c.l.b16 %v667
        %v1631 = vunpack.c.l.b16 %v668
        %v1632 = vunpack.c.l.b16 %v669
        %v1633 = vunpack.c.l.b16 %v670
        %v1634 = vunpack.c.l.b16 %v671
        %v1635 = vunpack.c.l.b16 %v672
        %v1636 = vunpack.c.l.b16 %v673
        %v1637 = vunpack.c.l.b16 %v674
        %v1638 = vunpack.c.l.b16 %v675
        %v1639 = vunpack.c.l.b16 %v676
        %v1640 = vunpack.c.l.b16 %v677
        %v1641 = vunpack.c.l.b16 %v678
        %v1642 = vunpack.c.l.b16 %v679
        %v1643 = vunpack.c.l.b16 %v680
        %v1644 = vpack.c.b16 %v1261, %v1628
        %v1645 = vpack.c.b16 %v1263, %v1629
        %v1646 = vpack.c.b16 %v1265, %v1630
        %v1647 = vpack.c.b16 %v1267, %v1631
        %v1648 = vpack.c.b16 %v1269, %v1632
        %v1649 = vpack.c.b16 %v1271, %v1633
        %v1650 = vpack.c.b16 %v1273, %v1634
        %v1651 = vpack.c.b16 %v1275, %v1635
        %v1652 = vpack.c.b16 %v1277, %v1636
        %v1653 = vpack.c.b16 %v1279, %v1637
        %v1654 = vpack.c.b16 %v1281, %v1638
        %v1655 = vpack.c.b16 %v1283, %v1639
        %v1656 = vpack.c.b16 %v1285, %v1640
        %v1657 = vpack.c.b16 %v1287, %v1641
        %v1658 = vpack.c.b16 %v1289, %v1642
        %v1659 = vpack.c.b16 %v1291, %v1643
        %v1660 = vrot.slane %v1644, 1
        %v1661 = vrot.slane %v1372, 1
        %v1662 = vsel %vm1147, %v1660, %v1661
        %v1663 = vrot.slane %v1645, 1
        %v1664 = vrot.slane %v1373, 1
        %v1665 = vsel %vm1147, %v1663, %v1664
        %v1666 = vrot.slane %v1646, 1
        %v1667 = vrot.slane %v1374, 1
        %v1668 = vsel %vm1147, %v1666, %v1667
        %v1669 = vrot.slane %v1647, 1
        %v1670 = vrot.slane %v1375, 1
        %v1671 = vsel %vm1147, %v1669, %v1670
        %v1672 = vrot.slane %v1648, 1
        %v1673 = vrot.slane %v1376, 1
        %v1674 = vsel %vm1147, %v1672, %v1673
        %v1675 = vrot.slane %v1649, 1
        %v1676 = vrot.slane %v1377, 1
        %v1677 = vsel %vm1147, %v1675, %v1676
        %v1678 = vrot.slane %v1650, 1
        %v1679 = vrot.slane %v1378, 1
        %v1680 = vsel %vm1147, %v1678, %v1679
        %v1681 = vrot.slane %v1651, 1
        %v1682 = vrot.slane %v1379, 1
        %v1683 = vsel %vm1147, %v1681, %v1682
        %v1684 = vrot.slane %v1652, 1
        %v1685 = vrot.slane %v1380, 1
        %v1686 = vsel %vm1147, %v1684, %v1685
        %v1687 = vrot.slane %v1653, 1
        %v1688 = vrot.slane %v1381, 1
        %v1689 = vsel %vm1147, %v1687, %v1688
        %v1690 = vrot.slane %v1654, 1
        %v1691 = vrot.slane %v1382, 1
        %v1692 = vsel %vm1147, %v1690, %v1691
        %v1693 = vrot.slane %v1655, 1
        %v1694 = vrot.slane %v1383, 1
        %v1695 = vsel %vm1147, %v1693, %v1694
        %v1696 = vrot.slane %v1656, 1
        %v1697 = vrot.slane %v1384, 1
        %v1698 = vsel %vm1147, %v1696, %v1697
        %v1699 = vrot.slane %v1657, 1
        %v1700 = vrot.slane %v1385, 1
        %v1701 = vsel %vm1147, %v1699, %v1700
        %v1702 = vrot.slane %v1658, 1
        %v1703 = vrot.slane %v1386, 1
        %v1704 = vsel %vm1147, %v1702, %v1703
        %v1705 = vrot.slane %v1659, 1
        %v1706 = vrot.slane %v1387, 1
        %v1707 = vsel %vm1147, %v1705, %v1706
        %1708 = vrot.lane.b32.xlu0 %v1662, 40
        %v1709 = vpop.permute.xlu0 %1708
        %1710 = vrot.lane.b32.xlu0 %v1665, 40
        %v1711 = vpop.permute.xlu0 %1710
        %1712 = vrot.lane.b32.xlu0 %v1668, 40
        %v1713 = vpop.permute.xlu0 %1712
        %1714 = vrot.lane.b32.xlu0 %v1671, 40
        %v1715 = vpop.permute.xlu0 %1714
        %1716 = vrot.lane.b32.xlu0 %v1674, 40
        %v1717 = vpop.permute.xlu0 %1716
        %1718 = vrot.lane.b32.xlu0 %v1677, 40
        %v1719 = vpop.permute.xlu0 %1718
        %1720 = vrot.lane.b32.xlu0 %v1680, 40
        %v1721 = vpop.permute.xlu0 %1720
        %1722 = vrot.lane.b32.xlu0 %v1683, 40
        %v1723 = vpop.permute.xlu0 %1722
        %1724 = vrot.lane.b32.xlu0 %v1686, 40
        %v1725 = vpop.permute.xlu0 %1724
        %1726 = vrot.lane.b32.xlu0 %v1689, 40
        %v1727 = vpop.permute.xlu0 %1726
        %1728 = vrot.lane.b32.xlu0 %v1692, 40
        %v1729 = vpop.permute.xlu0 %1728
        %1730 = vrot.lane.b32.xlu0 %v1695, 40
        %v1731 = vpop.permute.xlu0 %1730
        %1732 = vrot.lane.b32.xlu0 %v1698, 40
        %v1733 = vpop.permute.xlu0 %1732
        %1734 = vrot.lane.b32.xlu0 %v1701, 40
        %v1735 = vpop.permute.xlu0 %1734
        %1736 = vrot.lane.b32.xlu0 %v1704, 40
        %v1737 = vpop.permute.xlu0 %1736
        %1738 = vrot.lane.b32.xlu0 %v1707, 40
        %v1739 = vpop.permute.xlu0 %1738
        %v1772 = vunpack.c.l.b16 %v682
        %v1773 = vunpack.c.l.b16 %v683
        %v1774 = vunpack.c.l.b16 %v684
        %v1775 = vunpack.c.l.b16 %v685
        %v1776 = vunpack.c.l.b16 %v686
        %v1777 = vunpack.c.l.b16 %v687
        %v1778 = vunpack.c.l.b16 %v688
        %v1779 = vunpack.c.l.b16 %v689
        %v1780 = vunpack.c.l.b16 %v690
        %v1781 = vunpack.c.l.b16 %v691
        %v1782 = vunpack.c.l.b16 %v692
        %v1783 = vunpack.c.l.b16 %v693
        %v1784 = vunpack.c.l.b16 %v694
        %v1785 = vunpack.c.l.b16 %v695
        %v1786 = vunpack.c.l.b16 %v696
        %v1787 = vunpack.c.l.b16 %v697
        %v1788 = vunpack.c.l.b16 %v698
        %v1789 = vunpack.c.l.b16 %v699
        %v1790 = vunpack.c.l.b16 %v700
        %v1791 = vunpack.c.l.b16 %v701
        %v1792 = vunpack.c.l.b16 %v702
        %v1793 = vunpack.c.l.b16 %v703
        %v1794 = vunpack.c.l.b16 %v704
        %v1795 = vunpack.c.l.b16 %v705
        %v1796 = vunpack.c.l.b16 %v706
        %v1797 = vunpack.c.l.b16 %v707
        %v1798 = vunpack.c.l.b16 %v708
        %v1799 = vunpack.c.l.b16 %v709
        %v1800 = vunpack.c.l.b16 %v710
        %v1801 = vunpack.c.l.b16 %v711
        %v1802 = vunpack.c.l.b16 %v712
        %v1803 = vunpack.c.l.b16 %v713
        %v1804 = vpack.c.b16 %v1773, %v1772
        %v1805 = vpack.c.b16 %v1775, %v1774
        %v1806 = vpack.c.b16 %v1777, %v1776
        %v1807 = vpack.c.b16 %v1779, %v1778
        %v1808 = vpack.c.b16 %v1781, %v1780
        %v1809 = vpack.c.b16 %v1783, %v1782
        %v1810 = vpack.c.b16 %v1785, %v1784
        %v1811 = vpack.c.b16 %v1787, %v1786
        %v1812 = vpack.c.b16 %v1789, %v1788
        %v1813 = vpack.c.b16 %v1791, %v1790
        %v1814 = vpack.c.b16 %v1793, %v1792
        %v1815 = vpack.c.b16 %v1795, %v1794
        %v1816 = vpack.c.b16 %v1797, %v1796
        %v1817 = vpack.c.b16 %v1799, %v1798
        %v1818 = vpack.c.b16 %v1801, %v1800
        %v1819 = vpack.c.b16 %v1803, %v1802
        %1820 = vrot.lane.b32.xlu0 %v1804, 48
        %v1821 = vpop.permute.xlu0 %1820
        %1822 = vrot.lane.b32.xlu0 %v1805, 48
        %v1823 = vpop.permute.xlu0 %1822
        %1824 = vrot.lane.b32.xlu0 %v1806, 48
        %v1825 = vpop.permute.xlu0 %1824
        %1826 = vrot.lane.b32.xlu0 %v1807, 48
        %v1827 = vpop.permute.xlu0 %1826
        %1828 = vrot.lane.b32.xlu0 %v1808, 48
        %v1829 = vpop.permute.xlu0 %1828
        %1830 = vrot.lane.b32.xlu0 %v1809, 48
        %v1831 = vpop.permute.xlu0 %1830
        %1832 = vrot.lane.b32.xlu0 %v1810, 48
        %v1833 = vpop.permute.xlu0 %1832
        %1834 = vrot.lane.b32.xlu0 %v1811, 48
        %v1835 = vpop.permute.xlu0 %1834
        %1836 = vrot.lane.b32.xlu0 %v1812, 48
        %v1837 = vpop.permute.xlu0 %1836
        %1838 = vrot.lane.b32.xlu0 %v1813, 48
        %v1839 = vpop.permute.xlu0 %1838
        %1840 = vrot.lane.b32.xlu0 %v1814, 48
        %v1841 = vpop.permute.xlu0 %1840
        %1842 = vrot.lane.b32.xlu0 %v1815, 48
        %v1843 = vpop.permute.xlu0 %1842
        %1844 = vrot.lane.b32.xlu0 %v1816, 48
        %v1845 = vpop.permute.xlu0 %1844
        %1846 = vrot.lane.b32.xlu0 %v1817, 48
        %v1847 = vpop.permute.xlu0 %1846
        %1848 = vrot.lane.b32.xlu0 %v1818, 48
        %v1849 = vpop.permute.xlu0 %1848
        %1850 = vrot.lane.b32.xlu0 %v1819, 48
        %v1851 = vpop.permute.xlu0 %1850
        %v1868 = vunpack.c.l.b16 %v714
        %v1869 = vunpack.c.l.b16 %v715
        %v1870 = vunpack.c.l.b16 %v716
        %v1871 = vunpack.c.l.b16 %v717
        %v1872 = vunpack.c.l.b16 %v718
        %v1873 = vunpack.c.l.b16 %v719
        %v1874 = vunpack.c.l.b16 %v720
        %v1875 = vunpack.c.l.b16 %v721
        %v1876 = vunpack.c.l.b16 %v722
        %v1877 = vunpack.c.l.b16 %v723
        %v1878 = vunpack.c.l.b16 %v724
        %v1879 = vunpack.c.l.b16 %v725
        %v1880 = vunpack.c.l.b16 %v726
        %v1881 = vunpack.c.l.b16 %v727
        %v1882 = vunpack.c.l.b16 %v728
        %v1883 = vunpack.c.l.b16 %v729
        %v1884 = vpack.c.b16 %v1868, %v1868
        %v1885 = vpack.c.b16 %v1869, %v1869
        %v1886 = vpack.c.b16 %v1870, %v1870
        %v1887 = vpack.c.b16 %v1871, %v1871
        %v1888 = vpack.c.b16 %v1872, %v1872
        %v1889 = vpack.c.b16 %v1873, %v1873
        %v1890 = vpack.c.b16 %v1874, %v1874
        %v1891 = vpack.c.b16 %v1875, %v1875
        %v1892 = vpack.c.b16 %v1876, %v1876
        %v1893 = vpack.c.b16 %v1877, %v1877
        %v1894 = vpack.c.b16 %v1878, %v1878
        %v1895 = vpack.c.b16 %v1879, %v1879
        %v1896 = vpack.c.b16 %v1880, %v1880
        %v1897 = vpack.c.b16 %v1881, %v1881
        %v1898 = vpack.c.b16 %v1882, %v1882
        %v1899 = vpack.c.b16 %v1883, %v1883
        %v1901 = vshrl.u32 %v1804, 16
        %v1903 = vshll.u32 %v1804, 16
        %v1905 = vrot.slane %v1903, 1
        %v1906 = vor.u32 %v1901, %v1905
        %v1908 = vshll.u32 %v1884, 16
        %v1910 = vrot.slane %v1908, 1
        %v1911 = vsel %vm874, %v1906, %v1910
        %v1913 = vshrl.u32 %v1805, 16
        %v1915 = vshll.u32 %v1805, 16
        %v1917 = vrot.slane %v1915, 1
        %v1918 = vor.u32 %v1913, %v1917
        %v1920 = vshll.u32 %v1885, 16
        %v1922 = vrot.slane %v1920, 1
        %v1923 = vsel %vm874, %v1918, %v1922
        %v1925 = vshrl.u32 %v1806, 16
        %v1927 = vshll.u32 %v1806, 16
        %v1929 = vrot.slane %v1927, 1
        %v1930 = vor.u32 %v1925, %v1929
        %v1932 = vshll.u32 %v1886, 16
        %v1934 = vrot.slane %v1932, 1
        %v1935 = vsel %vm874, %v1930, %v1934
        %v1937 = vshrl.u32 %v1807, 16
        %v1939 = vshll.u32 %v1807, 16
        %v1941 = vrot.slane %v1939, 1
        %v1942 = vor.u32 %v1937, %v1941
        %v1944 = vshll.u32 %v1887, 16
        %v1946 = vrot.slane %v1944, 1
        %v1947 = vsel %vm874, %v1942, %v1946
        %v1949 = vshrl.u32 %v1808, 16
        %v1951 = vshll.u32 %v1808, 16
        %v1953 = vrot.slane %v1951, 1
        %v1954 = vor.u32 %v1949, %v1953
        %v1956 = vshll.u32 %v1888, 16
        %v1958 = vrot.slane %v1956, 1
        %v1959 = vsel %vm874, %v1954, %v1958
        %v1961 = vshrl.u32 %v1809, 16
        %v1963 = vshll.u32 %v1809, 16
        %v1965 = vrot.slane %v1963, 1
        %v1966 = vor.u32 %v1961, %v1965
        %v1968 = vshll.u32 %v1889, 16
        %v1970 = vrot.slane %v1968, 1
        %v1971 = vsel %vm874, %v1966, %v1970
        %v1973 = vshrl.u32 %v1810, 16
        %v1975 = vshll.u32 %v1810, 16
        %v1977 = vrot.slane %v1975, 1
        %v1978 = vor.u32 %v1973, %v1977
        %v1980 = vshll.u32 %v1890, 16
        %v1982 = vrot.slane %v1980, 1
        %v1983 = vsel %vm874, %v1978, %v1982
        %v1985 = vshrl.u32 %v1811, 16
        %v1987 = vshll.u32 %v1811, 16
        %v1989 = vrot.slane %v1987, 1
        %v1990 = vor.u32 %v1985, %v1989
        %v1992 = vshll.u32 %v1891, 16
        %v1994 = vrot.slane %v1992, 1
        %v1995 = vsel %vm874, %v1990, %v1994
        %v1997 = vshrl.u32 %v1812, 16
        %v1999 = vshll.u32 %v1812, 16
        %v2001 = vrot.slane %v1999, 1
        %v2002 = vor.u32 %v1997, %v2001
        %v2004 = vshll.u32 %v1892, 16
        %v2006 = vrot.slane %v2004, 1
        %v2007 = vsel %vm874, %v2002, %v2006
        %v2009 = vshrl.u32 %v1813, 16
        %v2011 = vshll.u32 %v1813, 16
        %v2013 = vrot.slane %v2011, 1
        %v2014 = vor.u32 %v2009, %v2013
        %v2016 = vshll.u32 %v1893, 16
        %v2018 = vrot.slane %v2016, 1
        %v2019 = vsel %vm874, %v2014, %v2018
        %v2021 = vshrl.u32 %v1814, 16
        %v2023 = vshll.u32 %v1814, 16
        %v2025 = vrot.slane %v2023, 1
        %v2026 = vor.u32 %v2021, %v2025
        %v2028 = vshll.u32 %v1894, 16
        %v2030 = vrot.slane %v2028, 1
        %v2031 = vsel %vm874, %v2026, %v2030
        %v2033 = vshrl.u32 %v1815, 16
        %v2035 = vshll.u32 %v1815, 16
        %v2037 = vrot.slane %v2035, 1
        %v2038 = vor.u32 %v2033, %v2037
        %v2040 = vshll.u32 %v1895, 16
        %v2042 = vrot.slane %v2040, 1
        %v2043 = vsel %vm874, %v2038, %v2042
        %v2045 = vshrl.u32 %v1816, 16
        %v2047 = vshll.u32 %v1816, 16
        %v2049 = vrot.slane %v2047, 1
        %v2050 = vor.u32 %v2045, %v2049
        %v2052 = vshll.u32 %v1896, 16
        %v2054 = vrot.slane %v2052, 1
        %v2055 = vsel %vm874, %v2050, %v2054
        %v2057 = vshrl.u32 %v1817, 16
        %v2059 = vshll.u32 %v1817, 16
        %v2061 = vrot.slane %v2059, 1
        %v2062 = vor.u32 %v2057, %v2061
        %v2064 = vshll.u32 %v1897, 16
        %v2066 = vrot.slane %v2064, 1
        %v2067 = vsel %vm874, %v2062, %v2066
        %v2069 = vshrl.u32 %v1818, 16
        %v2071 = vshll.u32 %v1818, 16
        %v2073 = vrot.slane %v2071, 1
        %v2074 = vor.u32 %v2069, %v2073
        %v2076 = vshll.u32 %v1898, 16
        %v2078 = vrot.slane %v2076, 1
        %v2079 = vsel %vm874, %v2074, %v2078
        %v2081 = vshrl.u32 %v1819, 16
        %v2083 = vshll.u32 %v1819, 16
        %v2085 = vrot.slane %v2083, 1
        %v2086 = vor.u32 %v2081, %v2085
        %v2088 = vshll.u32 %v1899, 16
        %v2090 = vrot.slane %v2088, 1
        %v2091 = vsel %vm874, %v2086, %v2090
        %2092 = vrot.lane.b32.xlu0 %v1911, 56
        %v2093 = vpop.permute.xlu0 %2092
        %2094 = vrot.lane.b32.xlu0 %v1923, 56
        %v2095 = vpop.permute.xlu0 %2094
        %2096 = vrot.lane.b32.xlu0 %v1935, 56
        %v2097 = vpop.permute.xlu0 %2096
        %2098 = vrot.lane.b32.xlu0 %v1947, 56
        %v2099 = vpop.permute.xlu0 %2098
        %2100 = vrot.lane.b32.xlu0 %v1959, 56
        %v2101 = vpop.permute.xlu0 %2100
        %2102 = vrot.lane.b32.xlu0 %v1971, 56
        %v2103 = vpop.permute.xlu0 %2102
        %2104 = vrot.lane.b32.xlu0 %v1983, 56
        %v2105 = vpop.permute.xlu0 %2104
        %2106 = vrot.lane.b32.xlu0 %v1995, 56
        %v2107 = vpop.permute.xlu0 %2106
        %2108 = vrot.lane.b32.xlu0 %v2007, 56
        %v2109 = vpop.permute.xlu0 %2108
        %2110 = vrot.lane.b32.xlu0 %v2019, 56
        %v2111 = vpop.permute.xlu0 %2110
        %2112 = vrot.lane.b32.xlu0 %v2031, 56
        %v2113 = vpop.permute.xlu0 %2112
        %2114 = vrot.lane.b32.xlu0 %v2043, 56
        %v2115 = vpop.permute.xlu0 %2114
        %2116 = vrot.lane.b32.xlu0 %v2055, 56
        %v2117 = vpop.permute.xlu0 %2116
        %2118 = vrot.lane.b32.xlu0 %v2067, 56
        %v2119 = vpop.permute.xlu0 %2118
        %2120 = vrot.lane.b32.xlu0 %v2079, 56
        %v2121 = vpop.permute.xlu0 %2120
        %2122 = vrot.lane.b32.xlu0 %v2091, 56
        %v2123 = vpop.permute.xlu0 %2122
        %v2140 = vunpack.c.l.b16 %v730
        %v2141 = vunpack.c.l.b16 %v731
        %v2142 = vunpack.c.l.b16 %v732
        %v2143 = vunpack.c.l.b16 %v733
        %v2144 = vunpack.c.l.b16 %v734
        %v2145 = vunpack.c.l.b16 %v735
        %v2146 = vunpack.c.l.b16 %v736
        %v2147 = vunpack.c.l.b16 %v737
        %v2148 = vunpack.c.l.b16 %v738
        %v2149 = vunpack.c.l.b16 %v739
        %v2150 = vunpack.c.l.b16 %v740
        %v2151 = vunpack.c.l.b16 %v741
        %v2152 = vunpack.c.l.b16 %v742
        %v2153 = vunpack.c.l.b16 %v743
        %v2154 = vunpack.c.l.b16 %v744
        %v2155 = vunpack.c.l.b16 %v745
        %v2156 = vpack.c.b16 %v1773, %v2140
        %v2157 = vpack.c.b16 %v1775, %v2141
        %v2158 = vpack.c.b16 %v1777, %v2142
        %v2159 = vpack.c.b16 %v1779, %v2143
        %v2160 = vpack.c.b16 %v1781, %v2144
        %v2161 = vpack.c.b16 %v1783, %v2145
        %v2162 = vpack.c.b16 %v1785, %v2146
        %v2163 = vpack.c.b16 %v1787, %v2147
        %v2164 = vpack.c.b16 %v1789, %v2148
        %v2165 = vpack.c.b16 %v1791, %v2149
        %v2166 = vpack.c.b16 %v1793, %v2150
        %v2167 = vpack.c.b16 %v1795, %v2151
        %v2168 = vpack.c.b16 %v1797, %v2152
        %v2169 = vpack.c.b16 %v1799, %v2153
        %v2170 = vpack.c.b16 %v1801, %v2154
        %v2171 = vpack.c.b16 %v1803, %v2155
        %v2172 = vrot.slane %v2156, 1
        %v2173 = vrot.slane %v1884, 1
        %v2174 = vsel %vm1147, %v2172, %v2173
        %v2175 = vrot.slane %v2157, 1
        %v2176 = vrot.slane %v1885, 1
        %v2177 = vsel %vm1147, %v2175, %v2176
        %v2178 = vrot.slane %v2158, 1
        %v2179 = vrot.slane %v1886, 1
        %v2180 = vsel %vm1147, %v2178, %v2179
        %v2181 = vrot.slane %v2159, 1
        %v2182 = vrot.slane %v1887, 1
        %v2183 = vsel %vm1147, %v2181, %v2182
        %v2184 = vrot.slane %v2160, 1
        %v2185 = vrot.slane %v1888, 1
        %v2186 = vsel %vm1147, %v2184, %v2185
        %v2187 = vrot.slane %v2161, 1
        %v2188 = vrot.slane %v1889, 1
        %v2189 = vsel %vm1147, %v2187, %v2188
        %v2190 = vrot.slane %v2162, 1
        %v2191 = vrot.slane %v1890, 1
        %v2192 = vsel %vm1147, %v2190, %v2191
        %v2193 = vrot.slane %v2163, 1
        %v2194 = vrot.slane %v1891, 1
        %v2195 = vsel %vm1147, %v2193, %v2194
        %v2196 = vrot.slane %v2164, 1
        %v2197 = vrot.slane %v1892, 1
        %v2198 = vsel %vm1147, %v2196, %v2197
        %v2199 = vrot.slane %v2165, 1
        %v2200 = vrot.slane %v1893, 1
        %v2201 = vsel %vm1147, %v2199, %v2200
        %v2202 = vrot.slane %v2166, 1
        %v2203 = vrot.slane %v1894, 1
        %v2204 = vsel %vm1147, %v2202, %v2203
        %v2205 = vrot.slane %v2167, 1
        %v2206 = vrot.slane %v1895, 1
        %v2207 = vsel %vm1147, %v2205, %v2206
        %v2208 = vrot.slane %v2168, 1
        %v2209 = vrot.slane %v1896, 1
        %v2210 = vsel %vm1147, %v2208, %v2209
        %v2211 = vrot.slane %v2169, 1
        %v2212 = vrot.slane %v1897, 1
        %v2213 = vsel %vm1147, %v2211, %v2212
        %v2214 = vrot.slane %v2170, 1
        %v2215 = vrot.slane %v1898, 1
        %v2216 = vsel %vm1147, %v2214, %v2215
        %v2217 = vrot.slane %v2171, 1
        %v2218 = vrot.slane %v1899, 1
        %v2219 = vsel %vm1147, %v2217, %v2218
        %2220 = vrot.lane.b32.xlu0 %v2174, 64
        %v2221 = vpop.permute.xlu0 %2220
        %2222 = vrot.lane.b32.xlu0 %v2177, 64
        %v2223 = vpop.permute.xlu0 %2222
        %2224 = vrot.lane.b32.xlu0 %v2180, 64
        %v2225 = vpop.permute.xlu0 %2224
        %2226 = vrot.lane.b32.xlu0 %v2183, 64
        %v2227 = vpop.permute.xlu0 %2226
        %2228 = vrot.lane.b32.xlu0 %v2186, 64
        %v2229 = vpop.permute.xlu0 %2228
        %2230 = vrot.lane.b32.xlu0 %v2189, 64
        %v2231 = vpop.permute.xlu0 %2230
        %2232 = vrot.lane.b32.xlu0 %v2192, 64
        %v2233 = vpop.permute.xlu0 %2232
        %2234 = vrot.lane.b32.xlu0 %v2195, 64
        %v2235 = vpop.permute.xlu0 %2234
        %2236 = vrot.lane.b32.xlu0 %v2198, 64
        %v2237 = vpop.permute.xlu0 %2236
        %2238 = vrot.lane.b32.xlu0 %v2201, 64
        %v2239 = vpop.permute.xlu0 %2238
        %2240 = vrot.lane.b32.xlu0 %v2204, 64
        %v2241 = vpop.permute.xlu0 %2240
        %2242 = vrot.lane.b32.xlu0 %v2207, 64
        %v2243 = vpop.permute.xlu0 %2242
        %2244 = vrot.lane.b32.xlu0 %v2210, 64
        %v2245 = vpop.permute.xlu0 %2244
        %2246 = vrot.lane.b32.xlu0 %v2213, 64
        %v2247 = vpop.permute.xlu0 %2246
        %2248 = vrot.lane.b32.xlu0 %v2216, 64
        %v2249 = vpop.permute.xlu0 %2248
        %2250 = vrot.lane.b32.xlu0 %v2219, 64
        %v2251 = vpop.permute.xlu0 %2250
        %vm2252 = vcmask 64512
        %v2254 = vsel %vm2252, %v810, %v1068
        %v2256 = vsel %vm2252, %v811, %v1070
        %v2258 = vsel %vm2252, %v812, %v1072
        %v2260 = vsel %vm2252, %v813, %v1074
        %v2262 = vsel %vm2252, %v814, %v1076
        %v2264 = vsel %vm2252, %v815, %v1078
        %v2266 = vsel %vm2252, %v816, %v1080
        %v2268 = vsel %vm2252, %v817, %v1082
        %v2270 = vsel %vm2252, %v818, %v1084
        %v2272 = vsel %vm2252, %v819, %v1086
        %v2274 = vsel %vm2252, %v820, %v1088
        %v2276 = vsel %vm2252, %v821, %v1090
        %v2278 = vsel %vm2252, %v822, %v1092
        %v2280 = vsel %vm2252, %v823, %v1094
        %v2282 = vsel %vm2252, %v824, %v1096
        %v2284 = vsel %vm2252, %v825, %v1098
        %vm2285 = vcmask 130048
        %v2287 = vsel %vm2285, %v2254, %v1197
        %v2289 = vsel %vm2285, %v2256, %v1199
        %v2291 = vsel %vm2285, %v2258, %v1201
        %v2293 = vsel %vm2285, %v2260, %v1203
        %v2295 = vsel %vm2285, %v2262, %v1205
        %v2297 = vsel %vm2285, %v2264, %v1207
        %v2299 = vsel %vm2285, %v2266, %v1209
        %v2301 = vsel %vm2285, %v2268, %v1211
        %v2303 = vsel %vm2285, %v2270, %v1213
        %v2305 = vsel %vm2285, %v2272, %v1215
        %v2307 = vsel %vm2285, %v2274, %v1217
        %v2309 = vsel %vm2285, %v2276, %v1219
        %v2311 = vsel %vm2285, %v2278, %v1221
        %v2313 = vsel %vm2285, %v2280, %v1223
        %v2315 = vsel %vm2285, %v2282, %v1225
        %v2317 = vsel %vm2285, %v2284, %v1227
        %vm2318 = vcmask 195584
        %v2320 = vsel %vm2318, %v2287, %v1309
        %v2322 = vsel %vm2318, %v2289, %v1311
        %v2324 = vsel %vm2318, %v2291, %v1313
        %v2326 = vsel %vm2318, %v2293, %v1315
        %v2328 = vsel %vm2318, %v2295, %v1317
        %v2330 = vsel %vm2318, %v2297, %v1319
        %v2332 = vsel %vm2318, %v2299, %v1321
        %v2334 = vsel %vm2318, %v2301, %v1323
        %v2336 = vsel %vm2318, %v2303, %v1325
        %v2338 = vsel %vm2318, %v2305, %v1327
        %v2340 = vsel %vm2318, %v2307, %v1329
        %v2342 = vsel %vm2318, %v2309, %v1331
        %v2344 = vsel %vm2318, %v2311, %v1333
        %v2346 = vsel %vm2318, %v2313, %v1335
        %v2348 = vsel %vm2318, %v2315, %v1337
        %v2350 = vsel %vm2318, %v2317, %v1339
        %vm2351 = vcmask 261120
        %v2353 = vsel %vm2351, %v2320, %v1581
        %v2355 = vsel %vm2351, %v2322, %v1583
        %v2357 = vsel %vm2351, %v2324, %v1585
        %v2359 = vsel %vm2351, %v2326, %v1587
        %v2361 = vsel %vm2351, %v2328, %v1589
        %v2363 = vsel %vm2351, %v2330, %v1591
        %v2365 = vsel %vm2351, %v2332, %v1593
        %v2367 = vsel %vm2351, %v2334, %v1595
        %v2369 = vsel %vm2351, %v2336, %v1597
        %v2371 = vsel %vm2351, %v2338, %v1599
        %v2373 = vsel %vm2351, %v2340, %v1601
        %v2375 = vsel %vm2351, %v2342, %v1603
        %v2377 = vsel %vm2351, %v2344, %v1605
        %v2379 = vsel %vm2351, %v2346, %v1607
        %v2381 = vsel %vm2351, %v2348, %v1609
        %v2383 = vsel %vm2351, %v2350, %v1611
        %vm2384 = vcmask 326656
        %v2386 = vsel %vm2384, %v2353, %v1709
        %v2388 = vsel %vm2384, %v2355, %v1711
        %v2390 = vsel %vm2384, %v2357, %v1713
        %v2392 = vsel %vm2384, %v2359, %v1715
        %v2394 = vsel %vm2384, %v2361, %v1717
        %v2396 = vsel %vm2384, %v2363, %v1719
        %v2398 = vsel %vm2384, %v2365, %v1721
        %v2400 = vsel %vm2384, %v2367, %v1723
        %v2402 = vsel %vm2384, %v2369, %v1725
        %v2404 = vsel %vm2384, %v2371, %v1727
        %v2406 = vsel %vm2384, %v2373, %v1729
        %v2408 = vsel %vm2384, %v2375, %v1731
        %v2410 = vsel %vm2384, %v2377, %v1733
        %v2412 = vsel %vm2384, %v2379, %v1735
        %v2414 = vsel %vm2384, %v2381, %v1737
        %v2416 = vsel %vm2384, %v2383, %v1739
        %vm2417 = vcmask 392192
        %v2419 = vsel %vm2417, %v2386, %v1821
        %v2421 = vsel %vm2417, %v2388, %v1823
        %v2423 = vsel %vm2417, %v2390, %v1825
        %v2425 = vsel %vm2417, %v2392, %v1827
        %v2427 = vsel %vm2417, %v2394, %v1829
        %v2429 = vsel %vm2417, %v2396, %v1831
        %v2431 = vsel %vm2417, %v2398, %v1833
        %v2433 = vsel %vm2417, %v2400, %v1835
        %v2435 = vsel %vm2417, %v2402, %v1837
        %v2437 = vsel %vm2417, %v2404, %v1839
        %v2439 = vsel %vm2417, %v2406, %v1841
        %v2441 = vsel %vm2417, %v2408, %v1843
        %v2443 = vsel %vm2417, %v2410, %v1845
        %v2445 = vsel %vm2417, %v2412, %v1847
        %v2447 = vsel %vm2417, %v2414, %v1849
        %v2449 = vsel %vm2417, %v2416, %v1851
        %vm2450 = vcmask 457728
        %v2452 = vsel %vm2450, %v2419, %v2093
        %v2454 = vsel %vm2450, %v2421, %v2095
        %v2456 = vsel %vm2450, %v2423, %v2097
        %v2458 = vsel %vm2450, %v2425, %v2099
        %v2460 = vsel %vm2450, %v2427, %v2101
        %v2462 = vsel %vm2450, %v2429, %v2103
        %v2464 = vsel %vm2450, %v2431, %v2105
        %v2466 = vsel %vm2450, %v2433, %v2107
        %v2468 = vsel %vm2450, %v2435, %v2109
        %v2470 = vsel %vm2450, %v2437, %v2111
        %v2472 = vsel %vm2450, %v2439, %v2113
        %v2474 = vsel %vm2450, %v2441, %v2115
        %v2476 = vsel %vm2450, %v2443, %v2117
        %v2478 = vsel %vm2450, %v2445, %v2119
        %v2480 = vsel %vm2450, %v2447, %v2121
        %v2482 = vsel %vm2450, %v2449, %v2123
        %v2484 = vsel %vm409, %v2452, %v2221
        %v2486 = vsel %vm409, %v2454, %v2223
        %v2488 = vsel %vm409, %v2456, %v2225
        %v2490 = vsel %vm409, %v2458, %v2227
        %v2492 = vsel %vm409, %v2460, %v2229
        %v2494 = vsel %vm409, %v2462, %v2231
        %v2496 = vsel %vm409, %v2464, %v2233
        %v2498 = vsel %vm409, %v2466, %v2235
        %v2500 = vsel %vm409, %v2468, %v2237
        %v2502 = vsel %vm409, %v2470, %v2239
        %v2504 = vsel %vm409, %v2472, %v2241
        %v2506 = vsel %vm409, %v2474, %v2243
        %v2508 = vsel %vm409, %v2476, %v2245
        %v2510 = vsel %vm409, %v2478, %v2247
        %v2512 = vsel %vm409, %v2480, %v2249
        %v2514 = vsel %vm409, %v2482, %v2251
        %v2515 = vld [vmem:[%s2] sm:$0xf]
        %v2516 = vld [vmem:[%s2 + $0x4] sm:$0xf]
        %v2517 = vld [vmem:[%s2 + $0x8] sm:$0xf]
        %v2518 = vld [vmem:[%s2 + $0xc] sm:$0xf]
        %v2519 = vld [vmem:[%s2 + $0x10] sm:$0xf]
        %v2520 = vld [vmem:[%s2 + $0x14] sm:$0xf]
        %v2521 = vld [vmem:[%s2 + $0x18] sm:$0xf]
        %v2522 = vld [vmem:[%s2 + $0x1c] sm:$0xf]
        %v2523 = vld [vmem:[%s2 + $0x20] sm:$0xf]
        %v2524 = vld [vmem:[%s3] sm:$0x1]
        %v2526 = vlaneseq
        %v2527 = vshrl.u32 %v2526, 7
        %v2528 = vsub.s32 0, %v2527
        %v2529 = vrot.slane %v2524, %v2528
        %v2540 = vunpack.c.l.b16 %v2515
        %v2541 = vunpack.c.l.b16 %v2516
        %v2542 = vunpack.c.l.b16 %v2517
        %v2543 = vunpack.c.l.b16 %v2518
        %v2544 = vunpack.c.l.b16 %v2519
        %v2545 = vunpack.c.l.b16 %v2520
        %v2546 = vunpack.c.l.b16 %v2521
        %v2547 = vunpack.c.l.b16 %v2522
        %v2548 = vunpack.c.l.b16 %v2523
        %v2549 = vpack.c.b16 %v2541, %v2540
        %v2550 = vpack.c.b16 %v2543, %v2542
        %v2551 = vpack.c.b16 %v2545, %v2544
        %v2552 = vpack.c.b16 %v2547, %v2546
        %v2553 = vpack.c.b16 %v2548, %v2548
        %vm2558 = vcmask 588800
        %v2559 = vsel %vm2558, %v2484, 0
        %v2561 = vsel %vm2558, %v2486, 0
        %v2563 = vsel %vm2558, %v2488, 0
        %v2565 = vsel %vm2558, %v2490, 0
        %v2567 = vsel %vm2558, %v2492, 0
        %v2569 = vsel %vm2558, %v2494, 0
        %v2571 = vsel %vm2558, %v2496, 0
        %v2573 = vsel %vm2558, %v2498, 0
        %v2575 = vsel %vm2558, %v2500, 0
        %v2577 = vsel %vm2558, %v2502, 0
        %v2579 = vsel %vm2558, %v2504, 0
        %v2581 = vsel %vm2558, %v2506, 0
        %v2583 = vsel %vm2558, %v2508, 0
        %v2585 = vsel %vm2558, %v2510, 0
        %v2587 = vsel %vm2558, %v2512, 0
        %v2589 = vsel %vm2558, %v2514, 0
        %vm2591 = vcmask 1043456
        %v2593 = vsel %vm2591, %v2553, 0
        %2595 = vmatprep.subr.bf16.mxu0 0
        %2596 = vmatpush1.bf16.msra.mxu0 0
        %2597 = vmatprep.subr.bf16.mxu0 0
        %2598 = vmatpush1.bf16.msra.mxu0 0
        %2599 = vmatprep.subr.bf16.mxu0 0
        %2600 = vmatpush1.bf16.msra.mxu0 0
        %2601 = vmatprep.subr.bf16.mxu0 0
        %2602 = vmatpush1.bf16.msra.mxu0 %v2593
        %2603 = vmatprep.subr.bf16.mxu0 0
        %2604 = vmatpush1.bf16.msra.mxu0 %v2552
        %2605 = vmatprep.subr.bf16.mxu0 0
        %2606 = vmatpush1.bf16.msra.mxu0 %v2551
        %2607 = vmatprep.subr.bf16.mxu0 0
        %2608 = vmatpush1.bf16.msra.mxu0 %v2550
        %2609 = vmatprep.subr.bf16.mxu0 0
        %2610 = vmatpush1.bf16.msra.mxu0 %v2549
        %2611 = vmatprep.subr.bf16.mxu0 0
        %2612 = vmatpush2.bf16.msra.mxu0 0
        %2613 = vmatprep.subr.bf16.mxu0 0
        %2614 = vmatpush2.bf16.msra.mxu0 0
        %2615 = vmatprep.subr.bf16.mxu0 0
        %2616 = vmatpush2.bf16.msra.mxu0 0
        %2617 = vmatprep.subr.bf16.mxu0 0
        %2618 = vmatpush2.bf16.msra.mxu0 0
        %2619 = vmatprep.subr.bf16.mxu0 0
        %2620 = vmatpush2.bf16.msra.mxu0 0
        %2621 = vmatprep.subr.bf16.mxu0 0
        %2622 = vmatpush2.bf16.msra.mxu0 0
        %2623 = vmatprep.subr.bf16.mxu0 0
        %2624 = vmatpush2.bf16.msra.mxu0 0
        %2625 = vmatprep.subr.bf16.mxu0 0
        %2626 = vmatpush2.bf16.msra.mxu0 0
        %2627 = vmatprep.mubr.bf16.mxu0 0
        %2628 = vmatmul.mubr.bf16.gmra.mxu0 %v2559
        %v2629 = vpop.f32.mrf.mxu0
        %v2630 = vadd.f32 %v2529, %v2629
        %v2631 = vpop.f32.mrf.mxu0
        %v2632 = vpop.f32.mrf.mxu0
        %v2633 = vadd.f32 %v2529, %v2632
        %v2634 = vpop.f32.mrf.mxu0
        %2635 = vmatprep.mubr.bf16.mxu0 0
        %2636 = vmatmul.mubr.bf16.gmra.mxu0 %v2561
        %v2637 = vpop.f32.mrf.mxu0
        %v2638 = vadd.f32 %v2529, %v2637
        %v2639 = vpop.f32.mrf.mxu0
        %v2640 = vpop.f32.mrf.mxu0
        %v2641 = vadd.f32 %v2529, %v2640
        %v2642 = vpop.f32.mrf.mxu0
        %2643 = vmatprep.mubr.bf16.mxu0 0
        %2644 = vmatmul.mubr.bf16.gmra.mxu0 %v2563
        %v2645 = vpop.f32.mrf.mxu0
        %v2646 = vadd.f32 %v2529, %v2645
        %v2647 = vpop.f32.mrf.mxu0
        %v2648 = vpop.f32.mrf.mxu0
        %v2649 = vadd.f32 %v2529, %v2648
        %v2650 = vpop.f32.mrf.mxu0
        %2651 = vmatprep.mubr.bf16.mxu0 0
        %2652 = vmatmul.mubr.bf16.gmra.mxu0 %v2565
        %v2653 = vpop.f32.mrf.mxu0
        %v2654 = vadd.f32 %v2529, %v2653
        %v2655 = vpop.f32.mrf.mxu0
        %v2656 = vpop.f32.mrf.mxu0
        %v2657 = vadd.f32 %v2529, %v2656
        %v2658 = vpop.f32.mrf.mxu0
        %2659 = vmatprep.mubr.bf16.mxu0 0
        %2660 = vmatmul.mubr.bf16.gmra.mxu0 %v2567
        %v2661 = vpop.f32.mrf.mxu0
        %v2662 = vadd.f32 %v2529, %v2661
        %v2663 = vpop.f32.mrf.mxu0
        %v2664 = vpop.f32.mrf.mxu0
        %v2665 = vadd.f32 %v2529, %v2664
        %v2666 = vpop.f32.mrf.mxu0
        %2667 = vmatprep.mubr.bf16.mxu0 0
        %2668 = vmatmul.mubr.bf16.gmra.mxu0 %v2569
        %v2669 = vpop.f32.mrf.mxu0
        %v2670 = vadd.f32 %v2529, %v2669
        %v2671 = vpop.f32.mrf.mxu0
        %v2672 = vpop.f32.mrf.mxu0
        %v2673 = vadd.f32 %v2529, %v2672
        %v2674 = vpop.f32.mrf.mxu0
        %2675 = vmatprep.mubr.bf16.mxu0 0
        %2676 = vmatmul.mubr.bf16.gmra.mxu0 %v2571
        %v2677 = vpop.f32.mrf.mxu0
        %v2678 = vadd.f32 %v2529, %v2677
        %v2679 = vpop.f32.mrf.mxu0
        %v2680 = vpop.f32.mrf.mxu0
        %v2681 = vadd.f32 %v2529, %v2680
        %v2682 = vpop.f32.mrf.mxu0
        %2683 = vmatprep.mubr.bf16.mxu0 0
        %2684 = vmatmul.mubr.bf16.gmra.mxu0 %v2573
        %v2685 = vpop.f32.mrf.mxu0
        %v2686 = vadd.f32 %v2529, %v2685
        %v2687 = vpop.f32.mrf.mxu0
        %v2688 = vpop.f32.mrf.mxu0
        %v2689 = vadd.f32 %v2529, %v2688
        %v2690 = vpop.f32.mrf.mxu0
        %2691 = vmatprep.mubr.bf16.mxu0 0
        %2692 = vmatmul.mubr.bf16.gmra.mxu0 %v2575
        %v2693 = vpop.f32.mrf.mxu0
        %v2694 = vadd.f32 %v2529, %v2693
        %v2695 = vpop.f32.mrf.mxu0
        %v2696 = vpop.f32.mrf.mxu0
        %v2697 = vadd.f32 %v2529, %v2696
        %v2698 = vpop.f32.mrf.mxu0
        %2699 = vmatprep.mubr.bf16.mxu0 0
        %2700 = vmatmul.mubr.bf16.gmra.mxu0 %v2577
        %v2701 = vpop.f32.mrf.mxu0
        %v2702 = vadd.f32 %v2529, %v2701
        %v2703 = vpop.f32.mrf.mxu0
        %v2704 = vpop.f32.mrf.mxu0
        %v2705 = vadd.f32 %v2529, %v2704
        %v2706 = vpop.f32.mrf.mxu0
        %2707 = vmatprep.mubr.bf16.mxu0 0
        %2708 = vmatmul.mubr.bf16.gmra.mxu0 %v2579
        %v2709 = vpop.f32.mrf.mxu0
        %v2710 = vadd.f32 %v2529, %v2709
        %v2711 = vpop.f32.mrf.mxu0
        %v2712 = vpop.f32.mrf.mxu0
        %v2713 = vadd.f32 %v2529, %v2712
        %v2714 = vpop.f32.mrf.mxu0
        %2715 = vmatprep.mubr.bf16.mxu0 0
        %2716 = vmatmul.mubr.bf16.gmra.mxu0 %v2581
        %v2717 = vpop.f32.mrf.mxu0
        %v2718 = vadd.f32 %v2529, %v2717
        %v2719 = vpop.f32.mrf.mxu0
        %v2720 = vpop.f32.mrf.mxu0
        %v2721 = vadd.f32 %v2529, %v2720
        %v2722 = vpop.f32.mrf.mxu0
        %2723 = vmatprep.mubr.bf16.mxu0 0
        %2724 = vmatmul.mubr.bf16.gmra.mxu0 %v2583
        %v2725 = vpop.f32.mrf.mxu0
        %v2726 = vadd.f32 %v2529, %v2725
        %v2727 = vpop.f32.mrf.mxu0
        %v2728 = vpop.f32.mrf.mxu0
        %v2729 = vadd.f32 %v2529, %v2728
        %v2730 = vpop.f32.mrf.mxu0
        %2731 = vmatprep.mubr.bf16.mxu0 0
        %2732 = vmatmul.mubr.bf16.gmra.mxu0 %v2585
        %v2733 = vpop.f32.mrf.mxu0
        %v2734 = vadd.f32 %v2529, %v2733
        %v2735 = vpop.f32.mrf.mxu0
        %v2736 = vpop.f32.mrf.mxu0
        %v2737 = vadd.f32 %v2529, %v2736
        %v2738 = vpop.f32.mrf.mxu0
        %2739 = vmatprep.mubr.bf16.mxu0 0
        %2740 = vmatmul.mubr.bf16.gmra.mxu0 %v2587
        %v2741 = vpop.f32.mrf.mxu0
        %v2742 = vadd.f32 %v2529, %v2741
        %v2743 = vpop.f32.mrf.mxu0
        %v2744 = vpop.f32.mrf.mxu0
        %v2745 = vadd.f32 %v2529, %v2744
        %v2746 = vpop.f32.mrf.mxu0
        %2747 = vmatprep.mubr.bf16.mxu0 0
        %2748 = vmatmul.mubr.bf16.gmra.mxu0 %v2589
        %v2749 = vpop.f32.mrf.mxu0
        %v2750 = vadd.f32 %v2529, %v2749
        %v2751 = vpop.f32.mrf.mxu0
        %v2752 = vpop.f32.mrf.mxu0
        %v2753 = vadd.f32 %v2529, %v2752
        %v2754 = vpop.f32.mrf.mxu0
        %2755 = vdwg.mxu0
        %v2756 = vmax.f32 %v2630, 0.0
        %v2757 = vmax.f32 %v2633, 0.0
        %v2758 = vmax.f32 %v2638, 0.0
        %v2759 = vmax.f32 %v2641, 0.0
        %v2760 = vmax.f32 %v2646, 0.0
        %v2761 = vmax.f32 %v2649, 0.0
        %v2762 = vmax.f32 %v2654, 0.0
        %v2763 = vmax.f32 %v2657, 0.0
        %v2764 = vmax.f32 %v2662, 0.0
        %v2765 = vmax.f32 %v2665, 0.0
        %v2766 = vmax.f32 %v2670, 0.0
        %v2767 = vmax.f32 %v2673, 0.0
        %v2768 = vmax.f32 %v2678, 0.0
        %v2769 = vmax.f32 %v2681, 0.0
        %v2770 = vmax.f32 %v2686, 0.0
        %v2771 = vmax.f32 %v2689, 0.0
        %v2772 = vmax.f32 %v2694, 0.0
        %v2773 = vmax.f32 %v2697, 0.0
        %v2774 = vmax.f32 %v2702, 0.0
        %v2775 = vmax.f32 %v2705, 0.0
        %v2776 = vmax.f32 %v2710, 0.0
        %v2777 = vmax.f32 %v2713, 0.0
        %v2778 = vmax.f32 %v2718, 0.0
        %v2779 = vmax.f32 %v2721, 0.0
        %v2780 = vmax.f32 %v2726, 0.0
        %v2781 = vmax.f32 %v2729, 0.0
        %v2782 = vmax.f32 %v2734, 0.0
        %v2783 = vmax.f32 %v2737, 0.0
        %v2784 = vmax.f32 %v2742, 0.0
        %v2785 = vmax.f32 %v2745, 0.0
        %v2786 = vmax.f32 %v2750, 0.0
        %v2787 = vmax.f32 %v2753, 0.0
        %2788 = vst.msk [vmem:[#allocation2] sm:$0xff] %vm409, %v2756
        %2789 = vst.msk [vmem:[#allocation2 + $0x8] sm:$0xff] %vm409, %v2757
        %2790 = vst.msk [vmem:[#allocation2 + $0x18] sm:$0xff] %vm409, %v2758
        %2791 = vst.msk [vmem:[#allocation2 + $0x20] sm:$0xff] %vm409, %v2759
        %2792 = vst.msk [vmem:[#allocation2 + $0x30] sm:$0xff] %vm409, %v2760
        %2793 = vst.msk [vmem:[#allocation2 + $0x38] sm:$0xff] %vm409, %v2761
        %2794 = vst.msk [vmem:[#allocation2 + $0x48] sm:$0xff] %vm409, %v2762
        %2795 = vst.msk [vmem:[#allocation2 + $0x50] sm:$0xff] %vm409, %v2763
        %2796 = vst.msk [vmem:[#allocation2 + $0x60] sm:$0xff] %vm409, %v2764
        %2797 = vst.msk [vmem:[#allocation2 + $0x68] sm:$0xff] %vm409, %v2765
        %2798 = vst.msk [vmem:[#allocation2 + $0x78] sm:$0xff] %vm409, %v2766
        %2799 = vst.msk [vmem:[#allocation2 + $0x80] sm:$0xff] %vm409, %v2767
        %2800 = vst.msk [vmem:[#allocation2 + $0x90] sm:$0xff] %vm409, %v2768
        %2801 = vst.msk [vmem:[#allocation2 + $0x98] sm:$0xff] %vm409, %v2769
        %2802 = vst.msk [vmem:[#allocation2 + $0xa8] sm:$0xff] %vm409, %v2770
        %2803 = vst.msk [vmem:[#allocation2 + $0xb0] sm:$0xff] %vm409, %v2771
        %2804 = vst.msk [vmem:[#allocation2 + $0xc0] sm:$0xff] %vm409, %v2772
        %2805 = vst.msk [vmem:[#allocation2 + $0xc8] sm:$0xff] %vm409, %v2773
        %2806 = vst.msk [vmem:[#allocation2 + $0xd8] sm:$0xff] %vm409, %v2774
        %2807 = vst.msk [vmem:[#allocation2 + $0xe0] sm:$0xff] %vm409, %v2775
        %2808 = vst.msk [vmem:[#allocation2 + $0xf0] sm:$0xff] %vm409, %v2776
        %2809 = vst.msk [vmem:[#allocation2 + $0xf8] sm:$0xff] %vm409, %v2777
        %2810 = vst.msk [vmem:[#allocation2 + $0x108] sm:$0xff] %vm409, %v2778
        %2811 = vst.msk [vmem:[#allocation2 + $0x110] sm:$0xff] %vm409, %v2779
        %2812 = vst.msk [vmem:[#allocation2 + $0x120] sm:$0xff] %vm409, %v2780
        %2813 = vst.msk [vmem:[#allocation2 + $0x128] sm:$0xff] %vm409, %v2781
        %2814 = vst.msk [vmem:[#allocation2 + $0x138] sm:$0xff] %vm409, %v2782
        %2815 = vst.msk [vmem:[#allocation2 + $0x140] sm:$0xff] %vm409, %v2783
        %2816 = vst.msk [vmem:[#allocation2 + $0x150] sm:$0xff] %vm409, %v2784
        %2817 = vst.msk [vmem:[#allocation2 + $0x158] sm:$0xff] %vm409, %v2785
        %2818 = vst.msk [vmem:[#allocation2 + $0x168] sm:$0xff] %vm409, %v2786
        %2819 = vst.msk [vmem:[#allocation2 + $0x170] sm:$0xff] %vm409, %v2787
        %v2820 = vld [vmem:[#allocation2 + $0x1] sm:$0xff]
        %v2821 = vld [vmem:[#allocation2 + $0x9] sm:$0xff]
        %v2822 = vld [vmem:[#allocation2 + $0x19] sm:$0xff]
        %v2823 = vld [vmem:[#allocation2 + $0x21] sm:$0xff]
        %v2824 = vld [vmem:[#allocation2 + $0x31] sm:$0xff]
        %v2825 = vld [vmem:[#allocation2 + $0x39] sm:$0xff]
        %v2826 = vld [vmem:[#allocation2 + $0x49] sm:$0xff]
        %v2827 = vld [vmem:[#allocation2 + $0x51] sm:$0xff]
        %v2828 = vld [vmem:[#allocation2 + $0x61] sm:$0xff]
        %v2829 = vld [vmem:[#allocation2 + $0x69] sm:$0xff]
        %v2830 = vld [vmem:[#allocation2 + $0x79] sm:$0xff]
        %v2831 = vld [vmem:[#allocation2 + $0x81] sm:$0xff]
        %v2832 = vld [vmem:[#allocation2 + $0x91] sm:$0xff]
        %v2833 = vld [vmem:[#allocation2 + $0x99] sm:$0xff]
        %v2834 = vld [vmem:[#allocation2 + $0xa9] sm:$0xff]
        %v2835 = vld [vmem:[#allocation2 + $0xb1] sm:$0xff]
        %v2836 = vld [vmem:[#allocation2 + $0xc1] sm:$0xff]
        %v2837 = vld [vmem:[#allocation2 + $0xc9] sm:$0xff]
        %v2838 = vld [vmem:[#allocation2 + $0xd9] sm:$0xff]
        %v2839 = vld [vmem:[#allocation2 + $0xe1] sm:$0xff]
        %v2840 = vld [vmem:[#allocation2 + $0xf1] sm:$0xff]
        %v2841 = vld [vmem:[#allocation2 + $0xf9] sm:$0xff]
        %v2842 = vld [vmem:[#allocation2 + $0x109] sm:$0xff]
        %v2843 = vld [vmem:[#allocation2 + $0x111] sm:$0xff]
        %v2844 = vld [vmem:[#allocation2 + $0x121] sm:$0xff]
        %v2845 = vld [vmem:[#allocation2 + $0x129] sm:$0xff]
        %v2846 = vld [vmem:[#allocation2 + $0x139] sm:$0xff]
        %v2847 = vld [vmem:[#allocation2 + $0x141] sm:$0xff]
        %v2848 = vld [vmem:[#allocation2 + $0x151] sm:$0xff]
        %v2849 = vld [vmem:[#allocation2 + $0x159] sm:$0xff]
        %v2850 = vld [vmem:[#allocation2 + $0x169] sm:$0xff]
        %v2851 = vld [vmem:[#allocation2 + $0x171] sm:$0xff]
        %s2852 = scalar_lea.vmem [#allocation2], 24
        %v2853 = vld [vmem:[%s2852] sm:$0xff]
        %v2854 = vld [vmem:[%s2852 + $0x8] sm:$0xff]
        %v2855 = vld [vmem:[%s2852 + $0x18] sm:$0xff]
        %v2856 = vld [vmem:[%s2852 + $0x20] sm:$0xff]
        %v2857 = vld [vmem:[%s2852 + $0x30] sm:$0xff]
        %v2858 = vld [vmem:[%s2852 + $0x38] sm:$0xff]
        %v2859 = vld [vmem:[%s2852 + $0x48] sm:$0xff]
        %v2860 = vld [vmem:[%s2852 + $0x50] sm:$0xff]
        %v2861 = vld [vmem:[%s2852 + $0x60] sm:$0xff]
        %v2862 = vld [vmem:[%s2852 + $0x68] sm:$0xff]
        %v2863 = vld [vmem:[%s2852 + $0x78] sm:$0xff]
        %v2864 = vld [vmem:[%s2852 + $0x80] sm:$0xff]
        %v2865 = vld [vmem:[%s2852 + $0x90] sm:$0xff]
        %v2866 = vld [vmem:[%s2852 + $0x98] sm:$0xff]
        %v2867 = vld [vmem:[%s2852 + $0xa8] sm:$0xff]
        %v2868 = vld [vmem:[%s2852 + $0xb0] sm:$0xff]
        %v2869 = vld [vmem:[%s2852 + $0xc0] sm:$0xff]
        %v2870 = vld [vmem:[%s2852 + $0xc8] sm:$0xff]
        %v2871 = vld [vmem:[%s2852 + $0xd8] sm:$0xff]
        %v2872 = vld [vmem:[%s2852 + $0xe0] sm:$0xff]
        %v2873 = vld [vmem:[%s2852 + $0xf0] sm:$0xff]
        %v2874 = vld [vmem:[%s2852 + $0xf8] sm:$0xff]
        %v2875 = vld [vmem:[%s2852 + $0x108] sm:$0xff]
        %v2876 = vld [vmem:[%s2852 + $0x110] sm:$0xff]
        %v2877 = vld [vmem:[%s2852 + $0x120] sm:$0xff]
        %v2878 = vld [vmem:[%s2852 + $0x128] sm:$0xff]
        %v2879 = vld [vmem:[%s2852 + $0x138] sm:$0xff]
        %v2880 = vld [vmem:[%s2852 + $0x140] sm:$0xff]
        %v2881 = vld [vmem:[%s2852 + $0x150] sm:$0xff]
        %v2882 = vld [vmem:[%s2852 + $0x158] sm:$0xff]
        %v2883 = vld [vmem:[%s2852 + $0x168] sm:$0xff]
        %v2884 = vld [vmem:[%s2852 + $0x170] sm:$0xff]
        %v2885 = vld [vmem:[%s2852 + $0x1] sm:$0xff]
        %v2886 = vld [vmem:[%s2852 + $0x9] sm:$0xff]
        %v2887 = vld [vmem:[%s2852 + $0x19] sm:$0xff]
        %v2888 = vld [vmem:[%s2852 + $0x21] sm:$0xff]
        %v2889 = vld [vmem:[%s2852 + $0x31] sm:$0xff]
        %v2890 = vld [vmem:[%s2852 + $0x39] sm:$0xff]
        %v2891 = vld [vmem:[%s2852 + $0x49] sm:$0xff]
        %v2892 = vld [vmem:[%s2852 + $0x51] sm:$0xff]
        %v2893 = vld [vmem:[%s2852 + $0x61] sm:$0xff]
        %v2894 = vld [vmem:[%s2852 + $0x69] sm:$0xff]
        %v2895 = vld [vmem:[%s2852 + $0x79] sm:$0xff]
        %v2896 = vld [vmem:[%s2852 + $0x81] sm:$0xff]
        %v2897 = vld [vmem:[%s2852 + $0x91] sm:$0xff]
        %v2898 = vld [vmem:[%s2852 + $0x99] sm:$0xff]
        %v2899 = vld [vmem:[%s2852 + $0xa9] sm:$0xff]
        %v2900 = vld [vmem:[%s2852 + $0xb1] sm:$0xff]
        %v2901 = vld [vmem:[%s2852 + $0xc1] sm:$0xff]
        %v2902 = vld [vmem:[%s2852 + $0xc9] sm:$0xff]
        %v2903 = vld [vmem:[%s2852 + $0xd9] sm:$0xff]
        %v2904 = vld [vmem:[%s2852 + $0xe1] sm:$0xff]
        %v2905 = vld [vmem:[%s2852 + $0xf1] sm:$0xff]
        %v2906 = vld [vmem:[%s2852 + $0xf9] sm:$0xff]
        %v2907 = vld [vmem:[%s2852 + $0x109] sm:$0xff]
        %v2908 = vld [vmem:[%s2852 + $0x111] sm:$0xff]
        %v2909 = vld [vmem:[%s2852 + $0x121] sm:$0xff]
        %v2910 = vld [vmem:[%s2852 + $0x129] sm:$0xff]
        %v2911 = vld [vmem:[%s2852 + $0x139] sm:$0xff]
        %v2912 = vld [vmem:[%s2852 + $0x141] sm:$0xff]
        %v2913 = vld [vmem:[%s2852 + $0x151] sm:$0xff]
        %v2914 = vld [vmem:[%s2852 + $0x159] sm:$0xff]
        %v2915 = vld [vmem:[%s2852 + $0x169] sm:$0xff]
        %v2916 = vld [vmem:[%s2852 + $0x171] sm:$0xff]
        %v2917 = vadd.f32 %v2756, %v2820
        %v2918 = vadd.f32 %v2757, %v2821
        %v2919 = vadd.f32 %v2758, %v2822
        %v2920 = vadd.f32 %v2759, %v2823
        %v2921 = vadd.f32 %v2760, %v2824
        %v2922 = vadd.f32 %v2761, %v2825
        %v2923 = vadd.f32 %v2762, %v2826
        %v2924 = vadd.f32 %v2763, %v2827
        %v2925 = vadd.f32 %v2764, %v2828
        %v2926 = vadd.f32 %v2765, %v2829
        %v2927 = vadd.f32 %v2766, %v2830
        %v2928 = vadd.f32 %v2767, %v2831
        %v2929 = vadd.f32 %v2768, %v2832
        %v2930 = vadd.f32 %v2769, %v2833
        %v2931 = vadd.f32 %v2770, %v2834
        %v2932 = vadd.f32 %v2771, %v2835
        %v2933 = vadd.f32 %v2772, %v2836
        %v2934 = vadd.f32 %v2773, %v2837
        %v2935 = vadd.f32 %v2774, %v2838
        %v2936 = vadd.f32 %v2775, %v2839
        %v2937 = vadd.f32 %v2776, %v2840
        %v2938 = vadd.f32 %v2777, %v2841
        %v2939 = vadd.f32 %v2778, %v2842
        %v2940 = vadd.f32 %v2779, %v2843
        %v2941 = vadd.f32 %v2780, %v2844
        %v2942 = vadd.f32 %v2781, %v2845
        %v2943 = vadd.f32 %v2782, %v2846
        %v2944 = vadd.f32 %v2783, %v2847
        %v2945 = vadd.f32 %v2784, %v2848
        %v2946 = vadd.f32 %v2785, %v2849
        %v2947 = vadd.f32 %v2786, %v2850
        %v2948 = vadd.f32 %v2787, %v2851
        %v2949 = vadd.f32 %v2917, %v2853
        %v2950 = vadd.f32 %v2918, %v2854
        %v2951 = vadd.f32 %v2919, %v2855
        %v2952 = vadd.f32 %v2920, %v2856
        %v2953 = vadd.f32 %v2921, %v2857
        %v2954 = vadd.f32 %v2922, %v2858
        %v2955 = vadd.f32 %v2923, %v2859
        %v2956 = vadd.f32 %v2924, %v2860
        %v2957 = vadd.f32 %v2925, %v2861
        %v2958 = vadd.f32 %v2926, %v2862
        %v2959 = vadd.f32 %v2927, %v2863
        %v2960 = vadd.f32 %v2928, %v2864
        %v2961 = vadd.f32 %v2929, %v2865
        %v2962 = vadd.f32 %v2930, %v2866
        %v2963 = vadd.f32 %v2931, %v2867
        %v2964 = vadd.f32 %v2932, %v2868
        %v2965 = vadd.f32 %v2933, %v2869
        %v2966 = vadd.f32 %v2934, %v2870
        %v2967 = vadd.f32 %v2935, %v2871
        %v2968 = vadd.f32 %v2936, %v2872
        %v2969 = vadd.f32 %v2937, %v2873
        %v2970 = vadd.f32 %v2938, %v2874
        %v2971 = vadd.f32 %v2939, %v2875
        %v2972 = vadd.f32 %v2940, %v2876
        %v2973 = vadd.f32 %v2941, %v2877
        %v2974 = vadd.f32 %v2942, %v2878
        %v2975 = vadd.f32 %v2943, %v2879
        %v2976 = vadd.f32 %v2944, %v2880
        %v2977 = vadd.f32 %v2945, %v2881
        %v2978 = vadd.f32 %v2946, %v2882
        %v2979 = vadd.f32 %v2947, %v2883
        %v2980 = vadd.f32 %v2948, %v2884
        %v2981 = vadd.f32 %v2949, %v2885
        %v2982 = vadd.f32 %v2950, %v2886
        %v2983 = vadd.f32 %v2951, %v2887
        %v2984 = vadd.f32 %v2952, %v2888
        %v2985 = vadd.f32 %v2953, %v2889
        %v2986 = vadd.f32 %v2954, %v2890
        %v2987 = vadd.f32 %v2955, %v2891
        %v2988 = vadd.f32 %v2956, %v2892
        %v2989 = vadd.f32 %v2957, %v2893
        %v2990 = vadd.f32 %v2958, %v2894
        %v2991 = vadd.f32 %v2959, %v2895
        %v2992 = vadd.f32 %v2960, %v2896
        %v2993 = vadd.f32 %v2961, %v2897
        %v2994 = vadd.f32 %v2962, %v2898
        %v2995 = vadd.f32 %v2963, %v2899
        %v2996 = vadd.f32 %v2964, %v2900
        %v2997 = vadd.f32 %v2965, %v2901
        %v2998 = vadd.f32 %v2966, %v2902
        %v2999 = vadd.f32 %v2967, %v2903
        %v3000 = vadd.f32 %v2968, %v2904
        %v3001 = vadd.f32 %v2969, %v2905
        %v3002 = vadd.f32 %v2970, %v2906
        %v3003 = vadd.f32 %v2971, %v2907
        %v3004 = vadd.f32 %v2972, %v2908
        %v3005 = vadd.f32 %v2973, %v2909
        %v3006 = vadd.f32 %v2974, %v2910
        %v3007 = vadd.f32 %v2975, %v2911
        %v3008 = vadd.f32 %v2976, %v2912
        %v3009 = vadd.f32 %v2977, %v2913
        %v3010 = vadd.f32 %v2978, %v2914
        %v3011 = vadd.f32 %v2979, %v2915
        %v3012 = vadd.f32 %v2980, %v2916
        %v3013 = vmul.f32 %v2981, 0.25
        %v3014 = vmul.f32 %v2982, 0.25
        %v3015 = vmul.f32 %v2983, 0.25
        %v3016 = vmul.f32 %v2984, 0.25
        %v3017 = vmul.f32 %v2985, 0.25
        %v3018 = vmul.f32 %v2986, 0.25
        %v3019 = vmul.f32 %v2987, 0.25
        %v3020 = vmul.f32 %v2988, 0.25
        %v3021 = vmul.f32 %v2989, 0.25
        %v3022 = vmul.f32 %v2990, 0.25
        %v3023 = vmul.f32 %v2991, 0.25
        %v3024 = vmul.f32 %v2992, 0.25
        %v3025 = vmul.f32 %v2993, 0.25
        %v3026 = vmul.f32 %v2994, 0.25
        %v3027 = vmul.f32 %v2995, 0.25
        %v3028 = vmul.f32 %v2996, 0.25
        %v3029 = vmul.f32 %v2997, 0.25
        %v3030 = vmul.f32 %v2998, 0.25
        %v3031 = vmul.f32 %v2999, 0.25
        %v3032 = vmul.f32 %v3000, 0.25
        %v3033 = vmul.f32 %v3001, 0.25
        %v3034 = vmul.f32 %v3002, 0.25
        %v3035 = vmul.f32 %v3003, 0.25
        %v3036 = vmul.f32 %v3004, 0.25
        %v3037 = vmul.f32 %v3005, 0.25
        %v3038 = vmul.f32 %v3006, 0.25
        %v3039 = vmul.f32 %v3007, 0.25
        %v3040 = vmul.f32 %v3008, 0.25
        %v3041 = vmul.f32 %v3009, 0.25
        %v3042 = vmul.f32 %v3010, 0.25
        %v3043 = vmul.f32 %v3011, 0.25
        %v3044 = vmul.f32 %v3012, 0.25
        %v3045 = vpack.c.bf16 %v3014, %v3013
        %v3046 = vpack.c.bf16 %v3016, %v3015
        %v3047 = vpack.c.bf16 %v3018, %v3017
        %v3048 = vpack.c.bf16 %v3020, %v3019
        %v3049 = vpack.c.bf16 %v3022, %v3021
        %v3050 = vpack.c.bf16 %v3024, %v3023
        %v3051 = vpack.c.bf16 %v3026, %v3025
        %v3052 = vpack.c.bf16 %v3028, %v3027
        %v3053 = vpack.c.bf16 %v3030, %v3029
        %v3054 = vpack.c.bf16 %v3032, %v3031
        %v3055 = vpack.c.bf16 %v3034, %v3033
        %v3056 = vpack.c.bf16 %v3036, %v3035
        %v3057 = vpack.c.bf16 %v3038, %v3037
        %v3058 = vpack.c.bf16 %v3040, %v3039
        %v3059 = vpack.c.bf16 %v3042, %v3041
        %v3060 = vpack.c.bf16 %v3044, %v3043
        %v3077 = vunpack.c.l.b16 %v3045
        %v3078 = vunpack.c.h.b16 %v3045
        %v3079 = vunpack.c.l.b16 %v3046
        %v3080 = vunpack.c.h.b16 %v3046
        %v3081 = vunpack.c.l.b16 %v3047
        %v3082 = vunpack.c.h.b16 %v3047
        %v3083 = vunpack.c.l.b16 %v3048
        %v3084 = vunpack.c.h.b16 %v3048
        %v3085 = vunpack.c.l.b16 %v3049
        %v3086 = vunpack.c.h.b16 %v3049
        %v3087 = vunpack.c.l.b16 %v3050
        %v3088 = vunpack.c.h.b16 %v3050
        %v3089 = vunpack.c.l.b16 %v3051
        %v3090 = vunpack.c.h.b16 %v3051
        %v3091 = vunpack.c.l.b16 %v3052
        %v3092 = vunpack.c.h.b16 %v3052
        %v3093 = vunpack.c.l.b16 %v3053
        %v3094 = vunpack.c.h.b16 %v3053
        %v3095 = vunpack.c.l.b16 %v3054
        %v3096 = vunpack.c.h.b16 %v3054
        %v3097 = vunpack.c.l.b16 %v3055
        %v3098 = vunpack.c.h.b16 %v3055
        %v3099 = vunpack.c.l.b16 %v3056
        %v3100 = vunpack.c.h.b16 %v3056
        %v3101 = vunpack.c.l.b16 %v3057
        %v3102 = vunpack.c.h.b16 %v3057
        %v3103 = vunpack.c.l.b16 %v3058
        %v3104 = vunpack.c.h.b16 %v3058
        %v3105 = vunpack.c.l.b16 %v3059
        %v3106 = vunpack.c.h.b16 %v3059
        %v3107 = vunpack.c.l.b16 %v3060
        %v3108 = vunpack.c.h.b16 %v3060
        %v3109 = vpack.c.b16 %v3077, %v3077
        %v3110 = vpack.c.b16 %v3078, %v3078
        %v3111 = vpack.c.b16 %v3079, %v3079
        %v3112 = vpack.c.b16 %v3080, %v3080
        %v3113 = vpack.c.b16 %v3081, %v3081
        %v3114 = vpack.c.b16 %v3082, %v3082
        %v3115 = vpack.c.b16 %v3083, %v3083
        %v3116 = vpack.c.b16 %v3084, %v3084
        %v3117 = vpack.c.b16 %v3085, %v3085
        %v3118 = vpack.c.b16 %v3086, %v3086
        %v3119 = vpack.c.b16 %v3087, %v3087
        %v3120 = vpack.c.b16 %v3088, %v3088
        %v3121 = vpack.c.b16 %v3089, %v3089
        %v3122 = vpack.c.b16 %v3090, %v3090
        %v3123 = vpack.c.b16 %v3091, %v3091
        %v3124 = vpack.c.b16 %v3092, %v3092
        %v3125 = vpack.c.b16 %v3093, %v3093
        %v3126 = vpack.c.b16 %v3094, %v3094
        %v3127 = vpack.c.b16 %v3095, %v3095
        %v3128 = vpack.c.b16 %v3096, %v3096
        %v3129 = vpack.c.b16 %v3097, %v3097
        %v3130 = vpack.c.b16 %v3098, %v3098
        %v3131 = vpack.c.b16 %v3099, %v3099
        %v3132 = vpack.c.b16 %v3100, %v3100
        %v3133 = vpack.c.b16 %v3101, %v3101
        %v3134 = vpack.c.b16 %v3102, %v3102
        %v3135 = vpack.c.b16 %v3103, %v3103
        %v3136 = vpack.c.b16 %v3104, %v3104
        %v3137 = vpack.c.b16 %v3105, %v3105
        %v3138 = vpack.c.b16 %v3106, %v3106
        %v3139 = vpack.c.b16 %v3107, %v3107
        %v3140 = vpack.c.b16 %v3108, %v3108
        %vm3141 = vsmask.f32 4368
        %vm3142 = vmor %vm440, %vm3141
        %v3144 = vshrl.u32 %v3109, 16
        %v3146 = vrot.slane %v3144, 7
        %v3147 = vshll.u32 %v3109, 16
        %v3149 = vor.u32 %v3146, %v3147
        %v3150 = vrot.slane %v3146, 4
        %v3152 = vshrl.u32 %v3110, 16
        %v3154 = vrot.slane %v3152, 7
        %v3155 = vshll.u32 %v3110, 16
        %v3157 = vor.u32 %v3154, %v3155
        %v3158 = vsel %vm3142, %v3150, %v3157
        %v3159 = vrot.slane %v3154, 4
        %v3161 = vshrl.u32 %v3111, 16
        %v3163 = vrot.slane %v3161, 7
        %v3164 = vshll.u32 %v3111, 16
        %v3166 = vor.u32 %v3163, %v3164
        %v3167 = vrot.slane %v3163, 4
        %v3169 = vshrl.u32 %v3112, 16
        %v3171 = vrot.slane %v3169, 7
        %v3172 = vshll.u32 %v3112, 16
        %v3174 = vor.u32 %v3171, %v3172
        %v3175 = vsel %vm3142, %v3167, %v3174
        %v3176 = vrot.slane %v3171, 4
        %v3178 = vshrl.u32 %v3113, 16
        %v3180 = vrot.slane %v3178, 7
        %v3181 = vshll.u32 %v3113, 16
        %v3183 = vor.u32 %v3180, %v3181
        %v3184 = vrot.slane %v3180, 4
        %v3186 = vshrl.u32 %v3114, 16
        %v3188 = vrot.slane %v3186, 7
        %v3189 = vshll.u32 %v3114, 16
        %v3191 = vor.u32 %v3188, %v3189
        %v3192 = vsel %vm3142, %v3184, %v3191
        %v3193 = vrot.slane %v3188, 4
        %v3195 = vshrl.u32 %v3115, 16
        %v3197 = vrot.slane %v3195, 7
        %v3198 = vshll.u32 %v3115, 16
        %v3200 = vor.u32 %v3197, %v3198
        %v3201 = vrot.slane %v3197, 4
        %v3203 = vshrl.u32 %v3116, 16
        %v3205 = vrot.slane %v3203, 7
        %v3206 = vshll.u32 %v3116, 16
        %v3208 = vor.u32 %v3205, %v3206
        %v3209 = vsel %vm3142, %v3201, %v3208
        %v3210 = vrot.slane %v3205, 4
        %v3212 = vshrl.u32 %v3117, 16
        %v3214 = vrot.slane %v3212, 7
        %v3215 = vshll.u32 %v3117, 16
        %v3217 = vor.u32 %v3214, %v3215
        %v3218 = vrot.slane %v3214, 4
        %v3220 = vshrl.u32 %v3118, 16
        %v3222 = vrot.slane %v3220, 7
        %v3223 = vshll.u32 %v3118, 16
        %v3225 = vor.u32 %v3222, %v3223
        %v3226 = vsel %vm3142, %v3218, %v3225
        %v3227 = vrot.slane %v3222, 4
        %v3229 = vshrl.u32 %v3119, 16
        %v3231 = vrot.slane %v3229, 7
        %v3232 = vshll.u32 %v3119, 16
        %v3234 = vor.u32 %v3231, %v3232
        %v3235 = vrot.slane %v3231, 4
        %v3237 = vshrl.u32 %v3120, 16
        %v3239 = vrot.slane %v3237, 7
        %v3240 = vshll.u32 %v3120, 16
        %v3242 = vor.u32 %v3239, %v3240
        %v3243 = vsel %vm3142, %v3235, %v3242
        %v3244 = vrot.slane %v3239, 4
        %v3246 = vshrl.u32 %v3121, 16
        %v3248 = vrot.slane %v3246, 7
        %v3249 = vshll.u32 %v3121, 16
        %v3251 = vor.u32 %v3248, %v3249
        %v3252 = vrot.slane %v3248, 4
        %v3254 = vshrl.u32 %v3122, 16
        %v3256 = vrot.slane %v3254, 7
        %v3257 = vshll.u32 %v3122, 16
        %v3259 = vor.u32 %v3256, %v3257
        %v3260 = vsel %vm3142, %v3252, %v3259
        %v3261 = vrot.slane %v3256, 4
        %v3263 = vshrl.u32 %v3123, 16
        %v3265 = vrot.slane %v3263, 7
        %v3266 = vshll.u32 %v3123, 16
        %v3268 = vor.u32 %v3265, %v3266
        %v3269 = vrot.slane %v3265, 4
        %v3271 = vshrl.u32 %v3124, 16
        %v3273 = vrot.slane %v3271, 7
        %v3274 = vshll.u32 %v3124, 16
        %v3276 = vor.u32 %v3273, %v3274
        %v3277 = vsel %vm3142, %v3269, %v3276
        %v3278 = vrot.slane %v3273, 4
        %v3280 = vshrl.u32 %v3125, 16
        %v3282 = vrot.slane %v3280, 7
        %v3283 = vshll.u32 %v3125, 16
        %v3285 = vor.u32 %v3282, %v3283
        %v3286 = vrot.slane %v3282, 4
        %v3288 = vshrl.u32 %v3126, 16
        %v3290 = vrot.slane %v3288, 7
        %v3291 = vshll.u32 %v3126, 16
        %v3293 = vor.u32 %v3290, %v3291
        %v3294 = vsel %vm3142, %v3286, %v3293
        %v3295 = vrot.slane %v3290, 4
        %v3297 = vshrl.u32 %v3127, 16
        %v3299 = vrot.slane %v3297, 7
        %v3300 = vshll.u32 %v3127, 16
        %v3302 = vor.u32 %v3299, %v3300
        %v3303 = vrot.slane %v3299, 4
        %v3305 = vshrl.u32 %v3128, 16
        %v3307 = vrot.slane %v3305, 7
        %v3308 = vshll.u32 %v3128, 16
        %v3310 = vor.u32 %v3307, %v3308
        %v3311 = vsel %vm3142, %v3303, %v3310
        %v3312 = vrot.slane %v3307, 4
        %v3314 = vshrl.u32 %v3129, 16
        %v3316 = vrot.slane %v3314, 7
        %v3317 = vshll.u32 %v3129, 16
        %v3319 = vor.u32 %v3316, %v3317
        %v3320 = vrot.slane %v3316, 4
        %v3322 = vshrl.u32 %v3130, 16
        %v3324 = vrot.slane %v3322, 7
        %v3325 = vshll.u32 %v3130, 16
        %v3327 = vor.u32 %v3324, %v3325
        %v3328 = vsel %vm3142, %v3320, %v3327
        %v3329 = vrot.slane %v3324, 4
        %v3331 = vshrl.u32 %v3131, 16
        %v3333 = vrot.slane %v3331, 7
        %v3334 = vshll.u32 %v3131, 16
        %v3336 = vor.u32 %v3333, %v3334
        %v3337 = vrot.slane %v3333, 4
        %v3339 = vshrl.u32 %v3132, 16
        %v3341 = vrot.slane %v3339, 7
        %v3342 = vshll.u32 %v3132, 16
        %v3344 = vor.u32 %v3341, %v3342
        %v3345 = vsel %vm3142, %v3337, %v3344
        %v3346 = vrot.slane %v3341, 4
        %v3348 = vshrl.u32 %v3133, 16
        %v3350 = vrot.slane %v3348, 7
        %v3351 = vshll.u32 %v3133, 16
        %v3353 = vor.u32 %v3350, %v3351
        %v3354 = vrot.slane %v3350, 4
        %v3356 = vshrl.u32 %v3134, 16
        %v3358 = vrot.slane %v3356, 7
        %v3359 = vshll.u32 %v3134, 16
        %v3361 = vor.u32 %v3358, %v3359
        %v3362 = vsel %vm3142, %v3354, %v3361
        %v3363 = vrot.slane %v3358, 4
        %v3365 = vshrl.u32 %v3135, 16
        %v3367 = vrot.slane %v3365, 7
        %v3368 = vshll.u32 %v3135, 16
        %v3370 = vor.u32 %v3367, %v3368
        %v3371 = vrot.slane %v3367, 4
        %v3373 = vshrl.u32 %v3136, 16
        %v3375 = vrot.slane %v3373, 7
        %v3376 = vshll.u32 %v3136, 16
        %v3378 = vor.u32 %v3375, %v3376
        %v3379 = vsel %vm3142, %v3371, %v3378
        %v3380 = vrot.slane %v3375, 4
        %v3382 = vshrl.u32 %v3137, 16
        %v3384 = vrot.slane %v3382, 7
        %v3385 = vshll.u32 %v3137, 16
        %v3387 = vor.u32 %v3384, %v3385
        %v3388 = vrot.slane %v3384, 4
        %v3390 = vshrl.u32 %v3138, 16
        %v3392 = vrot.slane %v3390, 7
        %v3393 = vshll.u32 %v3138, 16
        %v3395 = vor.u32 %v3392, %v3393
        %v3396 = vsel %vm3142, %v3388, %v3395
        %v3397 = vrot.slane %v3392, 4
        %v3399 = vshrl.u32 %v3139, 16
        %v3401 = vrot.slane %v3399, 7
        %v3402 = vshll.u32 %v3139, 16
        %v3404 = vor.u32 %v3401, %v3402
        %v3405 = vrot.slane %v3401, 4
        %v3407 = vshrl.u32 %v3140, 16
        %v3409 = vrot.slane %v3407, 7
        %v3410 = vshll.u32 %v3140, 16
        %v3412 = vor.u32 %v3409, %v3410
        %v3413 = vsel %vm3142, %v3405, %v3412
        %v3414 = vrot.slane %v3409, 4
        %s3463 = scalar_lea.vmem [#allocation3], 12
        %vm3464 = vcmask 519168
        %vm3465 = vmand %vm3464, %vm496
        %v3466 = vld [vmem:[%s3463] sm:$0xf]
        %v3467 = vsel %vm3465, %v3149, %v3466
        %3468 = vst [vmem:[%s3463] sm:$0xf] %v3467
        %3469 = vst.msk [vmem:[%s3463 + $0x4] sm:$0xf] %vm431, %v3158
        %v3470 = vld [vmem:[%s3463 + $0x8] sm:$0x1]
        %v3471 = vsel %vm441, %v3159, %v3470
        %3472 = vst [vmem:[%s3463 + $0x8] sm:$0x1] %v3471
        %v3473 = vld [vmem:[%s3463 + $0xc] sm:$0xf]
        %v3474 = vsel %vm3465, %v3166, %v3473
        %3475 = vst [vmem:[%s3463 + $0xc] sm:$0xf] %v3474
        %3476 = vst.msk [vmem:[%s3463 + $0x10] sm:$0xf] %vm431, %v3175
        %v3477 = vld [vmem:[%s3463 + $0x14] sm:$0x1]
        %v3478 = vsel %vm441, %v3176, %v3477
        %3479 = vst [vmem:[%s3463 + $0x14] sm:$0x1] %v3478
        %v3480 = vld [vmem:[%s3463 + $0x18] sm:$0xf]
        %v3481 = vsel %vm3465, %v3183, %v3480
        %3482 = vst [vmem:[%s3463 + $0x18] sm:$0xf] %v3481
        %3483 = vst.msk [vmem:[%s3463 + $0x1c] sm:$0xf] %vm431, %v3192
        %v3484 = vld [vmem:[%s3463 + $0x20] sm:$0x1]
        %v3485 = vsel %vm441, %v3193, %v3484
        %3486 = vst [vmem:[%s3463 + $0x20] sm:$0x1] %v3485
        %v3487 = vld [vmem:[%s3463 + $0x24] sm:$0xf]
        %v3488 = vsel %vm3465, %v3200, %v3487
        %3489 = vst [vmem:[%s3463 + $0x24] sm:$0xf] %v3488
        %3490 = vst.msk [vmem:[%s3463 + $0x28] sm:$0xf] %vm431, %v3209
        %v3491 = vld [vmem:[%s3463 + $0x2c] sm:$0x1]
        %v3492 = vsel %vm441, %v3210, %v3491
        %3493 = vst [vmem:[%s3463 + $0x2c] sm:$0x1] %v3492
        %v3494 = vld [vmem:[%s3463 + $0x30] sm:$0xf]
        %v3495 = vsel %vm3465, %v3217, %v3494
        %3496 = vst [vmem:[%s3463 + $0x30] sm:$0xf] %v3495
        %3497 = vst.msk [vmem:[%s3463 + $0x34] sm:$0xf] %vm431, %v3226
        %v3498 = vld [vmem:[%s3463 + $0x38] sm:$0x1]
        %v3499 = vsel %vm441, %v3227, %v3498
        %3500 = vst [vmem:[%s3463 + $0x38] sm:$0x1] %v3499
        %v3501 = vld [vmem:[%s3463 + $0x3c] sm:$0xf]
        %v3502 = vsel %vm3465, %v3234, %v3501
        %3503 = vst [vmem:[%s3463 + $0x3c] sm:$0xf] %v3502
        %3504 = vst.msk [vmem:[%s3463 + $0x40] sm:$0xf] %vm431, %v3243
        %v3505 = vld [vmem:[%s3463 + $0x44] sm:$0x1]
        %v3506 = vsel %vm441, %v3244, %v3505
        %3507 = vst [vmem:[%s3463 + $0x44] sm:$0x1] %v3506
        %v3508 = vld [vmem:[%s3463 + $0x48] sm:$0xf]
        %v3509 = vsel %vm3465, %v3251, %v3508
        %3510 = vst [vmem:[%s3463 + $0x48] sm:$0xf] %v3509
        %3511 = vst.msk [vmem:[%s3463 + $0x4c] sm:$0xf] %vm431, %v3260
        %v3512 = vld [vmem:[%s3463 + $0x50] sm:$0x1]
        %v3513 = vsel %vm441, %v3261, %v3512
        %3514 = vst [vmem:[%s3463 + $0x50] sm:$0x1] %v3513
        %v3515 = vld [vmem:[%s3463 + $0x54] sm:$0xf]
        %v3516 = vsel %vm3465, %v3268, %v3515
        %3517 = vst [vmem:[%s3463 + $0x54] sm:$0xf] %v3516
        %3518 = vst.msk [vmem:[%s3463 + $0x58] sm:$0xf] %vm431, %v3277
        %v3519 = vld [vmem:[%s3463 + $0x5c] sm:$0x1]
        %v3520 = vsel %vm441, %v3278, %v3519
        %3521 = vst [vmem:[%s3463 + $0x5c] sm:$0x1] %v3520
        %v3522 = vld [vmem:[%s3463 + $0x60] sm:$0xf]
        %v3523 = vsel %vm3465, %v3285, %v3522
        %3524 = vst [vmem:[%s3463 + $0x60] sm:$0xf] %v3523
        %3525 = vst.msk [vmem:[%s3463 + $0x64] sm:$0xf] %vm431, %v3294
        %v3526 = vld [vmem:[%s3463 + $0x68] sm:$0x1]
        %v3527 = vsel %vm441, %v3295, %v3526
        %3528 = vst [vmem:[%s3463 + $0x68] sm:$0x1] %v3527
        %v3529 = vld [vmem:[%s3463 + $0x6c] sm:$0xf]
        %v3530 = vsel %vm3465, %v3302, %v3529
        %3531 = vst [vmem:[%s3463 + $0x6c] sm:$0xf] %v3530
        %3532 = vst.msk [vmem:[%s3463 + $0x70] sm:$0xf] %vm431, %v3311
        %v3533 = vld [vmem:[%s3463 + $0x74] sm:$0x1]
        %v3534 = vsel %vm441, %v3312, %v3533
        %3535 = vst [vmem:[%s3463 + $0x74] sm:$0x1] %v3534
        %v3536 = vld [vmem:[%s3463 + $0x78] sm:$0xf]
        %v3537 = vsel %vm3465, %v3319, %v3536
        %3538 = vst [vmem:[%s3463 + $0x78] sm:$0xf] %v3537
        %3539 = vst.msk [vmem:[%s3463 + $0x7c] sm:$0xf] %vm431, %v3328
        %v3540 = vld [vmem:[%s3463 + $0x80] sm:$0x1]
        %v3541 = vsel %vm441, %v3329, %v3540
        %3542 = vst [vmem:[%s3463 + $0x80] sm:$0x1] %v3541
        %v3543 = vld [vmem:[%s3463 + $0x84] sm:$0xf]
        %v3544 = vsel %vm3465, %v3336, %v3543
        %3545 = vst [vmem:[%s3463 + $0x84] sm:$0xf] %v3544
        %3546 = vst.msk [vmem:[%s3463 + $0x88] sm:$0xf] %vm431, %v3345
        %v3547 = vld [vmem:[%s3463 + $0x8c] sm:$0x1]
        %v3548 = vsel %vm441, %v3346, %v3547
        %3549 = vst [vmem:[%s3463 + $0x8c] sm:$0x1] %v3548
        %v3550 = vld [vmem:[%s3463 + $0x90] sm:$0xf]
        %v3551 = vsel %vm3465, %v3353, %v3550
        %3552 = vst [vmem:[%s3463 + $0x90] sm:$0xf] %v3551
        %3553 = vst.msk [vmem:[%s3463 + $0x94] sm:$0xf] %vm431, %v3362
        %v3554 = vld [vmem:[%s3463 + $0x98] sm:$0x1]
        %v3555 = vsel %vm441, %v3363, %v3554
        %3556 = vst [vmem:[%s3463 + $0x98] sm:$0x1] %v3555
        %v3557 = vld [vmem:[%s3463 + $0x9c] sm:$0xf]
        %v3558 = vsel %vm3465, %v3370, %v3557
        %3559 = vst [vmem:[%s3463 + $0x9c] sm:$0xf] %v3558
        %3560 = vst.msk [vmem:[%s3463 + $0xa0] sm:$0xf] %vm431, %v3379
        %v3561 = vld [vmem:[%s3463 + $0xa4] sm:$0x1]
        %v3562 = vsel %vm441, %v3380, %v3561
        %3563 = vst [vmem:[%s3463 + $0xa4] sm:$0x1] %v3562
        %v3564 = vld [vmem:[%s3463 + $0xa8] sm:$0xf]
        %v3565 = vsel %vm3465, %v3387, %v3564
        %3566 = vst [vmem:[%s3463 + $0xa8] sm:$0xf] %v3565
        %3567 = vst.msk [vmem:[%s3463 + $0xac] sm:$0xf] %vm431, %v3396
        %v3568 = vld [vmem:[%s3463 + $0xb0] sm:$0x1]
        %v3569 = vsel %vm441, %v3397, %v3568
        %3570 = vst [vmem:[%s3463 + $0xb0] sm:$0x1] %v3569
        %v3571 = vld [vmem:[%s3463 + $0xb4] sm:$0xf]
        %v3572 = vsel %vm3465, %v3404, %v3571
        %3573 = vst [vmem:[%s3463 + $0xb4] sm:$0xf] %v3572
        %3574 = vst.msk [vmem:[%s3463 + $0xb8] sm:$0xf] %vm431, %v3413
        %v3575 = vld [vmem:[%s3463 + $0xbc] sm:$0x1]
        %v3576 = vsel %vm441, %v3414, %v3575
        %3577 = vst [vmem:[%s3463 + $0xbc] sm:$0x1] %v3576
        %v3578 = vld [vmem:[#allocation3] sm:$0xf]
        %v3579 = vld [vmem:[#allocation3 + $0x4] sm:$0xf]
        %v3580 = vld [vmem:[#allocation3 + $0xc] sm:$0xf]
        %v3581 = vld [vmem:[#allocation3 + $0x10] sm:$0xf]
        %v3582 = vld [vmem:[#allocation3 + $0x18] sm:$0xf]
        %v3583 = vld [vmem:[#allocation3 + $0x1c] sm:$0xf]
        %v3584 = vld [vmem:[#allocation3 + $0x24] sm:$0xf]
        %v3585 = vld [vmem:[#allocation3 + $0x28] sm:$0xf]
        %v3586 = vld [vmem:[#allocation3 + $0x30] sm:$0xf]
        %v3587 = vld [vmem:[#allocation3 + $0x34] sm:$0xf]
        %v3588 = vld [vmem:[#allocation3 + $0x3c] sm:$0xf]
        %v3589 = vld [vmem:[#allocation3 + $0x40] sm:$0xf]
        %v3590 = vld [vmem:[#allocation3 + $0x48] sm:$0xf]
        %v3591 = vld [vmem:[#allocation3 + $0x4c] sm:$0xf]
        %v3592 = vld [vmem:[#allocation3 + $0x54] sm:$0xf]
        %v3593 = vld [vmem:[#allocation3 + $0x58] sm:$0xf]
        %v3594 = vld [vmem:[#allocation3 + $0x60] sm:$0xf]
        %v3595 = vld [vmem:[#allocation3 + $0x64] sm:$0xf]
        %v3596 = vld [vmem:[#allocation3 + $0x6c] sm:$0xf]
        %v3597 = vld [vmem:[#allocation3 + $0x70] sm:$0xf]
        %v3598 = vld [vmem:[#allocation3 + $0x78] sm:$0xf]
        %v3599 = vld [vmem:[#allocation3 + $0x7c] sm:$0xf]
        %v3600 = vld [vmem:[#allocation3 + $0x84] sm:$0xf]
        %v3601 = vld [vmem:[#allocation3 + $0x88] sm:$0xf]
        %v3602 = vld [vmem:[#allocation3 + $0x90] sm:$0xf]
        %v3603 = vld [vmem:[#allocation3 + $0x94] sm:$0xf]
        %v3604 = vld [vmem:[#allocation3 + $0x9c] sm:$0xf]
        %v3605 = vld [vmem:[#allocation3 + $0xa0] sm:$0xf]
        %v3606 = vld [vmem:[#allocation3 + $0xa8] sm:$0xf]
        %v3607 = vld [vmem:[#allocation3 + $0xac] sm:$0xf]
        %v3608 = vld [vmem:[#allocation3 + $0xb4] sm:$0xf]
        %v3609 = vld [vmem:[#allocation3 + $0xb8] sm:$0xf]
        %v3610 = vld [vmem:[#allocation3 + $0x8] sm:$0x1]
        %v3611 = vld [vmem:[#allocation3 + $0x14] sm:$0x1]
        %v3612 = vld [vmem:[#allocation3 + $0x20] sm:$0x1]
        %v3613 = vld [vmem:[#allocation3 + $0x2c] sm:$0x1]
        %v3614 = vld [vmem:[#allocation3 + $0x38] sm:$0x1]
        %v3615 = vld [vmem:[#allocation3 + $0x44] sm:$0x1]
        %v3616 = vld [vmem:[#allocation3 + $0x50] sm:$0x1]
        %v3617 = vld [vmem:[#allocation3 + $0x5c] sm:$0x1]
        %v3618 = vld [vmem:[#allocation3 + $0x68] sm:$0x1]
        %v3619 = vld [vmem:[#allocation3 + $0x74] sm:$0x1]
        %v3620 = vld [vmem:[#allocation3 + $0x80] sm:$0x1]
        %v3621 = vld [vmem:[#allocation3 + $0x8c] sm:$0x1]
        %v3622 = vld [vmem:[#allocation3 + $0x98] sm:$0x1]
        %v3623 = vld [vmem:[#allocation3 + $0xa4] sm:$0x1]
        %v3624 = vld [vmem:[#allocation3 + $0xb0] sm:$0x1]
        %v3625 = vld [vmem:[#allocation3 + $0xbc] sm:$0x1]
        %v3626 = vld [vmem:[#allocation3] sm:$0xe]
        %v3627 = vld [vmem:[#allocation3 + $0xc] sm:$0xe]
        %v3628 = vld [vmem:[#allocation3 + $0x18] sm:$0xe]
        %v3629 = vld [vmem:[#allocation3 + $0x24] sm:$0xe]
        %v3630 = vld [vmem:[#allocation3 + $0x30] sm:$0xe]
        %v3631 = vld [vmem:[#allocation3 + $0x3c] sm:$0xe]
        %v3632 = vld [vmem:[#allocation3 + $0x48] sm:$0xe]
        %v3633 = vld [vmem:[#allocation3 + $0x54] sm:$0xe]
        %v3634 = vld [vmem:[#allocation3 + $0x60] sm:$0xe]
        %v3635 = vld [vmem:[#allocation3 + $0x6c] sm:$0xe]
        %v3636 = vld [vmem:[#allocation3 + $0x78] sm:$0xe]
        %v3637 = vld [vmem:[#allocation3 + $0x84] sm:$0xe]
        %v3638 = vld [vmem:[#allocation3 + $0x90] sm:$0xe]
        %v3639 = vld [vmem:[#allocation3 + $0x9c] sm:$0xe]
        %v3640 = vld [vmem:[#allocation3 + $0xa8] sm:$0xe]
        %v3641 = vld [vmem:[#allocation3 + $0xb4] sm:$0xe]
        %v3642 = vld [vmem:[%s3463] sm:$0xf]
        %v3643 = vld [vmem:[%s3463 + $0x4] sm:$0xf]
        %v3644 = vld [vmem:[%s3463 + $0xc] sm:$0xf]
        %v3645 = vld [vmem:[%s3463 + $0x10] sm:$0xf]
        %v3646 = vld [vmem:[%s3463 + $0x18] sm:$0xf]
        %v3647 = vld [vmem:[%s3463 + $0x1c] sm:$0xf]
        %v3648 = vld [vmem:[%s3463 + $0x24] sm:$0xf]
        %v3649 = vld [vmem:[%s3463 + $0x28] sm:$0xf]
        %v3650 = vld [vmem:[%s3463 + $0x30] sm:$0xf]
        %v3651 = vld [vmem:[%s3463 + $0x34] sm:$0xf]
        %v3652 = vld [vmem:[%s3463 + $0x3c] sm:$0xf]
        %v3653 = vld [vmem:[%s3463 + $0x40] sm:$0xf]
        %v3654 = vld [vmem:[%s3463 + $0x48] sm:$0xf]
        %v3655 = vld [vmem:[%s3463 + $0x4c] sm:$0xf]
        %v3656 = vld [vmem:[%s3463 + $0x54] sm:$0xf]
        %v3657 = vld [vmem:[%s3463 + $0x58] sm:$0xf]
        %v3658 = vld [vmem:[%s3463 + $0x60] sm:$0xf]
        %v3659 = vld [vmem:[%s3463 + $0x64] sm:$0xf]
        %v3660 = vld [vmem:[%s3463 + $0x6c] sm:$0xf]
        %v3661 = vld [vmem:[%s3463 + $0x70] sm:$0xf]
        %v3662 = vld [vmem:[%s3463 + $0x78] sm:$0xf]
        %v3663 = vld [vmem:[%s3463 + $0x7c] sm:$0xf]
        %v3664 = vld [vmem:[%s3463 + $0x84] sm:$0xf]
        %v3665 = vld [vmem:[%s3463 + $0x88] sm:$0xf]
        %v3666 = vld [vmem:[%s3463 + $0x90] sm:$0xf]
        %v3667 = vld [vmem:[%s3463 + $0x94] sm:$0xf]
        %v3668 = vld [vmem:[%s3463 + $0x9c] sm:$0xf]
        %v3669 = vld [vmem:[%s3463 + $0xa0] sm:$0xf]
        %v3670 = vld [vmem:[%s3463 + $0xa8] sm:$0xf]
        %v3671 = vld [vmem:[%s3463 + $0xac] sm:$0xf]
        %v3672 = vld [vmem:[%s3463 + $0xb4] sm:$0xf]
        %v3673 = vld [vmem:[%s3463 + $0xb8] sm:$0xf]
        %v3674 = vld [vmem:[%s3463 + $0x8] sm:$0x1]
        %v3675 = vld [vmem:[%s3463 + $0x14] sm:$0x1]
        %v3676 = vld [vmem:[%s3463 + $0x20] sm:$0x1]
        %v3677 = vld [vmem:[%s3463 + $0x2c] sm:$0x1]
        %v3678 = vld [vmem:[%s3463 + $0x38] sm:$0x1]
        %v3679 = vld [vmem:[%s3463 + $0x44] sm:$0x1]
        %v3680 = vld [vmem:[%s3463 + $0x50] sm:$0x1]
        %v3681 = vld [vmem:[%s3463 + $0x5c] sm:$0x1]
        %v3682 = vld [vmem:[%s3463 + $0x68] sm:$0x1]
        %v3683 = vld [vmem:[%s3463 + $0x74] sm:$0x1]
        %v3684 = vld [vmem:[%s3463 + $0x80] sm:$0x1]
        %v3685 = vld [vmem:[%s3463 + $0x8c] sm:$0x1]
        %v3686 = vld [vmem:[%s3463 + $0x98] sm:$0x1]
        %v3687 = vld [vmem:[%s3463 + $0xa4] sm:$0x1]
        %v3688 = vld [vmem:[%s3463 + $0xb0] sm:$0x1]
        %v3689 = vld [vmem:[%s3463 + $0xbc] sm:$0x1]
        %v3690 = vld [vmem:[%s3463] sm:$0xe]
        %v3691 = vld [vmem:[%s3463 + $0xc] sm:$0xe]
        %v3692 = vld [vmem:[%s3463 + $0x18] sm:$0xe]
        %v3693 = vld [vmem:[%s3463 + $0x24] sm:$0xe]
        %v3694 = vld [vmem:[%s3463 + $0x30] sm:$0xe]
        %v3695 = vld [vmem:[%s3463 + $0x3c] sm:$0xe]
        %v3696 = vld [vmem:[%s3463 + $0x48] sm:$0xe]
        %v3697 = vld [vmem:[%s3463 + $0x54] sm:$0xe]
        %v3698 = vld [vmem:[%s3463 + $0x60] sm:$0xe]
        %v3699 = vld [vmem:[%s3463 + $0x6c] sm:$0xe]
        %v3700 = vld [vmem:[%s3463 + $0x78] sm:$0xe]
        %v3701 = vld [vmem:[%s3463 + $0x84] sm:$0xe]
        %v3702 = vld [vmem:[%s3463 + $0x90] sm:$0xe]
        %v3703 = vld [vmem:[%s3463 + $0x9c] sm:$0xe]
        %v3704 = vld [vmem:[%s3463 + $0xa8] sm:$0xe]
        %v3705 = vld [vmem:[%s3463 + $0xb4] sm:$0xe]
        %s3706 = scalar_lea.vmem [#allocation3], 24
        %v3707 = vld [vmem:[%s3706] sm:$0xf]
        %v3708 = vld [vmem:[%s3706 + $0x4] sm:$0xf]
        %v3709 = vld [vmem:[%s3706 + $0xc] sm:$0xf]
        %v3710 = vld [vmem:[%s3706 + $0x10] sm:$0xf]
        %v3711 = vld [vmem:[%s3706 + $0x18] sm:$0xf]
        %v3712 = vld [vmem:[%s3706 + $0x1c] sm:$0xf]
        %v3713 = vld [vmem:[%s3706 + $0x24] sm:$0xf]
        %v3714 = vld [vmem:[%s3706 + $0x28] sm:$0xf]
        %v3715 = vld [vmem:[%s3706 + $0x30] sm:$0xf]
        %v3716 = vld [vmem:[%s3706 + $0x34] sm:$0xf]
        %v3717 = vld [vmem:[%s3706 + $0x3c] sm:$0xf]
        %v3718 = vld [vmem:[%s3706 + $0x40] sm:$0xf]
        %v3719 = vld [vmem:[%s3706 + $0x48] sm:$0xf]
        %v3720 = vld [vmem:[%s3706 + $0x4c] sm:$0xf]
        %v3721 = vld [vmem:[%s3706 + $0x54] sm:$0xf]
        %v3722 = vld [vmem:[%s3706 + $0x58] sm:$0xf]
        %v3723 = vld [vmem:[%s3706 + $0x60] sm:$0xf]
        %v3724 = vld [vmem:[%s3706 + $0x64] sm:$0xf]
        %v3725 = vld [vmem:[%s3706 + $0x6c] sm:$0xf]
        %v3726 = vld [vmem:[%s3706 + $0x70] sm:$0xf]
        %v3727 = vld [vmem:[%s3706 + $0x78] sm:$0xf]
        %v3728 = vld [vmem:[%s3706 + $0x7c] sm:$0xf]
        %v3729 = vld [vmem:[%s3706 + $0x84] sm:$0xf]
        %v3730 = vld [vmem:[%s3706 + $0x88] sm:$0xf]
        %v3731 = vld [vmem:[%s3706 + $0x90] sm:$0xf]
        %v3732 = vld [vmem:[%s3706 + $0x94] sm:$0xf]
        %v3733 = vld [vmem:[%s3706 + $0x9c] sm:$0xf]
        %v3734 = vld [vmem:[%s3706 + $0xa0] sm:$0xf]
        %v3735 = vld [vmem:[%s3706 + $0xa8] sm:$0xf]
        %v3736 = vld [vmem:[%s3706 + $0xac] sm:$0xf]
        %v3737 = vld [vmem:[%s3706 + $0xb4] sm:$0xf]
        %v3738 = vld [vmem:[%s3706 + $0xb8] sm:$0xf]
        %v3739 = vld [vmem:[%s3706 + $0x8] sm:$0x1]
        %v3740 = vld [vmem:[%s3706 + $0x14] sm:$0x1]
        %v3741 = vld [vmem:[%s3706 + $0x20] sm:$0x1]
        %v3742 = vld [vmem:[%s3706 + $0x2c] sm:$0x1]
        %v3743 = vld [vmem:[%s3706 + $0x38] sm:$0x1]
        %v3744 = vld [vmem:[%s3706 + $0x44] sm:$0x1]
        %v3745 = vld [vmem:[%s3706 + $0x50] sm:$0x1]
        %v3746 = vld [vmem:[%s3706 + $0x5c] sm:$0x1]
        %v3747 = vld [vmem:[%s3706 + $0x68] sm:$0x1]
        %v3748 = vld [vmem:[%s3706 + $0x74] sm:$0x1]
        %v3749 = vld [vmem:[%s3706 + $0x80] sm:$0x1]
        %v3750 = vld [vmem:[%s3706 + $0x8c] sm:$0x1]
        %v3751 = vld [vmem:[%s3706 + $0x98] sm:$0x1]
        %v3752 = vld [vmem:[%s3706 + $0xa4] sm:$0x1]
        %v3753 = vld [vmem:[%s3706 + $0xb0] sm:$0x1]
        %v3754 = vld [vmem:[%s3706 + $0xbc] sm:$0x1]
        %v3755 = vld [vmem:[%s3706] sm:$0xe]
        %v3756 = vld [vmem:[%s3706 + $0xc] sm:$0xe]
        %v3757 = vld [vmem:[%s3706 + $0x18] sm:$0xe]
        %v3758 = vld [vmem:[%s3706 + $0x24] sm:$0xe]
        %v3759 = vld [vmem:[%s3706 + $0x30] sm:$0xe]
        %v3760 = vld [vmem:[%s3706 + $0x3c] sm:$0xe]
        %v3761 = vld [vmem:[%s3706 + $0x48] sm:$0xe]
        %v3762 = vld [vmem:[%s3706 + $0x54] sm:$0xe]
        %v3763 = vld [vmem:[%s3706 + $0x60] sm:$0xe]
        %v3764 = vld [vmem:[%s3706 + $0x6c] sm:$0xe]
        %v3765 = vld [vmem:[%s3706 + $0x78] sm:$0xe]
        %v3766 = vld [vmem:[%s3706 + $0x84] sm:$0xe]
        %v3767 = vld [vmem:[%s3706 + $0x90] sm:$0xe]
        %v3768 = vld [vmem:[%s3706 + $0x9c] sm:$0xe]
        %v3769 = vld [vmem:[%s3706 + $0xa8] sm:$0xe]
        %v3770 = vld [vmem:[%s3706 + $0xb4] sm:$0xe]
        %v3803 = vunpack.c.l.b16 %v3578
        %v3804 = vunpack.c.l.b16 %v3579
        %v3805 = vunpack.c.l.b16 %v3580
        %v3806 = vunpack.c.l.b16 %v3581
        %v3807 = vunpack.c.l.b16 %v3582
        %v3808 = vunpack.c.l.b16 %v3583
        %v3809 = vunpack.c.l.b16 %v3584
        %v3810 = vunpack.c.l.b16 %v3585
        %v3811 = vunpack.c.l.b16 %v3586
        %v3812 = vunpack.c.l.b16 %v3587
        %v3813 = vunpack.c.l.b16 %v3588
        %v3814 = vunpack.c.l.b16 %v3589
        %v3815 = vunpack.c.l.b16 %v3590
        %v3816 = vunpack.c.l.b16 %v3591
        %v3817 = vunpack.c.l.b16 %v3592
        %v3818 = vunpack.c.l.b16 %v3593
        %v3819 = vunpack.c.l.b16 %v3594
        %v3820 = vunpack.c.l.b16 %v3595
        %v3821 = vunpack.c.l.b16 %v3596
        %v3822 = vunpack.c.l.b16 %v3597
        %v3823 = vunpack.c.l.b16 %v3598
        %v3824 = vunpack.c.l.b16 %v3599
        %v3825 = vunpack.c.l.b16 %v3600
        %v3826 = vunpack.c.l.b16 %v3601
        %v3827 = vunpack.c.l.b16 %v3602
        %v3828 = vunpack.c.l.b16 %v3603
        %v3829 = vunpack.c.l.b16 %v3604
        %v3830 = vunpack.c.l.b16 %v3605
        %v3831 = vunpack.c.l.b16 %v3606
        %v3832 = vunpack.c.l.b16 %v3607
        %v3833 = vunpack.c.l.b16 %v3608
        %v3834 = vunpack.c.l.b16 %v3609
        %v3835 = vpack.c.b16 %v3804, %v3803
        %v3836 = vpack.c.b16 %v3806, %v3805
        %v3837 = vpack.c.b16 %v3808, %v3807
        %v3838 = vpack.c.b16 %v3810, %v3809
        %v3839 = vpack.c.b16 %v3812, %v3811
        %v3840 = vpack.c.b16 %v3814, %v3813
        %v3841 = vpack.c.b16 %v3816, %v3815
        %v3842 = vpack.c.b16 %v3818, %v3817
        %v3843 = vpack.c.b16 %v3820, %v3819
        %v3844 = vpack.c.b16 %v3822, %v3821
        %v3845 = vpack.c.b16 %v3824, %v3823
        %v3846 = vpack.c.b16 %v3826, %v3825
        %v3847 = vpack.c.b16 %v3828, %v3827
        %v3848 = vpack.c.b16 %v3830, %v3829
        %v3849 = vpack.c.b16 %v3832, %v3831
        %v3850 = vpack.c.b16 %v3834, %v3833
        %v3867 = vunpack.c.l.b16 %v3610
        %v3868 = vunpack.c.l.b16 %v3611
        %v3869 = vunpack.c.l.b16 %v3612
        %v3870 = vunpack.c.l.b16 %v3613
        %v3871 = vunpack.c.l.b16 %v3614
        %v3872 = vunpack.c.l.b16 %v3615
        %v3873 = vunpack.c.l.b16 %v3616
        %v3874 = vunpack.c.l.b16 %v3617
        %v3875 = vunpack.c.l.b16 %v3618
        %v3876 = vunpack.c.l.b16 %v3619
        %v3877 = vunpack.c.l.b16 %v3620
        %v3878 = vunpack.c.l.b16 %v3621
        %v3879 = vunpack.c.l.b16 %v3622
        %v3880 = vunpack.c.l.b16 %v3623
        %v3881 = vunpack.c.l.b16 %v3624
        %v3882 = vunpack.c.l.b16 %v3625
        %v3883 = vpack.c.b16 %v3867, %v3867
        %v3884 = vpack.c.b16 %v3868, %v3868
        %v3885 = vpack.c.b16 %v3869, %v3869
        %v3886 = vpack.c.b16 %v3870, %v3870
        %v3887 = vpack.c.b16 %v3871, %v3871
        %v3888 = vpack.c.b16 %v3872, %v3872
        %v3889 = vpack.c.b16 %v3873, %v3873
        %v3890 = vpack.c.b16 %v3874, %v3874
        %v3891 = vpack.c.b16 %v3875, %v3875
        %v3892 = vpack.c.b16 %v3876, %v3876
        %v3893 = vpack.c.b16 %v3877, %v3877
        %v3894 = vpack.c.b16 %v3878, %v3878
        %v3895 = vpack.c.b16 %v3879, %v3879
        %v3896 = vpack.c.b16 %v3880, %v3880
        %v3897 = vpack.c.b16 %v3881, %v3881
        %v3898 = vpack.c.b16 %v3882, %v3882
        %v3900 = vshrl.u32 %v3835, 16
        %v3902 = vshll.u32 %v3835, 16
        %v3904 = vrot.slane %v3902, 1
        %v3905 = vor.u32 %v3900, %v3904
        %v3907 = vshll.u32 %v3883, 16
        %v3909 = vrot.slane %v3907, 1
        %v3910 = vsel %vm874, %v3905, %v3909
        %v3912 = vshrl.u32 %v3836, 16
        %v3914 = vshll.u32 %v3836, 16
        %v3916 = vrot.slane %v3914, 1
        %v3917 = vor.u32 %v3912, %v3916
        %v3919 = vshll.u32 %v3884, 16
        %v3921 = vrot.slane %v3919, 1
        %v3922 = vsel %vm874, %v3917, %v3921
        %v3924 = vshrl.u32 %v3837, 16
        %v3926 = vshll.u32 %v3837, 16
        %v3928 = vrot.slane %v3926, 1
        %v3929 = vor.u32 %v3924, %v3928
        %v3931 = vshll.u32 %v3885, 16
        %v3933 = vrot.slane %v3931, 1
        %v3934 = vsel %vm874, %v3929, %v3933
        %v3936 = vshrl.u32 %v3838, 16
        %v3938 = vshll.u32 %v3838, 16
        %v3940 = vrot.slane %v3938, 1
        %v3941 = vor.u32 %v3936, %v3940
        %v3943 = vshll.u32 %v3886, 16
        %v3945 = vrot.slane %v3943, 1
        %v3946 = vsel %vm874, %v3941, %v3945
        %v3948 = vshrl.u32 %v3839, 16
        %v3950 = vshll.u32 %v3839, 16
        %v3952 = vrot.slane %v3950, 1
        %v3953 = vor.u32 %v3948, %v3952
        %v3955 = vshll.u32 %v3887, 16
        %v3957 = vrot.slane %v3955, 1
        %v3958 = vsel %vm874, %v3953, %v3957
        %v3960 = vshrl.u32 %v3840, 16
        %v3962 = vshll.u32 %v3840, 16
        %v3964 = vrot.slane %v3962, 1
        %v3965 = vor.u32 %v3960, %v3964
        %v3967 = vshll.u32 %v3888, 16
        %v3969 = vrot.slane %v3967, 1
        %v3970 = vsel %vm874, %v3965, %v3969
        %v3972 = vshrl.u32 %v3841, 16
        %v3974 = vshll.u32 %v3841, 16
        %v3976 = vrot.slane %v3974, 1
        %v3977 = vor.u32 %v3972, %v3976
        %v3979 = vshll.u32 %v3889, 16
        %v3981 = vrot.slane %v3979, 1
        %v3982 = vsel %vm874, %v3977, %v3981
        %v3984 = vshrl.u32 %v3842, 16
        %v3986 = vshll.u32 %v3842, 16
        %v3988 = vrot.slane %v3986, 1
        %v3989 = vor.u32 %v3984, %v3988
        %v3991 = vshll.u32 %v3890, 16
        %v3993 = vrot.slane %v3991, 1
        %v3994 = vsel %vm874, %v3989, %v3993
        %v3996 = vshrl.u32 %v3843, 16
        %v3998 = vshll.u32 %v3843, 16
        %v4000 = vrot.slane %v3998, 1
        %v4001 = vor.u32 %v3996, %v4000
        %v4003 = vshll.u32 %v3891, 16
        %v4005 = vrot.slane %v4003, 1
        %v4006 = vsel %vm874, %v4001, %v4005
        %v4008 = vshrl.u32 %v3844, 16
        %v4010 = vshll.u32 %v3844, 16
        %v4012 = vrot.slane %v4010, 1
        %v4013 = vor.u32 %v4008, %v4012
        %v4015 = vshll.u32 %v3892, 16
        %v4017 = vrot.slane %v4015, 1
        %v4018 = vsel %vm874, %v4013, %v4017
        %v4020 = vshrl.u32 %v3845, 16
        %v4022 = vshll.u32 %v3845, 16
        %v4024 = vrot.slane %v4022, 1
        %v4025 = vor.u32 %v4020, %v4024
        %v4027 = vshll.u32 %v3893, 16
        %v4029 = vrot.slane %v4027, 1
        %v4030 = vsel %vm874, %v4025, %v4029
        %v4032 = vshrl.u32 %v3846, 16
        %v4034 = vshll.u32 %v3846, 16
        %v4036 = vrot.slane %v4034, 1
        %v4037 = vor.u32 %v4032, %v4036
        %v4039 = vshll.u32 %v3894, 16
        %v4041 = vrot.slane %v4039, 1
        %v4042 = vsel %vm874, %v4037, %v4041
        %v4044 = vshrl.u32 %v3847, 16
        %v4046 = vshll.u32 %v3847, 16
        %v4048 = vrot.slane %v4046, 1
        %v4049 = vor.u32 %v4044, %v4048
        %v4051 = vshll.u32 %v3895, 16
        %v4053 = vrot.slane %v4051, 1
        %v4054 = vsel %vm874, %v4049, %v4053
        %v4056 = vshrl.u32 %v3848, 16
        %v4058 = vshll.u32 %v3848, 16
        %v4060 = vrot.slane %v4058, 1
        %v4061 = vor.u32 %v4056, %v4060
        %v4063 = vshll.u32 %v3896, 16
        %v4065 = vrot.slane %v4063, 1
        %v4066 = vsel %vm874, %v4061, %v4065
        %v4068 = vshrl.u32 %v3849, 16
        %v4070 = vshll.u32 %v3849, 16
        %v4072 = vrot.slane %v4070, 1
        %v4073 = vor.u32 %v4068, %v4072
        %v4075 = vshll.u32 %v3897, 16
        %v4077 = vrot.slane %v4075, 1
        %v4078 = vsel %vm874, %v4073, %v4077
        %v4080 = vshrl.u32 %v3850, 16
        %v4082 = vshll.u32 %v3850, 16
        %v4084 = vrot.slane %v4082, 1
        %v4085 = vor.u32 %v4080, %v4084
        %v4087 = vshll.u32 %v3898, 16
        %v4089 = vrot.slane %v4087, 1
        %v4090 = vsel %vm874, %v4085, %v4089
        %4091 = vrot.lane.b32.xlu0 %v3910, 64
        %v4092 = vpop.permute.xlu0 %4091
        %4093 = vrot.lane.b32.xlu0 %v3922, 64
        %v4094 = vpop.permute.xlu0 %4093
        %4095 = vrot.lane.b32.xlu0 %v3934, 64
        %v4096 = vpop.permute.xlu0 %4095
        %4097 = vrot.lane.b32.xlu0 %v3946, 64
        %v4098 = vpop.permute.xlu0 %4097
        %4099 = vrot.lane.b32.xlu0 %v3958, 64
        %v4100 = vpop.permute.xlu0 %4099
        %4101 = vrot.lane.b32.xlu0 %v3970, 64
        %v4102 = vpop.permute.xlu0 %4101
        %4103 = vrot.lane.b32.xlu0 %v3982, 64
        %v4104 = vpop.permute.xlu0 %4103
        %4105 = vrot.lane.b32.xlu0 %v3994, 64
        %v4106 = vpop.permute.xlu0 %4105
        %4107 = vrot.lane.b32.xlu0 %v4006, 64
        %v4108 = vpop.permute.xlu0 %4107
        %4109 = vrot.lane.b32.xlu0 %v4018, 64
        %v4110 = vpop.permute.xlu0 %4109
        %4111 = vrot.lane.b32.xlu0 %v4030, 64
        %v4112 = vpop.permute.xlu0 %4111
        %4113 = vrot.lane.b32.xlu0 %v4042, 64
        %v4114 = vpop.permute.xlu0 %4113
        %4115 = vrot.lane.b32.xlu0 %v4054, 64
        %v4116 = vpop.permute.xlu0 %4115
        %4117 = vrot.lane.b32.xlu0 %v4066, 64
        %v4118 = vpop.permute.xlu0 %4117
        %4119 = vrot.lane.b32.xlu0 %v4078, 64
        %v4120 = vpop.permute.xlu0 %4119
        %4121 = vrot.lane.b32.xlu0 %v4090, 64
        %v4122 = vpop.permute.xlu0 %4121
        %v4139 = vunpack.c.l.b16 %v3626
        %v4140 = vunpack.c.l.b16 %v3627
        %v4141 = vunpack.c.l.b16 %v3628
        %v4142 = vunpack.c.l.b16 %v3629
        %v4143 = vunpack.c.l.b16 %v3630
        %v4144 = vunpack.c.l.b16 %v3631
        %v4145 = vunpack.c.l.b16 %v3632
        %v4146 = vunpack.c.l.b16 %v3633
        %v4147 = vunpack.c.l.b16 %v3634
        %v4148 = vunpack.c.l.b16 %v3635
        %v4149 = vunpack.c.l.b16 %v3636
        %v4150 = vunpack.c.l.b16 %v3637
        %v4151 = vunpack.c.l.b16 %v3638
        %v4152 = vunpack.c.l.b16 %v3639
        %v4153 = vunpack.c.l.b16 %v3640
        %v4154 = vunpack.c.l.b16 %v3641
        %v4155 = vpack.c.b16 %v3804, %v4139
        %v4156 = vpack.c.b16 %v3806, %v4140
        %v4157 = vpack.c.b16 %v3808, %v4141
        %v4158 = vpack.c.b16 %v3810, %v4142
        %v4159 = vpack.c.b16 %v3812, %v4143
        %v4160 = vpack.c.b16 %v3814, %v4144
        %v4161 = vpack.c.b16 %v3816, %v4145
        %v4162 = vpack.c.b16 %v3818, %v4146
        %v4163 = vpack.c.b16 %v3820, %v4147
        %v4164 = vpack.c.b16 %v3822, %v4148
        %v4165 = vpack.c.b16 %v3824, %v4149
        %v4166 = vpack.c.b16 %v3826, %v4150
        %v4167 = vpack.c.b16 %v3828, %v4151
        %v4168 = vpack.c.b16 %v3830, %v4152
        %v4169 = vpack.c.b16 %v3832, %v4153
        %v4170 = vpack.c.b16 %v3834, %v4154
        %v4171 = vrot.slane %v4155, 1
        %v4172 = vrot.slane %v3883, 1
        %v4173 = vsel %vm1147, %v4171, %v4172
        %v4174 = vrot.slane %v4156, 1
        %v4175 = vrot.slane %v3884, 1
        %v4176 = vsel %vm1147, %v4174, %v4175
        %v4177 = vrot.slane %v4157, 1
        %v4178 = vrot.slane %v3885, 1
        %v4179 = vsel %vm1147, %v4177, %v4178
        %v4180 = vrot.slane %v4158, 1
        %v4181 = vrot.slane %v3886, 1
        %v4182 = vsel %vm1147, %v4180, %v4181
        %v4183 = vrot.slane %v4159, 1
        %v4184 = vrot.slane %v3887, 1
        %v4185 = vsel %vm1147, %v4183, %v4184
        %v4186 = vrot.slane %v4160, 1
        %v4187 = vrot.slane %v3888, 1
        %v4188 = vsel %vm1147, %v4186, %v4187
        %v4189 = vrot.slane %v4161, 1
        %v4190 = vrot.slane %v3889, 1
        %v4191 = vsel %vm1147, %v4189, %v4190
        %v4192 = vrot.slane %v4162, 1
        %v4193 = vrot.slane %v3890, 1
        %v4194 = vsel %vm1147, %v4192, %v4193
        %v4195 = vrot.slane %v4163, 1
        %v4196 = vrot.slane %v3891, 1
        %v4197 = vsel %vm1147, %v4195, %v4196
        %v4198 = vrot.slane %v4164, 1
        %v4199 = vrot.slane %v3892, 1
        %v4200 = vsel %vm1147, %v4198, %v4199
        %v4201 = vrot.slane %v4165, 1
        %v4202 = vrot.slane %v3893, 1
        %v4203 = vsel %vm1147, %v4201, %v4202
        %v4204 = vrot.slane %v4166, 1
        %v4205 = vrot.slane %v3894, 1
        %v4206 = vsel %vm1147, %v4204, %v4205
        %v4207 = vrot.slane %v4167, 1
        %v4208 = vrot.slane %v3895, 1
        %v4209 = vsel %vm1147, %v4207, %v4208
        %v4210 = vrot.slane %v4168, 1
        %v4211 = vrot.slane %v3896, 1
        %v4212 = vsel %vm1147, %v4210, %v4211
        %v4213 = vrot.slane %v4169, 1
        %v4214 = vrot.slane %v3897, 1
        %v4215 = vsel %vm1147, %v4213, %v4214
        %v4216 = vrot.slane %v4170, 1
        %v4217 = vrot.slane %v3898, 1
        %v4218 = vsel %vm1147, %v4216, %v4217
        %v4251 = vunpack.c.l.b16 %v3642
        %v4252 = vunpack.c.l.b16 %v3643
        %v4253 = vunpack.c.l.b16 %v3644
        %v4254 = vunpack.c.l.b16 %v3645
        %v4255 = vunpack.c.l.b16 %v3646
        %v4256 = vunpack.c.l.b16 %v3647
        %v4257 = vunpack.c.l.b16 %v3648
        %v4258 = vunpack.c.l.b16 %v3649
        %v4259 = vunpack.c.l.b16 %v3650
        %v4260 = vunpack.c.l.b16 %v3651
        %v4261 = vunpack.c.l.b16 %v3652
        %v4262 = vunpack.c.l.b16 %v3653
        %v4263 = vunpack.c.l.b16 %v3654
        %v4264 = vunpack.c.l.b16 %v3655
        %v4265 = vunpack.c.l.b16 %v3656
        %v4266 = vunpack.c.l.b16 %v3657
        %v4267 = vunpack.c.l.b16 %v3658
        %v4268 = vunpack.c.l.b16 %v3659
        %v4269 = vunpack.c.l.b16 %v3660
        %v4270 = vunpack.c.l.b16 %v3661
        %v4271 = vunpack.c.l.b16 %v3662
        %v4272 = vunpack.c.l.b16 %v3663
        %v4273 = vunpack.c.l.b16 %v3664
        %v4274 = vunpack.c.l.b16 %v3665
        %v4275 = vunpack.c.l.b16 %v3666
        %v4276 = vunpack.c.l.b16 %v3667
        %v4277 = vunpack.c.l.b16 %v3668
        %v4278 = vunpack.c.l.b16 %v3669
        %v4279 = vunpack.c.l.b16 %v3670
        %v4280 = vunpack.c.l.b16 %v3671
        %v4281 = vunpack.c.l.b16 %v3672
        %v4282 = vunpack.c.l.b16 %v3673
        %v4283 = vpack.c.b16 %v4252, %v4251
        %v4284 = vpack.c.b16 %v4254, %v4253
        %v4285 = vpack.c.b16 %v4256, %v4255
        %v4286 = vpack.c.b16 %v4258, %v4257
        %v4287 = vpack.c.b16 %v4260, %v4259
        %v4288 = vpack.c.b16 %v4262, %v4261
        %v4289 = vpack.c.b16 %v4264, %v4263
        %v4290 = vpack.c.b16 %v4266, %v4265
        %v4291 = vpack.c.b16 %v4268, %v4267
        %v4292 = vpack.c.b16 %v4270, %v4269
        %v4293 = vpack.c.b16 %v4272, %v4271
        %v4294 = vpack.c.b16 %v4274, %v4273
        %v4295 = vpack.c.b16 %v4276, %v4275
        %v4296 = vpack.c.b16 %v4278, %v4277
        %v4297 = vpack.c.b16 %v4280, %v4279
        %v4298 = vpack.c.b16 %v4282, %v4281
        %4299 = vrot.lane.b32.xlu0 %v4283, 64
        %v4300 = vpop.permute.xlu0 %4299
        %4301 = vrot.lane.b32.xlu0 %v4284, 64
        %v4302 = vpop.permute.xlu0 %4301
        %4303 = vrot.lane.b32.xlu0 %v4285, 64
        %v4304 = vpop.permute.xlu0 %4303
        %4305 = vrot.lane.b32.xlu0 %v4286, 64
        %v4306 = vpop.permute.xlu0 %4305
        %4307 = vrot.lane.b32.xlu0 %v4287, 64
        %v4308 = vpop.permute.xlu0 %4307
        %4309 = vrot.lane.b32.xlu0 %v4288, 64
        %v4310 = vpop.permute.xlu0 %4309
        %4311 = vrot.lane.b32.xlu0 %v4289, 64
        %v4312 = vpop.permute.xlu0 %4311
        %4313 = vrot.lane.b32.xlu0 %v4290, 64
        %v4314 = vpop.permute.xlu0 %4313
        %4315 = vrot.lane.b32.xlu0 %v4291, 64
        %v4316 = vpop.permute.xlu0 %4315
        %4317 = vrot.lane.b32.xlu0 %v4292, 64
        %v4318 = vpop.permute.xlu0 %4317
        %4319 = vrot.lane.b32.xlu0 %v4293, 64
        %v4320 = vpop.permute.xlu0 %4319
        %4321 = vrot.lane.b32.xlu0 %v4294, 64
        %v4322 = vpop.permute.xlu0 %4321
        %4323 = vrot.lane.b32.xlu0 %v4295, 64
        %v4324 = vpop.permute.xlu0 %4323
        %4325 = vrot.lane.b32.xlu0 %v4296, 64
        %v4326 = vpop.permute.xlu0 %4325
        %4327 = vrot.lane.b32.xlu0 %v4297, 64
        %v4328 = vpop.permute.xlu0 %4327
        %4329 = vrot.lane.b32.xlu0 %v4298, 64
        %v4330 = vpop.permute.xlu0 %4329
        %v4347 = vunpack.c.l.b16 %v3674
        %v4348 = vunpack.c.l.b16 %v3675
        %v4349 = vunpack.c.l.b16 %v3676
        %v4350 = vunpack.c.l.b16 %v3677
        %v4351 = vunpack.c.l.b16 %v3678
        %v4352 = vunpack.c.l.b16 %v3679
        %v4353 = vunpack.c.l.b16 %v3680
        %v4354 = vunpack.c.l.b16 %v3681
        %v4355 = vunpack.c.l.b16 %v3682
        %v4356 = vunpack.c.l.b16 %v3683
        %v4357 = vunpack.c.l.b16 %v3684
        %v4358 = vunpack.c.l.b16 %v3685
        %v4359 = vunpack.c.l.b16 %v3686
        %v4360 = vunpack.c.l.b16 %v3687
        %v4361 = vunpack.c.l.b16 %v3688
        %v4362 = vunpack.c.l.b16 %v3689
        %v4363 = vpack.c.b16 %v4347, %v4347
        %v4364 = vpack.c.b16 %v4348, %v4348
        %v4365 = vpack.c.b16 %v4349, %v4349
        %v4366 = vpack.c.b16 %v4350, %v4350
        %v4367 = vpack.c.b16 %v4351, %v4351
        %v4368 = vpack.c.b16 %v4352, %v4352
        %v4369 = vpack.c.b16 %v4353, %v4353
        %v4370 = vpack.c.b16 %v4354, %v4354
        %v4371 = vpack.c.b16 %v4355, %v4355
        %v4372 = vpack.c.b16 %v4356, %v4356
        %v4373 = vpack.c.b16 %v4357, %v4357
        %v4374 = vpack.c.b16 %v4358, %v4358
        %v4375 = vpack.c.b16 %v4359, %v4359
        %v4376 = vpack.c.b16 %v4360, %v4360
        %v4377 = vpack.c.b16 %v4361, %v4361
        %v4378 = vpack.c.b16 %v4362, %v4362
        %v4380 = vshrl.u32 %v4283, 16
        %v4382 = vshll.u32 %v4283, 16
        %v4384 = vrot.slane %v4382, 1
        %v4385 = vor.u32 %v4380, %v4384
        %v4387 = vshll.u32 %v4363, 16
        %v4389 = vrot.slane %v4387, 1
        %v4390 = vsel %vm874, %v4385, %v4389
        %v4392 = vshrl.u32 %v4284, 16
        %v4394 = vshll.u32 %v4284, 16
        %v4396 = vrot.slane %v4394, 1
        %v4397 = vor.u32 %v4392, %v4396
        %v4399 = vshll.u32 %v4364, 16
        %v4401 = vrot.slane %v4399, 1
        %v4402 = vsel %vm874, %v4397, %v4401
        %v4404 = vshrl.u32 %v4285, 16
        %v4406 = vshll.u32 %v4285, 16
        %v4408 = vrot.slane %v4406, 1
        %v4409 = vor.u32 %v4404, %v4408
        %v4411 = vshll.u32 %v4365, 16
        %v4413 = vrot.slane %v4411, 1
        %v4414 = vsel %vm874, %v4409, %v4413
        %v4416 = vshrl.u32 %v4286, 16
        %v4418 = vshll.u32 %v4286, 16
        %v4420 = vrot.slane %v4418, 1
        %v4421 = vor.u32 %v4416, %v4420
        %v4423 = vshll.u32 %v4366, 16
        %v4425 = vrot.slane %v4423, 1
        %v4426 = vsel %vm874, %v4421, %v4425
        %v4428 = vshrl.u32 %v4287, 16
        %v4430 = vshll.u32 %v4287, 16
        %v4432 = vrot.slane %v4430, 1
        %v4433 = vor.u32 %v4428, %v4432
        %v4435 = vshll.u32 %v4367, 16
        %v4437 = vrot.slane %v4435, 1
        %v4438 = vsel %vm874, %v4433, %v4437
        %v4440 = vshrl.u32 %v4288, 16
        %v4442 = vshll.u32 %v4288, 16
        %v4444 = vrot.slane %v4442, 1
        %v4445 = vor.u32 %v4440, %v4444
        %v4447 = vshll.u32 %v4368, 16
        %v4449 = vrot.slane %v4447, 1
        %v4450 = vsel %vm874, %v4445, %v4449
        %v4452 = vshrl.u32 %v4289, 16
        %v4454 = vshll.u32 %v4289, 16
        %v4456 = vrot.slane %v4454, 1
        %v4457 = vor.u32 %v4452, %v4456
        %v4459 = vshll.u32 %v4369, 16
        %v4461 = vrot.slane %v4459, 1
        %v4462 = vsel %vm874, %v4457, %v4461
        %v4464 = vshrl.u32 %v4290, 16
        %v4466 = vshll.u32 %v4290, 16
        %v4468 = vrot.slane %v4466, 1
        %v4469 = vor.u32 %v4464, %v4468
        %v4471 = vshll.u32 %v4370, 16
        %v4473 = vrot.slane %v4471, 1
        %v4474 = vsel %vm874, %v4469, %v4473
        %v4476 = vshrl.u32 %v4291, 16
        %v4478 = vshll.u32 %v4291, 16
        %v4480 = vrot.slane %v4478, 1
        %v4481 = vor.u32 %v4476, %v4480
        %v4483 = vshll.u32 %v4371, 16
        %v4485 = vrot.slane %v4483, 1
        %v4486 = vsel %vm874, %v4481, %v4485
        %v4488 = vshrl.u32 %v4292, 16
        %v4490 = vshll.u32 %v4292, 16
        %v4492 = vrot.slane %v4490, 1
        %v4493 = vor.u32 %v4488, %v4492
        %v4495 = vshll.u32 %v4372, 16
        %v4497 = vrot.slane %v4495, 1
        %v4498 = vsel %vm874, %v4493, %v4497
        %v4500 = vshrl.u32 %v4293, 16
        %v4502 = vshll.u32 %v4293, 16
        %v4504 = vrot.slane %v4502, 1
        %v4505 = vor.u32 %v4500, %v4504
        %v4507 = vshll.u32 %v4373, 16
        %v4509 = vrot.slane %v4507, 1
        %v4510 = vsel %vm874, %v4505, %v4509
        %v4512 = vshrl.u32 %v4294, 16
        %v4514 = vshll.u32 %v4294, 16
        %v4516 = vrot.slane %v4514, 1
        %v4517 = vor.u32 %v4512, %v4516
        %v4519 = vshll.u32 %v4374, 16
        %v4521 = vrot.slane %v4519, 1
        %v4522 = vsel %vm874, %v4517, %v4521
        %v4524 = vshrl.u32 %v4295, 16
        %v4526 = vshll.u32 %v4295, 16
        %v4528 = vrot.slane %v4526, 1
        %v4529 = vor.u32 %v4524, %v4528
        %v4531 = vshll.u32 %v4375, 16
        %v4533 = vrot.slane %v4531, 1
        %v4534 = vsel %vm874, %v4529, %v4533
        %v4536 = vshrl.u32 %v4296, 16
        %v4538 = vshll.u32 %v4296, 16
        %v4540 = vrot.slane %v4538, 1
        %v4541 = vor.u32 %v4536, %v4540
        %v4543 = vshll.u32 %v4376, 16
        %v4545 = vrot.slane %v4543, 1
        %v4546 = vsel %vm874, %v4541, %v4545
        %v4548 = vshrl.u32 %v4297, 16
        %v4550 = vshll.u32 %v4297, 16
        %v4552 = vrot.slane %v4550, 1
        %v4553 = vor.u32 %v4548, %v4552
        %v4555 = vshll.u32 %v4377, 16
        %v4557 = vrot.slane %v4555, 1
        %v4558 = vsel %vm874, %v4553, %v4557
        %v4560 = vshrl.u32 %v4298, 16
        %v4562 = vshll.u32 %v4298, 16
        %v4564 = vrot.slane %v4562, 1
        %v4565 = vor.u32 %v4560, %v4564
        %v4567 = vshll.u32 %v4378, 16
        %v4569 = vrot.slane %v4567, 1
        %v4570 = vsel %vm874, %v4565, %v4569
        %v4587 = vunpack.c.l.b16 %v3690
        %v4588 = vunpack.c.l.b16 %v3691
        %v4589 = vunpack.c.l.b16 %v3692
        %v4590 = vunpack.c.l.b16 %v3693
        %v4591 = vunpack.c.l.b16 %v3694
        %v4592 = vunpack.c.l.b16 %v3695
        %v4593 = vunpack.c.l.b16 %v3696
        %v4594 = vunpack.c.l.b16 %v3697
        %v4595 = vunpack.c.l.b16 %v3698
        %v4596 = vunpack.c.l.b16 %v3699
        %v4597 = vunpack.c.l.b16 %v3700
        %v4598 = vunpack.c.l.b16 %v3701
        %v4599 = vunpack.c.l.b16 %v3702
        %v4600 = vunpack.c.l.b16 %v3703
        %v4601 = vunpack.c.l.b16 %v3704
        %v4602 = vunpack.c.l.b16 %v3705
        %v4603 = vpack.c.b16 %v4252, %v4587
        %v4604 = vpack.c.b16 %v4254, %v4588
        %v4605 = vpack.c.b16 %v4256, %v4589
        %v4606 = vpack.c.b16 %v4258, %v4590
        %v4607 = vpack.c.b16 %v4260, %v4591
        %v4608 = vpack.c.b16 %v4262, %v4592
        %v4609 = vpack.c.b16 %v4264, %v4593
        %v4610 = vpack.c.b16 %v4266, %v4594
        %v4611 = vpack.c.b16 %v4268, %v4595
        %v4612 = vpack.c.b16 %v4270, %v4596
        %v4613 = vpack.c.b16 %v4272, %v4597
        %v4614 = vpack.c.b16 %v4274, %v4598
        %v4615 = vpack.c.b16 %v4276, %v4599
        %v4616 = vpack.c.b16 %v4278, %v4600
        %v4617 = vpack.c.b16 %v4280, %v4601
        %v4618 = vpack.c.b16 %v4282, %v4602
        %v4619 = vrot.slane %v4603, 1
        %v4620 = vrot.slane %v4363, 1
        %v4621 = vsel %vm1147, %v4619, %v4620
        %v4622 = vrot.slane %v4604, 1
        %v4623 = vrot.slane %v4364, 1
        %v4624 = vsel %vm1147, %v4622, %v4623
        %v4625 = vrot.slane %v4605, 1
        %v4626 = vrot.slane %v4365, 1
        %v4627 = vsel %vm1147, %v4625, %v4626
        %v4628 = vrot.slane %v4606, 1
        %v4629 = vrot.slane %v4366, 1
        %v4630 = vsel %vm1147, %v4628, %v4629
        %v4631 = vrot.slane %v4607, 1
        %v4632 = vrot.slane %v4367, 1
        %v4633 = vsel %vm1147, %v4631, %v4632
        %v4634 = vrot.slane %v4608, 1
        %v4635 = vrot.slane %v4368, 1
        %v4636 = vsel %vm1147, %v4634, %v4635
        %v4637 = vrot.slane %v4609, 1
        %v4638 = vrot.slane %v4369, 1
        %v4639 = vsel %vm1147, %v4637, %v4638
        %v4640 = vrot.slane %v4610, 1
        %v4641 = vrot.slane %v4370, 1
        %v4642 = vsel %vm1147, %v4640, %v4641
        %v4643 = vrot.slane %v4611, 1
        %v4644 = vrot.slane %v4371, 1
        %v4645 = vsel %vm1147, %v4643, %v4644
        %v4646 = vrot.slane %v4612, 1
        %v4647 = vrot.slane %v4372, 1
        %v4648 = vsel %vm1147, %v4646, %v4647
        %v4649 = vrot.slane %v4613, 1
        %v4650 = vrot.slane %v4373, 1
        %v4651 = vsel %vm1147, %v4649, %v4650
        %v4652 = vrot.slane %v4614, 1
        %v4653 = vrot.slane %v4374, 1
        %v4654 = vsel %vm1147, %v4652, %v4653
        %v4655 = vrot.slane %v4615, 1
        %v4656 = vrot.slane %v4375, 1
        %v4657 = vsel %vm1147, %v4655, %v4656
        %v4658 = vrot.slane %v4616, 1
        %v4659 = vrot.slane %v4376, 1
        %v4660 = vsel %vm1147, %v4658, %v4659
        %v4661 = vrot.slane %v4617, 1
        %v4662 = vrot.slane %v4377, 1
        %v4663 = vsel %vm1147, %v4661, %v4662
        %v4664 = vrot.slane %v4618, 1
        %v4665 = vrot.slane %v4378, 1
        %v4666 = vsel %vm1147, %v4664, %v4665
        %4667 = vrot.lane.b32.xlu0 %v4621, 64
        %v4668 = vpop.permute.xlu0 %4667
        %4669 = vrot.lane.b32.xlu0 %v4624, 64
        %v4670 = vpop.permute.xlu0 %4669
        %4671 = vrot.lane.b32.xlu0 %v4627, 64
        %v4672 = vpop.permute.xlu0 %4671
        %4673 = vrot.lane.b32.xlu0 %v4630, 64
        %v4674 = vpop.permute.xlu0 %4673
        %4675 = vrot.lane.b32.xlu0 %v4633, 64
        %v4676 = vpop.permute.xlu0 %4675
        %4677 = vrot.lane.b32.xlu0 %v4636, 64
        %v4678 = vpop.permute.xlu0 %4677
        %4679 = vrot.lane.b32.xlu0 %v4639, 64
        %v4680 = vpop.permute.xlu0 %4679
        %4681 = vrot.lane.b32.xlu0 %v4642, 64
        %v4682 = vpop.permute.xlu0 %4681
        %4683 = vrot.lane.b32.xlu0 %v4645, 64
        %v4684 = vpop.permute.xlu0 %4683
        %4685 = vrot.lane.b32.xlu0 %v4648, 64
        %v4686 = vpop.permute.xlu0 %4685
        %4687 = vrot.lane.b32.xlu0 %v4651, 64
        %v4688 = vpop.permute.xlu0 %4687
        %4689 = vrot.lane.b32.xlu0 %v4654, 64
        %v4690 = vpop.permute.xlu0 %4689
        %4691 = vrot.lane.b32.xlu0 %v4657, 64
        %v4692 = vpop.permute.xlu0 %4691
        %4693 = vrot.lane.b32.xlu0 %v4660, 64
        %v4694 = vpop.permute.xlu0 %4693
        %4695 = vrot.lane.b32.xlu0 %v4663, 64
        %v4696 = vpop.permute.xlu0 %4695
        %4697 = vrot.lane.b32.xlu0 %v4666, 64
        %v4698 = vpop.permute.xlu0 %4697
        %v4731 = vunpack.c.l.b16 %v3707
        %v4732 = vunpack.c.l.b16 %v3708
        %v4733 = vunpack.c.l.b16 %v3709
        %v4734 = vunpack.c.l.b16 %v3710
        %v4735 = vunpack.c.l.b16 %v3711
        %v4736 = vunpack.c.l.b16 %v3712
        %v4737 = vunpack.c.l.b16 %v3713
        %v4738 = vunpack.c.l.b16 %v3714
        %v4739 = vunpack.c.l.b16 %v3715
        %v4740 = vunpack.c.l.b16 %v3716
        %v4741 = vunpack.c.l.b16 %v3717
        %v4742 = vunpack.c.l.b16 %v3718
        %v4743 = vunpack.c.l.b16 %v3719
        %v4744 = vunpack.c.l.b16 %v3720
        %v4745 = vunpack.c.l.b16 %v3721
        %v4746 = vunpack.c.l.b16 %v3722
        %v4747 = vunpack.c.l.b16 %v3723
        %v4748 = vunpack.c.l.b16 %v3724
        %v4749 = vunpack.c.l.b16 %v3725
        %v4750 = vunpack.c.l.b16 %v3726
        %v4751 = vunpack.c.l.b16 %v3727
        %v4752 = vunpack.c.l.b16 %v3728
        %v4753 = vunpack.c.l.b16 %v3729
        %v4754 = vunpack.c.l.b16 %v3730
        %v4755 = vunpack.c.l.b16 %v3731
        %v4756 = vunpack.c.l.b16 %v3732
        %v4757 = vunpack.c.l.b16 %v3733
        %v4758 = vunpack.c.l.b16 %v3734
        %v4759 = vunpack.c.l.b16 %v3735
        %v4760 = vunpack.c.l.b16 %v3736
        %v4761 = vunpack.c.l.b16 %v3737
        %v4762 = vunpack.c.l.b16 %v3738
        %v4763 = vpack.c.b16 %v4732, %v4731
        %v4764 = vpack.c.b16 %v4734, %v4733
        %v4765 = vpack.c.b16 %v4736, %v4735
        %v4766 = vpack.c.b16 %v4738, %v4737
        %v4767 = vpack.c.b16 %v4740, %v4739
        %v4768 = vpack.c.b16 %v4742, %v4741
        %v4769 = vpack.c.b16 %v4744, %v4743
        %v4770 = vpack.c.b16 %v4746, %v4745
        %v4771 = vpack.c.b16 %v4748, %v4747
        %v4772 = vpack.c.b16 %v4750, %v4749
        %v4773 = vpack.c.b16 %v4752, %v4751
        %v4774 = vpack.c.b16 %v4754, %v4753
        %v4775 = vpack.c.b16 %v4756, %v4755
        %v4776 = vpack.c.b16 %v4758, %v4757
        %v4777 = vpack.c.b16 %v4760, %v4759
        %v4778 = vpack.c.b16 %v4762, %v4761
        %v4795 = vunpack.c.l.b16 %v3739
        %v4796 = vunpack.c.l.b16 %v3740
        %v4797 = vunpack.c.l.b16 %v3741
        %v4798 = vunpack.c.l.b16 %v3742
        %v4799 = vunpack.c.l.b16 %v3743
        %v4800 = vunpack.c.l.b16 %v3744
        %v4801 = vunpack.c.l.b16 %v3745
        %v4802 = vunpack.c.l.b16 %v3746
        %v4803 = vunpack.c.l.b16 %v3747
        %v4804 = vunpack.c.l.b16 %v3748
        %v4805 = vunpack.c.l.b16 %v3749
        %v4806 = vunpack.c.l.b16 %v3750
        %v4807 = vunpack.c.l.b16 %v3751
        %v4808 = vunpack.c.l.b16 %v3752
        %v4809 = vunpack.c.l.b16 %v3753
        %v4810 = vunpack.c.l.b16 %v3754
        %v4811 = vpack.c.b16 %v4795, %v4795
        %v4812 = vpack.c.b16 %v4796, %v4796
        %v4813 = vpack.c.b16 %v4797, %v4797
        %v4814 = vpack.c.b16 %v4798, %v4798
        %v4815 = vpack.c.b16 %v4799, %v4799
        %v4816 = vpack.c.b16 %v4800, %v4800
        %v4817 = vpack.c.b16 %v4801, %v4801
        %v4818 = vpack.c.b16 %v4802, %v4802
        %v4819 = vpack.c.b16 %v4803, %v4803
        %v4820 = vpack.c.b16 %v4804, %v4804
        %v4821 = vpack.c.b16 %v4805, %v4805
        %v4822 = vpack.c.b16 %v4806, %v4806
        %v4823 = vpack.c.b16 %v4807, %v4807
        %v4824 = vpack.c.b16 %v4808, %v4808
        %v4825 = vpack.c.b16 %v4809, %v4809
        %v4826 = vpack.c.b16 %v4810, %v4810
        %v4828 = vshrl.u32 %v4763, 16
        %v4830 = vshll.u32 %v4763, 16
        %v4832 = vrot.slane %v4830, 1
        %v4833 = vor.u32 %v4828, %v4832
        %v4835 = vshll.u32 %v4811, 16
        %v4837 = vrot.slane %v4835, 1
        %v4838 = vsel %vm874, %v4833, %v4837
        %v4840 = vshrl.u32 %v4764, 16
        %v4842 = vshll.u32 %v4764, 16
        %v4844 = vrot.slane %v4842, 1
        %v4845 = vor.u32 %v4840, %v4844
        %v4847 = vshll.u32 %v4812, 16
        %v4849 = vrot.slane %v4847, 1
        %v4850 = vsel %vm874, %v4845, %v4849
        %v4852 = vshrl.u32 %v4765, 16
        %v4854 = vshll.u32 %v4765, 16
        %v4856 = vrot.slane %v4854, 1
        %v4857 = vor.u32 %v4852, %v4856
        %v4859 = vshll.u32 %v4813, 16
        %v4861 = vrot.slane %v4859, 1
        %v4862 = vsel %vm874, %v4857, %v4861
        %v4864 = vshrl.u32 %v4766, 16
        %v4866 = vshll.u32 %v4766, 16
        %v4868 = vrot.slane %v4866, 1
        %v4869 = vor.u32 %v4864, %v4868
        %v4871 = vshll.u32 %v4814, 16
        %v4873 = vrot.slane %v4871, 1
        %v4874 = vsel %vm874, %v4869, %v4873
        %v4876 = vshrl.u32 %v4767, 16
        %v4878 = vshll.u32 %v4767, 16
        %v4880 = vrot.slane %v4878, 1
        %v4881 = vor.u32 %v4876, %v4880
        %v4883 = vshll.u32 %v4815, 16
        %v4885 = vrot.slane %v4883, 1
        %v4886 = vsel %vm874, %v4881, %v4885
        %v4888 = vshrl.u32 %v4768, 16
        %v4890 = vshll.u32 %v4768, 16
        %v4892 = vrot.slane %v4890, 1
        %v4893 = vor.u32 %v4888, %v4892
        %v4895 = vshll.u32 %v4816, 16
        %v4897 = vrot.slane %v4895, 1
        %v4898 = vsel %vm874, %v4893, %v4897
        %v4900 = vshrl.u32 %v4769, 16
        %v4902 = vshll.u32 %v4769, 16
        %v4904 = vrot.slane %v4902, 1
        %v4905 = vor.u32 %v4900, %v4904
        %v4907 = vshll.u32 %v4817, 16
        %v4909 = vrot.slane %v4907, 1
        %v4910 = vsel %vm874, %v4905, %v4909
        %v4912 = vshrl.u32 %v4770, 16
        %v4914 = vshll.u32 %v4770, 16
        %v4916 = vrot.slane %v4914, 1
        %v4917 = vor.u32 %v4912, %v4916
        %v4919 = vshll.u32 %v4818, 16
        %v4921 = vrot.slane %v4919, 1
        %v4922 = vsel %vm874, %v4917, %v4921
        %v4924 = vshrl.u32 %v4771, 16
        %v4926 = vshll.u32 %v4771, 16
        %v4928 = vrot.slane %v4926, 1
        %v4929 = vor.u32 %v4924, %v4928
        %v4931 = vshll.u32 %v4819, 16
        %v4933 = vrot.slane %v4931, 1
        %v4934 = vsel %vm874, %v4929, %v4933
        %v4936 = vshrl.u32 %v4772, 16
        %v4938 = vshll.u32 %v4772, 16
        %v4940 = vrot.slane %v4938, 1
        %v4941 = vor.u32 %v4936, %v4940
        %v4943 = vshll.u32 %v4820, 16
        %v4945 = vrot.slane %v4943, 1
        %v4946 = vsel %vm874, %v4941, %v4945
        %v4948 = vshrl.u32 %v4773, 16
        %v4950 = vshll.u32 %v4773, 16
        %v4952 = vrot.slane %v4950, 1
        %v4953 = vor.u32 %v4948, %v4952
        %v4955 = vshll.u32 %v4821, 16
        %v4957 = vrot.slane %v4955, 1
        %v4958 = vsel %vm874, %v4953, %v4957
        %v4960 = vshrl.u32 %v4774, 16
        %v4962 = vshll.u32 %v4774, 16
        %v4964 = vrot.slane %v4962, 1
        %v4965 = vor.u32 %v4960, %v4964
        %v4967 = vshll.u32 %v4822, 16
        %v4969 = vrot.slane %v4967, 1
        %v4970 = vsel %vm874, %v4965, %v4969
        %v4972 = vshrl.u32 %v4775, 16
        %v4974 = vshll.u32 %v4775, 16
        %v4976 = vrot.slane %v4974, 1
        %v4977 = vor.u32 %v4972, %v4976
        %v4979 = vshll.u32 %v4823, 16
        %v4981 = vrot.slane %v4979, 1
        %v4982 = vsel %vm874, %v4977, %v4981
        %v4984 = vshrl.u32 %v4776, 16
        %v4986 = vshll.u32 %v4776, 16
        %v4988 = vrot.slane %v4986, 1
        %v4989 = vor.u32 %v4984, %v4988
        %v4991 = vshll.u32 %v4824, 16
        %v4993 = vrot.slane %v4991, 1
        %v4994 = vsel %vm874, %v4989, %v4993
        %v4996 = vshrl.u32 %v4777, 16
        %v4998 = vshll.u32 %v4777, 16
        %v5000 = vrot.slane %v4998, 1
        %v5001 = vor.u32 %v4996, %v5000
        %v5003 = vshll.u32 %v4825, 16
        %v5005 = vrot.slane %v5003, 1
        %v5006 = vsel %vm874, %v5001, %v5005
        %v5008 = vshrl.u32 %v4778, 16
        %v5010 = vshll.u32 %v4778, 16
        %v5012 = vrot.slane %v5010, 1
        %v5013 = vor.u32 %v5008, %v5012
        %v5015 = vshll.u32 %v4826, 16
        %v5017 = vrot.slane %v5015, 1
        %v5018 = vsel %vm874, %v5013, %v5017
        %5019 = vrot.lane.b32.xlu0 %v4838, 64
        %v5020 = vpop.permute.xlu0 %5019
        %5021 = vrot.lane.b32.xlu0 %v4850, 64
        %v5022 = vpop.permute.xlu0 %5021
        %5023 = vrot.lane.b32.xlu0 %v4862, 64
        %v5024 = vpop.permute.xlu0 %5023
        %5025 = vrot.lane.b32.xlu0 %v4874, 64
        %v5026 = vpop.permute.xlu0 %5025
        %5027 = vrot.lane.b32.xlu0 %v4886, 64
        %v5028 = vpop.permute.xlu0 %5027
        %5029 = vrot.lane.b32.xlu0 %v4898, 64
        %v5030 = vpop.permute.xlu0 %5029
        %5031 = vrot.lane.b32.xlu0 %v4910, 64
        %v5032 = vpop.permute.xlu0 %5031
        %5033 = vrot.lane.b32.xlu0 %v4922, 64
        %v5034 = vpop.permute.xlu0 %5033
        %5035 = vrot.lane.b32.xlu0 %v4934, 64
        %v5036 = vpop.permute.xlu0 %5035
        %5037 = vrot.lane.b32.xlu0 %v4946, 64
        %v5038 = vpop.permute.xlu0 %5037
        %5039 = vrot.lane.b32.xlu0 %v4958, 64
        %v5040 = vpop.permute.xlu0 %5039
        %5041 = vrot.lane.b32.xlu0 %v4970, 64
        %v5042 = vpop.permute.xlu0 %5041
        %5043 = vrot.lane.b32.xlu0 %v4982, 64
        %v5044 = vpop.permute.xlu0 %5043
        %5045 = vrot.lane.b32.xlu0 %v4994, 64
        %v5046 = vpop.permute.xlu0 %5045
        %5047 = vrot.lane.b32.xlu0 %v5006, 64
        %v5048 = vpop.permute.xlu0 %5047
        %5049 = vrot.lane.b32.xlu0 %v5018, 64
        %v5050 = vpop.permute.xlu0 %5049
        %v5067 = vunpack.c.l.b16 %v3755
        %v5068 = vunpack.c.l.b16 %v3756
        %v5069 = vunpack.c.l.b16 %v3757
        %v5070 = vunpack.c.l.b16 %v3758
        %v5071 = vunpack.c.l.b16 %v3759
        %v5072 = vunpack.c.l.b16 %v3760
        %v5073 = vunpack.c.l.b16 %v3761
        %v5074 = vunpack.c.l.b16 %v3762
        %v5075 = vunpack.c.l.b16 %v3763
        %v5076 = vunpack.c.l.b16 %v3764
        %v5077 = vunpack.c.l.b16 %v3765
        %v5078 = vunpack.c.l.b16 %v3766
        %v5079 = vunpack.c.l.b16 %v3767
        %v5080 = vunpack.c.l.b16 %v3768
        %v5081 = vunpack.c.l.b16 %v3769
        %v5082 = vunpack.c.l.b16 %v3770
        %v5083 = vpack.c.b16 %v4732, %v5067
        %v5084 = vpack.c.b16 %v4734, %v5068
        %v5085 = vpack.c.b16 %v4736, %v5069
        %v5086 = vpack.c.b16 %v4738, %v5070
        %v5087 = vpack.c.b16 %v4740, %v5071
        %v5088 = vpack.c.b16 %v4742, %v5072
        %v5089 = vpack.c.b16 %v4744, %v5073
        %v5090 = vpack.c.b16 %v4746, %v5074
        %v5091 = vpack.c.b16 %v4748, %v5075
        %v5092 = vpack.c.b16 %v4750, %v5076
        %v5093 = vpack.c.b16 %v4752, %v5077
        %v5094 = vpack.c.b16 %v4754, %v5078
        %v5095 = vpack.c.b16 %v4756, %v5079
        %v5096 = vpack.c.b16 %v4758, %v5080
        %v5097 = vpack.c.b16 %v4760, %v5081
        %v5098 = vpack.c.b16 %v4762, %v5082
        %v5099 = vrot.slane %v5083, 1
        %v5100 = vrot.slane %v4811, 1
        %v5101 = vsel %vm1147, %v5099, %v5100
        %v5102 = vrot.slane %v5084, 1
        %v5103 = vrot.slane %v4812, 1
        %v5104 = vsel %vm1147, %v5102, %v5103
        %v5105 = vrot.slane %v5085, 1
        %v5106 = vrot.slane %v4813, 1
        %v5107 = vsel %vm1147, %v5105, %v5106
        %v5108 = vrot.slane %v5086, 1
        %v5109 = vrot.slane %v4814, 1
        %v5110 = vsel %vm1147, %v5108, %v5109
        %v5111 = vrot.slane %v5087, 1
        %v5112 = vrot.slane %v4815, 1
        %v5113 = vsel %vm1147, %v5111, %v5112
        %v5114 = vrot.slane %v5088, 1
        %v5115 = vrot.slane %v4816, 1
        %v5116 = vsel %vm1147, %v5114, %v5115
        %v5117 = vrot.slane %v5089, 1
        %v5118 = vrot.slane %v4817, 1
        %v5119 = vsel %vm1147, %v5117, %v5118
        %v5120 = vrot.slane %v5090, 1
        %v5121 = vrot.slane %v4818, 1
        %v5122 = vsel %vm1147, %v5120, %v5121
        %v5123 = vrot.slane %v5091, 1
        %v5124 = vrot.slane %v4819, 1
        %v5125 = vsel %vm1147, %v5123, %v5124
        %v5126 = vrot.slane %v5092, 1
        %v5127 = vrot.slane %v4820, 1
        %v5128 = vsel %vm1147, %v5126, %v5127
        %v5129 = vrot.slane %v5093, 1
        %v5130 = vrot.slane %v4821, 1
        %v5131 = vsel %vm1147, %v5129, %v5130
        %v5132 = vrot.slane %v5094, 1
        %v5133 = vrot.slane %v4822, 1
        %v5134 = vsel %vm1147, %v5132, %v5133
        %v5135 = vrot.slane %v5095, 1
        %v5136 = vrot.slane %v4823, 1
        %v5137 = vsel %vm1147, %v5135, %v5136
        %v5138 = vrot.slane %v5096, 1
        %v5139 = vrot.slane %v4824, 1
        %v5140 = vsel %vm1147, %v5138, %v5139
        %v5141 = vrot.slane %v5097, 1
        %v5142 = vrot.slane %v4825, 1
        %v5143 = vsel %vm1147, %v5141, %v5142
        %v5144 = vrot.slane %v5098, 1
        %v5145 = vrot.slane %v4826, 1
        %v5146 = vsel %vm1147, %v5144, %v5145
        %v5148 = vsel %vm409, %v3835, %v4092
        %v5151 = vsel %vm409, %v3836, %v4094
        %v5154 = vsel %vm409, %v3837, %v4096
        %v5157 = vsel %vm409, %v3838, %v4098
        %v5160 = vsel %vm409, %v3839, %v4100
        %v5163 = vsel %vm409, %v3840, %v4102
        %v5166 = vsel %vm409, %v3841, %v4104
        %v5169 = vsel %vm409, %v3842, %v4106
        %v5172 = vsel %vm409, %v3843, %v4108
        %v5175 = vsel %vm409, %v3844, %v4110
        %v5178 = vsel %vm409, %v3845, %v4112
        %v5181 = vsel %vm409, %v3846, %v4114
        %v5184 = vsel %vm409, %v3847, %v4116
        %v5187 = vsel %vm409, %v3848, %v4118
        %v5190 = vsel %vm409, %v3849, %v4120
        %v5193 = vsel %vm409, %v3850, %v4122
        %v5197 = vsel %vm409, %v4173, %v4300
        %v5201 = vsel %vm409, %v4176, %v4302
        %v5205 = vsel %vm409, %v4179, %v4304
        %v5209 = vsel %vm409, %v4182, %v4306
        %v5213 = vsel %vm409, %v4185, %v4308
        %v5217 = vsel %vm409, %v4188, %v4310
        %v5221 = vsel %vm409, %v4191, %v4312
        %v5225 = vsel %vm409, %v4194, %v4314
        %v5229 = vsel %vm409, %v4197, %v4316
        %v5233 = vsel %vm409, %v4200, %v4318
        %v5237 = vsel %vm409, %v4203, %v4320
        %v5241 = vsel %vm409, %v4206, %v4322
        %v5245 = vsel %vm409, %v4209, %v4324
        %v5249 = vsel %vm409, %v4212, %v4326
        %v5253 = vsel %vm409, %v4215, %v4328
        %v5257 = vsel %vm409, %v4218, %v4330
        %v5261 = vsel %vm409, %v4390, %v4668
        %v5265 = vsel %vm409, %v4402, %v4670
        %v5269 = vsel %vm409, %v4414, %v4672
        %v5273 = vsel %vm409, %v4426, %v4674
        %v5277 = vsel %vm409, %v4438, %v4676
        %v5281 = vsel %vm409, %v4450, %v4678
        %v5285 = vsel %vm409, %v4462, %v4680
        %v5289 = vsel %vm409, %v4474, %v4682
        %v5293 = vsel %vm409, %v4486, %v4684
        %v5297 = vsel %vm409, %v4498, %v4686
        %v5301 = vsel %vm409, %v4510, %v4688
        %v5305 = vsel %vm409, %v4522, %v4690
        %v5309 = vsel %vm409, %v4534, %v4692
        %v5313 = vsel %vm409, %v4546, %v4694
        %v5317 = vsel %vm409, %v4558, %v4696
        %v5321 = vsel %vm409, %v4570, %v4698
        %v5324 = vsel %vm409, %v4763, %v5020
        %v5327 = vsel %vm409, %v4764, %v5022
        %v5330 = vsel %vm409, %v4765, %v5024
        %v5333 = vsel %vm409, %v4766, %v5026
        %v5336 = vsel %vm409, %v4767, %v5028
        %v5339 = vsel %vm409, %v4768, %v5030
        %v5342 = vsel %vm409, %v4769, %v5032
        %v5345 = vsel %vm409, %v4770, %v5034
        %v5348 = vsel %vm409, %v4771, %v5036
        %v5351 = vsel %vm409, %v4772, %v5038
        %v5354 = vsel %vm409, %v4773, %v5040
        %v5357 = vsel %vm409, %v4774, %v5042
        %v5360 = vsel %vm409, %v4775, %v5044
        %v5363 = vsel %vm409, %v4776, %v5046
        %v5366 = vsel %vm409, %v4777, %v5048
        %v5369 = vsel %vm409, %v4778, %v5050
        %v5371 = vld [vmem:[%s4] sm:$0xf]
        %v5372 = vld [vmem:[%s4 + $0x4] sm:$0xf]
        %v5373 = vld [vmem:[%s4 + $0x8] sm:$0xf]
        %v5374 = vld [vmem:[%s4 + $0xc] sm:$0xf]
        %v5375 = vld [vmem:[%s4 + $0x10] sm:$0xf]
        %v5376 = vld [vmem:[%s4 + $0x14] sm:$0xf]
        %v5377 = vld [vmem:[%s4 + $0x18] sm:$0xf]
        %v5378 = vld [vmem:[%s4 + $0x1c] sm:$0xf]
        %v5379 = vld [vmem:[%s4 + $0x20] sm:$0xf]
        %v5380 = vld [vmem:[%s4 + $0x24] sm:$0xf]
        %v5381 = vld [vmem:[%s4 + $0x28] sm:$0xf]
        %v5382 = vld [vmem:[%s4 + $0x2c] sm:$0xf]
        %v5383 = vld [vmem:[%s4 + $0x30] sm:$0xf]
        %v5384 = vld [vmem:[%s4 + $0x34] sm:$0xf]
        %v5385 = vld [vmem:[%s4 + $0x38] sm:$0xf]
        %v5386 = vld [vmem:[%s4 + $0x3c] sm:$0xf]
        %v5387 = vld [vmem:[%s4 + $0x40] sm:$0xf]
        %v5388 = vld [vmem:[%s4 + $0x44] sm:$0xf]
        %v5389 = vld [vmem:[%s4 + $0x48] sm:$0xf]
        %v5390 = vld [vmem:[%s4 + $0x4c] sm:$0xf]
        %v5391 = vld [vmem:[%s4 + $0x50] sm:$0xf]
        %v5392 = vld [vmem:[%s4 + $0x54] sm:$0xf]
        %v5393 = vld [vmem:[%s4 + $0x58] sm:$0xf]
        %v5394 = vld [vmem:[%s4 + $0x5c] sm:$0xf]
        %v5395 = vld [vmem:[%s4 + $0x60] sm:$0xf]
        %v5396 = vld [vmem:[%s4 + $0x64] sm:$0xf]
        %v5397 = vld [vmem:[%s4 + $0x68] sm:$0xf]
        %v5398 = vld [vmem:[%s4 + $0x6c] sm:$0xf]
        %v5399 = vld [vmem:[%s4 + $0x70] sm:$0xf]
        %v5400 = vld [vmem:[%s4 + $0x74] sm:$0xf]
        %v5401 = vld [vmem:[%s4 + $0x78] sm:$0xf]
        %v5402 = vld [vmem:[%s4 + $0x7c] sm:$0xf]
        %v5403 = vld [vmem:[%s4 + $0x80] sm:$0xf]
        %v5404 = vld [vmem:[%s4 + $0x84] sm:$0xf]
        %v5405 = vld [vmem:[%s4 + $0x88] sm:$0xf]
        %v5406 = vld [vmem:[%s4 + $0x8c] sm:$0xf]
        %v5407 = vld [vmem:[%s4 + $0x90] sm:$0xf]
        %v5408 = vld [vmem:[%s4 + $0x94] sm:$0xf]
        %v5409 = vld [vmem:[%s4 + $0x98] sm:$0xf]
        %v5410 = vld [vmem:[%s4 + $0x9c] sm:$0xf]
        %v5411 = vld [vmem:[%s4 + $0xa0] sm:$0xf]
        %v5412 = vld [vmem:[%s4 + $0xa4] sm:$0xf]
        %v5413 = vld [vmem:[%s4 + $0xa8] sm:$0xf]
        %v5414 = vld [vmem:[%s4 + $0xac] sm:$0xf]
        %v5415 = vld [vmem:[%s4 + $0xb0] sm:$0xf]
        %v5416 = vld [vmem:[%s4 + $0xb4] sm:$0xf]
        %v5417 = vld [vmem:[%s4 + $0xb8] sm:$0xf]
        %v5418 = vld [vmem:[%s4 + $0xbc] sm:$0xf]
        %v5419 = vld [vmem:[%s4 + $0xc0] sm:$0xf]
        %v5420 = vld [vmem:[%s4 + $0xc4] sm:$0xf]
        %v5421 = vld [vmem:[%s4 + $0xc8] sm:$0xf]
        %v5422 = vld [vmem:[%s4 + $0xcc] sm:$0xf]
        %v5423 = vld [vmem:[%s4 + $0xd0] sm:$0xf]
        %v5424 = vld [vmem:[%s4 + $0xd4] sm:$0xf]
        %v5425 = vld [vmem:[%s4 + $0xd8] sm:$0xf]
        %v5426 = vld [vmem:[%s4 + $0xdc] sm:$0xf]
        %v5427 = vld [vmem:[%s4 + $0xe0] sm:$0xf]
        %v5428 = vld [vmem:[%s4 + $0xe4] sm:$0xf]
        %v5429 = vld [vmem:[%s4 + $0xe8] sm:$0xf]
        %v5430 = vld [vmem:[%s4 + $0xec] sm:$0xf]
        %v5431 = vld [vmem:[%s4 + $0xf0] sm:$0xf]
        %v5432 = vld [vmem:[%s4 + $0xf4] sm:$0xf]
        %v5433 = vld [vmem:[%s4 + $0xf8] sm:$0xf]
        %v5434 = vld [vmem:[%s4 + $0xfc] sm:$0xf]
        %v5435 = vld [vmem:[%s4 + $0x100] sm:$0xf]
        %v5436 = vld [vmem:[%s4 + $0x104] sm:$0xf]
        %v5437 = vld [vmem:[%s4 + $0x108] sm:$0xf]
        %v5438 = vld [vmem:[%s4 + $0x10c] sm:$0xf]
        %v5439 = vld [vmem:[%s4 + $0x110] sm:$0xf]
        %v5440 = vld [vmem:[%s4 + $0x114] sm:$0xf]
        %v5441 = vld [vmem:[%s4 + $0x118] sm:$0xf]
        %v5442 = vld [vmem:[%s4 + $0x11c] sm:$0xf]
        %v5443 = vld [vmem:[%s5] sm:$0x1]
        %v5445 = vlaneseq
        %v5446 = vshrl.u32 %v5445, 7
        %v5447 = vsub.s32 0, %v5446
        %v5448 = vrot.slane %v5443, %v5447
        %v5522 = vunpack.c.l.b16 %v5371
        %v5523 = vunpack.c.l.b16 %v5372
        %v5524 = vunpack.c.l.b16 %v5373
        %v5525 = vunpack.c.l.b16 %v5374
        %v5526 = vunpack.c.l.b16 %v5375
        %v5527 = vunpack.c.l.b16 %v5376
        %v5528 = vunpack.c.l.b16 %v5377
        %v5529 = vunpack.c.l.b16 %v5378
        %v5530 = vunpack.c.l.b16 %v5379
        %v5531 = vunpack.c.l.b16 %v5380
        %v5532 = vunpack.c.l.b16 %v5381
        %v5533 = vunpack.c.l.b16 %v5382
        %v5534 = vunpack.c.l.b16 %v5383
        %v5535 = vunpack.c.l.b16 %v5384
        %v5536 = vunpack.c.l.b16 %v5385
        %v5537 = vunpack.c.l.b16 %v5386
        %v5538 = vunpack.c.l.b16 %v5387
        %v5539 = vunpack.c.l.b16 %v5388
        %v5540 = vunpack.c.l.b16 %v5389
        %v5541 = vunpack.c.l.b16 %v5390
        %v5542 = vunpack.c.l.b16 %v5391
        %v5543 = vunpack.c.l.b16 %v5392
        %v5544 = vunpack.c.l.b16 %v5393
        %v5545 = vunpack.c.l.b16 %v5394
        %v5546 = vunpack.c.l.b16 %v5395
        %v5547 = vunpack.c.l.b16 %v5396
        %v5548 = vunpack.c.l.b16 %v5397
        %v5549 = vunpack.c.l.b16 %v5398
        %v5550 = vunpack.c.l.b16 %v5399
        %v5551 = vunpack.c.l.b16 %v5400
        %v5552 = vunpack.c.l.b16 %v5401
        %v5553 = vunpack.c.l.b16 %v5402
        %v5554 = vunpack.c.l.b16 %v5403
        %v5555 = vunpack.c.l.b16 %v5404
        %v5556 = vunpack.c.l.b16 %v5405
        %v5557 = vunpack.c.l.b16 %v5406
        %v5558 = vunpack.c.l.b16 %v5407
        %v5559 = vunpack.c.l.b16 %v5408
        %v5560 = vunpack.c.l.b16 %v5409
        %v5561 = vunpack.c.l.b16 %v5410
        %v5562 = vunpack.c.l.b16 %v5411
        %v5563 = vunpack.c.l.b16 %v5412
        %v5564 = vunpack.c.l.b16 %v5413
        %v5565 = vunpack.c.l.b16 %v5414
        %v5566 = vunpack.c.l.b16 %v5415
        %v5567 = vunpack.c.l.b16 %v5416
        %v5568 = vunpack.c.l.b16 %v5417
        %v5569 = vunpack.c.l.b16 %v5418
        %v5570 = vunpack.c.l.b16 %v5419
        %v5571 = vunpack.c.l.b16 %v5420
        %v5572 = vunpack.c.l.b16 %v5421
        %v5573 = vunpack.c.l.b16 %v5422
        %v5574 = vunpack.c.l.b16 %v5423
        %v5575 = vunpack.c.l.b16 %v5424
        %v5576 = vunpack.c.l.b16 %v5425
        %v5577 = vunpack.c.l.b16 %v5426
        %v5578 = vunpack.c.l.b16 %v5427
        %v5579 = vunpack.c.l.b16 %v5428
        %v5580 = vunpack.c.l.b16 %v5429
        %v5581 = vunpack.c.l.b16 %v5430
        %v5582 = vunpack.c.l.b16 %v5431
        %v5583 = vunpack.c.l.b16 %v5432
        %v5584 = vunpack.c.l.b16 %v5433
        %v5585 = vunpack.c.l.b16 %v5434
        %v5586 = vunpack.c.l.b16 %v5435
        %v5587 = vunpack.c.l.b16 %v5436
        %v5588 = vunpack.c.l.b16 %v5437
        %v5589 = vunpack.c.l.b16 %v5438
        %v5590 = vunpack.c.l.b16 %v5439
        %v5591 = vunpack.c.l.b16 %v5440
        %v5592 = vunpack.c.l.b16 %v5441
        %v5593 = vunpack.c.l.b16 %v5442
        %v5594 = vpack.c.b16 %v5523, %v5522
        %v5595 = vpack.c.b16 %v5525, %v5524
        %v5596 = vpack.c.b16 %v5527, %v5526
        %v5597 = vpack.c.b16 %v5529, %v5528
        %v5598 = vpack.c.b16 %v5531, %v5530
        %v5599 = vpack.c.b16 %v5533, %v5532
        %v5600 = vpack.c.b16 %v5535, %v5534
        %v5601 = vpack.c.b16 %v5537, %v5536
        %v5602 = vpack.c.b16 %v5539, %v5538
        %v5603 = vpack.c.b16 %v5541, %v5540
        %v5604 = vpack.c.b16 %v5543, %v5542
        %v5605 = vpack.c.b16 %v5545, %v5544
        %v5606 = vpack.c.b16 %v5547, %v5546
        %v5607 = vpack.c.b16 %v5549, %v5548
        %v5608 = vpack.c.b16 %v5551, %v5550
        %v5609 = vpack.c.b16 %v5553, %v5552
        %v5610 = vpack.c.b16 %v5555, %v5554
        %v5611 = vpack.c.b16 %v5557, %v5556
        %v5612 = vpack.c.b16 %v5559, %v5558
        %v5613 = vpack.c.b16 %v5561, %v5560
        %v5614 = vpack.c.b16 %v5563, %v5562
        %v5615 = vpack.c.b16 %v5565, %v5564
        %v5616 = vpack.c.b16 %v5567, %v5566
        %v5617 = vpack.c.b16 %v5569, %v5568
        %v5618 = vpack.c.b16 %v5571, %v5570
        %v5619 = vpack.c.b16 %v5573, %v5572
        %v5620 = vpack.c.b16 %v5575, %v5574
        %v5621 = vpack.c.b16 %v5577, %v5576
        %v5622 = vpack.c.b16 %v5579, %v5578
        %v5623 = vpack.c.b16 %v5581, %v5580
        %v5624 = vpack.c.b16 %v5583, %v5582
        %v5625 = vpack.c.b16 %v5585, %v5584
        %v5626 = vpack.c.b16 %v5587, %v5586
        %v5627 = vpack.c.b16 %v5589, %v5588
        %v5628 = vpack.c.b16 %v5591, %v5590
        %v5629 = vpack.c.b16 %v5593, %v5592
        %v5667 = vsel %vm409, %v5101, 0
        %v5670 = vsel %vm409, %v5104, 0
        %v5673 = vsel %vm409, %v5107, 0
        %v5676 = vsel %vm409, %v5110, 0
        %v5679 = vsel %vm409, %v5113, 0
        %v5682 = vsel %vm409, %v5116, 0
        %v5685 = vsel %vm409, %v5119, 0
        %v5688 = vsel %vm409, %v5122, 0
        %v5691 = vsel %vm409, %v5125, 0
        %v5694 = vsel %vm409, %v5128, 0
        %v5697 = vsel %vm409, %v5131, 0
        %v5700 = vsel %vm409, %v5134, 0
        %v5703 = vsel %vm409, %v5137, 0
        %v5706 = vsel %vm409, %v5140, 0
        %v5709 = vsel %vm409, %v5143, 0
        %v5712 = vsel %vm409, %v5146, 0
        %5714 = vmatprep.subr.bf16.mxu0 0
        %5715 = vmatpush1.bf16.msra.mxu0 %v5601
        %5716 = vmatprep.subr.bf16.mxu0 0
        %5717 = vmatpush1.bf16.msra.mxu0 %v5600
        %5718 = vmatprep.subr.bf16.mxu0 0
        %5719 = vmatpush1.bf16.msra.mxu0 %v5599
        %5720 = vmatprep.subr.bf16.mxu0 0
        %5721 = vmatpush1.bf16.msra.mxu0 %v5598
        %5722 = vmatprep.subr.bf16.mxu0 0
        %5723 = vmatpush1.bf16.msra.mxu0 %v5597
        %5724 = vmatprep.subr.bf16.mxu0 0
        %5725 = vmatpush1.bf16.msra.mxu0 %v5596
        %5726 = vmatprep.subr.bf16.mxu0 0
        %5727 = vmatpush1.bf16.msra.mxu0 %v5595
        %5728 = vmatprep.subr.bf16.mxu0 0
        %5729 = vmatpush1.bf16.msra.mxu0 %v5594
        %5730 = vmatprep.subr.bf16.mxu0 0
        %5731 = vmatpush2.bf16.msra.mxu0 %v5609
        %5732 = vmatprep.subr.bf16.mxu0 0
        %5733 = vmatpush2.bf16.msra.mxu0 %v5608
        %5734 = vmatprep.subr.bf16.mxu0 0
        %5735 = vmatpush2.bf16.msra.mxu0 %v5607
        %5736 = vmatprep.subr.bf16.mxu0 0
        %5737 = vmatpush2.bf16.msra.mxu0 %v5606
        %5738 = vmatprep.subr.bf16.mxu0 0
        %5739 = vmatpush2.bf16.msra.mxu0 %v5605
        %5740 = vmatprep.subr.bf16.mxu0 0
        %5741 = vmatpush2.bf16.msra.mxu0 %v5604
        %5742 = vmatprep.subr.bf16.mxu0 0
        %5743 = vmatpush2.bf16.msra.mxu0 %v5603
        %5744 = vmatprep.subr.bf16.mxu0 0
        %5745 = vmatpush2.bf16.msra.mxu0 %v5602
        %5746 = vmatprep.mubr.bf16.mxu0 %v5197
        %5747 = vmatmul.mubr.bf16.gmra.mxu0 %v5148
        %v5748 = vpop.f32.mrf.mxu0
        %v5749 = vadd.f32 %v5448, %v5748
        %v5750 = vpop.f32.mrf.mxu0
        %v5751 = vpop.f32.mrf.mxu0
        %v5752 = vadd.f32 %v5448, %v5751
        %v5753 = vpop.f32.mrf.mxu0
        %5754 = vmatprep.mubr.bf16.mxu0 %v5201
        %5755 = vmatmul.mubr.bf16.gmra.mxu0 %v5151
        %v5756 = vpop.f32.mrf.mxu0
        %v5757 = vadd.f32 %v5448, %v5756
        %v5758 = vpop.f32.mrf.mxu0
        %v5759 = vpop.f32.mrf.mxu0
        %v5760 = vadd.f32 %v5448, %v5759
        %v5761 = vpop.f32.mrf.mxu0
        %5762 = vmatprep.mubr.bf16.mxu0 %v5205
        %5763 = vmatmul.mubr.bf16.gmra.mxu0 %v5154
        %v5764 = vpop.f32.mrf.mxu0
        %v5765 = vadd.f32 %v5448, %v5764
        %v5766 = vpop.f32.mrf.mxu0
        %v5767 = vpop.f32.mrf.mxu0
        %v5768 = vadd.f32 %v5448, %v5767
        %v5769 = vpop.f32.mrf.mxu0
        %5770 = vmatprep.mubr.bf16.mxu0 %v5209
        %5771 = vmatmul.mubr.bf16.gmra.mxu0 %v5157
        %v5772 = vpop.f32.mrf.mxu0
        %v5773 = vadd.f32 %v5448, %v5772
        %v5774 = vpop.f32.mrf.mxu0
        %v5775 = vpop.f32.mrf.mxu0
        %v5776 = vadd.f32 %v5448, %v5775
        %v5777 = vpop.f32.mrf.mxu0
        %5778 = vmatprep.mubr.bf16.mxu0 %v5213
        %5779 = vmatmul.mubr.bf16.gmra.mxu0 %v5160
        %v5780 = vpop.f32.mrf.mxu0
        %v5781 = vadd.f32 %v5448, %v5780
        %v5782 = vpop.f32.mrf.mxu0
        %v5783 = vpop.f32.mrf.mxu0
        %v5784 = vadd.f32 %v5448, %v5783
        %v5785 = vpop.f32.mrf.mxu0
        %5786 = vmatprep.mubr.bf16.mxu0 %v5217
        %5787 = vmatmul.mubr.bf16.gmra.mxu0 %v5163
        %v5788 = vpop.f32.mrf.mxu0
        %v5789 = vadd.f32 %v5448, %v5788
        %v5790 = vpop.f32.mrf.mxu0
        %v5791 = vpop.f32.mrf.mxu0
        %v5792 = vadd.f32 %v5448, %v5791
        %v5793 = vpop.f32.mrf.mxu0
        %5794 = vmatprep.mubr.bf16.mxu0 %v5221
        %5795 = vmatmul.mubr.bf16.gmra.mxu0 %v5166
        %v5796 = vpop.f32.mrf.mxu0
        %v5797 = vadd.f32 %v5448, %v5796
        %v5798 = vpop.f32.mrf.mxu0
        %v5799 = vpop.f32.mrf.mxu0
        %v5800 = vadd.f32 %v5448, %v5799
        %v5801 = vpop.f32.mrf.mxu0
        %5802 = vmatprep.mubr.bf16.mxu0 %v5225
        %5803 = vmatmul.mubr.bf16.gmra.mxu0 %v5169
        %v5804 = vpop.f32.mrf.mxu0
        %v5805 = vadd.f32 %v5448, %v5804
        %v5806 = vpop.f32.mrf.mxu0
        %v5807 = vpop.f32.mrf.mxu0
        %v5808 = vadd.f32 %v5448, %v5807
        %v5809 = vpop.f32.mrf.mxu0
        %5810 = vmatprep.mubr.bf16.mxu0 %v5229
        %5811 = vmatmul.mubr.bf16.gmra.mxu0 %v5172
        %v5812 = vpop.f32.mrf.mxu0
        %v5813 = vadd.f32 %v5448, %v5812
        %v5814 = vpop.f32.mrf.mxu0
        %v5815 = vpop.f32.mrf.mxu0
        %v5816 = vadd.f32 %v5448, %v5815
        %v5817 = vpop.f32.mrf.mxu0
        %5818 = vmatprep.mubr.bf16.mxu0 %v5233
        %5819 = vmatmul.mubr.bf16.gmra.mxu0 %v5175
        %v5820 = vpop.f32.mrf.mxu0
        %v5821 = vadd.f32 %v5448, %v5820
        %v5822 = vpop.f32.mrf.mxu0
        %v5823 = vpop.f32.mrf.mxu0
        %v5824 = vadd.f32 %v5448, %v5823
        %v5825 = vpop.f32.mrf.mxu0
        %5826 = vmatprep.mubr.bf16.mxu0 %v5237
        %5827 = vmatmul.mubr.bf16.gmra.mxu0 %v5178
        %v5828 = vpop.f32.mrf.mxu0
        %v5829 = vadd.f32 %v5448, %v5828
        %v5830 = vpop.f32.mrf.mxu0
        %v5831 = vpop.f32.mrf.mxu0
        %v5832 = vadd.f32 %v5448, %v5831
        %v5833 = vpop.f32.mrf.mxu0
        %5834 = vmatprep.mubr.bf16.mxu0 %v5241
        %5835 = vmatmul.mubr.bf16.gmra.mxu0 %v5181
        %v5836 = vpop.f32.mrf.mxu0
        %v5837 = vadd.f32 %v5448, %v5836
        %v5838 = vpop.f32.mrf.mxu0
        %v5839 = vpop.f32.mrf.mxu0
        %v5840 = vadd.f32 %v5448, %v5839
        %v5841 = vpop.f32.mrf.mxu0
        %5842 = vmatprep.mubr.bf16.mxu0 %v5245
        %5843 = vmatmul.mubr.bf16.gmra.mxu0 %v5184
        %v5844 = vpop.f32.mrf.mxu0
        %v5845 = vadd.f32 %v5448, %v5844
        %v5846 = vpop.f32.mrf.mxu0
        %v5847 = vpop.f32.mrf.mxu0
        %v5848 = vadd.f32 %v5448, %v5847
        %v5849 = vpop.f32.mrf.mxu0
        %5850 = vmatprep.mubr.bf16.mxu0 %v5249
        %5851 = vmatmul.mubr.bf16.gmra.mxu0 %v5187
        %v5852 = vpop.f32.mrf.mxu0
        %v5853 = vadd.f32 %v5448, %v5852
        %v5854 = vpop.f32.mrf.mxu0
        %v5855 = vpop.f32.mrf.mxu0
        %v5856 = vadd.f32 %v5448, %v5855
        %v5857 = vpop.f32.mrf.mxu0
        %5858 = vmatprep.mubr.bf16.mxu0 %v5253
        %5859 = vmatmul.mubr.bf16.gmra.mxu0 %v5190
        %v5860 = vpop.f32.mrf.mxu0
        %v5861 = vadd.f32 %v5448, %v5860
        %v5862 = vpop.f32.mrf.mxu0
        %v5863 = vpop.f32.mrf.mxu0
        %v5864 = vadd.f32 %v5448, %v5863
        %v5865 = vpop.f32.mrf.mxu0
        %5866 = vmatprep.mubr.bf16.mxu0 %v5257
        %5867 = vmatmul.mubr.bf16.gmra.mxu0 %v5193
        %v5868 = vpop.f32.mrf.mxu0
        %v5869 = vadd.f32 %v5448, %v5868
        %v5870 = vpop.f32.mrf.mxu0
        %v5871 = vpop.f32.mrf.mxu0
        %v5872 = vadd.f32 %v5448, %v5871
        %v5873 = vpop.f32.mrf.mxu0
        %5874 = vdwg.mxu0
        %5875 = vmatprep.subr.bf16.mxu0 0
        %5876 = vmatpush1.bf16.msra.mxu0 %v5617
        %5877 = vmatprep.subr.bf16.mxu0 0
        %5878 = vmatpush1.bf16.msra.mxu0 %v5616
        %5879 = vmatprep.subr.bf16.mxu0 0
        %5880 = vmatpush1.bf16.msra.mxu0 %v5615
        %5881 = vmatprep.subr.bf16.mxu0 0
        %5882 = vmatpush1.bf16.msra.mxu0 %v5614
        %5883 = vmatprep.subr.bf16.mxu0 0
        %5884 = vmatpush1.bf16.msra.mxu0 %v5613
        %5885 = vmatprep.subr.bf16.mxu0 0
        %5886 = vmatpush1.bf16.msra.mxu0 %v5612
        %5887 = vmatprep.subr.bf16.mxu0 0
        %5888 = vmatpush1.bf16.msra.mxu0 %v5611
        %5889 = vmatprep.subr.bf16.mxu0 0
        %5890 = vmatpush1.bf16.msra.mxu0 %v5610
        %5891 = vmatprep.subr.bf16.mxu0 0
        %5892 = vmatpush2.bf16.msra.mxu0 %v5625
        %5893 = vmatprep.subr.bf16.mxu0 0
        %5894 = vmatpush2.bf16.msra.mxu0 %v5624
        %5895 = vmatprep.subr.bf16.mxu0 0
        %5896 = vmatpush2.bf16.msra.mxu0 %v5623
        %5897 = vmatprep.subr.bf16.mxu0 0
        %5898 = vmatpush2.bf16.msra.mxu0 %v5622
        %5899 = vmatprep.subr.bf16.mxu0 0
        %5900 = vmatpush2.bf16.msra.mxu0 %v5621
        %5901 = vmatprep.subr.bf16.mxu0 0
        %5902 = vmatpush2.bf16.msra.mxu0 %v5620
        %5903 = vmatprep.subr.bf16.mxu0 0
        %5904 = vmatpush2.bf16.msra.mxu0 %v5619
        %5905 = vmatprep.subr.bf16.mxu0 0
        %5906 = vmatpush2.bf16.msra.mxu0 %v5618
        %5907 = vmatprep.mubr.bf16.mxu0 %v5324
        %5908 = vmatmul.mubr.bf16.gmra.mxu0 %v5261
        %v5909 = vpop.f32.mrf.mxu0
        %v5910 = vadd.f32 %v5749, %v5909
        %v5911 = vpop.f32.mrf.mxu0
        %v5912 = vpop.f32.mrf.mxu0
        %v5913 = vadd.f32 %v5752, %v5912
        %v5914 = vpop.f32.mrf.mxu0
        %5915 = vmatprep.mubr.bf16.mxu0 %v5327
        %5916 = vmatmul.mubr.bf16.gmra.mxu0 %v5265
        %v5917 = vpop.f32.mrf.mxu0
        %v5918 = vadd.f32 %v5757, %v5917
        %v5919 = vpop.f32.mrf.mxu0
        %v5920 = vpop.f32.mrf.mxu0
        %v5921 = vadd.f32 %v5760, %v5920
        %v5922 = vpop.f32.mrf.mxu0
        %5923 = vmatprep.mubr.bf16.mxu0 %v5330
        %5924 = vmatmul.mubr.bf16.gmra.mxu0 %v5269
        %v5925 = vpop.f32.mrf.mxu0
        %v5926 = vadd.f32 %v5765, %v5925
        %v5927 = vpop.f32.mrf.mxu0
        %v5928 = vpop.f32.mrf.mxu0
        %v5929 = vadd.f32 %v5768, %v5928
        %v5930 = vpop.f32.mrf.mxu0
        %5931 = vmatprep.mubr.bf16.mxu0 %v5333
        %5932 = vmatmul.mubr.bf16.gmra.mxu0 %v5273
        %v5933 = vpop.f32.mrf.mxu0
        %v5934 = vadd.f32 %v5773, %v5933
        %v5935 = vpop.f32.mrf.mxu0
        %v5936 = vpop.f32.mrf.mxu0
        %v5937 = vadd.f32 %v5776, %v5936
        %v5938 = vpop.f32.mrf.mxu0
        %5939 = vmatprep.mubr.bf16.mxu0 %v5336
        %5940 = vmatmul.mubr.bf16.gmra.mxu0 %v5277
        %v5941 = vpop.f32.mrf.mxu0
        %v5942 = vadd.f32 %v5781, %v5941
        %v5943 = vpop.f32.mrf.mxu0
        %v5944 = vpop.f32.mrf.mxu0
        %v5945 = vadd.f32 %v5784, %v5944
        %v5946 = vpop.f32.mrf.mxu0
        %5947 = vmatprep.mubr.bf16.mxu0 %v5339
        %5948 = vmatmul.mubr.bf16.gmra.mxu0 %v5281
        %v5949 = vpop.f32.mrf.mxu0
        %v5950 = vadd.f32 %v5789, %v5949
        %v5951 = vpop.f32.mrf.mxu0
        %v5952 = vpop.f32.mrf.mxu0
        %v5953 = vadd.f32 %v5792, %v5952
        %v5954 = vpop.f32.mrf.mxu0
        %5955 = vmatprep.mubr.bf16.mxu0 %v5342
        %5956 = vmatmul.mubr.bf16.gmra.mxu0 %v5285
        %v5957 = vpop.f32.mrf.mxu0
        %v5958 = vadd.f32 %v5797, %v5957
        %v5959 = vpop.f32.mrf.mxu0
        %v5960 = vpop.f32.mrf.mxu0
        %v5961 = vadd.f32 %v5800, %v5960
        %v5962 = vpop.f32.mrf.mxu0
        %5963 = vmatprep.mubr.bf16.mxu0 %v5345
        %5964 = vmatmul.mubr.bf16.gmra.mxu0 %v5289
        %v5965 = vpop.f32.mrf.mxu0
        %v5966 = vadd.f32 %v5805, %v5965
        %v5967 = vpop.f32.mrf.mxu0
        %v5968 = vpop.f32.mrf.mxu0
        %v5969 = vadd.f32 %v5808, %v5968
        %v5970 = vpop.f32.mrf.mxu0
        %5971 = vmatprep.mubr.bf16.mxu0 %v5348
        %5972 = vmatmul.mubr.bf16.gmra.mxu0 %v5293
        %v5973 = vpop.f32.mrf.mxu0
        %v5974 = vadd.f32 %v5813, %v5973
        %v5975 = vpop.f32.mrf.mxu0
        %v5976 = vpop.f32.mrf.mxu0
        %v5977 = vadd.f32 %v5816, %v5976
        %v5978 = vpop.f32.mrf.mxu0
        %5979 = vmatprep.mubr.bf16.mxu0 %v5351
        %5980 = vmatmul.mubr.bf16.gmra.mxu0 %v5297
        %v5981 = vpop.f32.mrf.mxu0
        %v5982 = vadd.f32 %v5821, %v5981
        %v5983 = vpop.f32.mrf.mxu0
        %v5984 = vpop.f32.mrf.mxu0
        %v5985 = vadd.f32 %v5824, %v5984
        %v5986 = vpop.f32.mrf.mxu0
        %5987 = vmatprep.mubr.bf16.mxu0 %v5354
        %5988 = vmatmul.mubr.bf16.gmra.mxu0 %v5301
        %v5989 = vpop.f32.mrf.mxu0
        %v5990 = vadd.f32 %v5829, %v5989
        %v5991 = vpop.f32.mrf.mxu0
        %v5992 = vpop.f32.mrf.mxu0
        %v5993 = vadd.f32 %v5832, %v5992
        %v5994 = vpop.f32.mrf.mxu0
        %5995 = vmatprep.mubr.bf16.mxu0 %v5357
        %5996 = vmatmul.mubr.bf16.gmra.mxu0 %v5305
        %v5997 = vpop.f32.mrf.mxu0
        %v5998 = vadd.f32 %v5837, %v5997
        %v5999 = vpop.f32.mrf.mxu0
        %v6000 = vpop.f32.mrf.mxu0
        %v6001 = vadd.f32 %v5840, %v6000
        %v6002 = vpop.f32.mrf.mxu0
        %6003 = vmatprep.mubr.bf16.mxu0 %v5360
        %6004 = vmatmul.mubr.bf16.gmra.mxu0 %v5309
        %v6005 = vpop.f32.mrf.mxu0
        %v6006 = vadd.f32 %v5845, %v6005
        %v6007 = vpop.f32.mrf.mxu0
        %v6008 = vpop.f32.mrf.mxu0
        %v6009 = vadd.f32 %v5848, %v6008
        %v6010 = vpop.f32.mrf.mxu0
        %6011 = vmatprep.mubr.bf16.mxu0 %v5363
        %6012 = vmatmul.mubr.bf16.gmra.mxu0 %v5313
        %v6013 = vpop.f32.mrf.mxu0
        %v6014 = vadd.f32 %v5853, %v6013
        %v6015 = vpop.f32.mrf.mxu0
        %v6016 = vpop.f32.mrf.mxu0
        %v6017 = vadd.f32 %v5856, %v6016
        %v6018 = vpop.f32.mrf.mxu0
        %6019 = vmatprep.mubr.bf16.mxu0 %v5366
        %6020 = vmatmul.mubr.bf16.gmra.mxu0 %v5317
        %v6021 = vpop.f32.mrf.mxu0
        %v6022 = vadd.f32 %v5861, %v6021
        %v6023 = vpop.f32.mrf.mxu0
        %v6024 = vpop.f32.mrf.mxu0
        %v6025 = vadd.f32 %v5864, %v6024
        %v6026 = vpop.f32.mrf.mxu0
        %6027 = vmatprep.mubr.bf16.mxu0 %v5369
        %6028 = vmatmul.mubr.bf16.gmra.mxu0 %v5321
        %v6029 = vpop.f32.mrf.mxu0
        %v6030 = vadd.f32 %v5869, %v6029
        %v6031 = vpop.f32.mrf.mxu0
        %v6032 = vpop.f32.mrf.mxu0
        %v6033 = vadd.f32 %v5872, %v6032
        %v6034 = vpop.f32.mrf.mxu0
        %6035 = vdwg.mxu0
        %6036 = vmatprep.subr.bf16.mxu0 0
        %6037 = vmatpush1.bf16.msra.mxu0 0
        %6038 = vmatprep.subr.bf16.mxu0 0
        %6039 = vmatpush1.bf16.msra.mxu0 0
        %6040 = vmatprep.subr.bf16.mxu0 0
        %6041 = vmatpush1.bf16.msra.mxu0 0
        %6042 = vmatprep.subr.bf16.mxu0 0
        %6043 = vmatpush1.bf16.msra.mxu0 0
        %6044 = vmatprep.subr.bf16.mxu0 0
        %6045 = vmatpush1.bf16.msra.mxu0 %v5629
        %6046 = vmatprep.subr.bf16.mxu0 0
        %6047 = vmatpush1.bf16.msra.mxu0 %v5628
        %6048 = vmatprep.subr.bf16.mxu0 0
        %6049 = vmatpush1.bf16.msra.mxu0 %v5627
        %6050 = vmatprep.subr.bf16.mxu0 0
        %6051 = vmatpush1.bf16.msra.mxu0 %v5626
        %6052 = vmatprep.subr.bf16.mxu0 0
        %6053 = vmatpush2.bf16.msra.mxu0 0
        %6054 = vmatprep.subr.bf16.mxu0 0
        %6055 = vmatpush2.bf16.msra.mxu0 0
        %6056 = vmatprep.subr.bf16.mxu0 0
        %6057 = vmatpush2.bf16.msra.mxu0 0
        %6058 = vmatprep.subr.bf16.mxu0 0
        %6059 = vmatpush2.bf16.msra.mxu0 0
        %6060 = vmatprep.subr.bf16.mxu0 0
        %6061 = vmatpush2.bf16.msra.mxu0 0
        %6062 = vmatprep.subr.bf16.mxu0 0
        %6063 = vmatpush2.bf16.msra.mxu0 0
        %6064 = vmatprep.subr.bf16.mxu0 0
        %6065 = vmatpush2.bf16.msra.mxu0 0
        %6066 = vmatprep.subr.bf16.mxu0 0
        %6067 = vmatpush2.bf16.msra.mxu0 0
        %6068 = vmatprep.mubr.bf16.mxu0 0
        %6069 = vmatmul.mubr.bf16.gmra.mxu0 %v5667
        %v6070 = vpop.f32.mrf.mxu0
        %v6071 = vadd.f32 %v5910, %v6070
        %v6072 = vpop.f32.mrf.mxu0
        %v6073 = vpop.f32.mrf.mxu0
        %v6074 = vadd.f32 %v5913, %v6073
        %v6075 = vpop.f32.mrf.mxu0
        %6076 = vmatprep.mubr.bf16.mxu0 0
        %6077 = vmatmul.mubr.bf16.gmra.mxu0 %v5670
        %v6078 = vpop.f32.mrf.mxu0
        %v6079 = vadd.f32 %v5918, %v6078
        %v6080 = vpop.f32.mrf.mxu0
        %v6081 = vpop.f32.mrf.mxu0
        %v6082 = vadd.f32 %v5921, %v6081
        %v6083 = vpop.f32.mrf.mxu0
        %6084 = vmatprep.mubr.bf16.mxu0 0
        %6085 = vmatmul.mubr.bf16.gmra.mxu0 %v5673
        %v6086 = vpop.f32.mrf.mxu0
        %v6087 = vadd.f32 %v5926, %v6086
        %v6088 = vpop.f32.mrf.mxu0
        %v6089 = vpop.f32.mrf.mxu0
        %v6090 = vadd.f32 %v5929, %v6089
        %v6091 = vpop.f32.mrf.mxu0
        %6092 = vmatprep.mubr.bf16.mxu0 0
        %6093 = vmatmul.mubr.bf16.gmra.mxu0 %v5676
        %v6094 = vpop.f32.mrf.mxu0
        %v6095 = vadd.f32 %v5934, %v6094
        %v6096 = vpop.f32.mrf.mxu0
        %v6097 = vpop.f32.mrf.mxu0
        %v6098 = vadd.f32 %v5937, %v6097
        %v6099 = vpop.f32.mrf.mxu0
        %6100 = vmatprep.mubr.bf16.mxu0 0
        %6101 = vmatmul.mubr.bf16.gmra.mxu0 %v5679
        %v6102 = vpop.f32.mrf.mxu0
        %v6103 = vadd.f32 %v5942, %v6102
        %v6104 = vpop.f32.mrf.mxu0
        %v6105 = vpop.f32.mrf.mxu0
        %v6106 = vadd.f32 %v5945, %v6105
        %v6107 = vpop.f32.mrf.mxu0
        %6108 = vmatprep.mubr.bf16.mxu0 0
        %6109 = vmatmul.mubr.bf16.gmra.mxu0 %v5682
        %v6110 = vpop.f32.mrf.mxu0
        %v6111 = vadd.f32 %v5950, %v6110
        %v6112 = vpop.f32.mrf.mxu0
        %v6113 = vpop.f32.mrf.mxu0
        %v6114 = vadd.f32 %v5953, %v6113
        %v6115 = vpop.f32.mrf.mxu0
        %6116 = vmatprep.mubr.bf16.mxu0 0
        %6117 = vmatmul.mubr.bf16.gmra.mxu0 %v5685
        %v6118 = vpop.f32.mrf.mxu0
        %v6119 = vadd.f32 %v5958, %v6118
        %v6120 = vpop.f32.mrf.mxu0
        %v6121 = vpop.f32.mrf.mxu0
        %v6122 = vadd.f32 %v5961, %v6121
        %v6123 = vpop.f32.mrf.mxu0
        %6124 = vmatprep.mubr.bf16.mxu0 0
        %6125 = vmatmul.mubr.bf16.gmra.mxu0 %v5688
        %v6126 = vpop.f32.mrf.mxu0
        %v6127 = vadd.f32 %v5966, %v6126
        %v6128 = vpop.f32.mrf.mxu0
        %v6129 = vpop.f32.mrf.mxu0
        %v6130 = vadd.f32 %v5969, %v6129
        %v6131 = vpop.f32.mrf.mxu0
        %6132 = vmatprep.mubr.bf16.mxu0 0
        %6133 = vmatmul.mubr.bf16.gmra.mxu0 %v5691
        %v6134 = vpop.f32.mrf.mxu0
        %v6135 = vadd.f32 %v5974, %v6134
        %v6136 = vpop.f32.mrf.mxu0
        %v6137 = vpop.f32.mrf.mxu0
        %v6138 = vadd.f32 %v5977, %v6137
        %v6139 = vpop.f32.mrf.mxu0
        %6140 = vmatprep.mubr.bf16.mxu0 0
        %6141 = vmatmul.mubr.bf16.gmra.mxu0 %v5694
        %v6142 = vpop.f32.mrf.mxu0
        %v6143 = vadd.f32 %v5982, %v6142
        %v6144 = vpop.f32.mrf.mxu0
        %v6145 = vpop.f32.mrf.mxu0
        %v6146 = vadd.f32 %v5985, %v6145
        %v6147 = vpop.f32.mrf.mxu0
        %6148 = vmatprep.mubr.bf16.mxu0 0
        %6149 = vmatmul.mubr.bf16.gmra.mxu0 %v5697
        %v6150 = vpop.f32.mrf.mxu0
        %v6151 = vadd.f32 %v5990, %v6150
        %v6152 = vpop.f32.mrf.mxu0
        %v6153 = vpop.f32.mrf.mxu0
        %v6154 = vadd.f32 %v5993, %v6153
        %v6155 = vpop.f32.mrf.mxu0
        %6156 = vmatprep.mubr.bf16.mxu0 0
        %6157 = vmatmul.mubr.bf16.gmra.mxu0 %v5700
        %v6158 = vpop.f32.mrf.mxu0
        %v6159 = vadd.f32 %v5998, %v6158
        %v6160 = vpop.f32.mrf.mxu0
        %v6161 = vpop.f32.mrf.mxu0
        %v6162 = vadd.f32 %v6001, %v6161
        %v6163 = vpop.f32.mrf.mxu0
        %6164 = vmatprep.mubr.bf16.mxu0 0
        %6165 = vmatmul.mubr.bf16.gmra.mxu0 %v5703
        %v6166 = vpop.f32.mrf.mxu0
        %v6167 = vadd.f32 %v6006, %v6166
        %v6168 = vpop.f32.mrf.mxu0
        %v6169 = vpop.f32.mrf.mxu0
        %v6170 = vadd.f32 %v6009, %v6169
        %v6171 = vpop.f32.mrf.mxu0
        %6172 = vmatprep.mubr.bf16.mxu0 0
        %6173 = vmatmul.mubr.bf16.gmra.mxu0 %v5706
        %v6174 = vpop.f32.mrf.mxu0
        %v6175 = vadd.f32 %v6014, %v6174
        %v6176 = vpop.f32.mrf.mxu0
        %v6177 = vpop.f32.mrf.mxu0
        %v6178 = vadd.f32 %v6017, %v6177
        %v6179 = vpop.f32.mrf.mxu0
        %6180 = vmatprep.mubr.bf16.mxu0 0
        %6181 = vmatmul.mubr.bf16.gmra.mxu0 %v5709
        %v6182 = vpop.f32.mrf.mxu0
        %v6183 = vadd.f32 %v6022, %v6182
        %v6184 = vpop.f32.mrf.mxu0
        %v6185 = vpop.f32.mrf.mxu0
        %v6186 = vadd.f32 %v6025, %v6185
        %v6187 = vpop.f32.mrf.mxu0
        %6188 = vmatprep.mubr.bf16.mxu0 0
        %6189 = vmatmul.mubr.bf16.gmra.mxu0 %v5712
        %v6190 = vpop.f32.mrf.mxu0
        %v6191 = vadd.f32 %v6030, %v6190
        %v6192 = vpop.f32.mrf.mxu0
        %v6193 = vpop.f32.mrf.mxu0
        %v6194 = vadd.f32 %v6033, %v6193
        %v6195 = vpop.f32.mrf.mxu0
        %6196 = vdwg.mxu0
        %v6197 = vmax.f32 %v6071, 0.0
        %v6198 = vmax.f32 %v6074, 0.0
        %v6199 = vmax.f32 %v6079, 0.0
        %v6200 = vmax.f32 %v6082, 0.0
        %v6201 = vmax.f32 %v6087, 0.0
        %v6202 = vmax.f32 %v6090, 0.0
        %v6203 = vmax.f32 %v6095, 0.0
        %v6204 = vmax.f32 %v6098, 0.0
        %v6205 = vmax.f32 %v6103, 0.0
        %v6206 = vmax.f32 %v6106, 0.0
        %v6207 = vmax.f32 %v6111, 0.0
        %v6208 = vmax.f32 %v6114, 0.0
        %v6209 = vmax.f32 %v6119, 0.0
        %v6210 = vmax.f32 %v6122, 0.0
        %v6211 = vmax.f32 %v6127, 0.0
        %v6212 = vmax.f32 %v6130, 0.0
        %v6213 = vmax.f32 %v6135, 0.0
        %v6214 = vmax.f32 %v6138, 0.0
        %v6215 = vmax.f32 %v6143, 0.0
        %v6216 = vmax.f32 %v6146, 0.0
        %v6217 = vmax.f32 %v6151, 0.0
        %v6218 = vmax.f32 %v6154, 0.0
        %v6219 = vmax.f32 %v6159, 0.0
        %v6220 = vmax.f32 %v6162, 0.0
        %v6221 = vmax.f32 %v6167, 0.0
        %v6222 = vmax.f32 %v6170, 0.0
        %v6223 = vmax.f32 %v6175, 0.0
        %v6224 = vmax.f32 %v6178, 0.0
        %v6225 = vmax.f32 %v6183, 0.0
        %v6226 = vmax.f32 %v6186, 0.0
        %v6227 = vmax.f32 %v6191, 0.0
        %v6228 = vmax.f32 %v6194, 0.0
        %6229 = vst.msk [vmem:[#allocation2] sm:$0xff] %vm409, %v6197
        %6230 = vst.msk [vmem:[#allocation2 + $0x8] sm:$0xff] %vm409, %v6198
        %6231 = vst.msk [vmem:[#allocation2 + $0x18] sm:$0xff] %vm409, %v6199
        %6232 = vst.msk [vmem:[#allocation2 + $0x20] sm:$0xff] %vm409, %v6200
        %6233 = vst.msk [vmem:[#allocation2 + $0x30] sm:$0xff] %vm409, %v6201
        %6234 = vst.msk [vmem:[#allocation2 + $0x38] sm:$0xff] %vm409, %v6202
        %6235 = vst.msk [vmem:[#allocation2 + $0x48] sm:$0xff] %vm409, %v6203
        %6236 = vst.msk [vmem:[#allocation2 + $0x50] sm:$0xff] %vm409, %v6204
        %6237 = vst.msk [vmem:[#allocation2 + $0x60] sm:$0xff] %vm409, %v6205
        %6238 = vst.msk [vmem:[#allocation2 + $0x68] sm:$0xff] %vm409, %v6206
        %6239 = vst.msk [vmem:[#allocation2 + $0x78] sm:$0xff] %vm409, %v6207
        %6240 = vst.msk [vmem:[#allocation2 + $0x80] sm:$0xff] %vm409, %v6208
        %6241 = vst.msk [vmem:[#allocation2 + $0x90] sm:$0xff] %vm409, %v6209
        %6242 = vst.msk [vmem:[#allocation2 + $0x98] sm:$0xff] %vm409, %v6210
        %6243 = vst.msk [vmem:[#allocation2 + $0xa8] sm:$0xff] %vm409, %v6211
        %6244 = vst.msk [vmem:[#allocation2 + $0xb0] sm:$0xff] %vm409, %v6212
        %6245 = vst.msk [vmem:[#allocation2 + $0xc0] sm:$0xff] %vm409, %v6213
        %6246 = vst.msk [vmem:[#allocation2 + $0xc8] sm:$0xff] %vm409, %v6214
        %6247 = vst.msk [vmem:[#allocation2 + $0xd8] sm:$0xff] %vm409, %v6215
        %6248 = vst.msk [vmem:[#allocation2 + $0xe0] sm:$0xff] %vm409, %v6216
        %6249 = vst.msk [vmem:[#allocation2 + $0xf0] sm:$0xff] %vm409, %v6217
        %6250 = vst.msk [vmem:[#allocation2 + $0xf8] sm:$0xff] %vm409, %v6218
        %6251 = vst.msk [vmem:[#allocation2 + $0x108] sm:$0xff] %vm409, %v6219
        %6252 = vst.msk [vmem:[#allocation2 + $0x110] sm:$0xff] %vm409, %v6220
        %6253 = vst.msk [vmem:[#allocation2 + $0x120] sm:$0xff] %vm409, %v6221
        %6254 = vst.msk [vmem:[#allocation2 + $0x128] sm:$0xff] %vm409, %v6222
        %6255 = vst.msk [vmem:[#allocation2 + $0x138] sm:$0xff] %vm409, %v6223
        %6256 = vst.msk [vmem:[#allocation2 + $0x140] sm:$0xff] %vm409, %v6224
        %6257 = vst.msk [vmem:[#allocation2 + $0x150] sm:$0xff] %vm409, %v6225
        %6258 = vst.msk [vmem:[#allocation2 + $0x158] sm:$0xff] %vm409, %v6226
        %6259 = vst.msk [vmem:[#allocation2 + $0x168] sm:$0xff] %vm409, %v6227
        %6260 = vst.msk [vmem:[#allocation2 + $0x170] sm:$0xff] %vm409, %v6228
        %v6261 = vld [vmem:[#allocation2 + $0x1] sm:$0xff]
        %v6262 = vld [vmem:[#allocation2 + $0x9] sm:$0xff]
        %v6263 = vld [vmem:[#allocation2 + $0x19] sm:$0xff]
        %v6264 = vld [vmem:[#allocation2 + $0x21] sm:$0xff]
        %v6265 = vld [vmem:[#allocation2 + $0x31] sm:$0xff]
        %v6266 = vld [vmem:[#allocation2 + $0x39] sm:$0xff]
        %v6267 = vld [vmem:[#allocation2 + $0x49] sm:$0xff]
        %v6268 = vld [vmem:[#allocation2 + $0x51] sm:$0xff]
        %v6269 = vld [vmem:[#allocation2 + $0x61] sm:$0xff]
        %v6270 = vld [vmem:[#allocation2 + $0x69] sm:$0xff]
        %v6271 = vld [vmem:[#allocation2 + $0x79] sm:$0xff]
        %v6272 = vld [vmem:[#allocation2 + $0x81] sm:$0xff]
        %v6273 = vld [vmem:[#allocation2 + $0x91] sm:$0xff]
        %v6274 = vld [vmem:[#allocation2 + $0x99] sm:$0xff]
        %v6275 = vld [vmem:[#allocation2 + $0xa9] sm:$0xff]
        %v6276 = vld [vmem:[#allocation2 + $0xb1] sm:$0xff]
        %v6277 = vld [vmem:[#allocation2 + $0xc1] sm:$0xff]
        %v6278 = vld [vmem:[#allocation2 + $0xc9] sm:$0xff]
        %v6279 = vld [vmem:[#allocation2 + $0xd9] sm:$0xff]
        %v6280 = vld [vmem:[#allocation2 + $0xe1] sm:$0xff]
        %v6281 = vld [vmem:[#allocation2 + $0xf1] sm:$0xff]
        %v6282 = vld [vmem:[#allocation2 + $0xf9] sm:$0xff]
        %v6283 = vld [vmem:[#allocation2 + $0x109] sm:$0xff]
        %v6284 = vld [vmem:[#allocation2 + $0x111] sm:$0xff]
        %v6285 = vld [vmem:[#allocation2 + $0x121] sm:$0xff]
        %v6286 = vld [vmem:[#allocation2 + $0x129] sm:$0xff]
        %v6287 = vld [vmem:[#allocation2 + $0x139] sm:$0xff]
        %v6288 = vld [vmem:[#allocation2 + $0x141] sm:$0xff]
        %v6289 = vld [vmem:[#allocation2 + $0x151] sm:$0xff]
        %v6290 = vld [vmem:[#allocation2 + $0x159] sm:$0xff]
        %v6291 = vld [vmem:[#allocation2 + $0x169] sm:$0xff]
        %v6292 = vld [vmem:[#allocation2 + $0x171] sm:$0xff]
        %v6293 = vld [vmem:[%s2852] sm:$0xff]
        %v6294 = vld [vmem:[%s2852 + $0x8] sm:$0xff]
        %v6295 = vld [vmem:[%s2852 + $0x18] sm:$0xff]
        %v6296 = vld [vmem:[%s2852 + $0x20] sm:$0xff]
        %v6297 = vld [vmem:[%s2852 + $0x30] sm:$0xff]
        %v6298 = vld [vmem:[%s2852 + $0x38] sm:$0xff]
        %v6299 = vld [vmem:[%s2852 + $0x48] sm:$0xff]
        %v6300 = vld [vmem:[%s2852 + $0x50] sm:$0xff]
        %v6301 = vld [vmem:[%s2852 + $0x60] sm:$0xff]
        %v6302 = vld [vmem:[%s2852 + $0x68] sm:$0xff]
        %v6303 = vld [vmem:[%s2852 + $0x78] sm:$0xff]
        %v6304 = vld [vmem:[%s2852 + $0x80] sm:$0xff]
        %v6305 = vld [vmem:[%s2852 + $0x90] sm:$0xff]
        %v6306 = vld [vmem:[%s2852 + $0x98] sm:$0xff]
        %v6307 = vld [vmem:[%s2852 + $0xa8] sm:$0xff]
        %v6308 = vld [vmem:[%s2852 + $0xb0] sm:$0xff]
        %v6309 = vld [vmem:[%s2852 + $0xc0] sm:$0xff]
        %v6310 = vld [vmem:[%s2852 + $0xc8] sm:$0xff]
        %v6311 = vld [vmem:[%s2852 + $0xd8] sm:$0xff]
        %v6312 = vld [vmem:[%s2852 + $0xe0] sm:$0xff]
        %v6313 = vld [vmem:[%s2852 + $0xf0] sm:$0xff]
        %v6314 = vld [vmem:[%s2852 + $0xf8] sm:$0xff]
        %v6315 = vld [vmem:[%s2852 + $0x108] sm:$0xff]
        %v6316 = vld [vmem:[%s2852 + $0x110] sm:$0xff]
        %v6317 = vld [vmem:[%s2852 + $0x120] sm:$0xff]
        %v6318 = vld [vmem:[%s2852 + $0x128] sm:$0xff]
        %v6319 = vld [vmem:[%s2852 + $0x138] sm:$0xff]
        %v6320 = vld [vmem:[%s2852 + $0x140] sm:$0xff]
        %v6321 = vld [vmem:[%s2852 + $0x150] sm:$0xff]
        %v6322 = vld [vmem:[%s2852 + $0x158] sm:$0xff]
        %v6323 = vld [vmem:[%s2852 + $0x168] sm:$0xff]
        %v6324 = vld [vmem:[%s2852 + $0x170] sm:$0xff]
        %v6325 = vld [vmem:[%s2852 + $0x1] sm:$0xff]
        %v6326 = vld [vmem:[%s2852 + $0x9] sm:$0xff]
        %v6327 = vld [vmem:[%s2852 + $0x19] sm:$0xff]
        %v6328 = vld [vmem:[%s2852 + $0x21] sm:$0xff]
        %v6329 = vld [vmem:[%s2852 + $0x31] sm:$0xff]
        %v6330 = vld [vmem:[%s2852 + $0x39] sm:$0xff]
        %v6331 = vld [vmem:[%s2852 + $0x49] sm:$0xff]
        %v6332 = vld [vmem:[%s2852 + $0x51] sm:$0xff]
        %v6333 = vld [vmem:[%s2852 + $0x61] sm:$0xff]
        %v6334 = vld [vmem:[%s2852 + $0x69] sm:$0xff]
        %v6335 = vld [vmem:[%s2852 + $0x79] sm:$0xff]
        %v6336 = vld [vmem:[%s2852 + $0x81] sm:$0xff]
        %v6337 = vld [vmem:[%s2852 + $0x91] sm:$0xff]
        %v6338 = vld [vmem:[%s2852 + $0x99] sm:$0xff]
        %v6339 = vld [vmem:[%s2852 + $0xa9] sm:$0xff]
        %v6340 = vld [vmem:[%s2852 + $0xb1] sm:$0xff]
        %v6341 = vld [vmem:[%s2852 + $0xc1] sm:$0xff]
        %v6342 = vld [vmem:[%s2852 + $0xc9] sm:$0xff]
        %v6343 = vld [vmem:[%s2852 + $0xd9] sm:$0xff]
        %v6344 = vld [vmem:[%s2852 + $0xe1] sm:$0xff]
        %v6345 = vld [vmem:[%s2852 + $0xf1] sm:$0xff]
        %v6346 = vld [vmem:[%s2852 + $0xf9] sm:$0xff]
        %v6347 = vld [vmem:[%s2852 + $0x109] sm:$0xff]
        %v6348 = vld [vmem:[%s2852 + $0x111] sm:$0xff]
        %v6349 = vld [vmem:[%s2852 + $0x121] sm:$0xff]
        %v6350 = vld [vmem:[%s2852 + $0x129] sm:$0xff]
        %v6351 = vld [vmem:[%s2852 + $0x139] sm:$0xff]
        %v6352 = vld [vmem:[%s2852 + $0x141] sm:$0xff]
        %v6353 = vld [vmem:[%s2852 + $0x151] sm:$0xff]
        %v6354 = vld [vmem:[%s2852 + $0x159] sm:$0xff]
        %v6355 = vld [vmem:[%s2852 + $0x169] sm:$0xff]
        %v6356 = vld [vmem:[%s2852 + $0x171] sm:$0xff]
        %v6357 = vadd.f32 %v6197, %v6261
        %v6358 = vadd.f32 %v6198, %v6262
        %v6359 = vadd.f32 %v6199, %v6263
        %v6360 = vadd.f32 %v6200, %v6264
        %v6361 = vadd.f32 %v6201, %v6265
        %v6362 = vadd.f32 %v6202, %v6266
        %v6363 = vadd.f32 %v6203, %v6267
        %v6364 = vadd.f32 %v6204, %v6268
        %v6365 = vadd.f32 %v6205, %v6269
        %v6366 = vadd.f32 %v6206, %v6270
        %v6367 = vadd.f32 %v6207, %v6271
        %v6368 = vadd.f32 %v6208, %v6272
        %v6369 = vadd.f32 %v6209, %v6273
        %v6370 = vadd.f32 %v6210, %v6274
        %v6371 = vadd.f32 %v6211, %v6275
        %v6372 = vadd.f32 %v6212, %v6276
        %v6373 = vadd.f32 %v6213, %v6277
        %v6374 = vadd.f32 %v6214, %v6278
        %v6375 = vadd.f32 %v6215, %v6279
        %v6376 = vadd.f32 %v6216, %v6280
        %v6377 = vadd.f32 %v6217, %v6281
        %v6378 = vadd.f32 %v6218, %v6282
        %v6379 = vadd.f32 %v6219, %v6283
        %v6380 = vadd.f32 %v6220, %v6284
        %v6381 = vadd.f32 %v6221, %v6285
        %v6382 = vadd.f32 %v6222, %v6286
        %v6383 = vadd.f32 %v6223, %v6287
        %v6384 = vadd.f32 %v6224, %v6288
        %v6385 = vadd.f32 %v6225, %v6289
        %v6386 = vadd.f32 %v6226, %v6290
        %v6387 = vadd.f32 %v6227, %v6291
        %v6388 = vadd.f32 %v6228, %v6292
        %v6389 = vadd.f32 %v6357, %v6293
        %v6390 = vadd.f32 %v6358, %v6294
        %v6391 = vadd.f32 %v6359, %v6295
        %v6392 = vadd.f32 %v6360, %v6296
        %v6393 = vadd.f32 %v6361, %v6297
        %v6394 = vadd.f32 %v6362, %v6298
        %v6395 = vadd.f32 %v6363, %v6299
        %v6396 = vadd.f32 %v6364, %v6300
        %v6397 = vadd.f32 %v6365, %v6301
        %v6398 = vadd.f32 %v6366, %v6302
        %v6399 = vadd.f32 %v6367, %v6303
        %v6400 = vadd.f32 %v6368, %v6304
        %v6401 = vadd.f32 %v6369, %v6305
        %v6402 = vadd.f32 %v6370, %v6306
        %v6403 = vadd.f32 %v6371, %v6307
        %v6404 = vadd.f32 %v6372, %v6308
        %v6405 = vadd.f32 %v6373, %v6309
        %v6406 = vadd.f32 %v6374, %v6310
        %v6407 = vadd.f32 %v6375, %v6311
        %v6408 = vadd.f32 %v6376, %v6312
        %v6409 = vadd.f32 %v6377, %v6313
        %v6410 = vadd.f32 %v6378, %v6314
        %v6411 = vadd.f32 %v6379, %v6315
        %v6412 = vadd.f32 %v6380, %v6316
        %v6413 = vadd.f32 %v6381, %v6317
        %v6414 = vadd.f32 %v6382, %v6318
        %v6415 = vadd.f32 %v6383, %v6319
        %v6416 = vadd.f32 %v6384, %v6320
        %v6417 = vadd.f32 %v6385, %v6321
        %v6418 = vadd.f32 %v6386, %v6322
        %v6419 = vadd.f32 %v6387, %v6323
        %v6420 = vadd.f32 %v6388, %v6324
        %v6421 = vadd.f32 %v6389, %v6325
        %v6422 = vadd.f32 %v6390, %v6326
        %v6423 = vadd.f32 %v6391, %v6327
        %v6424 = vadd.f32 %v6392, %v6328
        %v6425 = vadd.f32 %v6393, %v6329
        %v6426 = vadd.f32 %v6394, %v6330
        %v6427 = vadd.f32 %v6395, %v6331
        %v6428 = vadd.f32 %v6396, %v6332
        %v6429 = vadd.f32 %v6397, %v6333
        %v6430 = vadd.f32 %v6398, %v6334
        %v6431 = vadd.f32 %v6399, %v6335
        %v6432 = vadd.f32 %v6400, %v6336
        %v6433 = vadd.f32 %v6401, %v6337
        %v6434 = vadd.f32 %v6402, %v6338
        %v6435 = vadd.f32 %v6403, %v6339
        %v6436 = vadd.f32 %v6404, %v6340
        %v6437 = vadd.f32 %v6405, %v6341
        %v6438 = vadd.f32 %v6406, %v6342
        %v6439 = vadd.f32 %v6407, %v6343
        %v6440 = vadd.f32 %v6408, %v6344
        %v6441 = vadd.f32 %v6409, %v6345
        %v6442 = vadd.f32 %v6410, %v6346
        %v6443 = vadd.f32 %v6411, %v6347
        %v6444 = vadd.f32 %v6412, %v6348
        %v6445 = vadd.f32 %v6413, %v6349
        %v6446 = vadd.f32 %v6414, %v6350
        %v6447 = vadd.f32 %v6415, %v6351
        %v6448 = vadd.f32 %v6416, %v6352
        %v6449 = vadd.f32 %v6417, %v6353
        %v6450 = vadd.f32 %v6418, %v6354
        %v6451 = vadd.f32 %v6419, %v6355
        %v6452 = vadd.f32 %v6420, %v6356
        %v6453 = vmul.f32 %v6421, 0.25
        %v6454 = vmul.f32 %v6422, 0.25
        %v6455 = vmul.f32 %v6423, 0.25
        %v6456 = vmul.f32 %v6424, 0.25
        %v6457 = vmul.f32 %v6425, 0.25
        %v6458 = vmul.f32 %v6426, 0.25
        %v6459 = vmul.f32 %v6427, 0.25
        %v6460 = vmul.f32 %v6428, 0.25
        %v6461 = vmul.f32 %v6429, 0.25
        %v6462 = vmul.f32 %v6430, 0.25
        %v6463 = vmul.f32 %v6431, 0.25
        %v6464 = vmul.f32 %v6432, 0.25
        %v6465 = vmul.f32 %v6433, 0.25
        %v6466 = vmul.f32 %v6434, 0.25
        %v6467 = vmul.f32 %v6435, 0.25
        %v6468 = vmul.f32 %v6436, 0.25
        %v6469 = vmul.f32 %v6437, 0.25
        %v6470 = vmul.f32 %v6438, 0.25
        %v6471 = vmul.f32 %v6439, 0.25
        %v6472 = vmul.f32 %v6440, 0.25
        %v6473 = vmul.f32 %v6441, 0.25
        %v6474 = vmul.f32 %v6442, 0.25
        %v6475 = vmul.f32 %v6443, 0.25
        %v6476 = vmul.f32 %v6444, 0.25
        %v6477 = vmul.f32 %v6445, 0.25
        %v6478 = vmul.f32 %v6446, 0.25
        %v6479 = vmul.f32 %v6447, 0.25
        %v6480 = vmul.f32 %v6448, 0.25
        %v6481 = vmul.f32 %v6449, 0.25
        %v6482 = vmul.f32 %v6450, 0.25
        %v6483 = vmul.f32 %v6451, 0.25
        %v6484 = vmul.f32 %v6452, 0.25
        %v6485 = vpack.c.bf16 %v6454, %v6453
        %v6486 = vpack.c.bf16 %v6456, %v6455
        %v6487 = vpack.c.bf16 %v6458, %v6457
        %v6488 = vpack.c.bf16 %v6460, %v6459
        %v6489 = vpack.c.bf16 %v6462, %v6461
        %v6490 = vpack.c.bf16 %v6464, %v6463
        %v6491 = vpack.c.bf16 %v6466, %v6465
        %v6492 = vpack.c.bf16 %v6468, %v6467
        %v6493 = vpack.c.bf16 %v6470, %v6469
        %v6494 = vpack.c.bf16 %v6472, %v6471
        %v6495 = vpack.c.bf16 %v6474, %v6473
        %v6496 = vpack.c.bf16 %v6476, %v6475
        %v6497 = vpack.c.bf16 %v6478, %v6477
        %v6498 = vpack.c.bf16 %v6480, %v6479
        %v6499 = vpack.c.bf16 %v6482, %v6481
        %v6500 = vpack.c.bf16 %v6484, %v6483
        %v6517 = vunpack.c.l.b16 %v6485
        %v6518 = vunpack.c.h.b16 %v6485
        %v6519 = vunpack.c.l.b16 %v6486
        %v6520 = vunpack.c.h.b16 %v6486
        %v6521 = vunpack.c.l.b16 %v6487
        %v6522 = vunpack.c.h.b16 %v6487
        %v6523 = vunpack.c.l.b16 %v6488
        %v6524 = vunpack.c.h.b16 %v6488
        %v6525 = vunpack.c.l.b16 %v6489
        %v6526 = vunpack.c.h.b16 %v6489
        %v6527 = vunpack.c.l.b16 %v6490
        %v6528 = vunpack.c.h.b16 %v6490
        %v6529 = vunpack.c.l.b16 %v6491
        %v6530 = vunpack.c.h.b16 %v6491
        %v6531 = vunpack.c.l.b16 %v6492
        %v6532 = vunpack.c.h.b16 %v6492
        %v6533 = vunpack.c.l.b16 %v6493
        %v6534 = vunpack.c.h.b16 %v6493
        %v6535 = vunpack.c.l.b16 %v6494
        %v6536 = vunpack.c.h.b16 %v6494
        %v6537 = vunpack.c.l.b16 %v6495
        %v6538 = vunpack.c.h.b16 %v6495
        %v6539 = vunpack.c.l.b16 %v6496
        %v6540 = vunpack.c.h.b16 %v6496
        %v6541 = vunpack.c.l.b16 %v6497
        %v6542 = vunpack.c.h.b16 %v6497
        %v6543 = vunpack.c.l.b16 %v6498
        %v6544 = vunpack.c.h.b16 %v6498
        %v6545 = vunpack.c.l.b16 %v6499
        %v6546 = vunpack.c.h.b16 %v6499
        %v6547 = vunpack.c.l.b16 %v6500
        %v6548 = vunpack.c.h.b16 %v6500
        %v6549 = vpack.c.b16 %v6517, %v6517
        %v6550 = vpack.c.b16 %v6518, %v6518
        %v6551 = vpack.c.b16 %v6519, %v6519
        %v6552 = vpack.c.b16 %v6520, %v6520
        %v6553 = vpack.c.b16 %v6521, %v6521
        %v6554 = vpack.c.b16 %v6522, %v6522
        %v6555 = vpack.c.b16 %v6523, %v6523
        %v6556 = vpack.c.b16 %v6524, %v6524
        %v6557 = vpack.c.b16 %v6525, %v6525
        %v6558 = vpack.c.b16 %v6526, %v6526
        %v6559 = vpack.c.b16 %v6527, %v6527
        %v6560 = vpack.c.b16 %v6528, %v6528
        %v6561 = vpack.c.b16 %v6529, %v6529
        %v6562 = vpack.c.b16 %v6530, %v6530
        %v6563 = vpack.c.b16 %v6531, %v6531
        %v6564 = vpack.c.b16 %v6532, %v6532
        %v6565 = vpack.c.b16 %v6533, %v6533
        %v6566 = vpack.c.b16 %v6534, %v6534
        %v6567 = vpack.c.b16 %v6535, %v6535
        %v6568 = vpack.c.b16 %v6536, %v6536
        %v6569 = vpack.c.b16 %v6537, %v6537
        %v6570 = vpack.c.b16 %v6538, %v6538
        %v6571 = vpack.c.b16 %v6539, %v6539
        %v6572 = vpack.c.b16 %v6540, %v6540
        %v6573 = vpack.c.b16 %v6541, %v6541
        %v6574 = vpack.c.b16 %v6542, %v6542
        %v6575 = vpack.c.b16 %v6543, %v6543
        %v6576 = vpack.c.b16 %v6544, %v6544
        %v6577 = vpack.c.b16 %v6545, %v6545
        %v6578 = vpack.c.b16 %v6546, %v6546
        %v6579 = vpack.c.b16 %v6547, %v6547
        %v6580 = vpack.c.b16 %v6548, %v6548
        %v6582 = vshrl.u32 %v6549, 16
        %v6584 = vrot.slane %v6582, 7
        %v6585 = vshll.u32 %v6549, 16
        %v6587 = vor.u32 %v6584, %v6585
        %v6588 = vrot.slane %v6584, 4
        %v6590 = vshrl.u32 %v6550, 16
        %v6592 = vrot.slane %v6590, 7
        %v6593 = vshll.u32 %v6550, 16
        %v6595 = vor.u32 %v6592, %v6593
        %v6596 = vsel %vm3142, %v6588, %v6595
        %v6597 = vrot.slane %v6592, 4
        %v6599 = vshrl.u32 %v6551, 16
        %v6601 = vrot.slane %v6599, 7
        %v6602 = vshll.u32 %v6551, 16
        %v6604 = vor.u32 %v6601, %v6602
        %v6605 = vrot.slane %v6601, 4
        %v6607 = vshrl.u32 %v6552, 16
        %v6609 = vrot.slane %v6607, 7
        %v6610 = vshll.u32 %v6552, 16
        %v6612 = vor.u32 %v6609, %v6610
        %v6613 = vsel %vm3142, %v6605, %v6612
        %v6614 = vrot.slane %v6609, 4
        %v6616 = vshrl.u32 %v6553, 16
        %v6618 = vrot.slane %v6616, 7
        %v6619 = vshll.u32 %v6553, 16
        %v6621 = vor.u32 %v6618, %v6619
        %v6622 = vrot.slane %v6618, 4
        %v6624 = vshrl.u32 %v6554, 16
        %v6626 = vrot.slane %v6624, 7
        %v6627 = vshll.u32 %v6554, 16
        %v6629 = vor.u32 %v6626, %v6627
        %v6630 = vsel %vm3142, %v6622, %v6629
        %v6631 = vrot.slane %v6626, 4
        %v6633 = vshrl.u32 %v6555, 16
        %v6635 = vrot.slane %v6633, 7
        %v6636 = vshll.u32 %v6555, 16
        %v6638 = vor.u32 %v6635, %v6636
        %v6639 = vrot.slane %v6635, 4
        %v6641 = vshrl.u32 %v6556, 16
        %v6643 = vrot.slane %v6641, 7
        %v6644 = vshll.u32 %v6556, 16
        %v6646 = vor.u32 %v6643, %v6644
        %v6647 = vsel %vm3142, %v6639, %v6646
        %v6648 = vrot.slane %v6643, 4
        %v6650 = vshrl.u32 %v6557, 16
        %v6652 = vrot.slane %v6650, 7
        %v6653 = vshll.u32 %v6557, 16
        %v6655 = vor.u32 %v6652, %v6653
        %v6656 = vrot.slane %v6652, 4
        %v6658 = vshrl.u32 %v6558, 16
        %v6660 = vrot.slane %v6658, 7
        %v6661 = vshll.u32 %v6558, 16
        %v6663 = vor.u32 %v6660, %v6661
        %v6664 = vsel %vm3142, %v6656, %v6663
        %v6665 = vrot.slane %v6660, 4
        %v6667 = vshrl.u32 %v6559, 16
        %v6669 = vrot.slane %v6667, 7
        %v6670 = vshll.u32 %v6559, 16
        %v6672 = vor.u32 %v6669, %v6670
        %v6673 = vrot.slane %v6669, 4
        %v6675 = vshrl.u32 %v6560, 16
        %v6677 = vrot.slane %v6675, 7
        %v6678 = vshll.u32 %v6560, 16
        %v6680 = vor.u32 %v6677, %v6678
        %v6681 = vsel %vm3142, %v6673, %v6680
        %v6682 = vrot.slane %v6677, 4
        %v6684 = vshrl.u32 %v6561, 16
        %v6686 = vrot.slane %v6684, 7
        %v6687 = vshll.u32 %v6561, 16
        %v6689 = vor.u32 %v6686, %v6687
        %v6690 = vrot.slane %v6686, 4
        %v6692 = vshrl.u32 %v6562, 16
        %v6694 = vrot.slane %v6692, 7
        %v6695 = vshll.u32 %v6562, 16
        %v6697 = vor.u32 %v6694, %v6695
        %v6698 = vsel %vm3142, %v6690, %v6697
        %v6699 = vrot.slane %v6694, 4
        %v6701 = vshrl.u32 %v6563, 16
        %v6703 = vrot.slane %v6701, 7
        %v6704 = vshll.u32 %v6563, 16
        %v6706 = vor.u32 %v6703, %v6704
        %v6707 = vrot.slane %v6703, 4
        %v6709 = vshrl.u32 %v6564, 16
        %v6711 = vrot.slane %v6709, 7
        %v6712 = vshll.u32 %v6564, 16
        %v6714 = vor.u32 %v6711, %v6712
        %v6715 = vsel %vm3142, %v6707, %v6714
        %v6716 = vrot.slane %v6711, 4
        %v6718 = vshrl.u32 %v6565, 16
        %v6720 = vrot.slane %v6718, 7
        %v6721 = vshll.u32 %v6565, 16
        %v6723 = vor.u32 %v6720, %v6721
        %v6724 = vrot.slane %v6720, 4
        %v6726 = vshrl.u32 %v6566, 16
        %v6728 = vrot.slane %v6726, 7
        %v6729 = vshll.u32 %v6566, 16
        %v6731 = vor.u32 %v6728, %v6729
        %v6732 = vsel %vm3142, %v6724, %v6731
        %v6733 = vrot.slane %v6728, 4
        %v6735 = vshrl.u32 %v6567, 16
        %v6737 = vrot.slane %v6735, 7
        %v6738 = vshll.u32 %v6567, 16
        %v6740 = vor.u32 %v6737, %v6738
        %v6741 = vrot.slane %v6737, 4
        %v6743 = vshrl.u32 %v6568, 16
        %v6745 = vrot.slane %v6743, 7
        %v6746 = vshll.u32 %v6568, 16
        %v6748 = vor.u32 %v6745, %v6746
        %v6749 = vsel %vm3142, %v6741, %v6748
        %v6750 = vrot.slane %v6745, 4
        %v6752 = vshrl.u32 %v6569, 16
        %v6754 = vrot.slane %v6752, 7
        %v6755 = vshll.u32 %v6569, 16
        %v6757 = vor.u32 %v6754, %v6755
        %v6758 = vrot.slane %v6754, 4
        %v6760 = vshrl.u32 %v6570, 16
        %v6762 = vrot.slane %v6760, 7
        %v6763 = vshll.u32 %v6570, 16
        %v6765 = vor.u32 %v6762, %v6763
        %v6766 = vsel %vm3142, %v6758, %v6765
        %v6767 = vrot.slane %v6762, 4
        %v6769 = vshrl.u32 %v6571, 16
        %v6771 = vrot.slane %v6769, 7
        %v6772 = vshll.u32 %v6571, 16
        %v6774 = vor.u32 %v6771, %v6772
        %v6775 = vrot.slane %v6771, 4
        %v6777 = vshrl.u32 %v6572, 16
        %v6779 = vrot.slane %v6777, 7
        %v6780 = vshll.u32 %v6572, 16
        %v6782 = vor.u32 %v6779, %v6780
        %v6783 = vsel %vm3142, %v6775, %v6782
        %v6784 = vrot.slane %v6779, 4
        %v6786 = vshrl.u32 %v6573, 16
        %v6788 = vrot.slane %v6786, 7
        %v6789 = vshll.u32 %v6573, 16
        %v6791 = vor.u32 %v6788, %v6789
        %v6792 = vrot.slane %v6788, 4
        %v6794 = vshrl.u32 %v6574, 16
        %v6796 = vrot.slane %v6794, 7
        %v6797 = vshll.u32 %v6574, 16
        %v6799 = vor.u32 %v6796, %v6797
        %v6800 = vsel %vm3142, %v6792, %v6799
        %v6801 = vrot.slane %v6796, 4
        %v6803 = vshrl.u32 %v6575, 16
        %v6805 = vrot.slane %v6803, 7
        %v6806 = vshll.u32 %v6575, 16
        %v6808 = vor.u32 %v6805, %v6806
        %v6809 = vrot.slane %v6805, 4
        %v6811 = vshrl.u32 %v6576, 16
        %v6813 = vrot.slane %v6811, 7
        %v6814 = vshll.u32 %v6576, 16
        %v6816 = vor.u32 %v6813, %v6814
        %v6817 = vsel %vm3142, %v6809, %v6816
        %v6818 = vrot.slane %v6813, 4
        %v6820 = vshrl.u32 %v6577, 16
        %v6822 = vrot.slane %v6820, 7
        %v6823 = vshll.u32 %v6577, 16
        %v6825 = vor.u32 %v6822, %v6823
        %v6826 = vrot.slane %v6822, 4
        %v6828 = vshrl.u32 %v6578, 16
        %v6830 = vrot.slane %v6828, 7
        %v6831 = vshll.u32 %v6578, 16
        %v6833 = vor.u32 %v6830, %v6831
        %v6834 = vsel %vm3142, %v6826, %v6833
        %v6835 = vrot.slane %v6830, 4
        %v6837 = vshrl.u32 %v6579, 16
        %v6839 = vrot.slane %v6837, 7
        %v6840 = vshll.u32 %v6579, 16
        %v6842 = vor.u32 %v6839, %v6840
        %v6843 = vrot.slane %v6839, 4
        %v6845 = vshrl.u32 %v6580, 16
        %v6847 = vrot.slane %v6845, 7
        %v6848 = vshll.u32 %v6580, 16
        %v6850 = vor.u32 %v6847, %v6848
        %v6851 = vsel %vm3142, %v6843, %v6850
        %v6852 = vrot.slane %v6847, 4
        %v6901 = vld [vmem:[%s3463] sm:$0xf]
        %v6902 = vsel %vm3465, %v6587, %v6901
        %6903 = vst [vmem:[%s3463] sm:$0xf] %v6902
        %6904 = vst.msk [vmem:[%s3463 + $0x4] sm:$0xf] %vm431, %v6596
        %v6905 = vld [vmem:[%s3463 + $0x8] sm:$0x1]
        %v6906 = vsel %vm441, %v6597, %v6905
        %6907 = vst [vmem:[%s3463 + $0x8] sm:$0x1] %v6906
        %v6908 = vld [vmem:[%s3463 + $0xc] sm:$0xf]
        %v6909 = vsel %vm3465, %v6604, %v6908
        %6910 = vst [vmem:[%s3463 + $0xc] sm:$0xf] %v6909
        %6911 = vst.msk [vmem:[%s3463 + $0x10] sm:$0xf] %vm431, %v6613
        %v6912 = vld [vmem:[%s3463 + $0x14] sm:$0x1]
        %v6913 = vsel %vm441, %v6614, %v6912
        %6914 = vst [vmem:[%s3463 + $0x14] sm:$0x1] %v6913
        %v6915 = vld [vmem:[%s3463 + $0x18] sm:$0xf]
        %v6916 = vsel %vm3465, %v6621, %v6915
        %6917 = vst [vmem:[%s3463 + $0x18] sm:$0xf] %v6916
        %6918 = vst.msk [vmem:[%s3463 + $0x1c] sm:$0xf] %vm431, %v6630
        %v6919 = vld [vmem:[%s3463 + $0x20] sm:$0x1]
        %v6920 = vsel %vm441, %v6631, %v6919
        %6921 = vst [vmem:[%s3463 + $0x20] sm:$0x1] %v6920
        %v6922 = vld [vmem:[%s3463 + $0x24] sm:$0xf]
        %v6923 = vsel %vm3465, %v6638, %v6922
        %6924 = vst [vmem:[%s3463 + $0x24] sm:$0xf] %v6923
        %6925 = vst.msk [vmem:[%s3463 + $0x28] sm:$0xf] %vm431, %v6647
        %v6926 = vld [vmem:[%s3463 + $0x2c] sm:$0x1]
        %v6927 = vsel %vm441, %v6648, %v6926
        %6928 = vst [vmem:[%s3463 + $0x2c] sm:$0x1] %v6927
        %v6929 = vld [vmem:[%s3463 + $0x30] sm:$0xf]
        %v6930 = vsel %vm3465, %v6655, %v6929
        %6931 = vst [vmem:[%s3463 + $0x30] sm:$0xf] %v6930
        %6932 = vst.msk [vmem:[%s3463 + $0x34] sm:$0xf] %vm431, %v6664
        %v6933 = vld [vmem:[%s3463 + $0x38] sm:$0x1]
        %v6934 = vsel %vm441, %v6665, %v6933
        %6935 = vst [vmem:[%s3463 + $0x38] sm:$0x1] %v6934
        %v6936 = vld [vmem:[%s3463 + $0x3c] sm:$0xf]
        %v6937 = vsel %vm3465, %v6672, %v6936
        %6938 = vst [vmem:[%s3463 + $0x3c] sm:$0xf] %v6937
        %6939 = vst.msk [vmem:[%s3463 + $0x40] sm:$0xf] %vm431, %v6681
        %v6940 = vld [vmem:[%s3463 + $0x44] sm:$0x1]
        %v6941 = vsel %vm441, %v6682, %v6940
        %6942 = vst [vmem:[%s3463 + $0x44] sm:$0x1] %v6941
        %v6943 = vld [vmem:[%s3463 + $0x48] sm:$0xf]
        %v6944 = vsel %vm3465, %v6689, %v6943
        %6945 = vst [vmem:[%s3463 + $0x48] sm:$0xf] %v6944
        %6946 = vst.msk [vmem:[%s3463 + $0x4c] sm:$0xf] %vm431, %v6698
        %v6947 = vld [vmem:[%s3463 + $0x50] sm:$0x1]
        %v6948 = vsel %vm441, %v6699, %v6947
        %6949 = vst [vmem:[%s3463 + $0x50] sm:$0x1] %v6948
        %v6950 = vld [vmem:[%s3463 + $0x54] sm:$0xf]
        %v6951 = vsel %vm3465, %v6706, %v6950
        %6952 = vst [vmem:[%s3463 + $0x54] sm:$0xf] %v6951
        %6953 = vst.msk [vmem:[%s3463 + $0x58] sm:$0xf] %vm431, %v6715
        %v6954 = vld [vmem:[%s3463 + $0x5c] sm:$0x1]
        %v6955 = vsel %vm441, %v6716, %v6954
        %6956 = vst [vmem:[%s3463 + $0x5c] sm:$0x1] %v6955
        %v6957 = vld [vmem:[%s3463 + $0x60] sm:$0xf]
        %v6958 = vsel %vm3465, %v6723, %v6957
        %6959 = vst [vmem:[%s3463 + $0x60] sm:$0xf] %v6958
        %6960 = vst.msk [vmem:[%s3463 + $0x64] sm:$0xf] %vm431, %v6732
        %v6961 = vld [vmem:[%s3463 + $0x68] sm:$0x1]
        %v6962 = vsel %vm441, %v6733, %v6961
        %6963 = vst [vmem:[%s3463 + $0x68] sm:$0x1] %v6962
        %v6964 = vld [vmem:[%s3463 + $0x6c] sm:$0xf]
        %v6965 = vsel %vm3465, %v6740, %v6964
        %6966 = vst [vmem:[%s3463 + $0x6c] sm:$0xf] %v6965
        %6967 = vst.msk [vmem:[%s3463 + $0x70] sm:$0xf] %vm431, %v6749
        %v6968 = vld [vmem:[%s3463 + $0x74] sm:$0x1]
        %v6969 = vsel %vm441, %v6750, %v6968
        %6970 = vst [vmem:[%s3463 + $0x74] sm:$0x1] %v6969
        %v6971 = vld [vmem:[%s3463 + $0x78] sm:$0xf]
        %v6972 = vsel %vm3465, %v6757, %v6971
        %6973 = vst [vmem:[%s3463 + $0x78] sm:$0xf] %v6972
        %6974 = vst.msk [vmem:[%s3463 + $0x7c] sm:$0xf] %vm431, %v6766
        %v6975 = vld [vmem:[%s3463 + $0x80] sm:$0x1]
        %v6976 = vsel %vm441, %v6767, %v6975
        %6977 = vst [vmem:[%s3463 + $0x80] sm:$0x1] %v6976
        %v6978 = vld [vmem:[%s3463 + $0x84] sm:$0xf]
        %v6979 = vsel %vm3465, %v6774, %v6978
        %6980 = vst [vmem:[%s3463 + $0x84] sm:$0xf] %v6979
        %6981 = vst.msk [vmem:[%s3463 + $0x88] sm:$0xf] %vm431, %v6783
        %v6982 = vld [vmem:[%s3463 + $0x8c] sm:$0x1]
        %v6983 = vsel %vm441, %v6784, %v6982
        %6984 = vst [vmem:[%s3463 + $0x8c] sm:$0x1] %v6983
        %v6985 = vld [vmem:[%s3463 + $0x90] sm:$0xf]
        %v6986 = vsel %vm3465, %v6791, %v6985
        %6987 = vst [vmem:[%s3463 + $0x90] sm:$0xf] %v6986
        %6988 = vst.msk [vmem:[%s3463 + $0x94] sm:$0xf] %vm431, %v6800
        %v6989 = vld [vmem:[%s3463 + $0x98] sm:$0x1]
        %v6990 = vsel %vm441, %v6801, %v6989
        %6991 = vst [vmem:[%s3463 + $0x98] sm:$0x1] %v6990
        %v6992 = vld [vmem:[%s3463 + $0x9c] sm:$0xf]
        %v6993 = vsel %vm3465, %v6808, %v6992
        %6994 = vst [vmem:[%s3463 + $0x9c] sm:$0xf] %v6993
        %6995 = vst.msk [vmem:[%s3463 + $0xa0] sm:$0xf] %vm431, %v6817
        %v6996 = vld [vmem:[%s3463 + $0xa4] sm:$0x1]
        %v6997 = vsel %vm441, %v6818, %v6996
        %6998 = vst [vmem:[%s3463 + $0xa4] sm:$0x1] %v6997
        %v6999 = vld [vmem:[%s3463 + $0xa8] sm:$0xf]
        %v7000 = vsel %vm3465, %v6825, %v6999
        %7001 = vst [vmem:[%s3463 + $0xa8] sm:$0xf] %v7000
        %7002 = vst.msk [vmem:[%s3463 + $0xac] sm:$0xf] %vm431, %v6834
        %v7003 = vld [vmem:[%s3463 + $0xb0] sm:$0x1]
        %v7004 = vsel %vm441, %v6835, %v7003
        %7005 = vst [vmem:[%s3463 + $0xb0] sm:$0x1] %v7004
        %v7006 = vld [vmem:[%s3463 + $0xb4] sm:$0xf]
        %v7007 = vsel %vm3465, %v6842, %v7006
        %7008 = vst [vmem:[%s3463 + $0xb4] sm:$0xf] %v7007
        %7009 = vst.msk [vmem:[%s3463 + $0xb8] sm:$0xf] %vm431, %v6851
        %v7010 = vld [vmem:[%s3463 + $0xbc] sm:$0x1]
        %v7011 = vsel %vm441, %v6852, %v7010
        %7012 = vst [vmem:[%s3463 + $0xbc] sm:$0x1] %v7011
        %v7013 = vld [vmem:[#allocation3] sm:$0xf]
        %v7014 = vld [vmem:[#allocation3 + $0x4] sm:$0xf]
        %v7015 = vld [vmem:[#allocation3 + $0xc] sm:$0xf]
        %v7016 = vld [vmem:[#allocation3 + $0x10] sm:$0xf]
        %v7017 = vld [vmem:[#allocation3 + $0x18] sm:$0xf]
        %v7018 = vld [vmem:[#allocation3 + $0x1c] sm:$0xf]
        %v7019 = vld [vmem:[#allocation3 + $0x24] sm:$0xf]
        %v7020 = vld [vmem:[#allocation3 + $0x28] sm:$0xf]
        %v7021 = vld [vmem:[#allocation3 + $0x30] sm:$0xf]
        %v7022 = vld [vmem:[#allocation3 + $0x34] sm:$0xf]
        %v7023 = vld [vmem:[#allocation3 + $0x3c] sm:$0xf]
        %v7024 = vld [vmem:[#allocation3 + $0x40] sm:$0xf]
        %v7025 = vld [vmem:[#allocation3 + $0x48] sm:$0xf]
        %v7026 = vld [vmem:[#allocation3 + $0x4c] sm:$0xf]
        %v7027 = vld [vmem:[#allocation3 + $0x54] sm:$0xf]
        %v7028 = vld [vmem:[#allocation3 + $0x58] sm:$0xf]
        %v7029 = vld [vmem:[#allocation3 + $0x60] sm:$0xf]
        %v7030 = vld [vmem:[#allocation3 + $0x64] sm:$0xf]
        %v7031 = vld [vmem:[#allocation3 + $0x6c] sm:$0xf]
        %v7032 = vld [vmem:[#allocation3 + $0x70] sm:$0xf]
        %v7033 = vld [vmem:[#allocation3 + $0x78] sm:$0xf]
        %v7034 = vld [vmem:[#allocation3 + $0x7c] sm:$0xf]
        %v7035 = vld [vmem:[#allocation3 + $0x84] sm:$0xf]
        %v7036 = vld [vmem:[#allocation3 + $0x88] sm:$0xf]
        %v7037 = vld [vmem:[#allocation3 + $0x90] sm:$0xf]
        %v7038 = vld [vmem:[#allocation3 + $0x94] sm:$0xf]
        %v7039 = vld [vmem:[#allocation3 + $0x9c] sm:$0xf]
        %v7040 = vld [vmem:[#allocation3 + $0xa0] sm:$0xf]
        %v7041 = vld [vmem:[#allocation3 + $0xa8] sm:$0xf]
        %v7042 = vld [vmem:[#allocation3 + $0xac] sm:$0xf]
        %v7043 = vld [vmem:[#allocation3 + $0xb4] sm:$0xf]
        %v7044 = vld [vmem:[#allocation3 + $0xb8] sm:$0xf]
        %v7045 = vld [vmem:[#allocation3 + $0x8] sm:$0x1]
        %v7046 = vld [vmem:[#allocation3 + $0x14] sm:$0x1]
        %v7047 = vld [vmem:[#allocation3 + $0x20] sm:$0x1]
        %v7048 = vld [vmem:[#allocation3 + $0x2c] sm:$0x1]
        %v7049 = vld [vmem:[#allocation3 + $0x38] sm:$0x1]
        %v7050 = vld [vmem:[#allocation3 + $0x44] sm:$0x1]
        %v7051 = vld [vmem:[#allocation3 + $0x50] sm:$0x1]
        %v7052 = vld [vmem:[#allocation3 + $0x5c] sm:$0x1]
        %v7053 = vld [vmem:[#allocation3 + $0x68] sm:$0x1]
        %v7054 = vld [vmem:[#allocation3 + $0x74] sm:$0x1]
        %v7055 = vld [vmem:[#allocation3 + $0x80] sm:$0x1]
        %v7056 = vld [vmem:[#allocation3 + $0x8c] sm:$0x1]
        %v7057 = vld [vmem:[#allocation3 + $0x98] sm:$0x1]
        %v7058 = vld [vmem:[#allocation3 + $0xa4] sm:$0x1]
        %v7059 = vld [vmem:[#allocation3 + $0xb0] sm:$0x1]
        %v7060 = vld [vmem:[#allocation3 + $0xbc] sm:$0x1]
        %v7061 = vld [vmem:[#allocation3] sm:$0xe]
        %v7062 = vld [vmem:[#allocation3 + $0xc] sm:$0xe]
        %v7063 = vld [vmem:[#allocation3 + $0x18] sm:$0xe]
        %v7064 = vld [vmem:[#allocation3 + $0x24] sm:$0xe]
        %v7065 = vld [vmem:[#allocation3 + $0x30] sm:$0xe]
        %v7066 = vld [vmem:[#allocation3 + $0x3c] sm:$0xe]
        %v7067 = vld [vmem:[#allocation3 + $0x48] sm:$0xe]
        %v7068 = vld [vmem:[#allocation3 + $0x54] sm:$0xe]
        %v7069 = vld [vmem:[#allocation3 + $0x60] sm:$0xe]
        %v7070 = vld [vmem:[#allocation3 + $0x6c] sm:$0xe]
        %v7071 = vld [vmem:[#allocation3 + $0x78] sm:$0xe]
        %v7072 = vld [vmem:[#allocation3 + $0x84] sm:$0xe]
        %v7073 = vld [vmem:[#allocation3 + $0x90] sm:$0xe]
        %v7074 = vld [vmem:[#allocation3 + $0x9c] sm:$0xe]
        %v7075 = vld [vmem:[#allocation3 + $0xa8] sm:$0xe]
        %v7076 = vld [vmem:[#allocation3 + $0xb4] sm:$0xe]
        %v7077 = vld [vmem:[%s3463] sm:$0xf]
        %v7078 = vld [vmem:[%s3463 + $0x4] sm:$0xf]
        %v7079 = vld [vmem:[%s3463 + $0xc] sm:$0xf]
        %v7080 = vld [vmem:[%s3463 + $0x10] sm:$0xf]
        %v7081 = vld [vmem:[%s3463 + $0x18] sm:$0xf]
        %v7082 = vld [vmem:[%s3463 + $0x1c] sm:$0xf]
        %v7083 = vld [vmem:[%s3463 + $0x24] sm:$0xf]
        %v7084 = vld [vmem:[%s3463 + $0x28] sm:$0xf]
        %v7085 = vld [vmem:[%s3463 + $0x30] sm:$0xf]
        %v7086 = vld [vmem:[%s3463 + $0x34] sm:$0xf]
        %v7087 = vld [vmem:[%s3463 + $0x3c] sm:$0xf]
        %v7088 = vld [vmem:[%s3463 + $0x40] sm:$0xf]
        %v7089 = vld [vmem:[%s3463 + $0x48] sm:$0xf]
        %v7090 = vld [vmem:[%s3463 + $0x4c] sm:$0xf]
        %v7091 = vld [vmem:[%s3463 + $0x54] sm:$0xf]
        %v7092 = vld [vmem:[%s3463 + $0x58] sm:$0xf]
        %v7093 = vld [vmem:[%s3463 + $0x60] sm:$0xf]
        %v7094 = vld [vmem:[%s3463 + $0x64] sm:$0xf]
        %v7095 = vld [vmem:[%s3463 + $0x6c] sm:$0xf]
        %v7096 = vld [vmem:[%s3463 + $0x70] sm:$0xf]
        %v7097 = vld [vmem:[%s3463 + $0x78] sm:$0xf]
        %v7098 = vld [vmem:[%s3463 + $0x7c] sm:$0xf]
        %v7099 = vld [vmem:[%s3463 + $0x84] sm:$0xf]
        %v7100 = vld [vmem:[%s3463 + $0x88] sm:$0xf]
        %v7101 = vld [vmem:[%s3463 + $0x90] sm:$0xf]
        %v7102 = vld [vmem:[%s3463 + $0x94] sm:$0xf]
        %v7103 = vld [vmem:[%s3463 + $0x9c] sm:$0xf]
        %v7104 = vld [vmem:[%s3463 + $0xa0] sm:$0xf]
        %v7105 = vld [vmem:[%s3463 + $0xa8] sm:$0xf]
        %v7106 = vld [vmem:[%s3463 + $0xac] sm:$0xf]
        %v7107 = vld [vmem:[%s3463 + $0xb4] sm:$0xf]
        %v7108 = vld [vmem:[%s3463 + $0xb8] sm:$0xf]
        %v7109 = vld [vmem:[%s3463 + $0x8] sm:$0x1]
        %v7110 = vld [vmem:[%s3463 + $0x14] sm:$0x1]
        %v7111 = vld [vmem:[%s3463 + $0x20] sm:$0x1]
        %v7112 = vld [vmem:[%s3463 + $0x2c] sm:$0x1]
        %v7113 = vld [vmem:[%s3463 + $0x38] sm:$0x1]
        %v7114 = vld [vmem:[%s3463 + $0x44] sm:$0x1]
        %v7115 = vld [vmem:[%s3463 + $0x50] sm:$0x1]
        %v7116 = vld [vmem:[%s3463 + $0x5c] sm:$0x1]
        %v7117 = vld [vmem:[%s3463 + $0x68] sm:$0x1]
        %v7118 = vld [vmem:[%s3463 + $0x74] sm:$0x1]
        %v7119 = vld [vmem:[%s3463 + $0x80] sm:$0x1]
        %v7120 = vld [vmem:[%s3463 + $0x8c] sm:$0x1]
        %v7121 = vld [vmem:[%s3463 + $0x98] sm:$0x1]
        %v7122 = vld [vmem:[%s3463 + $0xa4] sm:$0x1]
        %v7123 = vld [vmem:[%s3463 + $0xb0] sm:$0x1]
        %v7124 = vld [vmem:[%s3463 + $0xbc] sm:$0x1]
        %v7125 = vld [vmem:[%s3463] sm:$0xe]
        %v7126 = vld [vmem:[%s3463 + $0xc] sm:$0xe]
        %v7127 = vld [vmem:[%s3463 + $0x18] sm:$0xe]
        %v7128 = vld [vmem:[%s3463 + $0x24] sm:$0xe]
        %v7129 = vld [vmem:[%s3463 + $0x30] sm:$0xe]
        %v7130 = vld [vmem:[%s3463 + $0x3c] sm:$0xe]
        %v7131 = vld [vmem:[%s3463 + $0x48] sm:$0xe]
        %v7132 = vld [vmem:[%s3463 + $0x54] sm:$0xe]
        %v7133 = vld [vmem:[%s3463 + $0x60] sm:$0xe]
        %v7134 = vld [vmem:[%s3463 + $0x6c] sm:$0xe]
        %v7135 = vld [vmem:[%s3463 + $0x78] sm:$0xe]
        %v7136 = vld [vmem:[%s3463 + $0x84] sm:$0xe]
        %v7137 = vld [vmem:[%s3463 + $0x90] sm:$0xe]
        %v7138 = vld [vmem:[%s3463 + $0x9c] sm:$0xe]
        %v7139 = vld [vmem:[%s3463 + $0xa8] sm:$0xe]
        %v7140 = vld [vmem:[%s3463 + $0xb4] sm:$0xe]
        %v7141 = vld [vmem:[%s3706] sm:$0xf]
        %v7142 = vld [vmem:[%s3706 + $0x4] sm:$0xf]
        %v7143 = vld [vmem:[%s3706 + $0xc] sm:$0xf]
        %v7144 = vld [vmem:[%s3706 + $0x10] sm:$0xf]
        %v7145 = vld [vmem:[%s3706 + $0x18] sm:$0xf]
        %v7146 = vld [vmem:[%s3706 + $0x1c] sm:$0xf]
        %v7147 = vld [vmem:[%s3706 + $0x24] sm:$0xf]
        %v7148 = vld [vmem:[%s3706 + $0x28] sm:$0xf]
        %v7149 = vld [vmem:[%s3706 + $0x30] sm:$0xf]
        %v7150 = vld [vmem:[%s3706 + $0x34] sm:$0xf]
        %v7151 = vld [vmem:[%s3706 + $0x3c] sm:$0xf]
        %v7152 = vld [vmem:[%s3706 + $0x40] sm:$0xf]
        %v7153 = vld [vmem:[%s3706 + $0x48] sm:$0xf]
        %v7154 = vld [vmem:[%s3706 + $0x4c] sm:$0xf]
        %v7155 = vld [vmem:[%s3706 + $0x54] sm:$0xf]
        %v7156 = vld [vmem:[%s3706 + $0x58] sm:$0xf]
        %v7157 = vld [vmem:[%s3706 + $0x60] sm:$0xf]
        %v7158 = vld [vmem:[%s3706 + $0x64] sm:$0xf]
        %v7159 = vld [vmem:[%s3706 + $0x6c] sm:$0xf]
        %v7160 = vld [vmem:[%s3706 + $0x70] sm:$0xf]
        %v7161 = vld [vmem:[%s3706 + $0x78] sm:$0xf]
        %v7162 = vld [vmem:[%s3706 + $0x7c] sm:$0xf]
        %v7163 = vld [vmem:[%s3706 + $0x84] sm:$0xf]
        %v7164 = vld [vmem:[%s3706 + $0x88] sm:$0xf]
        %v7165 = vld [vmem:[%s3706 + $0x90] sm:$0xf]
        %v7166 = vld [vmem:[%s3706 + $0x94] sm:$0xf]
        %v7167 = vld [vmem:[%s3706 + $0x9c] sm:$0xf]
        %v7168 = vld [vmem:[%s3706 + $0xa0] sm:$0xf]
        %v7169 = vld [vmem:[%s3706 + $0xa8] sm:$0xf]
        %v7170 = vld [vmem:[%s3706 + $0xac] sm:$0xf]
        %v7171 = vld [vmem:[%s3706 + $0xb4] sm:$0xf]
        %v7172 = vld [vmem:[%s3706 + $0xb8] sm:$0xf]
        %v7173 = vld [vmem:[%s3706 + $0x8] sm:$0x1]
        %v7174 = vld [vmem:[%s3706 + $0x14] sm:$0x1]
        %v7175 = vld [vmem:[%s3706 + $0x20] sm:$0x1]
        %v7176 = vld [vmem:[%s3706 + $0x2c] sm:$0x1]
        %v7177 = vld [vmem:[%s3706 + $0x38] sm:$0x1]
        %v7178 = vld [vmem:[%s3706 + $0x44] sm:$0x1]
        %v7179 = vld [vmem:[%s3706 + $0x50] sm:$0x1]
        %v7180 = vld [vmem:[%s3706 + $0x5c] sm:$0x1]
        %v7181 = vld [vmem:[%s3706 + $0x68] sm:$0x1]
        %v7182 = vld [vmem:[%s3706 + $0x74] sm:$0x1]
        %v7183 = vld [vmem:[%s3706 + $0x80] sm:$0x1]
        %v7184 = vld [vmem:[%s3706 + $0x8c] sm:$0x1]
        %v7185 = vld [vmem:[%s3706 + $0x98] sm:$0x1]
        %v7186 = vld [vmem:[%s3706 + $0xa4] sm:$0x1]
        %v7187 = vld [vmem:[%s3706 + $0xb0] sm:$0x1]
        %v7188 = vld [vmem:[%s3706 + $0xbc] sm:$0x1]
        %v7189 = vld [vmem:[%s3706] sm:$0xe]
        %v7190 = vld [vmem:[%s3706 + $0xc] sm:$0xe]
        %v7191 = vld [vmem:[%s3706 + $0x18] sm:$0xe]
        %v7192 = vld [vmem:[%s3706 + $0x24] sm:$0xe]
        %v7193 = vld [vmem:[%s3706 + $0x30] sm:$0xe]
        %v7194 = vld [vmem:[%s3706 + $0x3c] sm:$0xe]
        %v7195 = vld [vmem:[%s3706 + $0x48] sm:$0xe]
        %v7196 = vld [vmem:[%s3706 + $0x54] sm:$0xe]
        %v7197 = vld [vmem:[%s3706 + $0x60] sm:$0xe]
        %v7198 = vld [vmem:[%s3706 + $0x6c] sm:$0xe]
        %v7199 = vld [vmem:[%s3706 + $0x78] sm:$0xe]
        %v7200 = vld [vmem:[%s3706 + $0x84] sm:$0xe]
        %v7201 = vld [vmem:[%s3706 + $0x90] sm:$0xe]
        %v7202 = vld [vmem:[%s3706 + $0x9c] sm:$0xe]
        %v7203 = vld [vmem:[%s3706 + $0xa8] sm:$0xe]
        %v7204 = vld [vmem:[%s3706 + $0xb4] sm:$0xe]
        %v7237 = vunpack.c.l.b16 %v7013
        %v7238 = vunpack.c.l.b16 %v7014
        %v7239 = vunpack.c.l.b16 %v7015
        %v7240 = vunpack.c.l.b16 %v7016
        %v7241 = vunpack.c.l.b16 %v7017
        %v7242 = vunpack.c.l.b16 %v7018
        %v7243 = vunpack.c.l.b16 %v7019
        %v7244 = vunpack.c.l.b16 %v7020
        %v7245 = vunpack.c.l.b16 %v7021
        %v7246 = vunpack.c.l.b16 %v7022
        %v7247 = vunpack.c.l.b16 %v7023
        %v7248 = vunpack.c.l.b16 %v7024
        %v7249 = vunpack.c.l.b16 %v7025
        %v7250 = vunpack.c.l.b16 %v7026
        %v7251 = vunpack.c.l.b16 %v7027
        %v7252 = vunpack.c.l.b16 %v7028
        %v7253 = vunpack.c.l.b16 %v7029
        %v7254 = vunpack.c.l.b16 %v7030
        %v7255 = vunpack.c.l.b16 %v7031
        %v7256 = vunpack.c.l.b16 %v7032
        %v7257 = vunpack.c.l.b16 %v7033
        %v7258 = vunpack.c.l.b16 %v7034
        %v7259 = vunpack.c.l.b16 %v7035
        %v7260 = vunpack.c.l.b16 %v7036
        %v7261 = vunpack.c.l.b16 %v7037
        %v7262 = vunpack.c.l.b16 %v7038
        %v7263 = vunpack.c.l.b16 %v7039
        %v7264 = vunpack.c.l.b16 %v7040
        %v7265 = vunpack.c.l.b16 %v7041
        %v7266 = vunpack.c.l.b16 %v7042
        %v7267 = vunpack.c.l.b16 %v7043
        %v7268 = vunpack.c.l.b16 %v7044
        %v7269 = vpack.c.b16 %v7238, %v7237
        %v7270 = vpack.c.b16 %v7240, %v7239
        %v7271 = vpack.c.b16 %v7242, %v7241
        %v7272 = vpack.c.b16 %v7244, %v7243
        %v7273 = vpack.c.b16 %v7246, %v7245
        %v7274 = vpack.c.b16 %v7248, %v7247
        %v7275 = vpack.c.b16 %v7250, %v7249
        %v7276 = vpack.c.b16 %v7252, %v7251
        %v7277 = vpack.c.b16 %v7254, %v7253
        %v7278 = vpack.c.b16 %v7256, %v7255
        %v7279 = vpack.c.b16 %v7258, %v7257
        %v7280 = vpack.c.b16 %v7260, %v7259
        %v7281 = vpack.c.b16 %v7262, %v7261
        %v7282 = vpack.c.b16 %v7264, %v7263
        %v7283 = vpack.c.b16 %v7266, %v7265
        %v7284 = vpack.c.b16 %v7268, %v7267
        %v7301 = vunpack.c.l.b16 %v7045
        %v7302 = vunpack.c.l.b16 %v7046
        %v7303 = vunpack.c.l.b16 %v7047
        %v7304 = vunpack.c.l.b16 %v7048
        %v7305 = vunpack.c.l.b16 %v7049
        %v7306 = vunpack.c.l.b16 %v7050
        %v7307 = vunpack.c.l.b16 %v7051
        %v7308 = vunpack.c.l.b16 %v7052
        %v7309 = vunpack.c.l.b16 %v7053
        %v7310 = vunpack.c.l.b16 %v7054
        %v7311 = vunpack.c.l.b16 %v7055
        %v7312 = vunpack.c.l.b16 %v7056
        %v7313 = vunpack.c.l.b16 %v7057
        %v7314 = vunpack.c.l.b16 %v7058
        %v7315 = vunpack.c.l.b16 %v7059
        %v7316 = vunpack.c.l.b16 %v7060
        %v7317 = vpack.c.b16 %v7301, %v7301
        %v7318 = vpack.c.b16 %v7302, %v7302
        %v7319 = vpack.c.b16 %v7303, %v7303
        %v7320 = vpack.c.b16 %v7304, %v7304
        %v7321 = vpack.c.b16 %v7305, %v7305
        %v7322 = vpack.c.b16 %v7306, %v7306
        %v7323 = vpack.c.b16 %v7307, %v7307
        %v7324 = vpack.c.b16 %v7308, %v7308
        %v7325 = vpack.c.b16 %v7309, %v7309
        %v7326 = vpack.c.b16 %v7310, %v7310
        %v7327 = vpack.c.b16 %v7311, %v7311
        %v7328 = vpack.c.b16 %v7312, %v7312
        %v7329 = vpack.c.b16 %v7313, %v7313
        %v7330 = vpack.c.b16 %v7314, %v7314
        %v7331 = vpack.c.b16 %v7315, %v7315
        %v7332 = vpack.c.b16 %v7316, %v7316
        %v7334 = vshrl.u32 %v7269, 16
        %v7336 = vshll.u32 %v7269, 16
        %v7338 = vrot.slane %v7336, 1
        %v7339 = vor.u32 %v7334, %v7338
        %v7341 = vshll.u32 %v7317, 16
        %v7343 = vrot.slane %v7341, 1
        %v7344 = vsel %vm874, %v7339, %v7343
        %v7346 = vshrl.u32 %v7270, 16
        %v7348 = vshll.u32 %v7270, 16
        %v7350 = vrot.slane %v7348, 1
        %v7351 = vor.u32 %v7346, %v7350
        %v7353 = vshll.u32 %v7318, 16
        %v7355 = vrot.slane %v7353, 1
        %v7356 = vsel %vm874, %v7351, %v7355
        %v7358 = vshrl.u32 %v7271, 16
        %v7360 = vshll.u32 %v7271, 16
        %v7362 = vrot.slane %v7360, 1
        %v7363 = vor.u32 %v7358, %v7362
        %v7365 = vshll.u32 %v7319, 16
        %v7367 = vrot.slane %v7365, 1
        %v7368 = vsel %vm874, %v7363, %v7367
        %v7370 = vshrl.u32 %v7272, 16
        %v7372 = vshll.u32 %v7272, 16
        %v7374 = vrot.slane %v7372, 1
        %v7375 = vor.u32 %v7370, %v7374
        %v7377 = vshll.u32 %v7320, 16
        %v7379 = vrot.slane %v7377, 1
        %v7380 = vsel %vm874, %v7375, %v7379
        %v7382 = vshrl.u32 %v7273, 16
        %v7384 = vshll.u32 %v7273, 16
        %v7386 = vrot.slane %v7384, 1
        %v7387 = vor.u32 %v7382, %v7386
        %v7389 = vshll.u32 %v7321, 16
        %v7391 = vrot.slane %v7389, 1
        %v7392 = vsel %vm874, %v7387, %v7391
        %v7394 = vshrl.u32 %v7274, 16
        %v7396 = vshll.u32 %v7274, 16
        %v7398 = vrot.slane %v7396, 1
        %v7399 = vor.u32 %v7394, %v7398
        %v7401 = vshll.u32 %v7322, 16
        %v7403 = vrot.slane %v7401, 1
        %v7404 = vsel %vm874, %v7399, %v7403
        %v7406 = vshrl.u32 %v7275, 16
        %v7408 = vshll.u32 %v7275, 16
        %v7410 = vrot.slane %v7408, 1
        %v7411 = vor.u32 %v7406, %v7410
        %v7413 = vshll.u32 %v7323, 16
        %v7415 = vrot.slane %v7413, 1
        %v7416 = vsel %vm874, %v7411, %v7415
        %v7418 = vshrl.u32 %v7276, 16
        %v7420 = vshll.u32 %v7276, 16
        %v7422 = vrot.slane %v7420, 1
        %v7423 = vor.u32 %v7418, %v7422
        %v7425 = vshll.u32 %v7324, 16
        %v7427 = vrot.slane %v7425, 1
        %v7428 = vsel %vm874, %v7423, %v7427
        %v7430 = vshrl.u32 %v7277, 16
        %v7432 = vshll.u32 %v7277, 16
        %v7434 = vrot.slane %v7432, 1
        %v7435 = vor.u32 %v7430, %v7434
        %v7437 = vshll.u32 %v7325, 16
        %v7439 = vrot.slane %v7437, 1
        %v7440 = vsel %vm874, %v7435, %v7439
        %v7442 = vshrl.u32 %v7278, 16
        %v7444 = vshll.u32 %v7278, 16
        %v7446 = vrot.slane %v7444, 1
        %v7447 = vor.u32 %v7442, %v7446
        %v7449 = vshll.u32 %v7326, 16
        %v7451 = vrot.slane %v7449, 1
        %v7452 = vsel %vm874, %v7447, %v7451
        %v7454 = vshrl.u32 %v7279, 16
        %v7456 = vshll.u32 %v7279, 16
        %v7458 = vrot.slane %v7456, 1
        %v7459 = vor.u32 %v7454, %v7458
        %v7461 = vshll.u32 %v7327, 16
        %v7463 = vrot.slane %v7461, 1
        %v7464 = vsel %vm874, %v7459, %v7463
        %v7466 = vshrl.u32 %v7280, 16
        %v7468 = vshll.u32 %v7280, 16
        %v7470 = vrot.slane %v7468, 1
        %v7471 = vor.u32 %v7466, %v7470
        %v7473 = vshll.u32 %v7328, 16
        %v7475 = vrot.slane %v7473, 1
        %v7476 = vsel %vm874, %v7471, %v7475
        %v7478 = vshrl.u32 %v7281, 16
        %v7480 = vshll.u32 %v7281, 16
        %v7482 = vrot.slane %v7480, 1
        %v7483 = vor.u32 %v7478, %v7482
        %v7485 = vshll.u32 %v7329, 16
        %v7487 = vrot.slane %v7485, 1
        %v7488 = vsel %vm874, %v7483, %v7487
        %v7490 = vshrl.u32 %v7282, 16
        %v7492 = vshll.u32 %v7282, 16
        %v7494 = vrot.slane %v7492, 1
        %v7495 = vor.u32 %v7490, %v7494
        %v7497 = vshll.u32 %v7330, 16
        %v7499 = vrot.slane %v7497, 1
        %v7500 = vsel %vm874, %v7495, %v7499
        %v7502 = vshrl.u32 %v7283, 16
        %v7504 = vshll.u32 %v7283, 16
        %v7506 = vrot.slane %v7504, 1
        %v7507 = vor.u32 %v7502, %v7506
        %v7509 = vshll.u32 %v7331, 16
        %v7511 = vrot.slane %v7509, 1
        %v7512 = vsel %vm874, %v7507, %v7511
        %v7514 = vshrl.u32 %v7284, 16
        %v7516 = vshll.u32 %v7284, 16
        %v7518 = vrot.slane %v7516, 1
        %v7519 = vor.u32 %v7514, %v7518
        %v7521 = vshll.u32 %v7332, 16
        %v7523 = vrot.slane %v7521, 1
        %v7524 = vsel %vm874, %v7519, %v7523
        %7525 = vrot.lane.b32.xlu0 %v7344, 64
        %v7526 = vpop.permute.xlu0 %7525
        %7527 = vrot.lane.b32.xlu0 %v7356, 64
        %v7528 = vpop.permute.xlu0 %7527
        %7529 = vrot.lane.b32.xlu0 %v7368, 64
        %v7530 = vpop.permute.xlu0 %7529
        %7531 = vrot.lane.b32.xlu0 %v7380, 64
        %v7532 = vpop.permute.xlu0 %7531
        %7533 = vrot.lane.b32.xlu0 %v7392, 64
        %v7534 = vpop.permute.xlu0 %7533
        %7535 = vrot.lane.b32.xlu0 %v7404, 64
        %v7536 = vpop.permute.xlu0 %7535
        %7537 = vrot.lane.b32.xlu0 %v7416, 64
        %v7538 = vpop.permute.xlu0 %7537
        %7539 = vrot.lane.b32.xlu0 %v7428, 64
        %v7540 = vpop.permute.xlu0 %7539
        %7541 = vrot.lane.b32.xlu0 %v7440, 64
        %v7542 = vpop.permute.xlu0 %7541
        %7543 = vrot.lane.b32.xlu0 %v7452, 64
        %v7544 = vpop.permute.xlu0 %7543
        %7545 = vrot.lane.b32.xlu0 %v7464, 64
        %v7546 = vpop.permute.xlu0 %7545
        %7547 = vrot.lane.b32.xlu0 %v7476, 64
        %v7548 = vpop.permute.xlu0 %7547
        %7549 = vrot.lane.b32.xlu0 %v7488, 64
        %v7550 = vpop.permute.xlu0 %7549
        %7551 = vrot.lane.b32.xlu0 %v7500, 64
        %v7552 = vpop.permute.xlu0 %7551
        %7553 = vrot.lane.b32.xlu0 %v7512, 64
        %v7554 = vpop.permute.xlu0 %7553
        %7555 = vrot.lane.b32.xlu0 %v7524, 64
        %v7556 = vpop.permute.xlu0 %7555
        %v7573 = vunpack.c.l.b16 %v7061
        %v7574 = vunpack.c.l.b16 %v7062
        %v7575 = vunpack.c.l.b16 %v7063
        %v7576 = vunpack.c.l.b16 %v7064
        %v7577 = vunpack.c.l.b16 %v7065
        %v7578 = vunpack.c.l.b16 %v7066
        %v7579 = vunpack.c.l.b16 %v7067
        %v7580 = vunpack.c.l.b16 %v7068
        %v7581 = vunpack.c.l.b16 %v7069
        %v7582 = vunpack.c.l.b16 %v7070
        %v7583 = vunpack.c.l.b16 %v7071
        %v7584 = vunpack.c.l.b16 %v7072
        %v7585 = vunpack.c.l.b16 %v7073
        %v7586 = vunpack.c.l.b16 %v7074
        %v7587 = vunpack.c.l.b16 %v7075
        %v7588 = vunpack.c.l.b16 %v7076
        %v7589 = vpack.c.b16 %v7238, %v7573
        %v7590 = vpack.c.b16 %v7240, %v7574
        %v7591 = vpack.c.b16 %v7242, %v7575
        %v7592 = vpack.c.b16 %v7244, %v7576
        %v7593 = vpack.c.b16 %v7246, %v7577
        %v7594 = vpack.c.b16 %v7248, %v7578
        %v7595 = vpack.c.b16 %v7250, %v7579
        %v7596 = vpack.c.b16 %v7252, %v7580
        %v7597 = vpack.c.b16 %v7254, %v7581
        %v7598 = vpack.c.b16 %v7256, %v7582
        %v7599 = vpack.c.b16 %v7258, %v7583
        %v7600 = vpack.c.b16 %v7260, %v7584
        %v7601 = vpack.c.b16 %v7262, %v7585
        %v7602 = vpack.c.b16 %v7264, %v7586
        %v7603 = vpack.c.b16 %v7266, %v7587
        %v7604 = vpack.c.b16 %v7268, %v7588
        %v7605 = vrot.slane %v7589, 1
        %v7606 = vrot.slane %v7317, 1
        %v7607 = vsel %vm1147, %v7605, %v7606
        %v7608 = vrot.slane %v7590, 1
        %v7609 = vrot.slane %v7318, 1
        %v7610 = vsel %vm1147, %v7608, %v7609
        %v7611 = vrot.slane %v7591, 1
        %v7612 = vrot.slane %v7319, 1
        %v7613 = vsel %vm1147, %v7611, %v7612
        %v7614 = vrot.slane %v7592, 1
        %v7615 = vrot.slane %v7320, 1
        %v7616 = vsel %vm1147, %v7614, %v7615
        %v7617 = vrot.slane %v7593, 1
        %v7618 = vrot.slane %v7321, 1
        %v7619 = vsel %vm1147, %v7617, %v7618
        %v7620 = vrot.slane %v7594, 1
        %v7621 = vrot.slane %v7322, 1
        %v7622 = vsel %vm1147, %v7620, %v7621
        %v7623 = vrot.slane %v7595, 1
        %v7624 = vrot.slane %v7323, 1
        %v7625 = vsel %vm1147, %v7623, %v7624
        %v7626 = vrot.slane %v7596, 1
        %v7627 = vrot.slane %v7324, 1
        %v7628 = vsel %vm1147, %v7626, %v7627
        %v7629 = vrot.slane %v7597, 1
        %v7630 = vrot.slane %v7325, 1
        %v7631 = vsel %vm1147, %v7629, %v7630
        %v7632 = vrot.slane %v7598, 1
        %v7633 = vrot.slane %v7326, 1
        %v7634 = vsel %vm1147, %v7632, %v7633
        %v7635 = vrot.slane %v7599, 1
        %v7636 = vrot.slane %v7327, 1
        %v7637 = vsel %vm1147, %v7635, %v7636
        %v7638 = vrot.slane %v7600, 1
        %v7639 = vrot.slane %v7328, 1
        %v7640 = vsel %vm1147, %v7638, %v7639
        %v7641 = vrot.slane %v7601, 1
        %v7642 = vrot.slane %v7329, 1
        %v7643 = vsel %vm1147, %v7641, %v7642
        %v7644 = vrot.slane %v7602, 1
        %v7645 = vrot.slane %v7330, 1
        %v7646 = vsel %vm1147, %v7644, %v7645
        %v7647 = vrot.slane %v7603, 1
        %v7648 = vrot.slane %v7331, 1
        %v7649 = vsel %vm1147, %v7647, %v7648
        %v7650 = vrot.slane %v7604, 1
        %v7651 = vrot.slane %v7332, 1
        %v7652 = vsel %vm1147, %v7650, %v7651
        %v7685 = vunpack.c.l.b16 %v7077
        %v7686 = vunpack.c.l.b16 %v7078
        %v7687 = vunpack.c.l.b16 %v7079
        %v7688 = vunpack.c.l.b16 %v7080
        %v7689 = vunpack.c.l.b16 %v7081
        %v7690 = vunpack.c.l.b16 %v7082
        %v7691 = vunpack.c.l.b16 %v7083
        %v7692 = vunpack.c.l.b16 %v7084
        %v7693 = vunpack.c.l.b16 %v7085
        %v7694 = vunpack.c.l.b16 %v7086
        %v7695 = vunpack.c.l.b16 %v7087
        %v7696 = vunpack.c.l.b16 %v7088
        %v7697 = vunpack.c.l.b16 %v7089
        %v7698 = vunpack.c.l.b16 %v7090
        %v7699 = vunpack.c.l.b16 %v7091
        %v7700 = vunpack.c.l.b16 %v7092
        %v7701 = vunpack.c.l.b16 %v7093
        %v7702 = vunpack.c.l.b16 %v7094
        %v7703 = vunpack.c.l.b16 %v7095
        %v7704 = vunpack.c.l.b16 %v7096
        %v7705 = vunpack.c.l.b16 %v7097
        %v7706 = vunpack.c.l.b16 %v7098
        %v7707 = vunpack.c.l.b16 %v7099
        %v7708 = vunpack.c.l.b16 %v7100
        %v7709 = vunpack.c.l.b16 %v7101
        %v7710 = vunpack.c.l.b16 %v7102
        %v7711 = vunpack.c.l.b16 %v7103
        %v7712 = vunpack.c.l.b16 %v7104
        %v7713 = vunpack.c.l.b16 %v7105
        %v7714 = vunpack.c.l.b16 %v7106
        %v7715 = vunpack.c.l.b16 %v7107
        %v7716 = vunpack.c.l.b16 %v7108
        %v7717 = vpack.c.b16 %v7686, %v7685
        %v7718 = vpack.c.b16 %v7688, %v7687
        %v7719 = vpack.c.b16 %v7690, %v7689
        %v7720 = vpack.c.b16 %v7692, %v7691
        %v7721 = vpack.c.b16 %v7694, %v7693
        %v7722 = vpack.c.b16 %v7696, %v7695
        %v7723 = vpack.c.b16 %v7698, %v7697
        %v7724 = vpack.c.b16 %v7700, %v7699
        %v7725 = vpack.c.b16 %v7702, %v7701
        %v7726 = vpack.c.b16 %v7704, %v7703
        %v7727 = vpack.c.b16 %v7706, %v7705
        %v7728 = vpack.c.b16 %v7708, %v7707
        %v7729 = vpack.c.b16 %v7710, %v7709
        %v7730 = vpack.c.b16 %v7712, %v7711
        %v7731 = vpack.c.b16 %v7714, %v7713
        %v7732 = vpack.c.b16 %v7716, %v7715
        %7733 = vrot.lane.b32.xlu0 %v7717, 64
        %v7734 = vpop.permute.xlu0 %7733
        %7735 = vrot.lane.b32.xlu0 %v7718, 64
        %v7736 = vpop.permute.xlu0 %7735
        %7737 = vrot.lane.b32.xlu0 %v7719, 64
        %v7738 = vpop.permute.xlu0 %7737
        %7739 = vrot.lane.b32.xlu0 %v7720, 64
        %v7740 = vpop.permute.xlu0 %7739
        %7741 = vrot.lane.b32.xlu0 %v7721, 64
        %v7742 = vpop.permute.xlu0 %7741
        %7743 = vrot.lane.b32.xlu0 %v7722, 64
        %v7744 = vpop.permute.xlu0 %7743
        %7745 = vrot.lane.b32.xlu0 %v7723, 64
        %v7746 = vpop.permute.xlu0 %7745
        %7747 = vrot.lane.b32.xlu0 %v7724, 64
        %v7748 = vpop.permute.xlu0 %7747
        %7749 = vrot.lane.b32.xlu0 %v7725, 64
        %v7750 = vpop.permute.xlu0 %7749
        %7751 = vrot.lane.b32.xlu0 %v7726, 64
        %v7752 = vpop.permute.xlu0 %7751
        %7753 = vrot.lane.b32.xlu0 %v7727, 64
        %v7754 = vpop.permute.xlu0 %7753
        %7755 = vrot.lane.b32.xlu0 %v7728, 64
        %v7756 = vpop.permute.xlu0 %7755
        %7757 = vrot.lane.b32.xlu0 %v7729, 64
        %v7758 = vpop.permute.xlu0 %7757
        %7759 = vrot.lane.b32.xlu0 %v7730, 64
        %v7760 = vpop.permute.xlu0 %7759
        %7761 = vrot.lane.b32.xlu0 %v7731, 64
        %v7762 = vpop.permute.xlu0 %7761
        %7763 = vrot.lane.b32.xlu0 %v7732, 64
        %v7764 = vpop.permute.xlu0 %7763
        %v7781 = vunpack.c.l.b16 %v7109
        %v7782 = vunpack.c.l.b16 %v7110
        %v7783 = vunpack.c.l.b16 %v7111
        %v7784 = vunpack.c.l.b16 %v7112
        %v7785 = vunpack.c.l.b16 %v7113
        %v7786 = vunpack.c.l.b16 %v7114
        %v7787 = vunpack.c.l.b16 %v7115
        %v7788 = vunpack.c.l.b16 %v7116
        %v7789 = vunpack.c.l.b16 %v7117
        %v7790 = vunpack.c.l.b16 %v7118
        %v7791 = vunpack.c.l.b16 %v7119
        %v7792 = vunpack.c.l.b16 %v7120
        %v7793 = vunpack.c.l.b16 %v7121
        %v7794 = vunpack.c.l.b16 %v7122
        %v7795 = vunpack.c.l.b16 %v7123
        %v7796 = vunpack.c.l.b16 %v7124
        %v7797 = vpack.c.b16 %v7781, %v7781
        %v7798 = vpack.c.b16 %v7782, %v7782
        %v7799 = vpack.c.b16 %v7783, %v7783
        %v7800 = vpack.c.b16 %v7784, %v7784
        %v7801 = vpack.c.b16 %v7785, %v7785
        %v7802 = vpack.c.b16 %v7786, %v7786
        %v7803 = vpack.c.b16 %v7787, %v7787
        %v7804 = vpack.c.b16 %v7788, %v7788
        %v7805 = vpack.c.b16 %v7789, %v7789
        %v7806 = vpack.c.b16 %v7790, %v7790
        %v7807 = vpack.c.b16 %v7791, %v7791
        %v7808 = vpack.c.b16 %v7792, %v7792
        %v7809 = vpack.c.b16 %v7793, %v7793
        %v7810 = vpack.c.b16 %v7794, %v7794
        %v7811 = vpack.c.b16 %v7795, %v7795
        %v7812 = vpack.c.b16 %v7796, %v7796
        %v7814 = vshrl.u32 %v7717, 16
        %v7816 = vshll.u32 %v7717, 16
        %v7818 = vrot.slane %v7816, 1
        %v7819 = vor.u32 %v7814, %v7818
        %v7821 = vshll.u32 %v7797, 16
        %v7823 = vrot.slane %v7821, 1
        %v7824 = vsel %vm874, %v7819, %v7823
        %v7826 = vshrl.u32 %v7718, 16
        %v7828 = vshll.u32 %v7718, 16
        %v7830 = vrot.slane %v7828, 1
        %v7831 = vor.u32 %v7826, %v7830
        %v7833 = vshll.u32 %v7798, 16
        %v7835 = vrot.slane %v7833, 1
        %v7836 = vsel %vm874, %v7831, %v7835
        %v7838 = vshrl.u32 %v7719, 16
        %v7840 = vshll.u32 %v7719, 16
        %v7842 = vrot.slane %v7840, 1
        %v7843 = vor.u32 %v7838, %v7842
        %v7845 = vshll.u32 %v7799, 16
        %v7847 = vrot.slane %v7845, 1
        %v7848 = vsel %vm874, %v7843, %v7847
        %v7850 = vshrl.u32 %v7720, 16
        %v7852 = vshll.u32 %v7720, 16
        %v7854 = vrot.slane %v7852, 1
        %v7855 = vor.u32 %v7850, %v7854
        %v7857 = vshll.u32 %v7800, 16
        %v7859 = vrot.slane %v7857, 1
        %v7860 = vsel %vm874, %v7855, %v7859
        %v7862 = vshrl.u32 %v7721, 16
        %v7864 = vshll.u32 %v7721, 16
        %v7866 = vrot.slane %v7864, 1
        %v7867 = vor.u32 %v7862, %v7866
        %v7869 = vshll.u32 %v7801, 16
        %v7871 = vrot.slane %v7869, 1
        %v7872 = vsel %vm874, %v7867, %v7871
        %v7874 = vshrl.u32 %v7722, 16
        %v7876 = vshll.u32 %v7722, 16
        %v7878 = vrot.slane %v7876, 1
        %v7879 = vor.u32 %v7874, %v7878
        %v7881 = vshll.u32 %v7802, 16
        %v7883 = vrot.slane %v7881, 1
        %v7884 = vsel %vm874, %v7879, %v7883
        %v7886 = vshrl.u32 %v7723, 16
        %v7888 = vshll.u32 %v7723, 16
        %v7890 = vrot.slane %v7888, 1
        %v7891 = vor.u32 %v7886, %v7890
        %v7893 = vshll.u32 %v7803, 16
        %v7895 = vrot.slane %v7893, 1
        %v7896 = vsel %vm874, %v7891, %v7895
        %v7898 = vshrl.u32 %v7724, 16
        %v7900 = vshll.u32 %v7724, 16
        %v7902 = vrot.slane %v7900, 1
        %v7903 = vor.u32 %v7898, %v7902
        %v7905 = vshll.u32 %v7804, 16
        %v7907 = vrot.slane %v7905, 1
        %v7908 = vsel %vm874, %v7903, %v7907
        %v7910 = vshrl.u32 %v7725, 16
        %v7912 = vshll.u32 %v7725, 16
        %v7914 = vrot.slane %v7912, 1
        %v7915 = vor.u32 %v7910, %v7914
        %v7917 = vshll.u32 %v7805, 16
        %v7919 = vrot.slane %v7917, 1
        %v7920 = vsel %vm874, %v7915, %v7919
        %v7922 = vshrl.u32 %v7726, 16
        %v7924 = vshll.u32 %v7726, 16
        %v7926 = vrot.slane %v7924, 1
        %v7927 = vor.u32 %v7922, %v7926
        %v7929 = vshll.u32 %v7806, 16
        %v7931 = vrot.slane %v7929, 1
        %v7932 = vsel %vm874, %v7927, %v7931
        %v7934 = vshrl.u32 %v7727, 16
        %v7936 = vshll.u32 %v7727, 16
        %v7938 = vrot.slane %v7936, 1
        %v7939 = vor.u32 %v7934, %v7938
        %v7941 = vshll.u32 %v7807, 16
        %v7943 = vrot.slane %v7941, 1
        %v7944 = vsel %vm874, %v7939, %v7943
        %v7946 = vshrl.u32 %v7728, 16
        %v7948 = vshll.u32 %v7728, 16
        %v7950 = vrot.slane %v7948, 1
        %v7951 = vor.u32 %v7946, %v7950
        %v7953 = vshll.u32 %v7808, 16
        %v7955 = vrot.slane %v7953, 1
        %v7956 = vsel %vm874, %v7951, %v7955
        %v7958 = vshrl.u32 %v7729, 16
        %v7960 = vshll.u32 %v7729, 16
        %v7962 = vrot.slane %v7960, 1
        %v7963 = vor.u32 %v7958, %v7962
        %v7965 = vshll.u32 %v7809, 16
        %v7967 = vrot.slane %v7965, 1
        %v7968 = vsel %vm874, %v7963, %v7967
        %v7970 = vshrl.u32 %v7730, 16
        %v7972 = vshll.u32 %v7730, 16
        %v7974 = vrot.slane %v7972, 1
        %v7975 = vor.u32 %v7970, %v7974
        %v7977 = vshll.u32 %v7810, 16
        %v7979 = vrot.slane %v7977, 1
        %v7980 = vsel %vm874, %v7975, %v7979
        %v7982 = vshrl.u32 %v7731, 16
        %v7984 = vshll.u32 %v7731, 16
        %v7986 = vrot.slane %v7984, 1
        %v7987 = vor.u32 %v7982, %v7986
        %v7989 = vshll.u32 %v7811, 16
        %v7991 = vrot.slane %v7989, 1
        %v7992 = vsel %vm874, %v7987, %v7991
        %v7994 = vshrl.u32 %v7732, 16
        %v7996 = vshll.u32 %v7732, 16
        %v7998 = vrot.slane %v7996, 1
        %v7999 = vor.u32 %v7994, %v7998
        %v8001 = vshll.u32 %v7812, 16
        %v8003 = vrot.slane %v8001, 1
        %v8004 = vsel %vm874, %v7999, %v8003
        %v8021 = vunpack.c.l.b16 %v7125
        %v8022 = vunpack.c.l.b16 %v7126
        %v8023 = vunpack.c.l.b16 %v7127
        %v8024 = vunpack.c.l.b16 %v7128
        %v8025 = vunpack.c.l.b16 %v7129
        %v8026 = vunpack.c.l.b16 %v7130
        %v8027 = vunpack.c.l.b16 %v7131
        %v8028 = vunpack.c.l.b16 %v7132
        %v8029 = vunpack.c.l.b16 %v7133
        %v8030 = vunpack.c.l.b16 %v7134
        %v8031 = vunpack.c.l.b16 %v7135
        %v8032 = vunpack.c.l.b16 %v7136
        %v8033 = vunpack.c.l.b16 %v7137
        %v8034 = vunpack.c.l.b16 %v7138
        %v8035 = vunpack.c.l.b16 %v7139
        %v8036 = vunpack.c.l.b16 %v7140
        %v8037 = vpack.c.b16 %v7686, %v8021
        %v8038 = vpack.c.b16 %v7688, %v8022
        %v8039 = vpack.c.b16 %v7690, %v8023
        %v8040 = vpack.c.b16 %v7692, %v8024
        %v8041 = vpack.c.b16 %v7694, %v8025
        %v8042 = vpack.c.b16 %v7696, %v8026
        %v8043 = vpack.c.b16 %v7698, %v8027
        %v8044 = vpack.c.b16 %v7700, %v8028
        %v8045 = vpack.c.b16 %v7702, %v8029
        %v8046 = vpack.c.b16 %v7704, %v8030
        %v8047 = vpack.c.b16 %v7706, %v8031
        %v8048 = vpack.c.b16 %v7708, %v8032
        %v8049 = vpack.c.b16 %v7710, %v8033
        %v8050 = vpack.c.b16 %v7712, %v8034
        %v8051 = vpack.c.b16 %v7714, %v8035
        %v8052 = vpack.c.b16 %v7716, %v8036
        %v8053 = vrot.slane %v8037, 1
        %v8054 = vrot.slane %v7797, 1
        %v8055 = vsel %vm1147, %v8053, %v8054
        %v8056 = vrot.slane %v8038, 1
        %v8057 = vrot.slane %v7798, 1
        %v8058 = vsel %vm1147, %v8056, %v8057
        %v8059 = vrot.slane %v8039, 1
        %v8060 = vrot.slane %v7799, 1
        %v8061 = vsel %vm1147, %v8059, %v8060
        %v8062 = vrot.slane %v8040, 1
        %v8063 = vrot.slane %v7800, 1
        %v8064 = vsel %vm1147, %v8062, %v8063
        %v8065 = vrot.slane %v8041, 1
        %v8066 = vrot.slane %v7801, 1
        %v8067 = vsel %vm1147, %v8065, %v8066
        %v8068 = vrot.slane %v8042, 1
        %v8069 = vrot.slane %v7802, 1
        %v8070 = vsel %vm1147, %v8068, %v8069
        %v8071 = vrot.slane %v8043, 1
        %v8072 = vrot.slane %v7803, 1
        %v8073 = vsel %vm1147, %v8071, %v8072
        %v8074 = vrot.slane %v8044, 1
        %v8075 = vrot.slane %v7804, 1
        %v8076 = vsel %vm1147, %v8074, %v8075
        %v8077 = vrot.slane %v8045, 1
        %v8078 = vrot.slane %v7805, 1
        %v8079 = vsel %vm1147, %v8077, %v8078
        %v8080 = vrot.slane %v8046, 1
        %v8081 = vrot.slane %v7806, 1
        %v8082 = vsel %vm1147, %v8080, %v8081
        %v8083 = vrot.slane %v8047, 1
        %v8084 = vrot.slane %v7807, 1
        %v8085 = vsel %vm1147, %v8083, %v8084
        %v8086 = vrot.slane %v8048, 1
        %v8087 = vrot.slane %v7808, 1
        %v8088 = vsel %vm1147, %v8086, %v8087
        %v8089 = vrot.slane %v8049, 1
        %v8090 = vrot.slane %v7809, 1
        %v8091 = vsel %vm1147, %v8089, %v8090
        %v8092 = vrot.slane %v8050, 1
        %v8093 = vrot.slane %v7810, 1
        %v8094 = vsel %vm1147, %v8092, %v8093
        %v8095 = vrot.slane %v8051, 1
        %v8096 = vrot.slane %v7811, 1
        %v8097 = vsel %vm1147, %v8095, %v8096
        %v8098 = vrot.slane %v8052, 1
        %v8099 = vrot.slane %v7812, 1
        %v8100 = vsel %vm1147, %v8098, %v8099
        %8101 = vrot.lane.b32.xlu0 %v8055, 64
        %v8102 = vpop.permute.xlu0 %8101
        %8103 = vrot.lane.b32.xlu0 %v8058, 64
        %v8104 = vpop.permute.xlu0 %8103
        %8105 = vrot.lane.b32.xlu0 %v8061, 64
        %v8106 = vpop.permute.xlu0 %8105
        %8107 = vrot.lane.b32.xlu0 %v8064, 64
        %v8108 = vpop.permute.xlu0 %8107
        %8109 = vrot.lane.b32.xlu0 %v8067, 64
        %v8110 = vpop.permute.xlu0 %8109
        %8111 = vrot.lane.b32.xlu0 %v8070, 64
        %v8112 = vpop.permute.xlu0 %8111
        %8113 = vrot.lane.b32.xlu0 %v8073, 64
        %v8114 = vpop.permute.xlu0 %8113
        %8115 = vrot.lane.b32.xlu0 %v8076, 64
        %v8116 = vpop.permute.xlu0 %8115
        %8117 = vrot.lane.b32.xlu0 %v8079, 64
        %v8118 = vpop.permute.xlu0 %8117
        %8119 = vrot.lane.b32.xlu0 %v8082, 64
        %v8120 = vpop.permute.xlu0 %8119
        %8121 = vrot.lane.b32.xlu0 %v8085, 64
        %v8122 = vpop.permute.xlu0 %8121
        %8123 = vrot.lane.b32.xlu0 %v8088, 64
        %v8124 = vpop.permute.xlu0 %8123
        %8125 = vrot.lane.b32.xlu0 %v8091, 64
        %v8126 = vpop.permute.xlu0 %8125
        %8127 = vrot.lane.b32.xlu0 %v8094, 64
        %v8128 = vpop.permute.xlu0 %8127
        %8129 = vrot.lane.b32.xlu0 %v8097, 64
        %v8130 = vpop.permute.xlu0 %8129
        %8131 = vrot.lane.b32.xlu0 %v8100, 64
        %v8132 = vpop.permute.xlu0 %8131
        %v8165 = vunpack.c.l.b16 %v7141
        %v8166 = vunpack.c.l.b16 %v7142
        %v8167 = vunpack.c.l.b16 %v7143
        %v8168 = vunpack.c.l.b16 %v7144
        %v8169 = vunpack.c.l.b16 %v7145
        %v8170 = vunpack.c.l.b16 %v7146
        %v8171 = vunpack.c.l.b16 %v7147
        %v8172 = vunpack.c.l.b16 %v7148
        %v8173 = vunpack.c.l.b16 %v7149
        %v8174 = vunpack.c.l.b16 %v7150
        %v8175 = vunpack.c.l.b16 %v7151
        %v8176 = vunpack.c.l.b16 %v7152
        %v8177 = vunpack.c.l.b16 %v7153
        %v8178 = vunpack.c.l.b16 %v7154
        %v8179 = vunpack.c.l.b16 %v7155
        %v8180 = vunpack.c.l.b16 %v7156
        %v8181 = vunpack.c.l.b16 %v7157
        %v8182 = vunpack.c.l.b16 %v7158
        %v8183 = vunpack.c.l.b16 %v7159
        %v8184 = vunpack.c.l.b16 %v7160
        %v8185 = vunpack.c.l.b16 %v7161
        %v8186 = vunpack.c.l.b16 %v7162
        %v8187 = vunpack.c.l.b16 %v7163
        %v8188 = vunpack.c.l.b16 %v7164
        %v8189 = vunpack.c.l.b16 %v7165
        %v8190 = vunpack.c.l.b16 %v7166
        %v8191 = vunpack.c.l.b16 %v7167
        %v8192 = vunpack.c.l.b16 %v7168
        %v8193 = vunpack.c.l.b16 %v7169
        %v8194 = vunpack.c.l.b16 %v7170
        %v8195 = vunpack.c.l.b16 %v7171
        %v8196 = vunpack.c.l.b16 %v7172
        %v8197 = vpack.c.b16 %v8166, %v8165
        %v8198 = vpack.c.b16 %v8168, %v8167
        %v8199 = vpack.c.b16 %v8170, %v8169
        %v8200 = vpack.c.b16 %v8172, %v8171
        %v8201 = vpack.c.b16 %v8174, %v8173
        %v8202 = vpack.c.b16 %v8176, %v8175
        %v8203 = vpack.c.b16 %v8178, %v8177
        %v8204 = vpack.c.b16 %v8180, %v8179
        %v8205 = vpack.c.b16 %v8182, %v8181
        %v8206 = vpack.c.b16 %v8184, %v8183
        %v8207 = vpack.c.b16 %v8186, %v8185
        %v8208 = vpack.c.b16 %v8188, %v8187
        %v8209 = vpack.c.b16 %v8190, %v8189
        %v8210 = vpack.c.b16 %v8192, %v8191
        %v8211 = vpack.c.b16 %v8194, %v8193
        %v8212 = vpack.c.b16 %v8196, %v8195
        %v8229 = vunpack.c.l.b16 %v7173
        %v8230 = vunpack.c.l.b16 %v7174
        %v8231 = vunpack.c.l.b16 %v7175
        %v8232 = vunpack.c.l.b16 %v7176
        %v8233 = vunpack.c.l.b16 %v7177
        %v8234 = vunpack.c.l.b16 %v7178
        %v8235 = vunpack.c.l.b16 %v7179
        %v8236 = vunpack.c.l.b16 %v7180
        %v8237 = vunpack.c.l.b16 %v7181
        %v8238 = vunpack.c.l.b16 %v7182
        %v8239 = vunpack.c.l.b16 %v7183
        %v8240 = vunpack.c.l.b16 %v7184
        %v8241 = vunpack.c.l.b16 %v7185
        %v8242 = vunpack.c.l.b16 %v7186
        %v8243 = vunpack.c.l.b16 %v7187
        %v8244 = vunpack.c.l.b16 %v7188
        %v8245 = vpack.c.b16 %v8229, %v8229
        %v8246 = vpack.c.b16 %v8230, %v8230
        %v8247 = vpack.c.b16 %v8231, %v8231
        %v8248 = vpack.c.b16 %v8232, %v8232
        %v8249 = vpack.c.b16 %v8233, %v8233
        %v8250 = vpack.c.b16 %v8234, %v8234
        %v8251 = vpack.c.b16 %v8235, %v8235
        %v8252 = vpack.c.b16 %v8236, %v8236
        %v8253 = vpack.c.b16 %v8237, %v8237
        %v8254 = vpack.c.b16 %v8238, %v8238
        %v8255 = vpack.c.b16 %v8239, %v8239
        %v8256 = vpack.c.b16 %v8240, %v8240
        %v8257 = vpack.c.b16 %v8241, %v8241
        %v8258 = vpack.c.b16 %v8242, %v8242
        %v8259 = vpack.c.b16 %v8243, %v8243
        %v8260 = vpack.c.b16 %v8244, %v8244
        %v8262 = vshrl.u32 %v8197, 16
        %v8264 = vshll.u32 %v8197, 16
        %v8266 = vrot.slane %v8264, 1
        %v8267 = vor.u32 %v8262, %v8266
        %v8269 = vshll.u32 %v8245, 16
        %v8271 = vrot.slane %v8269, 1
        %v8272 = vsel %vm874, %v8267, %v8271
        %v8274 = vshrl.u32 %v8198, 16
        %v8276 = vshll.u32 %v8198, 16
        %v8278 = vrot.slane %v8276, 1
        %v8279 = vor.u32 %v8274, %v8278
        %v8281 = vshll.u32 %v8246, 16
        %v8283 = vrot.slane %v8281, 1
        %v8284 = vsel %vm874, %v8279, %v8283
        %v8286 = vshrl.u32 %v8199, 16
        %v8288 = vshll.u32 %v8199, 16
        %v8290 = vrot.slane %v8288, 1
        %v8291 = vor.u32 %v8286, %v8290
        %v8293 = vshll.u32 %v8247, 16
        %v8295 = vrot.slane %v8293, 1
        %v8296 = vsel %vm874, %v8291, %v8295
        %v8298 = vshrl.u32 %v8200, 16
        %v8300 = vshll.u32 %v8200, 16
        %v8302 = vrot.slane %v8300, 1
        %v8303 = vor.u32 %v8298, %v8302
        %v8305 = vshll.u32 %v8248, 16
        %v8307 = vrot.slane %v8305, 1
        %v8308 = vsel %vm874, %v8303, %v8307
        %v8310 = vshrl.u32 %v8201, 16
        %v8312 = vshll.u32 %v8201, 16
        %v8314 = vrot.slane %v8312, 1
        %v8315 = vor.u32 %v8310, %v8314
        %v8317 = vshll.u32 %v8249, 16
        %v8319 = vrot.slane %v8317, 1
        %v8320 = vsel %vm874, %v8315, %v8319
        %v8322 = vshrl.u32 %v8202, 16
        %v8324 = vshll.u32 %v8202, 16
        %v8326 = vrot.slane %v8324, 1
        %v8327 = vor.u32 %v8322, %v8326
        %v8329 = vshll.u32 %v8250, 16
        %v8331 = vrot.slane %v8329, 1
        %v8332 = vsel %vm874, %v8327, %v8331
        %v8334 = vshrl.u32 %v8203, 16
        %v8336 = vshll.u32 %v8203, 16
        %v8338 = vrot.slane %v8336, 1
        %v8339 = vor.u32 %v8334, %v8338
        %v8341 = vshll.u32 %v8251, 16
        %v8343 = vrot.slane %v8341, 1
        %v8344 = vsel %vm874, %v8339, %v8343
        %v8346 = vshrl.u32 %v8204, 16
        %v8348 = vshll.u32 %v8204, 16
        %v8350 = vrot.slane %v8348, 1
        %v8351 = vor.u32 %v8346, %v8350
        %v8353 = vshll.u32 %v8252, 16
        %v8355 = vrot.slane %v8353, 1
        %v8356 = vsel %vm874, %v8351, %v8355
        %v8358 = vshrl.u32 %v8205, 16
        %v8360 = vshll.u32 %v8205, 16
        %v8362 = vrot.slane %v8360, 1
        %v8363 = vor.u32 %v8358, %v8362
        %v8365 = vshll.u32 %v8253, 16
        %v8367 = vrot.slane %v8365, 1
        %v8368 = vsel %vm874, %v8363, %v8367
        %v8370 = vshrl.u32 %v8206, 16
        %v8372 = vshll.u32 %v8206, 16
        %v8374 = vrot.slane %v8372, 1
        %v8375 = vor.u32 %v8370, %v8374
        %v8377 = vshll.u32 %v8254, 16
        %v8379 = vrot.slane %v8377, 1
        %v8380 = vsel %vm874, %v8375, %v8379
        %v8382 = vshrl.u32 %v8207, 16
        %v8384 = vshll.u32 %v8207, 16
        %v8386 = vrot.slane %v8384, 1
        %v8387 = vor.u32 %v8382, %v8386
        %v8389 = vshll.u32 %v8255, 16
        %v8391 = vrot.slane %v8389, 1
        %v8392 = vsel %vm874, %v8387, %v8391
        %v8394 = vshrl.u32 %v8208, 16
        %v8396 = vshll.u32 %v8208, 16
        %v8398 = vrot.slane %v8396, 1
        %v8399 = vor.u32 %v8394, %v8398
        %v8401 = vshll.u32 %v8256, 16
        %v8403 = vrot.slane %v8401, 1
        %v8404 = vsel %vm874, %v8399, %v8403
        %v8406 = vshrl.u32 %v8209, 16
        %v8408 = vshll.u32 %v8209, 16
        %v8410 = vrot.slane %v8408, 1
        %v8411 = vor.u32 %v8406, %v8410
        %v8413 = vshll.u32 %v8257, 16
        %v8415 = vrot.slane %v8413, 1
        %v8416 = vsel %vm874, %v8411, %v8415
        %v8418 = vshrl.u32 %v8210, 16
        %v8420 = vshll.u32 %v8210, 16
        %v8422 = vrot.slane %v8420, 1
        %v8423 = vor.u32 %v8418, %v8422
        %v8425 = vshll.u32 %v8258, 16
        %v8427 = vrot.slane %v8425, 1
        %v8428 = vsel %vm874, %v8423, %v8427
        %v8430 = vshrl.u32 %v8211, 16
        %v8432 = vshll.u32 %v8211, 16
        %v8434 = vrot.slane %v8432, 1
        %v8435 = vor.u32 %v8430, %v8434
        %v8437 = vshll.u32 %v8259, 16
        %v8439 = vrot.slane %v8437, 1
        %v8440 = vsel %vm874, %v8435, %v8439
        %v8442 = vshrl.u32 %v8212, 16
        %v8444 = vshll.u32 %v8212, 16
        %v8446 = vrot.slane %v8444, 1
        %v8447 = vor.u32 %v8442, %v8446
        %v8449 = vshll.u32 %v8260, 16
        %v8451 = vrot.slane %v8449, 1
        %v8452 = vsel %vm874, %v8447, %v8451
        %8453 = vrot.lane.b32.xlu0 %v8272, 64
        %v8454 = vpop.permute.xlu0 %8453
        %8455 = vrot.lane.b32.xlu0 %v8284, 64
        %v8456 = vpop.permute.xlu0 %8455
        %8457 = vrot.lane.b32.xlu0 %v8296, 64
        %v8458 = vpop.permute.xlu0 %8457
        %8459 = vrot.lane.b32.xlu0 %v8308, 64
        %v8460 = vpop.permute.xlu0 %8459
        %8461 = vrot.lane.b32.xlu0 %v8320, 64
        %v8462 = vpop.permute.xlu0 %8461
        %8463 = vrot.lane.b32.xlu0 %v8332, 64
        %v8464 = vpop.permute.xlu0 %8463
        %8465 = vrot.lane.b32.xlu0 %v8344, 64
        %v8466 = vpop.permute.xlu0 %8465
        %8467 = vrot.lane.b32.xlu0 %v8356, 64
        %v8468 = vpop.permute.xlu0 %8467
        %8469 = vrot.lane.b32.xlu0 %v8368, 64
        %v8470 = vpop.permute.xlu0 %8469
        %8471 = vrot.lane.b32.xlu0 %v8380, 64
        %v8472 = vpop.permute.xlu0 %8471
        %8473 = vrot.lane.b32.xlu0 %v8392, 64
        %v8474 = vpop.permute.xlu0 %8473
        %8475 = vrot.lane.b32.xlu0 %v8404, 64
        %v8476 = vpop.permute.xlu0 %8475
        %8477 = vrot.lane.b32.xlu0 %v8416, 64
        %v8478 = vpop.permute.xlu0 %8477
        %8479 = vrot.lane.b32.xlu0 %v8428, 64
        %v8480 = vpop.permute.xlu0 %8479
        %8481 = vrot.lane.b32.xlu0 %v8440, 64
        %v8482 = vpop.permute.xlu0 %8481
        %8483 = vrot.lane.b32.xlu0 %v8452, 64
        %v8484 = vpop.permute.xlu0 %8483
        %v8501 = vunpack.c.l.b16 %v7189
        %v8502 = vunpack.c.l.b16 %v7190
        %v8503 = vunpack.c.l.b16 %v7191
        %v8504 = vunpack.c.l.b16 %v7192
        %v8505 = vunpack.c.l.b16 %v7193
        %v8506 = vunpack.c.l.b16 %v7194
        %v8507 = vunpack.c.l.b16 %v7195
        %v8508 = vunpack.c.l.b16 %v7196
        %v8509 = vunpack.c.l.b16 %v7197
        %v8510 = vunpack.c.l.b16 %v7198
        %v8511 = vunpack.c.l.b16 %v7199
        %v8512 = vunpack.c.l.b16 %v7200
        %v8513 = vunpack.c.l.b16 %v7201
        %v8514 = vunpack.c.l.b16 %v7202
        %v8515 = vunpack.c.l.b16 %v7203
        %v8516 = vunpack.c.l.b16 %v7204
        %v8517 = vpack.c.b16 %v8166, %v8501
        %v8518 = vpack.c.b16 %v8168, %v8502
        %v8519 = vpack.c.b16 %v8170, %v8503
        %v8520 = vpack.c.b16 %v8172, %v8504
        %v8521 = vpack.c.b16 %v8174, %v8505
        %v8522 = vpack.c.b16 %v8176, %v8506
        %v8523 = vpack.c.b16 %v8178, %v8507
        %v8524 = vpack.c.b16 %v8180, %v8508
        %v8525 = vpack.c.b16 %v8182, %v8509
        %v8526 = vpack.c.b16 %v8184, %v8510
        %v8527 = vpack.c.b16 %v8186, %v8511
        %v8528 = vpack.c.b16 %v8188, %v8512
        %v8529 = vpack.c.b16 %v8190, %v8513
        %v8530 = vpack.c.b16 %v8192, %v8514
        %v8531 = vpack.c.b16 %v8194, %v8515
        %v8532 = vpack.c.b16 %v8196, %v8516
        %v8533 = vrot.slane %v8517, 1
        %v8534 = vrot.slane %v8245, 1
        %v8535 = vsel %vm1147, %v8533, %v8534
        %v8536 = vrot.slane %v8518, 1
        %v8537 = vrot.slane %v8246, 1
        %v8538 = vsel %vm1147, %v8536, %v8537
        %v8539 = vrot.slane %v8519, 1
        %v8540 = vrot.slane %v8247, 1
        %v8541 = vsel %vm1147, %v8539, %v8540
        %v8542 = vrot.slane %v8520, 1
        %v8543 = vrot.slane %v8248, 1
        %v8544 = vsel %vm1147, %v8542, %v8543
        %v8545 = vrot.slane %v8521, 1
        %v8546 = vrot.slane %v8249, 1
        %v8547 = vsel %vm1147, %v8545, %v8546
        %v8548 = vrot.slane %v8522, 1
        %v8549 = vrot.slane %v8250, 1
        %v8550 = vsel %vm1147, %v8548, %v8549
        %v8551 = vrot.slane %v8523, 1
        %v8552 = vrot.slane %v8251, 1
        %v8553 = vsel %vm1147, %v8551, %v8552
        %v8554 = vrot.slane %v8524, 1
        %v8555 = vrot.slane %v8252, 1
        %v8556 = vsel %vm1147, %v8554, %v8555
        %v8557 = vrot.slane %v8525, 1
        %v8558 = vrot.slane %v8253, 1
        %v8559 = vsel %vm1147, %v8557, %v8558
        %v8560 = vrot.slane %v8526, 1
        %v8561 = vrot.slane %v8254, 1
        %v8562 = vsel %vm1147, %v8560, %v8561
        %v8563 = vrot.slane %v8527, 1
        %v8564 = vrot.slane %v8255, 1
        %v8565 = vsel %vm1147, %v8563, %v8564
        %v8566 = vrot.slane %v8528, 1
        %v8567 = vrot.slane %v8256, 1
        %v8568 = vsel %vm1147, %v8566, %v8567
        %v8569 = vrot.slane %v8529, 1
        %v8570 = vrot.slane %v8257, 1
        %v8571 = vsel %vm1147, %v8569, %v8570
        %v8572 = vrot.slane %v8530, 1
        %v8573 = vrot.slane %v8258, 1
        %v8574 = vsel %vm1147, %v8572, %v8573
        %v8575 = vrot.slane %v8531, 1
        %v8576 = vrot.slane %v8259, 1
        %v8577 = vsel %vm1147, %v8575, %v8576
        %v8578 = vrot.slane %v8532, 1
        %v8579 = vrot.slane %v8260, 1
        %v8580 = vsel %vm1147, %v8578, %v8579
        %v8582 = vsel %vm409, %v7269, %v7526
        %v8585 = vsel %vm409, %v7270, %v7528
        %v8588 = vsel %vm409, %v7271, %v7530
        %v8591 = vsel %vm409, %v7272, %v7532
        %v8594 = vsel %vm409, %v7273, %v7534
        %v8597 = vsel %vm409, %v7274, %v7536
        %v8600 = vsel %vm409, %v7275, %v7538
        %v8603 = vsel %vm409, %v7276, %v7540
        %v8606 = vsel %vm409, %v7277, %v7542
        %v8609 = vsel %vm409, %v7278, %v7544
        %v8612 = vsel %vm409, %v7279, %v7546
        %v8615 = vsel %vm409, %v7280, %v7548
        %v8618 = vsel %vm409, %v7281, %v7550
        %v8621 = vsel %vm409, %v7282, %v7552
        %v8624 = vsel %vm409, %v7283, %v7554
        %v8627 = vsel %vm409, %v7284, %v7556
        %v8631 = vsel %vm409, %v7607, %v7734
        %v8635 = vsel %vm409, %v7610, %v7736
        %v8639 = vsel %vm409, %v7613, %v7738
        %v8643 = vsel %vm409, %v7616, %v7740
        %v8647 = vsel %vm409, %v7619, %v7742
        %v8651 = vsel %vm409, %v7622, %v7744
        %v8655 = vsel %vm409, %v7625, %v7746
        %v8659 = vsel %vm409, %v7628, %v7748
        %v8663 = vsel %vm409, %v7631, %v7750
        %v8667 = vsel %vm409, %v7634, %v7752
        %v8671 = vsel %vm409, %v7637, %v7754
        %v8675 = vsel %vm409, %v7640, %v7756
        %v8679 = vsel %vm409, %v7643, %v7758
        %v8683 = vsel %vm409, %v7646, %v7760
        %v8687 = vsel %vm409, %v7649, %v7762
        %v8691 = vsel %vm409, %v7652, %v7764
        %v8695 = vsel %vm409, %v7824, %v8102
        %v8699 = vsel %vm409, %v7836, %v8104
        %v8703 = vsel %vm409, %v7848, %v8106
        %v8707 = vsel %vm409, %v7860, %v8108
        %v8711 = vsel %vm409, %v7872, %v8110
        %v8715 = vsel %vm409, %v7884, %v8112
        %v8719 = vsel %vm409, %v7896, %v8114
        %v8723 = vsel %vm409, %v7908, %v8116
        %v8727 = vsel %vm409, %v7920, %v8118
        %v8731 = vsel %vm409, %v7932, %v8120
        %v8735 = vsel %vm409, %v7944, %v8122
        %v8739 = vsel %vm409, %v7956, %v8124
        %v8743 = vsel %vm409, %v7968, %v8126
        %v8747 = vsel %vm409, %v7980, %v8128
        %v8751 = vsel %vm409, %v7992, %v8130
        %v8755 = vsel %vm409, %v8004, %v8132
        %v8758 = vsel %vm409, %v8197, %v8454
        %v8761 = vsel %vm409, %v8198, %v8456
        %v8764 = vsel %vm409, %v8199, %v8458
        %v8767 = vsel %vm409, %v8200, %v8460
        %v8770 = vsel %vm409, %v8201, %v8462
        %v8773 = vsel %vm409, %v8202, %v8464
        %v8776 = vsel %vm409, %v8203, %v8466
        %v8779 = vsel %vm409, %v8204, %v8468
        %v8782 = vsel %vm409, %v8205, %v8470
        %v8785 = vsel %vm409, %v8206, %v8472
        %v8788 = vsel %vm409, %v8207, %v8474
        %v8791 = vsel %vm409, %v8208, %v8476
        %v8794 = vsel %vm409, %v8209, %v8478
        %v8797 = vsel %vm409, %v8210, %v8480
        %v8800 = vsel %vm409, %v8211, %v8482
        %v8803 = vsel %vm409, %v8212, %v8484
        %v8805 = vld [vmem:[%s6] sm:$0xf]
        %v8806 = vld [vmem:[%s6 + $0x4] sm:$0xf]
        %v8807 = vld [vmem:[%s6 + $0x8] sm:$0xf]
        %v8808 = vld [vmem:[%s6 + $0xc] sm:$0xf]
        %v8809 = vld [vmem:[%s6 + $0x10] sm:$0xf]
        %v8810 = vld [vmem:[%s6 + $0x14] sm:$0xf]
        %v8811 = vld [vmem:[%s6 + $0x18] sm:$0xf]
        %v8812 = vld [vmem:[%s6 + $0x1c] sm:$0xf]
        %v8813 = vld [vmem:[%s6 + $0x20] sm:$0xf]
        %v8814 = vld [vmem:[%s6 + $0x24] sm:$0xf]
        %v8815 = vld [vmem:[%s6 + $0x28] sm:$0xf]
        %v8816 = vld [vmem:[%s6 + $0x2c] sm:$0xf]
        %v8817 = vld [vmem:[%s6 + $0x30] sm:$0xf]
        %v8818 = vld [vmem:[%s6 + $0x34] sm:$0xf]
        %v8819 = vld [vmem:[%s6 + $0x38] sm:$0xf]
        %v8820 = vld [vmem:[%s6 + $0x3c] sm:$0xf]
        %v8821 = vld [vmem:[%s6 + $0x40] sm:$0xf]
        %v8822 = vld [vmem:[%s6 + $0x44] sm:$0xf]
        %v8823 = vld [vmem:[%s6 + $0x48] sm:$0xf]
        %v8824 = vld [vmem:[%s6 + $0x4c] sm:$0xf]
        %v8825 = vld [vmem:[%s6 + $0x50] sm:$0xf]
        %v8826 = vld [vmem:[%s6 + $0x54] sm:$0xf]
        %v8827 = vld [vmem:[%s6 + $0x58] sm:$0xf]
        %v8828 = vld [vmem:[%s6 + $0x5c] sm:$0xf]
        %v8829 = vld [vmem:[%s6 + $0x60] sm:$0xf]
        %v8830 = vld [vmem:[%s6 + $0x64] sm:$0xf]
        %v8831 = vld [vmem:[%s6 + $0x68] sm:$0xf]
        %v8832 = vld [vmem:[%s6 + $0x6c] sm:$0xf]
        %v8833 = vld [vmem:[%s6 + $0x70] sm:$0xf]
        %v8834 = vld [vmem:[%s6 + $0x74] sm:$0xf]
        %v8835 = vld [vmem:[%s6 + $0x78] sm:$0xf]
        %v8836 = vld [vmem:[%s6 + $0x7c] sm:$0xf]
        %v8837 = vld [vmem:[%s6 + $0x80] sm:$0xf]
        %v8838 = vld [vmem:[%s6 + $0x84] sm:$0xf]
        %v8839 = vld [vmem:[%s6 + $0x88] sm:$0xf]
        %v8840 = vld [vmem:[%s6 + $0x8c] sm:$0xf]
        %v8841 = vld [vmem:[%s6 + $0x90] sm:$0xf]
        %v8842 = vld [vmem:[%s6 + $0x94] sm:$0xf]
        %v8843 = vld [vmem:[%s6 + $0x98] sm:$0xf]
        %v8844 = vld [vmem:[%s6 + $0x9c] sm:$0xf]
        %v8845 = vld [vmem:[%s6 + $0xa0] sm:$0xf]
        %v8846 = vld [vmem:[%s6 + $0xa4] sm:$0xf]
        %v8847 = vld [vmem:[%s6 + $0xa8] sm:$0xf]
        %v8848 = vld [vmem:[%s6 + $0xac] sm:$0xf]
        %v8849 = vld [vmem:[%s6 + $0xb0] sm:$0xf]
        %v8850 = vld [vmem:[%s6 + $0xb4] sm:$0xf]
        %v8851 = vld [vmem:[%s6 + $0xb8] sm:$0xf]
        %v8852 = vld [vmem:[%s6 + $0xbc] sm:$0xf]
        %v8853 = vld [vmem:[%s6 + $0xc0] sm:$0xf]
        %v8854 = vld [vmem:[%s6 + $0xc4] sm:$0xf]
        %v8855 = vld [vmem:[%s6 + $0xc8] sm:$0xf]
        %v8856 = vld [vmem:[%s6 + $0xcc] sm:$0xf]
        %v8857 = vld [vmem:[%s6 + $0xd0] sm:$0xf]
        %v8858 = vld [vmem:[%s6 + $0xd4] sm:$0xf]
        %v8859 = vld [vmem:[%s6 + $0xd8] sm:$0xf]
        %v8860 = vld [vmem:[%s6 + $0xdc] sm:$0xf]
        %v8861 = vld [vmem:[%s6 + $0xe0] sm:$0xf]
        %v8862 = vld [vmem:[%s6 + $0xe4] sm:$0xf]
        %v8863 = vld [vmem:[%s6 + $0xe8] sm:$0xf]
        %v8864 = vld [vmem:[%s6 + $0xec] sm:$0xf]
        %v8865 = vld [vmem:[%s6 + $0xf0] sm:$0xf]
        %v8866 = vld [vmem:[%s6 + $0xf4] sm:$0xf]
        %v8867 = vld [vmem:[%s6 + $0xf8] sm:$0xf]
        %v8868 = vld [vmem:[%s6 + $0xfc] sm:$0xf]
        %v8869 = vld [vmem:[%s6 + $0x100] sm:$0xf]
        %v8870 = vld [vmem:[%s6 + $0x104] sm:$0xf]
        %v8871 = vld [vmem:[%s6 + $0x108] sm:$0xf]
        %v8872 = vld [vmem:[%s6 + $0x10c] sm:$0xf]
        %v8873 = vld [vmem:[%s6 + $0x110] sm:$0xf]
        %v8874 = vld [vmem:[%s6 + $0x114] sm:$0xf]
        %v8875 = vld [vmem:[%s6 + $0x118] sm:$0xf]
        %v8876 = vld [vmem:[%s6 + $0x11c] sm:$0xf]
        %v8877 = vld [vmem:[%s7] sm:$0x1]
        %v8879 = vlaneseq
        %v8880 = vshrl.u32 %v8879, 7
        %v8881 = vsub.s32 0, %v8880
        %v8882 = vrot.slane %v8877, %v8881
        %v8956 = vunpack.c.l.b16 %v8805
        %v8957 = vunpack.c.l.b16 %v8806
        %v8958 = vunpack.c.l.b16 %v8807
        %v8959 = vunpack.c.l.b16 %v8808
        %v8960 = vunpack.c.l.b16 %v8809
        %v8961 = vunpack.c.l.b16 %v8810
        %v8962 = vunpack.c.l.b16 %v8811
        %v8963 = vunpack.c.l.b16 %v8812
        %v8964 = vunpack.c.l.b16 %v8813
        %v8965 = vunpack.c.l.b16 %v8814
        %v8966 = vunpack.c.l.b16 %v8815
        %v8967 = vunpack.c.l.b16 %v8816
        %v8968 = vunpack.c.l.b16 %v8817
        %v8969 = vunpack.c.l.b16 %v8818
        %v8970 = vunpack.c.l.b16 %v8819
        %v8971 = vunpack.c.l.b16 %v8820
        %v8972 = vunpack.c.l.b16 %v8821
        %v8973 = vunpack.c.l.b16 %v8822
        %v8974 = vunpack.c.l.b16 %v8823
        %v8975 = vunpack.c.l.b16 %v8824
        %v8976 = vunpack.c.l.b16 %v8825
        %v8977 = vunpack.c.l.b16 %v8826
        %v8978 = vunpack.c.l.b16 %v8827
        %v8979 = vunpack.c.l.b16 %v8828
        %v8980 = vunpack.c.l.b16 %v8829
        %v8981 = vunpack.c.l.b16 %v8830
        %v8982 = vunpack.c.l.b16 %v8831
        %v8983 = vunpack.c.l.b16 %v8832
        %v8984 = vunpack.c.l.b16 %v8833
        %v8985 = vunpack.c.l.b16 %v8834
        %v8986 = vunpack.c.l.b16 %v8835
        %v8987 = vunpack.c.l.b16 %v8836
        %v8988 = vunpack.c.l.b16 %v8837
        %v8989 = vunpack.c.l.b16 %v8838
        %v8990 = vunpack.c.l.b16 %v8839
        %v8991 = vunpack.c.l.b16 %v8840
        %v8992 = vunpack.c.l.b16 %v8841
        %v8993 = vunpack.c.l.b16 %v8842
        %v8994 = vunpack.c.l.b16 %v8843
        %v8995 = vunpack.c.l.b16 %v8844
        %v8996 = vunpack.c.l.b16 %v8845
        %v8997 = vunpack.c.l.b16 %v8846
        %v8998 = vunpack.c.l.b16 %v8847
        %v8999 = vunpack.c.l.b16 %v8848
        %v9000 = vunpack.c.l.b16 %v8849
        %v9001 = vunpack.c.l.b16 %v8850
        %v9002 = vunpack.c.l.b16 %v8851
        %v9003 = vunpack.c.l.b16 %v8852
        %v9004 = vunpack.c.l.b16 %v8853
        %v9005 = vunpack.c.l.b16 %v8854
        %v9006 = vunpack.c.l.b16 %v8855
        %v9007 = vunpack.c.l.b16 %v8856
        %v9008 = vunpack.c.l.b16 %v8857
        %v9009 = vunpack.c.l.b16 %v8858
        %v9010 = vunpack.c.l.b16 %v8859
        %v9011 = vunpack.c.l.b16 %v8860
        %v9012 = vunpack.c.l.b16 %v8861
        %v9013 = vunpack.c.l.b16 %v8862
        %v9014 = vunpack.c.l.b16 %v8863
        %v9015 = vunpack.c.l.b16 %v8864
        %v9016 = vunpack.c.l.b16 %v8865
        %v9017 = vunpack.c.l.b16 %v8866
        %v9018 = vunpack.c.l.b16 %v8867
        %v9019 = vunpack.c.l.b16 %v8868
        %v9020 = vunpack.c.l.b16 %v8869
        %v9021 = vunpack.c.l.b16 %v8870
        %v9022 = vunpack.c.l.b16 %v8871
        %v9023 = vunpack.c.l.b16 %v8872
        %v9024 = vunpack.c.l.b16 %v8873
        %v9025 = vunpack.c.l.b16 %v8874
        %v9026 = vunpack.c.l.b16 %v8875
        %v9027 = vunpack.c.l.b16 %v8876
        %v9028 = vpack.c.b16 %v8957, %v8956
        %v9029 = vpack.c.b16 %v8959, %v8958
        %v9030 = vpack.c.b16 %v8961, %v8960
        %v9031 = vpack.c.b16 %v8963, %v8962
        %v9032 = vpack.c.b16 %v8965, %v8964
        %v9033 = vpack.c.b16 %v8967, %v8966
        %v9034 = vpack.c.b16 %v8969, %v8968
        %v9035 = vpack.c.b16 %v8971, %v8970
        %v9036 = vpack.c.b16 %v8973, %v8972
        %v9037 = vpack.c.b16 %v8975, %v8974
        %v9038 = vpack.c.b16 %v8977, %v8976
        %v9039 = vpack.c.b16 %v8979, %v8978
        %v9040 = vpack.c.b16 %v8981, %v8980
        %v9041 = vpack.c.b16 %v8983, %v8982
        %v9042 = vpack.c.b16 %v8985, %v8984
        %v9043 = vpack.c.b16 %v8987, %v8986
        %v9044 = vpack.c.b16 %v8989, %v8988
        %v9045 = vpack.c.b16 %v8991, %v8990
        %v9046 = vpack.c.b16 %v8993, %v8992
        %v9047 = vpack.c.b16 %v8995, %v8994
        %v9048 = vpack.c.b16 %v8997, %v8996
        %v9049 = vpack.c.b16 %v8999, %v8998
        %v9050 = vpack.c.b16 %v9001, %v9000
        %v9051 = vpack.c.b16 %v9003, %v9002
        %v9052 = vpack.c.b16 %v9005, %v9004
        %v9053 = vpack.c.b16 %v9007, %v9006
        %v9054 = vpack.c.b16 %v9009, %v9008
        %v9055 = vpack.c.b16 %v9011, %v9010
        %v9056 = vpack.c.b16 %v9013, %v9012
        %v9057 = vpack.c.b16 %v9015, %v9014
        %v9058 = vpack.c.b16 %v9017, %v9016
        %v9059 = vpack.c.b16 %v9019, %v9018
        %v9060 = vpack.c.b16 %v9021, %v9020
        %v9061 = vpack.c.b16 %v9023, %v9022
        %v9062 = vpack.c.b16 %v9025, %v9024
        %v9063 = vpack.c.b16 %v9027, %v9026
        %v9101 = vsel %vm409, %v8535, 0
        %v9104 = vsel %vm409, %v8538, 0
        %v9107 = vsel %vm409, %v8541, 0
        %v9110 = vsel %vm409, %v8544, 0
        %v9113 = vsel %vm409, %v8547, 0
        %v9116 = vsel %vm409, %v8550, 0
        %v9119 = vsel %vm409, %v8553, 0
        %v9122 = vsel %vm409, %v8556, 0
        %v9125 = vsel %vm409, %v8559, 0
        %v9128 = vsel %vm409, %v8562, 0
        %v9131 = vsel %vm409, %v8565, 0
        %v9134 = vsel %vm409, %v8568, 0
        %v9137 = vsel %vm409, %v8571, 0
        %v9140 = vsel %vm409, %v8574, 0
        %v9143 = vsel %vm409, %v8577, 0
        %v9146 = vsel %vm409, %v8580, 0
        %9148 = vmatprep.subr.bf16.mxu0 0
        %9149 = vmatpush1.bf16.msra.mxu0 %v9035
        %9150 = vmatprep.subr.bf16.mxu0 0
        %9151 = vmatpush1.bf16.msra.mxu0 %v9034
        %9152 = vmatprep.subr.bf16.mxu0 0
        %9153 = vmatpush1.bf16.msra.mxu0 %v9033
        %9154 = vmatprep.subr.bf16.mxu0 0
        %9155 = vmatpush1.bf16.msra.mxu0 %v9032
        %9156 = vmatprep.subr.bf16.mxu0 0
        %9157 = vmatpush1.bf16.msra.mxu0 %v9031
        %9158 = vmatprep.subr.bf16.mxu0 0
        %9159 = vmatpush1.bf16.msra.mxu0 %v9030
        %9160 = vmatprep.subr.bf16.mxu0 0
        %9161 = vmatpush1.bf16.msra.mxu0 %v9029
        %9162 = vmatprep.subr.bf16.mxu0 0
        %9163 = vmatpush1.bf16.msra.mxu0 %v9028
        %9164 = vmatprep.subr.bf16.mxu0 0
        %9165 = vmatpush2.bf16.msra.mxu0 %v9043
        %9166 = vmatprep.subr.bf16.mxu0 0
        %9167 = vmatpush2.bf16.msra.mxu0 %v9042
        %9168 = vmatprep.subr.bf16.mxu0 0
        %9169 = vmatpush2.bf16.msra.mxu0 %v9041
        %9170 = vmatprep.subr.bf16.mxu0 0
        %9171 = vmatpush2.bf16.msra.mxu0 %v9040
        %9172 = vmatprep.subr.bf16.mxu0 0
        %9173 = vmatpush2.bf16.msra.mxu0 %v9039
        %9174 = vmatprep.subr.bf16.mxu0 0
        %9175 = vmatpush2.bf16.msra.mxu0 %v9038
        %9176 = vmatprep.subr.bf16.mxu0 0
        %9177 = vmatpush2.bf16.msra.mxu0 %v9037
        %9178 = vmatprep.subr.bf16.mxu0 0
        %9179 = vmatpush2.bf16.msra.mxu0 %v9036
        %9180 = vmatprep.mubr.bf16.mxu0 %v8631
        %9181 = vmatmul.mubr.bf16.gmra.mxu0 %v8582
        %v9182 = vpop.f32.mrf.mxu0
        %v9183 = vadd.f32 %v8882, %v9182
        %v9184 = vpop.f32.mrf.mxu0
        %v9185 = vpop.f32.mrf.mxu0
        %v9186 = vadd.f32 %v8882, %v9185
        %v9187 = vpop.f32.mrf.mxu0
        %9188 = vmatprep.mubr.bf16.mxu0 %v8635
        %9189 = vmatmul.mubr.bf16.gmra.mxu0 %v8585
        %v9190 = vpop.f32.mrf.mxu0
        %v9191 = vadd.f32 %v8882, %v9190
        %v9192 = vpop.f32.mrf.mxu0
        %v9193 = vpop.f32.mrf.mxu0
        %v9194 = vadd.f32 %v8882, %v9193
        %v9195 = vpop.f32.mrf.mxu0
        %9196 = vmatprep.mubr.bf16.mxu0 %v8639
        %9197 = vmatmul.mubr.bf16.gmra.mxu0 %v8588
        %v9198 = vpop.f32.mrf.mxu0
        %v9199 = vadd.f32 %v8882, %v9198
        %v9200 = vpop.f32.mrf.mxu0
        %v9201 = vpop.f32.mrf.mxu0
        %v9202 = vadd.f32 %v8882, %v9201
        %v9203 = vpop.f32.mrf.mxu0
        %9204 = vmatprep.mubr.bf16.mxu0 %v8643
        %9205 = vmatmul.mubr.bf16.gmra.mxu0 %v8591
        %v9206 = vpop.f32.mrf.mxu0
        %v9207 = vadd.f32 %v8882, %v9206
        %v9208 = vpop.f32.mrf.mxu0
        %v9209 = vpop.f32.mrf.mxu0
        %v9210 = vadd.f32 %v8882, %v9209
        %v9211 = vpop.f32.mrf.mxu0
        %9212 = vmatprep.mubr.bf16.mxu0 %v8647
        %9213 = vmatmul.mubr.bf16.gmra.mxu0 %v8594
        %v9214 = vpop.f32.mrf.mxu0
        %v9215 = vadd.f32 %v8882, %v9214
        %v9216 = vpop.f32.mrf.mxu0
        %v9217 = vpop.f32.mrf.mxu0
        %v9218 = vadd.f32 %v8882, %v9217
        %v9219 = vpop.f32.mrf.mxu0
        %9220 = vmatprep.mubr.bf16.mxu0 %v8651
        %9221 = vmatmul.mubr.bf16.gmra.mxu0 %v8597
        %v9222 = vpop.f32.mrf.mxu0
        %v9223 = vadd.f32 %v8882, %v9222
        %v9224 = vpop.f32.mrf.mxu0
        %v9225 = vpop.f32.mrf.mxu0
        %v9226 = vadd.f32 %v8882, %v9225
        %v9227 = vpop.f32.mrf.mxu0
        %9228 = vmatprep.mubr.bf16.mxu0 %v8655
        %9229 = vmatmul.mubr.bf16.gmra.mxu0 %v8600
        %v9230 = vpop.f32.mrf.mxu0
        %v9231 = vadd.f32 %v8882, %v9230
        %v9232 = vpop.f32.mrf.mxu0
        %v9233 = vpop.f32.mrf.mxu0
        %v9234 = vadd.f32 %v8882, %v9233
        %v9235 = vpop.f32.mrf.mxu0
        %9236 = vmatprep.mubr.bf16.mxu0 %v8659
        %9237 = vmatmul.mubr.bf16.gmra.mxu0 %v8603
        %v9238 = vpop.f32.mrf.mxu0
        %v9239 = vadd.f32 %v8882, %v9238
        %v9240 = vpop.f32.mrf.mxu0
        %v9241 = vpop.f32.mrf.mxu0
        %v9242 = vadd.f32 %v8882, %v9241
        %v9243 = vpop.f32.mrf.mxu0
        %9244 = vmatprep.mubr.bf16.mxu0 %v8663
        %9245 = vmatmul.mubr.bf16.gmra.mxu0 %v8606
        %v9246 = vpop.f32.mrf.mxu0
        %v9247 = vadd.f32 %v8882, %v9246
        %v9248 = vpop.f32.mrf.mxu0
        %v9249 = vpop.f32.mrf.mxu0
        %v9250 = vadd.f32 %v8882, %v9249
        %v9251 = vpop.f32.mrf.mxu0
        %9252 = vmatprep.mubr.bf16.mxu0 %v8667
        %9253 = vmatmul.mubr.bf16.gmra.mxu0 %v8609
        %v9254 = vpop.f32.mrf.mxu0
        %v9255 = vadd.f32 %v8882, %v9254
        %v9256 = vpop.f32.mrf.mxu0
        %v9257 = vpop.f32.mrf.mxu0
        %v9258 = vadd.f32 %v8882, %v9257
        %v9259 = vpop.f32.mrf.mxu0
        %9260 = vmatprep.mubr.bf16.mxu0 %v8671
        %9261 = vmatmul.mubr.bf16.gmra.mxu0 %v8612
        %v9262 = vpop.f32.mrf.mxu0
        %v9263 = vadd.f32 %v8882, %v9262
        %v9264 = vpop.f32.mrf.mxu0
        %v9265 = vpop.f32.mrf.mxu0
        %v9266 = vadd.f32 %v8882, %v9265
        %v9267 = vpop.f32.mrf.mxu0
        %9268 = vmatprep.mubr.bf16.mxu0 %v8675
        %9269 = vmatmul.mubr.bf16.gmra.mxu0 %v8615
        %v9270 = vpop.f32.mrf.mxu0
        %v9271 = vadd.f32 %v8882, %v9270
        %v9272 = vpop.f32.mrf.mxu0
        %v9273 = vpop.f32.mrf.mxu0
        %v9274 = vadd.f32 %v8882, %v9273
        %v9275 = vpop.f32.mrf.mxu0
        %9276 = vmatprep.mubr.bf16.mxu0 %v8679
        %9277 = vmatmul.mubr.bf16.gmra.mxu0 %v8618
        %v9278 = vpop.f32.mrf.mxu0
        %v9279 = vadd.f32 %v8882, %v9278
        %v9280 = vpop.f32.mrf.mxu0
        %v9281 = vpop.f32.mrf.mxu0
        %v9282 = vadd.f32 %v8882, %v9281
        %v9283 = vpop.f32.mrf.mxu0
        %9284 = vmatprep.mubr.bf16.mxu0 %v8683
        %9285 = vmatmul.mubr.bf16.gmra.mxu0 %v8621
        %v9286 = vpop.f32.mrf.mxu0
        %v9287 = vadd.f32 %v8882, %v9286
        %v9288 = vpop.f32.mrf.mxu0
        %v9289 = vpop.f32.mrf.mxu0
        %v9290 = vadd.f32 %v8882, %v9289
        %v9291 = vpop.f32.mrf.mxu0
        %9292 = vmatprep.mubr.bf16.mxu0 %v8687
        %9293 = vmatmul.mubr.bf16.gmra.mxu0 %v8624
        %v9294 = vpop.f32.mrf.mxu0
        %v9295 = vadd.f32 %v8882, %v9294
        %v9296 = vpop.f32.mrf.mxu0
        %v9297 = vpop.f32.mrf.mxu0
        %v9298 = vadd.f32 %v8882, %v9297
        %v9299 = vpop.f32.mrf.mxu0
        %9300 = vmatprep.mubr.bf16.mxu0 %v8691
        %9301 = vmatmul.mubr.bf16.gmra.mxu0 %v8627
        %v9302 = vpop.f32.mrf.mxu0
        %v9303 = vadd.f32 %v8882, %v9302
        %v9304 = vpop.f32.mrf.mxu0
        %v9305 = vpop.f32.mrf.mxu0
        %v9306 = vadd.f32 %v8882, %v9305
        %v9307 = vpop.f32.mrf.mxu0
        %9308 = vdwg.mxu0
        %9309 = vmatprep.subr.bf16.mxu0 0
        %9310 = vmatpush1.bf16.msra.mxu0 %v9051
        %9311 = vmatprep.subr.bf16.mxu0 0
        %9312 = vmatpush1.bf16.msra.mxu0 %v9050
        %9313 = vmatprep.subr.bf16.mxu0 0
        %9314 = vmatpush1.bf16.msra.mxu0 %v9049
        %9315 = vmatprep.subr.bf16.mxu0 0
        %9316 = vmatpush1.bf16.msra.mxu0 %v9048
        %9317 = vmatprep.subr.bf16.mxu0 0
        %9318 = vmatpush1.bf16.msra.mxu0 %v9047
        %9319 = vmatprep.subr.bf16.mxu0 0
        %9320 = vmatpush1.bf16.msra.mxu0 %v9046
        %9321 = vmatprep.subr.bf16.mxu0 0
        %9322 = vmatpush1.bf16.msra.mxu0 %v9045
        %9323 = vmatprep.subr.bf16.mxu0 0
        %9324 = vmatpush1.bf16.msra.mxu0 %v9044
        %9325 = vmatprep.subr.bf16.mxu0 0
        %9326 = vmatpush2.bf16.msra.mxu0 %v9059
        %9327 = vmatprep.subr.bf16.mxu0 0
        %9328 = vmatpush2.bf16.msra.mxu0 %v9058
        %9329 = vmatprep.subr.bf16.mxu0 0
        %9330 = vmatpush2.bf16.msra.mxu0 %v9057
        %9331 = vmatprep.subr.bf16.mxu0 0
        %9332 = vmatpush2.bf16.msra.mxu0 %v9056
        %9333 = vmatprep.subr.bf16.mxu0 0
        %9334 = vmatpush2.bf16.msra.mxu0 %v9055
        %9335 = vmatprep.subr.bf16.mxu0 0
        %9336 = vmatpush2.bf16.msra.mxu0 %v9054
        %9337 = vmatprep.subr.bf16.mxu0 0
        %9338 = vmatpush2.bf16.msra.mxu0 %v9053
        %9339 = vmatprep.subr.bf16.mxu0 0
        %9340 = vmatpush2.bf16.msra.mxu0 %v9052
        %9341 = vmatprep.mubr.bf16.mxu0 %v8758
        %9342 = vmatmul.mubr.bf16.gmra.mxu0 %v8695
        %v9343 = vpop.f32.mrf.mxu0
        %v9344 = vadd.f32 %v9183, %v9343
        %v9345 = vpop.f32.mrf.mxu0
        %v9346 = vpop.f32.mrf.mxu0
        %v9347 = vadd.f32 %v9186, %v9346
        %v9348 = vpop.f32.mrf.mxu0
        %9349 = vmatprep.mubr.bf16.mxu0 %v8761
        %9350 = vmatmul.mubr.bf16.gmra.mxu0 %v8699
        %v9351 = vpop.f32.mrf.mxu0
        %v9352 = vadd.f32 %v9191, %v9351
        %v9353 = vpop.f32.mrf.mxu0
        %v9354 = vpop.f32.mrf.mxu0
        %v9355 = vadd.f32 %v9194, %v9354
        %v9356 = vpop.f32.mrf.mxu0
        %9357 = vmatprep.mubr.bf16.mxu0 %v8764
        %9358 = vmatmul.mubr.bf16.gmra.mxu0 %v8703
        %v9359 = vpop.f32.mrf.mxu0
        %v9360 = vadd.f32 %v9199, %v9359
        %v9361 = vpop.f32.mrf.mxu0
        %v9362 = vpop.f32.mrf.mxu0
        %v9363 = vadd.f32 %v9202, %v9362
        %v9364 = vpop.f32.mrf.mxu0
        %9365 = vmatprep.mubr.bf16.mxu0 %v8767
        %9366 = vmatmul.mubr.bf16.gmra.mxu0 %v8707
        %v9367 = vpop.f32.mrf.mxu0
        %v9368 = vadd.f32 %v9207, %v9367
        %v9369 = vpop.f32.mrf.mxu0
        %v9370 = vpop.f32.mrf.mxu0
        %v9371 = vadd.f32 %v9210, %v9370
        %v9372 = vpop.f32.mrf.mxu0
        %9373 = vmatprep.mubr.bf16.mxu0 %v8770
        %9374 = vmatmul.mubr.bf16.gmra.mxu0 %v8711
        %v9375 = vpop.f32.mrf.mxu0
        %v9376 = vadd.f32 %v9215, %v9375
        %v9377 = vpop.f32.mrf.mxu0
        %v9378 = vpop.f32.mrf.mxu0
        %v9379 = vadd.f32 %v9218, %v9378
        %v9380 = vpop.f32.mrf.mxu0
        %9381 = vmatprep.mubr.bf16.mxu0 %v8773
        %9382 = vmatmul.mubr.bf16.gmra.mxu0 %v8715
        %v9383 = vpop.f32.mrf.mxu0
        %v9384 = vadd.f32 %v9223, %v9383
        %v9385 = vpop.f32.mrf.mxu0
        %v9386 = vpop.f32.mrf.mxu0
        %v9387 = vadd.f32 %v9226, %v9386
        %v9388 = vpop.f32.mrf.mxu0
        %9389 = vmatprep.mubr.bf16.mxu0 %v8776
        %9390 = vmatmul.mubr.bf16.gmra.mxu0 %v8719
        %v9391 = vpop.f32.mrf.mxu0
        %v9392 = vadd.f32 %v9231, %v9391
        %v9393 = vpop.f32.mrf.mxu0
        %v9394 = vpop.f32.mrf.mxu0
        %v9395 = vadd.f32 %v9234, %v9394
        %v9396 = vpop.f32.mrf.mxu0
        %9397 = vmatprep.mubr.bf16.mxu0 %v8779
        %9398 = vmatmul.mubr.bf16.gmra.mxu0 %v8723
        %v9399 = vpop.f32.mrf.mxu0
        %v9400 = vadd.f32 %v9239, %v9399
        %v9401 = vpop.f32.mrf.mxu0
        %v9402 = vpop.f32.mrf.mxu0
        %v9403 = vadd.f32 %v9242, %v9402
        %v9404 = vpop.f32.mrf.mxu0
        %9405 = vmatprep.mubr.bf16.mxu0 %v8782
        %9406 = vmatmul.mubr.bf16.gmra.mxu0 %v8727
        %v9407 = vpop.f32.mrf.mxu0
        %v9408 = vadd.f32 %v9247, %v9407
        %v9409 = vpop.f32.mrf.mxu0
        %v9410 = vpop.f32.mrf.mxu0
        %v9411 = vadd.f32 %v9250, %v9410
        %v9412 = vpop.f32.mrf.mxu0
        %9413 = vmatprep.mubr.bf16.mxu0 %v8785
        %9414 = vmatmul.mubr.bf16.gmra.mxu0 %v8731
        %v9415 = vpop.f32.mrf.mxu0
        %v9416 = vadd.f32 %v9255, %v9415
        %v9417 = vpop.f32.mrf.mxu0
        %v9418 = vpop.f32.mrf.mxu0
        %v9419 = vadd.f32 %v9258, %v9418
        %v9420 = vpop.f32.mrf.mxu0
        %9421 = vmatprep.mubr.bf16.mxu0 %v8788
        %9422 = vmatmul.mubr.bf16.gmra.mxu0 %v8735
        %v9423 = vpop.f32.mrf.mxu0
        %v9424 = vadd.f32 %v9263, %v9423
        %v9425 = vpop.f32.mrf.mxu0
        %v9426 = vpop.f32.mrf.mxu0
        %v9427 = vadd.f32 %v9266, %v9426
        %v9428 = vpop.f32.mrf.mxu0
        %9429 = vmatprep.mubr.bf16.mxu0 %v8791
        %9430 = vmatmul.mubr.bf16.gmra.mxu0 %v8739
        %v9431 = vpop.f32.mrf.mxu0
        %v9432 = vadd.f32 %v9271, %v9431
        %v9433 = vpop.f32.mrf.mxu0
        %v9434 = vpop.f32.mrf.mxu0
        %v9435 = vadd.f32 %v9274, %v9434
        %v9436 = vpop.f32.mrf.mxu0
        %9437 = vmatprep.mubr.bf16.mxu0 %v8794
        %9438 = vmatmul.mubr.bf16.gmra.mxu0 %v8743
        %v9439 = vpop.f32.mrf.mxu0
        %v9440 = vadd.f32 %v9279, %v9439
        %v9441 = vpop.f32.mrf.mxu0
        %v9442 = vpop.f32.mrf.mxu0
        %v9443 = vadd.f32 %v9282, %v9442
        %v9444 = vpop.f32.mrf.mxu0
        %9445 = vmatprep.mubr.bf16.mxu0 %v8797
        %9446 = vmatmul.mubr.bf16.gmra.mxu0 %v8747
        %v9447 = vpop.f32.mrf.mxu0
        %v9448 = vadd.f32 %v9287, %v9447
        %v9449 = vpop.f32.mrf.mxu0
        %v9450 = vpop.f32.mrf.mxu0
        %v9451 = vadd.f32 %v9290, %v9450
        %v9452 = vpop.f32.mrf.mxu0
        %9453 = vmatprep.mubr.bf16.mxu0 %v8800
        %9454 = vmatmul.mubr.bf16.gmra.mxu0 %v8751
        %v9455 = vpop.f32.mrf.mxu0
        %v9456 = vadd.f32 %v9295, %v9455
        %v9457 = vpop.f32.mrf.mxu0
        %v9458 = vpop.f32.mrf.mxu0
        %v9459 = vadd.f32 %v9298, %v9458
        %v9460 = vpop.f32.mrf.mxu0
        %9461 = vmatprep.mubr.bf16.mxu0 %v8803
        %9462 = vmatmul.mubr.bf16.gmra.mxu0 %v8755
        %v9463 = vpop.f32.mrf.mxu0
        %v9464 = vadd.f32 %v9303, %v9463
        %v9465 = vpop.f32.mrf.mxu0
        %v9466 = vpop.f32.mrf.mxu0
        %v9467 = vadd.f32 %v9306, %v9466
        %v9468 = vpop.f32.mrf.mxu0
        %9469 = vdwg.mxu0
        %9470 = vmatprep.subr.bf16.mxu0 0
        %9471 = vmatpush1.bf16.msra.mxu0 0
        %9472 = vmatprep.subr.bf16.mxu0 0
        %9473 = vmatpush1.bf16.msra.mxu0 0
        %9474 = vmatprep.subr.bf16.mxu0 0
        %9475 = vmatpush1.bf16.msra.mxu0 0
        %9476 = vmatprep.subr.bf16.mxu0 0
        %9477 = vmatpush1.bf16.msra.mxu0 0
        %9478 = vmatprep.subr.bf16.mxu0 0
        %9479 = vmatpush1.bf16.msra.mxu0 %v9063
        %9480 = vmatprep.subr.bf16.mxu0 0
        %9481 = vmatpush1.bf16.msra.mxu0 %v9062
        %9482 = vmatprep.subr.bf16.mxu0 0
        %9483 = vmatpush1.bf16.msra.mxu0 %v9061
        %9484 = vmatprep.subr.bf16.mxu0 0
        %9485 = vmatpush1.bf16.msra.mxu0 %v9060
        %9486 = vmatprep.subr.bf16.mxu0 0
        %9487 = vmatpush2.bf16.msra.mxu0 0
        %9488 = vmatprep.subr.bf16.mxu0 0
        %9489 = vmatpush2.bf16.msra.mxu0 0
        %9490 = vmatprep.subr.bf16.mxu0 0
        %9491 = vmatpush2.bf16.msra.mxu0 0
        %9492 = vmatprep.subr.bf16.mxu0 0
        %9493 = vmatpush2.bf16.msra.mxu0 0
        %9494 = vmatprep.subr.bf16.mxu0 0
        %9495 = vmatpush2.bf16.msra.mxu0 0
        %9496 = vmatprep.subr.bf16.mxu0 0
        %9497 = vmatpush2.bf16.msra.mxu0 0
        %9498 = vmatprep.subr.bf16.mxu0 0
        %9499 = vmatpush2.bf16.msra.mxu0 0
        %9500 = vmatprep.subr.bf16.mxu0 0
        %9501 = vmatpush2.bf16.msra.mxu0 0
        %9502 = vmatprep.mubr.bf16.mxu0 0
        %9503 = vmatmul.mubr.bf16.gmra.mxu0 %v9101
        %v9504 = vpop.f32.mrf.mxu0
        %v9505 = vadd.f32 %v9344, %v9504
        %v9506 = vpop.f32.mrf.mxu0
        %v9507 = vpop.f32.mrf.mxu0
        %v9508 = vadd.f32 %v9347, %v9507
        %v9509 = vpop.f32.mrf.mxu0
        %9510 = vmatprep.mubr.bf16.mxu0 0
        %9511 = vmatmul.mubr.bf16.gmra.mxu0 %v9104
        %v9512 = vpop.f32.mrf.mxu0
        %v9513 = vadd.f32 %v9352, %v9512
        %v9514 = vpop.f32.mrf.mxu0
        %v9515 = vpop.f32.mrf.mxu0
        %v9516 = vadd.f32 %v9355, %v9515
        %v9517 = vpop.f32.mrf.mxu0
        %9518 = vmatprep.mubr.bf16.mxu0 0
        %9519 = vmatmul.mubr.bf16.gmra.mxu0 %v9107
        %v9520 = vpop.f32.mrf.mxu0
        %v9521 = vadd.f32 %v9360, %v9520
        %v9522 = vpop.f32.mrf.mxu0
        %v9523 = vpop.f32.mrf.mxu0
        %v9524 = vadd.f32 %v9363, %v9523
        %v9525 = vpop.f32.mrf.mxu0
        %9526 = vmatprep.mubr.bf16.mxu0 0
        %9527 = vmatmul.mubr.bf16.gmra.mxu0 %v9110
        %v9528 = vpop.f32.mrf.mxu0
        %v9529 = vadd.f32 %v9368, %v9528
        %v9530 = vpop.f32.mrf.mxu0
        %v9531 = vpop.f32.mrf.mxu0
        %v9532 = vadd.f32 %v9371, %v9531
        %v9533 = vpop.f32.mrf.mxu0
        %9534 = vmatprep.mubr.bf16.mxu0 0
        %9535 = vmatmul.mubr.bf16.gmra.mxu0 %v9113
        %v9536 = vpop.f32.mrf.mxu0
        %v9537 = vadd.f32 %v9376, %v9536
        %v9538 = vpop.f32.mrf.mxu0
        %v9539 = vpop.f32.mrf.mxu0
        %v9540 = vadd.f32 %v9379, %v9539
        %v9541 = vpop.f32.mrf.mxu0
        %9542 = vmatprep.mubr.bf16.mxu0 0
        %9543 = vmatmul.mubr.bf16.gmra.mxu0 %v9116
        %v9544 = vpop.f32.mrf.mxu0
        %v9545 = vadd.f32 %v9384, %v9544
        %v9546 = vpop.f32.mrf.mxu0
        %v9547 = vpop.f32.mrf.mxu0
        %v9548 = vadd.f32 %v9387, %v9547
        %v9549 = vpop.f32.mrf.mxu0
        %9550 = vmatprep.mubr.bf16.mxu0 0
        %9551 = vmatmul.mubr.bf16.gmra.mxu0 %v9119
        %v9552 = vpop.f32.mrf.mxu0
        %v9553 = vadd.f32 %v9392, %v9552
        %v9554 = vpop.f32.mrf.mxu0
        %v9555 = vpop.f32.mrf.mxu0
        %v9556 = vadd.f32 %v9395, %v9555
        %v9557 = vpop.f32.mrf.mxu0
        %9558 = vmatprep.mubr.bf16.mxu0 0
        %9559 = vmatmul.mubr.bf16.gmra.mxu0 %v9122
        %v9560 = vpop.f32.mrf.mxu0
        %v9561 = vadd.f32 %v9400, %v9560
        %v9562 = vpop.f32.mrf.mxu0
        %v9563 = vpop.f32.mrf.mxu0
        %v9564 = vadd.f32 %v9403, %v9563
        %v9565 = vpop.f32.mrf.mxu0
        %9566 = vmatprep.mubr.bf16.mxu0 0
        %9567 = vmatmul.mubr.bf16.gmra.mxu0 %v9125
        %v9568 = vpop.f32.mrf.mxu0
        %v9569 = vadd.f32 %v9408, %v9568
        %v9570 = vpop.f32.mrf.mxu0
        %v9571 = vpop.f32.mrf.mxu0
        %v9572 = vadd.f32 %v9411, %v9571
        %v9573 = vpop.f32.mrf.mxu0
        %9574 = vmatprep.mubr.bf16.mxu0 0
        %9575 = vmatmul.mubr.bf16.gmra.mxu0 %v9128
        %v9576 = vpop.f32.mrf.mxu0
        %v9577 = vadd.f32 %v9416, %v9576
        %v9578 = vpop.f32.mrf.mxu0
        %v9579 = vpop.f32.mrf.mxu0
        %v9580 = vadd.f32 %v9419, %v9579
        %v9581 = vpop.f32.mrf.mxu0
        %9582 = vmatprep.mubr.bf16.mxu0 0
        %9583 = vmatmul.mubr.bf16.gmra.mxu0 %v9131
        %v9584 = vpop.f32.mrf.mxu0
        %v9585 = vadd.f32 %v9424, %v9584
        %v9586 = vpop.f32.mrf.mxu0
        %v9587 = vpop.f32.mrf.mxu0
        %v9588 = vadd.f32 %v9427, %v9587
        %v9589 = vpop.f32.mrf.mxu0
        %9590 = vmatprep.mubr.bf16.mxu0 0
        %9591 = vmatmul.mubr.bf16.gmra.mxu0 %v9134
        %v9592 = vpop.f32.mrf.mxu0
        %v9593 = vadd.f32 %v9432, %v9592
        %v9594 = vpop.f32.mrf.mxu0
        %v9595 = vpop.f32.mrf.mxu0
        %v9596 = vadd.f32 %v9435, %v9595
        %v9597 = vpop.f32.mrf.mxu0
        %9598 = vmatprep.mubr.bf16.mxu0 0
        %9599 = vmatmul.mubr.bf16.gmra.mxu0 %v9137
        %v9600 = vpop.f32.mrf.mxu0
        %v9601 = vadd.f32 %v9440, %v9600
        %v9602 = vpop.f32.mrf.mxu0
        %v9603 = vpop.f32.mrf.mxu0
        %v9604 = vadd.f32 %v9443, %v9603
        %v9605 = vpop.f32.mrf.mxu0
        %9606 = vmatprep.mubr.bf16.mxu0 0
        %9607 = vmatmul.mubr.bf16.gmra.mxu0 %v9140
        %v9608 = vpop.f32.mrf.mxu0
        %v9609 = vadd.f32 %v9448, %v9608
        %v9610 = vpop.f32.mrf.mxu0
        %v9611 = vpop.f32.mrf.mxu0
        %v9612 = vadd.f32 %v9451, %v9611
        %v9613 = vpop.f32.mrf.mxu0
        %9614 = vmatprep.mubr.bf16.mxu0 0
        %9615 = vmatmul.mubr.bf16.gmra.mxu0 %v9143
        %v9616 = vpop.f32.mrf.mxu0
        %v9617 = vadd.f32 %v9456, %v9616
        %v9618 = vpop.f32.mrf.mxu0
        %v9619 = vpop.f32.mrf.mxu0
        %v9620 = vadd.f32 %v9459, %v9619
        %v9621 = vpop.f32.mrf.mxu0
        %9622 = vmatprep.mubr.bf16.mxu0 0
        %9623 = vmatmul.mubr.bf16.gmra.mxu0 %v9146
        %v9624 = vpop.f32.mrf.mxu0
        %v9625 = vadd.f32 %v9464, %v9624
        %v9626 = vpop.f32.mrf.mxu0
        %v9627 = vpop.f32.mrf.mxu0
        %v9628 = vadd.f32 %v9467, %v9627
        %v9629 = vpop.f32.mrf.mxu0
        %9630 = vdwg.mxu0
        %v9631 = vmax.f32 %v9505, 0.0
        %v9632 = vmax.f32 %v9508, 0.0
        %v9633 = vmax.f32 %v9513, 0.0
        %v9634 = vmax.f32 %v9516, 0.0
        %v9635 = vmax.f32 %v9521, 0.0
        %v9636 = vmax.f32 %v9524, 0.0
        %v9637 = vmax.f32 %v9529, 0.0
        %v9638 = vmax.f32 %v9532, 0.0
        %v9639 = vmax.f32 %v9537, 0.0
        %v9640 = vmax.f32 %v9540, 0.0
        %v9641 = vmax.f32 %v9545, 0.0
        %v9642 = vmax.f32 %v9548, 0.0
        %v9643 = vmax.f32 %v9553, 0.0
        %v9644 = vmax.f32 %v9556, 0.0
        %v9645 = vmax.f32 %v9561, 0.0
        %v9646 = vmax.f32 %v9564, 0.0
        %v9647 = vmax.f32 %v9569, 0.0
        %v9648 = vmax.f32 %v9572, 0.0
        %v9649 = vmax.f32 %v9577, 0.0
        %v9650 = vmax.f32 %v9580, 0.0
        %v9651 = vmax.f32 %v9585, 0.0
        %v9652 = vmax.f32 %v9588, 0.0
        %v9653 = vmax.f32 %v9593, 0.0
        %v9654 = vmax.f32 %v9596, 0.0
        %v9655 = vmax.f32 %v9601, 0.0
        %v9656 = vmax.f32 %v9604, 0.0
        %v9657 = vmax.f32 %v9609, 0.0
        %v9658 = vmax.f32 %v9612, 0.0
        %v9659 = vmax.f32 %v9617, 0.0
        %v9660 = vmax.f32 %v9620, 0.0
        %v9661 = vmax.f32 %v9625, 0.0
        %v9662 = vmax.f32 %v9628, 0.0
        %9663 = vst.msk [vmem:[#allocation2] sm:$0xff] %vm409, %v9631
        %9664 = vst.msk [vmem:[#allocation2 + $0x8] sm:$0xff] %vm409, %v9632
        %9665 = vst.msk [vmem:[#allocation2 + $0x18] sm:$0xff] %vm409, %v9633
        %9666 = vst.msk [vmem:[#allocation2 + $0x20] sm:$0xff] %vm409, %v9634
        %9667 = vst.msk [vmem:[#allocation2 + $0x30] sm:$0xff] %vm409, %v9635
        %9668 = vst.msk [vmem:[#allocation2 + $0x38] sm:$0xff] %vm409, %v9636
        %9669 = vst.msk [vmem:[#allocation2 + $0x48] sm:$0xff] %vm409, %v9637
        %9670 = vst.msk [vmem:[#allocation2 + $0x50] sm:$0xff] %vm409, %v9638
        %9671 = vst.msk [vmem:[#allocation2 + $0x60] sm:$0xff] %vm409, %v9639
        %9672 = vst.msk [vmem:[#allocation2 + $0x68] sm:$0xff] %vm409, %v9640
        %9673 = vst.msk [vmem:[#allocation2 + $0x78] sm:$0xff] %vm409, %v9641
        %9674 = vst.msk [vmem:[#allocation2 + $0x80] sm:$0xff] %vm409, %v9642
        %9675 = vst.msk [vmem:[#allocation2 + $0x90] sm:$0xff] %vm409, %v9643
        %9676 = vst.msk [vmem:[#allocation2 + $0x98] sm:$0xff] %vm409, %v9644
        %9677 = vst.msk [vmem:[#allocation2 + $0xa8] sm:$0xff] %vm409, %v9645
        %9678 = vst.msk [vmem:[#allocation2 + $0xb0] sm:$0xff] %vm409, %v9646
        %9679 = vst.msk [vmem:[#allocation2 + $0xc0] sm:$0xff] %vm409, %v9647
        %9680 = vst.msk [vmem:[#allocation2 + $0xc8] sm:$0xff] %vm409, %v9648
        %9681 = vst.msk [vmem:[#allocation2 + $0xd8] sm:$0xff] %vm409, %v9649
        %9682 = vst.msk [vmem:[#allocation2 + $0xe0] sm:$0xff] %vm409, %v9650
        %9683 = vst.msk [vmem:[#allocation2 + $0xf0] sm:$0xff] %vm409, %v9651
        %9684 = vst.msk [vmem:[#allocation2 + $0xf8] sm:$0xff] %vm409, %v9652
        %9685 = vst.msk [vmem:[#allocation2 + $0x108] sm:$0xff] %vm409, %v9653
        %9686 = vst.msk [vmem:[#allocation2 + $0x110] sm:$0xff] %vm409, %v9654
        %9687 = vst.msk [vmem:[#allocation2 + $0x120] sm:$0xff] %vm409, %v9655
        %9688 = vst.msk [vmem:[#allocation2 + $0x128] sm:$0xff] %vm409, %v9656
        %9689 = vst.msk [vmem:[#allocation2 + $0x138] sm:$0xff] %vm409, %v9657
        %9690 = vst.msk [vmem:[#allocation2 + $0x140] sm:$0xff] %vm409, %v9658
        %9691 = vst.msk [vmem:[#allocation2 + $0x150] sm:$0xff] %vm409, %v9659
        %9692 = vst.msk [vmem:[#allocation2 + $0x158] sm:$0xff] %vm409, %v9660
        %9693 = vst.msk [vmem:[#allocation2 + $0x168] sm:$0xff] %vm409, %v9661
        %9694 = vst.msk [vmem:[#allocation2 + $0x170] sm:$0xff] %vm409, %v9662
        %v9695 = vld [vmem:[#allocation2 + $0x1] sm:$0xff]
        %v9696 = vld [vmem:[#allocation2 + $0x9] sm:$0xff]
        %v9697 = vld [vmem:[#allocation2 + $0x19] sm:$0xff]
        %v9698 = vld [vmem:[#allocation2 + $0x21] sm:$0xff]
        %v9699 = vld [vmem:[#allocation2 + $0x31] sm:$0xff]
        %v9700 = vld [vmem:[#allocation2 + $0x39] sm:$0xff]
        %v9701 = vld [vmem:[#allocation2 + $0x49] sm:$0xff]
        %v9702 = vld [vmem:[#allocation2 + $0x51] sm:$0xff]
        %v9703 = vld [vmem:[#allocation2 + $0x61] sm:$0xff]
        %v9704 = vld [vmem:[#allocation2 + $0x69] sm:$0xff]
        %v9705 = vld [vmem:[#allocation2 + $0x79] sm:$0xff]
        %v9706 = vld [vmem:[#allocation2 + $0x81] sm:$0xff]
        %v9707 = vld [vmem:[#allocation2 + $0x91] sm:$0xff]
        %v9708 = vld [vmem:[#allocation2 + $0x99] sm:$0xff]
        %v9709 = vld [vmem:[#allocation2 + $0xa9] sm:$0xff]
        %v9710 = vld [vmem:[#allocation2 + $0xb1] sm:$0xff]
        %v9711 = vld [vmem:[#allocation2 + $0xc1] sm:$0xff]
        %v9712 = vld [vmem:[#allocation2 + $0xc9] sm:$0xff]
        %v9713 = vld [vmem:[#allocation2 + $0xd9] sm:$0xff]
        %v9714 = vld [vmem:[#allocation2 + $0xe1] sm:$0xff]
        %v9715 = vld [vmem:[#allocation2 + $0xf1] sm:$0xff]
        %v9716 = vld [vmem:[#allocation2 + $0xf9] sm:$0xff]
        %v9717 = vld [vmem:[#allocation2 + $0x109] sm:$0xff]
        %v9718 = vld [vmem:[#allocation2 + $0x111] sm:$0xff]
        %v9719 = vld [vmem:[#allocation2 + $0x121] sm:$0xff]
        %v9720 = vld [vmem:[#allocation2 + $0x129] sm:$0xff]
        %v9721 = vld [vmem:[#allocation2 + $0x139] sm:$0xff]
        %v9722 = vld [vmem:[#allocation2 + $0x141] sm:$0xff]
        %v9723 = vld [vmem:[#allocation2 + $0x151] sm:$0xff]
        %v9724 = vld [vmem:[#allocation2 + $0x159] sm:$0xff]
        %v9725 = vld [vmem:[#allocation2 + $0x169] sm:$0xff]
        %v9726 = vld [vmem:[#allocation2 + $0x171] sm:$0xff]
        %v9727 = vld [vmem:[%s2852] sm:$0xff]
        %v9728 = vld [vmem:[%s2852 + $0x8] sm:$0xff]
        %v9729 = vld [vmem:[%s2852 + $0x18] sm:$0xff]
        %v9730 = vld [vmem:[%s2852 + $0x20] sm:$0xff]
        %v9731 = vld [vmem:[%s2852 + $0x30] sm:$0xff]
        %v9732 = vld [vmem:[%s2852 + $0x38] sm:$0xff]
        %v9733 = vld [vmem:[%s2852 + $0x48] sm:$0xff]
        %v9734 = vld [vmem:[%s2852 + $0x50] sm:$0xff]
        %v9735 = vld [vmem:[%s2852 + $0x60] sm:$0xff]
        %v9736 = vld [vmem:[%s2852 + $0x68] sm:$0xff]
        %v9737 = vld [vmem:[%s2852 + $0x78] sm:$0xff]
        %v9738 = vld [vmem:[%s2852 + $0x80] sm:$0xff]
        %v9739 = vld [vmem:[%s2852 + $0x90] sm:$0xff]
        %v9740 = vld [vmem:[%s2852 + $0x98] sm:$0xff]
        %v9741 = vld [vmem:[%s2852 + $0xa8] sm:$0xff]
        %v9742 = vld [vmem:[%s2852 + $0xb0] sm:$0xff]
        %v9743 = vld [vmem:[%s2852 + $0xc0] sm:$0xff]
        %v9744 = vld [vmem:[%s2852 + $0xc8] sm:$0xff]
        %v9745 = vld [vmem:[%s2852 + $0xd8] sm:$0xff]
        %v9746 = vld [vmem:[%s2852 + $0xe0] sm:$0xff]
        %v9747 = vld [vmem:[%s2852 + $0xf0] sm:$0xff]
        %v9748 = vld [vmem:[%s2852 + $0xf8] sm:$0xff]
        %v9749 = vld [vmem:[%s2852 + $0x108] sm:$0xff]
        %v9750 = vld [vmem:[%s2852 + $0x110] sm:$0xff]
        %v9751 = vld [vmem:[%s2852 + $0x120] sm:$0xff]
        %v9752 = vld [vmem:[%s2852 + $0x128] sm:$0xff]
        %v9753 = vld [vmem:[%s2852 + $0x138] sm:$0xff]
        %v9754 = vld [vmem:[%s2852 + $0x140] sm:$0xff]
        %v9755 = vld [vmem:[%s2852 + $0x150] sm:$0xff]
        %v9756 = vld [vmem:[%s2852 + $0x158] sm:$0xff]
        %v9757 = vld [vmem:[%s2852 + $0x168] sm:$0xff]
        %v9758 = vld [vmem:[%s2852 + $0x170] sm:$0xff]
        %v9759 = vld [vmem:[%s2852 + $0x1] sm:$0xff]
        %v9760 = vld [vmem:[%s2852 + $0x9] sm:$0xff]
        %v9761 = vld [vmem:[%s2852 + $0x19] sm:$0xff]
        %v9762 = vld [vmem:[%s2852 + $0x21] sm:$0xff]
        %v9763 = vld [vmem:[%s2852 + $0x31] sm:$0xff]
        %v9764 = vld [vmem:[%s2852 + $0x39] sm:$0xff]
        %v9765 = vld [vmem:[%s2852 + $0x49] sm:$0xff]
        %v9766 = vld [vmem:[%s2852 + $0x51] sm:$0xff]
        %v9767 = vld [vmem:[%s2852 + $0x61] sm:$0xff]
        %v9768 = vld [vmem:[%s2852 + $0x69] sm:$0xff]
        %v9769 = vld [vmem:[%s2852 + $0x79] sm:$0xff]
        %v9770 = vld [vmem:[%s2852 + $0x81] sm:$0xff]
        %v9771 = vld [vmem:[%s2852 + $0x91] sm:$0xff]
        %v9772 = vld [vmem:[%s2852 + $0x99] sm:$0xff]
        %v9773 = vld [vmem:[%s2852 + $0xa9] sm:$0xff]
        %v9774 = vld [vmem:[%s2852 + $0xb1] sm:$0xff]
        %v9775 = vld [vmem:[%s2852 + $0xc1] sm:$0xff]
        %v9776 = vld [vmem:[%s2852 + $0xc9] sm:$0xff]
        %v9777 = vld [vmem:[%s2852 + $0xd9] sm:$0xff]
        %v9778 = vld [vmem:[%s2852 + $0xe1] sm:$0xff]
        %v9779 = vld [vmem:[%s2852 + $0xf1] sm:$0xff]
        %v9780 = vld [vmem:[%s2852 + $0xf9] sm:$0xff]
        %v9781 = vld [vmem:[%s2852 + $0x109] sm:$0xff]
        %v9782 = vld [vmem:[%s2852 + $0x111] sm:$0xff]
        %v9783 = vld [vmem:[%s2852 + $0x121] sm:$0xff]
        %v9784 = vld [vmem:[%s2852 + $0x129] sm:$0xff]
        %v9785 = vld [vmem:[%s2852 + $0x139] sm:$0xff]
        %v9786 = vld [vmem:[%s2852 + $0x141] sm:$0xff]
        %v9787 = vld [vmem:[%s2852 + $0x151] sm:$0xff]
        %v9788 = vld [vmem:[%s2852 + $0x159] sm:$0xff]
        %v9789 = vld [vmem:[%s2852 + $0x169] sm:$0xff]
        %v9790 = vld [vmem:[%s2852 + $0x171] sm:$0xff]
        %v9791 = vadd.f32 %v9631, %v9695
        %v9792 = vadd.f32 %v9632, %v9696
        %v9793 = vadd.f32 %v9633, %v9697
        %v9794 = vadd.f32 %v9634, %v9698
        %v9795 = vadd.f32 %v9635, %v9699
        %v9796 = vadd.f32 %v9636, %v9700
        %v9797 = vadd.f32 %v9637, %v9701
        %v9798 = vadd.f32 %v9638, %v9702
        %v9799 = vadd.f32 %v9639, %v9703
        %v9800 = vadd.f32 %v9640, %v9704
        %v9801 = vadd.f32 %v9641, %v9705
        %v9802 = vadd.f32 %v9642, %v9706
        %v9803 = vadd.f32 %v9643, %v9707
        %v9804 = vadd.f32 %v9644, %v9708
        %v9805 = vadd.f32 %v9645, %v9709
        %v9806 = vadd.f32 %v9646, %v9710
        %v9807 = vadd.f32 %v9647, %v9711
        %v9808 = vadd.f32 %v9648, %v9712
        %v9809 = vadd.f32 %v9649, %v9713
        %v9810 = vadd.f32 %v9650, %v9714
        %v9811 = vadd.f32 %v9651, %v9715
        %v9812 = vadd.f32 %v9652, %v9716
        %v9813 = vadd.f32 %v9653, %v9717
        %v9814 = vadd.f32 %v9654, %v9718
        %v9815 = vadd.f32 %v9655, %v9719
        %v9816 = vadd.f32 %v9656, %v9720
        %v9817 = vadd.f32 %v9657, %v9721
        %v9818 = vadd.f32 %v9658, %v9722
        %v9819 = vadd.f32 %v9659, %v9723
        %v9820 = vadd.f32 %v9660, %v9724
        %v9821 = vadd.f32 %v9661, %v9725
        %v9822 = vadd.f32 %v9662, %v9726
        %v9823 = vadd.f32 %v9791, %v9727
        %v9824 = vadd.f32 %v9792, %v9728
        %v9825 = vadd.f32 %v9793, %v9729
        %v9826 = vadd.f32 %v9794, %v9730
        %v9827 = vadd.f32 %v9795, %v9731
        %v9828 = vadd.f32 %v9796, %v9732
        %v9829 = vadd.f32 %v9797, %v9733
        %v9830 = vadd.f32 %v9798, %v9734
        %v9831 = vadd.f32 %v9799, %v9735
        %v9832 = vadd.f32 %v9800, %v9736
        %v9833 = vadd.f32 %v9801, %v9737
        %v9834 = vadd.f32 %v9802, %v9738
        %v9835 = vadd.f32 %v9803, %v9739
        %v9836 = vadd.f32 %v9804, %v9740
        %v9837 = vadd.f32 %v9805, %v9741
        %v9838 = vadd.f32 %v9806, %v9742
        %v9839 = vadd.f32 %v9807, %v9743
        %v9840 = vadd.f32 %v9808, %v9744
        %v9841 = vadd.f32 %v9809, %v9745
        %v9842 = vadd.f32 %v9810, %v9746
        %v9843 = vadd.f32 %v9811, %v9747
        %v9844 = vadd.f32 %v9812, %v9748
        %v9845 = vadd.f32 %v9813, %v9749
        %v9846 = vadd.f32 %v9814, %v9750
        %v9847 = vadd.f32 %v9815, %v9751
        %v9848 = vadd.f32 %v9816, %v9752
        %v9849 = vadd.f32 %v9817, %v9753
        %v9850 = vadd.f32 %v9818, %v9754
        %v9851 = vadd.f32 %v9819, %v9755
        %v9852 = vadd.f32 %v9820, %v9756
        %v9853 = vadd.f32 %v9821, %v9757
        %v9854 = vadd.f32 %v9822, %v9758
        %v9855 = vadd.f32 %v9823, %v9759
        %v9856 = vadd.f32 %v9824, %v9760
        %v9857 = vadd.f32 %v9825, %v9761
        %v9858 = vadd.f32 %v9826, %v9762
        %v9859 = vadd.f32 %v9827, %v9763
        %v9860 = vadd.f32 %v9828, %v9764
        %v9861 = vadd.f32 %v9829, %v9765
        %v9862 = vadd.f32 %v9830, %v9766
        %v9863 = vadd.f32 %v9831, %v9767
        %v9864 = vadd.f32 %v9832, %v9768
        %v9865 = vadd.f32 %v9833, %v9769
        %v9866 = vadd.f32 %v9834, %v9770
        %v9867 = vadd.f32 %v9835, %v9771
        %v9868 = vadd.f32 %v9836, %v9772
        %v9869 = vadd.f32 %v9837, %v9773
        %v9870 = vadd.f32 %v9838, %v9774
        %v9871 = vadd.f32 %v9839, %v9775
        %v9872 = vadd.f32 %v9840, %v9776
        %v9873 = vadd.f32 %v9841, %v9777
        %v9874 = vadd.f32 %v9842, %v9778
        %v9875 = vadd.f32 %v9843, %v9779
        %v9876 = vadd.f32 %v9844, %v9780
        %v9877 = vadd.f32 %v9845, %v9781
        %v9878 = vadd.f32 %v9846, %v9782
        %v9879 = vadd.f32 %v9847, %v9783
        %v9880 = vadd.f32 %v9848, %v9784
        %v9881 = vadd.f32 %v9849, %v9785
        %v9882 = vadd.f32 %v9850, %v9786
        %v9883 = vadd.f32 %v9851, %v9787
        %v9884 = vadd.f32 %v9852, %v9788
        %v9885 = vadd.f32 %v9853, %v9789
        %v9886 = vadd.f32 %v9854, %v9790
        %v9887 = vmul.f32 %v9855, 0.25
        %v9888 = vmul.f32 %v9856, 0.25
        %v9889 = vmul.f32 %v9857, 0.25
        %v9890 = vmul.f32 %v9858, 0.25
        %v9891 = vmul.f32 %v9859, 0.25
        %v9892 = vmul.f32 %v9860, 0.25
        %v9893 = vmul.f32 %v9861, 0.25
        %v9894 = vmul.f32 %v9862, 0.25
        %v9895 = vmul.f32 %v9863, 0.25
        %v9896 = vmul.f32 %v9864, 0.25
        %v9897 = vmul.f32 %v9865, 0.25
        %v9898 = vmul.f32 %v9866, 0.25
        %v9899 = vmul.f32 %v9867, 0.25
        %v9900 = vmul.f32 %v9868, 0.25
        %v9901 = vmul.f32 %v9869, 0.25
        %v9902 = vmul.f32 %v9870, 0.25
        %v9903 = vmul.f32 %v9871, 0.25
        %v9904 = vmul.f32 %v9872, 0.25
        %v9905 = vmul.f32 %v9873, 0.25
        %v9906 = vmul.f32 %v9874, 0.25
        %v9907 = vmul.f32 %v9875, 0.25
        %v9908 = vmul.f32 %v9876, 0.25
        %v9909 = vmul.f32 %v9877, 0.25
        %v9910 = vmul.f32 %v9878, 0.25
        %v9911 = vmul.f32 %v9879, 0.25
        %v9912 = vmul.f32 %v9880, 0.25
        %v9913 = vmul.f32 %v9881, 0.25
        %v9914 = vmul.f32 %v9882, 0.25
        %v9915 = vmul.f32 %v9883, 0.25
        %v9916 = vmul.f32 %v9884, 0.25
        %v9917 = vmul.f32 %v9885, 0.25
        %v9918 = vmul.f32 %v9886, 0.25
        %v9919 = vadd.f32 %v3013, %v6453
        %v9920 = vadd.f32 %v3014, %v6454
        %v9921 = vadd.f32 %v3015, %v6455
        %v9922 = vadd.f32 %v3016, %v6456
        %v9923 = vadd.f32 %v3017, %v6457
        %v9924 = vadd.f32 %v3018, %v6458
        %v9925 = vadd.f32 %v3019, %v6459
        %v9926 = vadd.f32 %v3020, %v6460
        %v9927 = vadd.f32 %v3021, %v6461
        %v9928 = vadd.f32 %v3022, %v6462
        %v9929 = vadd.f32 %v3023, %v6463
        %v9930 = vadd.f32 %v3024, %v6464
        %v9931 = vadd.f32 %v3025, %v6465
        %v9932 = vadd.f32 %v3026, %v6466
        %v9933 = vadd.f32 %v3027, %v6467
        %v9934 = vadd.f32 %v3028, %v6468
        %v9935 = vadd.f32 %v3029, %v6469
        %v9936 = vadd.f32 %v3030, %v6470
        %v9937 = vadd.f32 %v3031, %v6471
        %v9938 = vadd.f32 %v3032, %v6472
        %v9939 = vadd.f32 %v3033, %v6473
        %v9940 = vadd.f32 %v3034, %v6474
        %v9941 = vadd.f32 %v3035, %v6475
        %v9942 = vadd.f32 %v3036, %v6476
        %v9943 = vadd.f32 %v3037, %v6477
        %v9944 = vadd.f32 %v3038, %v6478
        %v9945 = vadd.f32 %v3039, %v6479
        %v9946 = vadd.f32 %v3040, %v6480
        %v9947 = vadd.f32 %v3041, %v6481
        %v9948 = vadd.f32 %v3042, %v6482
        %v9949 = vadd.f32 %v3043, %v6483
        %v9950 = vadd.f32 %v3044, %v6484
        %v9951 = vadd.f32 %v9919, %v9887
        %v9952 = vadd.f32 %v9920, %v9888
        %v9953 = vadd.f32 %v9921, %v9889
        %v9954 = vadd.f32 %v9922, %v9890
        %v9955 = vadd.f32 %v9923, %v9891
        %v9956 = vadd.f32 %v9924, %v9892
        %v9957 = vadd.f32 %v9925, %v9893
        %v9958 = vadd.f32 %v9926, %v9894
        %v9959 = vadd.f32 %v9927, %v9895
        %v9960 = vadd.f32 %v9928, %v9896
        %v9961 = vadd.f32 %v9929, %v9897
        %v9962 = vadd.f32 %v9930, %v9898
        %v9963 = vadd.f32 %v9931, %v9899
        %v9964 = vadd.f32 %v9932, %v9900
        %v9965 = vadd.f32 %v9933, %v9901
        %v9966 = vadd.f32 %v9934, %v9902
        %v9967 = vadd.f32 %v9935, %v9903
        %v9968 = vadd.f32 %v9936, %v9904
        %v9969 = vadd.f32 %v9937, %v9905
        %v9970 = vadd.f32 %v9938, %v9906
        %v9971 = vadd.f32 %v9939, %v9907
        %v9972 = vadd.f32 %v9940, %v9908
        %v9973 = vadd.f32 %v9941, %v9909
        %v9974 = vadd.f32 %v9942, %v9910
        %v9975 = vadd.f32 %v9943, %v9911
        %v9976 = vadd.f32 %v9944, %v9912
        %v9977 = vadd.f32 %v9945, %v9913
        %v9978 = vadd.f32 %v9946, %v9914
        %v9979 = vadd.f32 %v9947, %v9915
        %v9980 = vadd.f32 %v9948, %v9916
        %v9981 = vadd.f32 %v9949, %v9917
        %v9982 = vadd.f32 %v9950, %v9918
        %v9983 = vld [vmem:[%s8] sm:$0x1]
        %v9985 = vlaneseq
        %v9986 = vshrl.u32 %v9985, 7
        %v9987 = vsub.s32 0, %v9986
        %v9988 = vrot.slane %v9983, %v9987
        %v9990 = vmul.f32 %v9951, %v9988
        %v9991 = vmul.f32 %v9952, %v9988
        %v9992 = vmul.f32 %v9953, %v9988
        %v9993 = vmul.f32 %v9954, %v9988
        %v9994 = vmul.f32 %v9955, %v9988
        %v9995 = vmul.f32 %v9956, %v9988
        %v9996 = vmul.f32 %v9957, %v9988
        %v9997 = vmul.f32 %v9958, %v9988
        %v9998 = vmul.f32 %v9959, %v9988
        %v9999 = vmul.f32 %v9960, %v9988
        %v10000 = vmul.f32 %v9961, %v9988
        %v10001 = vmul.f32 %v9962, %v9988
        %v10002 = vmul.f32 %v9963, %v9988
        %v10003 = vmul.f32 %v9964, %v9988
        %v10004 = vmul.f32 %v9965, %v9988
        %v10005 = vmul.f32 %v9966, %v9988
        %v10006 = vmul.f32 %v9967, %v9988
        %v10007 = vmul.f32 %v9968, %v9988
        %v10008 = vmul.f32 %v9969, %v9988
        %v10009 = vmul.f32 %v9970, %v9988
        %v10010 = vmul.f32 %v9971, %v9988
        %v10011 = vmul.f32 %v9972, %v9988
        %v10012 = vmul.f32 %v9973, %v9988
        %v10013 = vmul.f32 %v9974, %v9988
        %v10014 = vmul.f32 %v9975, %v9988
        %v10015 = vmul.f32 %v9976, %v9988
        %v10016 = vmul.f32 %v9977, %v9988
        %v10017 = vmul.f32 %v9978, %v9988
        %v10018 = vmul.f32 %v9979, %v9988
        %v10019 = vmul.f32 %v9980, %v9988
        %v10020 = vmul.f32 %v9981, %v9988
        %v10021 = vmul.f32 %v9982, %v9988
        %v10022 = vsel %vm409, %v9990, 0.0
        %10023 = vadd.xlane.f32.xlu0 %v10022
        %v10024 = vpop.xlane.xlu0 %10023
        %v10025 = vsel %vm409, %v9991, 0.0
        %10026 = vadd.xlane.f32.xlu0 %v10025
        %v10027 = vpop.xlane.xlu0 %10026
        %v10028 = vsel %vm409, %v9992, 0.0
        %10029 = vadd.xlane.f32.xlu0 %v10028
        %v10030 = vpop.xlane.xlu0 %10029
        %v10031 = vsel %vm409, %v9993, 0.0
        %10032 = vadd.xlane.f32.xlu0 %v10031
        %v10033 = vpop.xlane.xlu0 %10032
        %v10034 = vsel %vm409, %v9994, 0.0
        %10035 = vadd.xlane.f32.xlu0 %v10034
        %v10036 = vpop.xlane.xlu0 %10035
        %v10037 = vsel %vm409, %v9995, 0.0
        %10038 = vadd.xlane.f32.xlu0 %v10037
        %v10039 = vpop.xlane.xlu0 %10038
        %v10040 = vsel %vm409, %v9996, 0.0
        %10041 = vadd.xlane.f32.xlu0 %v10040
        %v10042 = vpop.xlane.xlu0 %10041
        %v10043 = vsel %vm409, %v9997, 0.0
        %10044 = vadd.xlane.f32.xlu0 %v10043
        %v10045 = vpop.xlane.xlu0 %10044
        %v10046 = vsel %vm409, %v9998, 0.0
        %10047 = vadd.xlane.f32.xlu0 %v10046
        %v10048 = vpop.xlane.xlu0 %10047
        %v10049 = vsel %vm409, %v9999, 0.0
        %10050 = vadd.xlane.f32.xlu0 %v10049
        %v10051 = vpop.xlane.xlu0 %10050
        %v10052 = vsel %vm409, %v10000, 0.0
        %10053 = vadd.xlane.f32.xlu0 %v10052
        %v10054 = vpop.xlane.xlu0 %10053
        %v10055 = vsel %vm409, %v10001, 0.0
        %10056 = vadd.xlane.f32.xlu0 %v10055
        %v10057 = vpop.xlane.xlu0 %10056
        %v10058 = vsel %vm409, %v10002, 0.0
        %10059 = vadd.xlane.f32.xlu0 %v10058
        %v10060 = vpop.xlane.xlu0 %10059
        %v10061 = vsel %vm409, %v10003, 0.0
        %10062 = vadd.xlane.f32.xlu0 %v10061
        %v10063 = vpop.xlane.xlu0 %10062
        %v10064 = vsel %vm409, %v10004, 0.0
        %10065 = vadd.xlane.f32.xlu0 %v10064
        %v10066 = vpop.xlane.xlu0 %10065
        %v10067 = vsel %vm409, %v10005, 0.0
        %10068 = vadd.xlane.f32.xlu0 %v10067
        %v10069 = vpop.xlane.xlu0 %10068
        %v10070 = vsel %vm409, %v10006, 0.0
        %10071 = vadd.xlane.f32.xlu0 %v10070
        %v10072 = vpop.xlane.xlu0 %10071
        %v10073 = vsel %vm409, %v10007, 0.0
        %10074 = vadd.xlane.f32.xlu0 %v10073
        %v10075 = vpop.xlane.xlu0 %10074
        %v10076 = vsel %vm409, %v10008, 0.0
        %10077 = vadd.xlane.f32.xlu0 %v10076
        %v10078 = vpop.xlane.xlu0 %10077
        %v10079 = vsel %vm409, %v10009, 0.0
        %10080 = vadd.xlane.f32.xlu0 %v10079
        %v10081 = vpop.xlane.xlu0 %10080
        %v10082 = vsel %vm409, %v10010, 0.0
        %10083 = vadd.xlane.f32.xlu0 %v10082
        %v10084 = vpop.xlane.xlu0 %10083
        %v10085 = vsel %vm409, %v10011, 0.0
        %10086 = vadd.xlane.f32.xlu0 %v10085
        %v10087 = vpop.xlane.xlu0 %10086
        %v10088 = vsel %vm409, %v10012, 0.0
        %10089 = vadd.xlane.f32.xlu0 %v10088
        %v10090 = vpop.xlane.xlu0 %10089
        %v10091 = vsel %vm409, %v10013, 0.0
        %10092 = vadd.xlane.f32.xlu0 %v10091
        %v10093 = vpop.xlane.xlu0 %10092
        %v10094 = vsel %vm409, %v10014, 0.0
        %10095 = vadd.xlane.f32.xlu0 %v10094
        %v10096 = vpop.xlane.xlu0 %10095
        %v10097 = vsel %vm409, %v10015, 0.0
        %10098 = vadd.xlane.f32.xlu0 %v10097
        %v10099 = vpop.xlane.xlu0 %10098
        %v10100 = vsel %vm409, %v10016, 0.0
        %10101 = vadd.xlane.f32.xlu0 %v10100
        %v10102 = vpop.xlane.xlu0 %10101
        %v10103 = vsel %vm409, %v10017, 0.0
        %10104 = vadd.xlane.f32.xlu0 %v10103
        %v10105 = vpop.xlane.xlu0 %10104
        %v10106 = vsel %vm409, %v10018, 0.0
        %10107 = vadd.xlane.f32.xlu0 %v10106
        %v10108 = vpop.xlane.xlu0 %10107
        %v10109 = vsel %vm409, %v10019, 0.0
        %10110 = vadd.xlane.f32.xlu0 %v10109
        %v10111 = vpop.xlane.xlu0 %10110
        %v10112 = vsel %vm409, %v10020, 0.0
        %10113 = vadd.xlane.f32.xlu0 %v10112
        %v10114 = vpop.xlane.xlu0 %10113
        %v10115 = vsel %vm409, %v10021, 0.0
        %10116 = vadd.xlane.f32.xlu0 %v10115
        %v10117 = vpop.xlane.xlu0 %10116
        %v10118 = vld [vmem:[%s406] sm:$0xff]
        %v10119 = vld [vmem:[%s406 + $0x8] sm:$0xff]
        %v10120 = vld [vmem:[%s406 + $0x10] sm:$0xff]
        %v10121 = vld [vmem:[%s406 + $0x18] sm:$0xff]
        %v10122 = vld [vmem:[%s406 + $0x20] sm:$0xff]
        %v10123 = vld [vmem:[%s406 + $0x28] sm:$0xff]
        %v10124 = vld [vmem:[%s406 + $0x30] sm:$0xff]
        %v10125 = vld [vmem:[%s406 + $0x38] sm:$0xff]
        %v10126 = vld [vmem:[%s406 + $0x40] sm:$0xff]
        %v10127 = vld [vmem:[%s406 + $0x48] sm:$0xff]
        %v10128 = vld [vmem:[%s406 + $0x50] sm:$0xff]
        %v10129 = vld [vmem:[%s406 + $0x58] sm:$0xff]
        %v10130 = vld [vmem:[%s406 + $0x60] sm:$0xff]
        %v10131 = vld [vmem:[%s406 + $0x68] sm:$0xff]
        %v10132 = vld [vmem:[%s406 + $0x70] sm:$0xff]
        %v10133 = vld [vmem:[%s406 + $0x78] sm:$0xff]
        %v10134 = vld [vmem:[%s406 + $0x80] sm:$0xff]
        %v10135 = vld [vmem:[%s406 + $0x88] sm:$0xff]
        %v10136 = vld [vmem:[%s406 + $0x90] sm:$0xff]
        %v10137 = vld [vmem:[%s406 + $0x98] sm:$0xff]
        %v10138 = vld [vmem:[%s406 + $0xa0] sm:$0xff]
        %v10139 = vld [vmem:[%s406 + $0xa8] sm:$0xff]
        %v10140 = vld [vmem:[%s406 + $0xb0] sm:$0xff]
        %v10141 = vld [vmem:[%s406 + $0xb8] sm:$0xff]
        %v10142 = vld [vmem:[%s406 + $0xc0] sm:$0xff]
        %v10143 = vld [vmem:[%s406 + $0xc8] sm:$0xff]
        %v10144 = vld [vmem:[%s406 + $0xd0] sm:$0xff]
        %v10145 = vld [vmem:[%s406 + $0xd8] sm:$0xff]
        %v10146 = vld [vmem:[%s406 + $0xe0] sm:$0xff]
        %v10147 = vld [vmem:[%s406 + $0xe8] sm:$0xff]
        %v10148 = vld [vmem:[%s406 + $0xf0] sm:$0xff]
        %v10149 = vld [vmem:[%s406 + $0xf8] sm:$0xff]
        %v10150 = vld [vmem:[%s9] sm:$0x1]
        %v10152 = vlaneseq
        %v10153 = vshrl.u32 %v10152, 7
        %v10154 = vsub.s32 0, %v10153
        %v10155 = vrot.slane %v10150, %v10154
        %v10157 = vmul.f32 %v10118, %v10155
        %v10158 = vmul.f32 %v10119, %v10155
        %v10159 = vmul.f32 %v10120, %v10155
        %v10160 = vmul.f32 %v10121, %v10155
        %v10161 = vmul.f32 %v10122, %v10155
        %v10162 = vmul.f32 %v10123, %v10155
        %v10163 = vmul.f32 %v10124, %v10155
        %v10164 = vmul.f32 %v10125, %v10155
        %v10165 = vmul.f32 %v10126, %v10155
        %v10166 = vmul.f32 %v10127, %v10155
        %v10167 = vmul.f32 %v10128, %v10155
        %v10168 = vmul.f32 %v10129, %v10155
        %v10169 = vmul.f32 %v10130, %v10155
        %v10170 = vmul.f32 %v10131, %v10155
        %v10171 = vmul.f32 %v10132, %v10155
        %v10172 = vmul.f32 %v10133, %v10155
        %v10173 = vmul.f32 %v10134, %v10155
        %v10174 = vmul.f32 %v10135, %v10155
        %v10175 = vmul.f32 %v10136, %v10155
        %v10176 = vmul.f32 %v10137, %v10155
        %v10177 = vmul.f32 %v10138, %v10155
        %v10178 = vmul.f32 %v10139, %v10155
        %v10179 = vmul.f32 %v10140, %v10155
        %v10180 = vmul.f32 %v10141, %v10155
        %v10181 = vmul.f32 %v10142, %v10155
        %v10182 = vmul.f32 %v10143, %v10155
        %v10183 = vmul.f32 %v10144, %v10155
        %v10184 = vmul.f32 %v10145, %v10155
        %v10185 = vmul.f32 %v10146, %v10155
        %v10186 = vmul.f32 %v10147, %v10155
        %v10187 = vmul.f32 %v10148, %v10155
        %v10188 = vmul.f32 %v10149, %v10155
        %v10189 = vsel %vm2252, %v10157, 0.0
        %10190 = vadd.xlane.f32.xlu0 %v10189
        %v10191 = vpop.xlane.xlu0 %10190
        %v10192 = vsel %vm2252, %v10158, 0.0
        %10193 = vadd.xlane.f32.xlu0 %v10192
        %v10194 = vpop.xlane.xlu0 %10193
        %v10195 = vsel %vm2252, %v10159, 0.0
        %10196 = vadd.xlane.f32.xlu0 %v10195
        %v10197 = vpop.xlane.xlu0 %10196
        %v10198 = vsel %vm2252, %v10160, 0.0
        %10199 = vadd.xlane.f32.xlu0 %v10198
        %v10200 = vpop.xlane.xlu0 %10199
        %v10201 = vsel %vm2252, %v10161, 0.0
        %10202 = vadd.xlane.f32.xlu0 %v10201
        %v10203 = vpop.xlane.xlu0 %10202
        %v10204 = vsel %vm2252, %v10162, 0.0
        %10205 = vadd.xlane.f32.xlu0 %v10204
        %v10206 = vpop.xlane.xlu0 %10205
        %v10207 = vsel %vm2252, %v10163, 0.0
        %10208 = vadd.xlane.f32.xlu0 %v10207
        %v10209 = vpop.xlane.xlu0 %10208
        %v10210 = vsel %vm2252, %v10164, 0.0
        %10211 = vadd.xlane.f32.xlu0 %v10210
        %v10212 = vpop.xlane.xlu0 %10211
        %v10213 = vsel %vm2252, %v10165, 0.0
        %10214 = vadd.xlane.f32.xlu0 %v10213
        %v10215 = vpop.xlane.xlu0 %10214
        %v10216 = vsel %vm2252, %v10166, 0.0
        %10217 = vadd.xlane.f32.xlu0 %v10216
        %v10218 = vpop.xlane.xlu0 %10217
        %v10219 = vsel %vm2252, %v10167, 0.0
        %10220 = vadd.xlane.f32.xlu0 %v10219
        %v10221 = vpop.xlane.xlu0 %10220
        %v10222 = vsel %vm2252, %v10168, 0.0
        %10223 = vadd.xlane.f32.xlu0 %v10222
        %v10224 = vpop.xlane.xlu0 %10223
        %v10225 = vsel %vm2252, %v10169, 0.0
        %10226 = vadd.xlane.f32.xlu0 %v10225
        %v10227 = vpop.xlane.xlu0 %10226
        %v10228 = vsel %vm2252, %v10170, 0.0
        %10229 = vadd.xlane.f32.xlu0 %v10228
        %v10230 = vpop.xlane.xlu0 %10229
        %v10231 = vsel %vm2252, %v10171, 0.0
        %10232 = vadd.xlane.f32.xlu0 %v10231
        %v10233 = vpop.xlane.xlu0 %10232
        %v10234 = vsel %vm2252, %v10172, 0.0
        %10235 = vadd.xlane.f32.xlu0 %v10234
        %v10236 = vpop.xlane.xlu0 %10235
        %v10237 = vsel %vm2252, %v10173, 0.0
        %10238 = vadd.xlane.f32.xlu0 %v10237
        %v10239 = vpop.xlane.xlu0 %10238
        %v10240 = vsel %vm2252, %v10174, 0.0
        %10241 = vadd.xlane.f32.xlu0 %v10240
        %v10242 = vpop.xlane.xlu0 %10241
        %v10243 = vsel %vm2252, %v10175, 0.0
        %10244 = vadd.xlane.f32.xlu0 %v10243
        %v10245 = vpop.xlane.xlu0 %10244
        %v10246 = vsel %vm2252, %v10176, 0.0
        %10247 = vadd.xlane.f32.xlu0 %v10246
        %v10248 = vpop.xlane.xlu0 %10247
        %v10249 = vsel %vm2252, %v10177, 0.0
        %10250 = vadd.xlane.f32.xlu0 %v10249
        %v10251 = vpop.xlane.xlu0 %10250
        %v10252 = vsel %vm2252, %v10178, 0.0
        %10253 = vadd.xlane.f32.xlu0 %v10252
        %v10254 = vpop.xlane.xlu0 %10253
        %v10255 = vsel %vm2252, %v10179, 0.0
        %10256 = vadd.xlane.f32.xlu0 %v10255
        %v10257 = vpop.xlane.xlu0 %10256
        %v10258 = vsel %vm2252, %v10180, 0.0
        %10259 = vadd.xlane.f32.xlu0 %v10258
        %v10260 = vpop.xlane.xlu0 %10259
        %v10261 = vsel %vm2252, %v10181, 0.0
        %10262 = vadd.xlane.f32.xlu0 %v10261
        %v10263 = vpop.xlane.xlu0 %10262
        %v10264 = vsel %vm2252, %v10182, 0.0
        %10265 = vadd.xlane.f32.xlu0 %v10264
        %v10266 = vpop.xlane.xlu0 %10265
        %v10267 = vsel %vm2252, %v10183, 0.0
        %10268 = vadd.xlane.f32.xlu0 %v10267
        %v10269 = vpop.xlane.xlu0 %10268
        %v10270 = vsel %vm2252, %v10184, 0.0
        %10271 = vadd.xlane.f32.xlu0 %v10270
        %v10272 = vpop.xlane.xlu0 %10271
        %v10273 = vsel %vm2252, %v10185, 0.0
        %10274 = vadd.xlane.f32.xlu0 %v10273
        %v10275 = vpop.xlane.xlu0 %10274
        %v10276 = vsel %vm2252, %v10186, 0.0
        %10277 = vadd.xlane.f32.xlu0 %v10276
        %v10278 = vpop.xlane.xlu0 %10277
        %v10279 = vsel %vm2252, %v10187, 0.0
        %10280 = vadd.xlane.f32.xlu0 %v10279
        %v10281 = vpop.xlane.xlu0 %10280
        %v10282 = vsel %vm2252, %v10188, 0.0
        %10283 = vadd.xlane.f32.xlu0 %v10282
        %v10284 = vpop.xlane.xlu0 %10283
        %v10285 = vadd.f32 %v10024, %v10191
        %v10286 = vadd.f32 %v10027, %v10194
        %v10287 = vadd.f32 %v10030, %v10197
        %v10288 = vadd.f32 %v10033, %v10200
        %v10289 = vadd.f32 %v10036, %v10203
        %v10290 = vadd.f32 %v10039, %v10206
        %v10291 = vadd.f32 %v10042, %v10209
        %v10292 = vadd.f32 %v10045, %v10212
        %v10293 = vadd.f32 %v10048, %v10215
        %v10294 = vadd.f32 %v10051, %v10218
        %v10295 = vadd.f32 %v10054, %v10221
        %v10296 = vadd.f32 %v10057, %v10224
        %v10297 = vadd.f32 %v10060, %v10227
        %v10298 = vadd.f32 %v10063, %v10230
        %v10299 = vadd.f32 %v10066, %v10233
        %v10300 = vadd.f32 %v10069, %v10236
        %v10301 = vadd.f32 %v10072, %v10239
        %v10302 = vadd.f32 %v10075, %v10242
        %v10303 = vadd.f32 %v10078, %v10245
        %v10304 = vadd.f32 %v10081, %v10248
        %v10305 = vadd.f32 %v10084, %v10251
        %v10306 = vadd.f32 %v10087, %v10254
        %v10307 = vadd.f32 %v10090, %v10257
        %v10308 = vadd.f32 %v10093, %v10260
        %v10309 = vadd.f32 %v10096, %v10263
        %v10310 = vadd.f32 %v10099, %v10266
        %v10311 = vadd.f32 %v10102, %v10269
        %v10312 = vadd.f32 %v10105, %v10272
        %v10313 = vadd.f32 %v10108, %v10275
        %v10314 = vadd.f32 %v10111, %v10278
        %v10315 = vadd.f32 %v10114, %v10281
        %v10316 = vadd.f32 %v10117, %v10284
        %v10317 = vld [vmem:[#allocation4] sm:$0x1]
        %v10319 = vlaneseq
        %v10320 = vshrl.u32 %v10319, 7
        %v10321 = vsub.s32 0, %v10320
        %v10322 = vrot.slane %v10317, %v10321
        %10323 = vset.pattern.permute.xlu0 0
        %10324 = vperm.xlu0 %10323, %v10322
        %v10325 = vpop.permute.xlu0 %10324
        %v10327 = vadd.f32 %v10285, %v10325
        %v10328 = vadd.f32 %v10286, %v10325
        %v10329 = vadd.f32 %v10287, %v10325
        %v10330 = vadd.f32 %v10288, %v10325
        %v10331 = vadd.f32 %v10289, %v10325
        %v10332 = vadd.f32 %v10290, %v10325
        %v10333 = vadd.f32 %v10291, %v10325
        %v10334 = vadd.f32 %v10292, %v10325
        %v10335 = vadd.f32 %v10293, %v10325
        %v10336 = vadd.f32 %v10294, %v10325
        %v10337 = vadd.f32 %v10295, %v10325
        %v10338 = vadd.f32 %v10296, %v10325
        %v10339 = vadd.f32 %v10297, %v10325
        %v10340 = vadd.f32 %v10298, %v10325
        %v10341 = vadd.f32 %v10299, %v10325
        %v10342 = vadd.f32 %v10300, %v10325
        %v10343 = vadd.f32 %v10301, %v10325
        %v10344 = vadd.f32 %v10302, %v10325
        %v10345 = vadd.f32 %v10303, %v10325
        %v10346 = vadd.f32 %v10304, %v10325
        %v10347 = vadd.f32 %v10305, %v10325
        %v10348 = vadd.f32 %v10306, %v10325
        %v10349 = vadd.f32 %v10307, %v10325
        %v10350 = vadd.f32 %v10308, %v10325
        %v10351 = vadd.f32 %v10309, %v10325
        %v10352 = vadd.f32 %v10310, %v10325
        %v10353 = vadd.f32 %v10311, %v10325
        %v10354 = vadd.f32 %v10312, %v10325
        %v10355 = vadd.f32 %v10313, %v10325
        %v10356 = vadd.f32 %v10314, %v10325
        %v10357 = vadd.f32 %v10315, %v10325
        %v10358 = vadd.f32 %v10316, %v10325
        %v10359 = vmax.f32 %v10327, 0.0
        %v10360 = vmax.f32 %v10328, 0.0
        %v10361 = vmax.f32 %v10329, 0.0
        %v10362 = vmax.f32 %v10330, 0.0
        %v10363 = vmax.f32 %v10331, 0.0
        %v10364 = vmax.f32 %v10332, 0.0
        %v10365 = vmax.f32 %v10333, 0.0
        %v10366 = vmax.f32 %v10334, 0.0
        %v10367 = vmax.f32 %v10335, 0.0
        %v10368 = vmax.f32 %v10336, 0.0
        %v10369 = vmax.f32 %v10337, 0.0
        %v10370 = vmax.f32 %v10338, 0.0
        %v10371 = vmax.f32 %v10339, 0.0
        %v10372 = vmax.f32 %v10340, 0.0
        %v10373 = vmax.f32 %v10341, 0.0
        %v10374 = vmax.f32 %v10342, 0.0
        %v10375 = vmax.f32 %v10343, 0.0
        %v10376 = vmax.f32 %v10344, 0.0
        %v10377 = vmax.f32 %v10345, 0.0
        %v10378 = vmax.f32 %v10346, 0.0
        %v10379 = vmax.f32 %v10347, 0.0
        %v10380 = vmax.f32 %v10348, 0.0
        %v10381 = vmax.f32 %v10349, 0.0
        %v10382 = vmax.f32 %v10350, 0.0
        %v10383 = vmax.f32 %v10351, 0.0
        %v10384 = vmax.f32 %v10352, 0.0
        %v10385 = vmax.f32 %v10353, 0.0
        %v10386 = vmax.f32 %v10354, 0.0
        %v10387 = vmax.f32 %v10355, 0.0
        %v10388 = vmax.f32 %v10356, 0.0
        %v10389 = vmax.f32 %v10357, 0.0
        %v10390 = vmax.f32 %v10358, 0.0
        %v10423 = vlaneseq
        %v10424 = vand.u32 %v10423, 127
        %v10425 = vlaneseq
        %v10426 = vshrl.u32 %v10425, 7
        %v10427 = vsub.s32 %v10424, %v10426
        %v10428 = vrot.slane %v10359, %v10427
        %v10429 = vadd.s32 %v10424, 4294967288
        %v10430 = vlaneseq
        %v10431 = vshrl.u32 %v10430, 7
        %v10432 = vsub.s32 %v10429, %v10431
        %v10433 = vrot.slane %v10360, %v10432
        %vm10434 = vcmask 130112
        %v10435 = vsel %vm10434, %v10433, %v10428
        %v10436 = vlaneseq
        %v10437 = vshrl.u32 %v10436, 7
        %v10438 = vsub.s32 %v10424, %v10437
        %v10439 = vrot.slane %v10361, %v10438
        %v10440 = vlaneseq
        %v10441 = vshrl.u32 %v10440, 7
        %v10442 = vsub.s32 %v10429, %v10441
        %v10443 = vrot.slane %v10362, %v10442
        %v10444 = vsel %vm10434, %v10443, %v10439
        %v10445 = vlaneseq
        %v10446 = vshrl.u32 %v10445, 7
        %v10447 = vsub.s32 %v10424, %v10446
        %v10448 = vrot.slane %v10363, %v10447
        %v10449 = vlaneseq
        %v10450 = vshrl.u32 %v10449, 7
        %v10451 = vsub.s32 %v10429, %v10450
        %v10452 = vrot.slane %v10364, %v10451
        %v10453 = vsel %vm10434, %v10452, %v10448
        %v10454 = vlaneseq
        %v10455 = vshrl.u32 %v10454, 7
        %v10456 = vsub.s32 %v10424, %v10455
        %v10457 = vrot.slane %v10365, %v10456
        %v10458 = vlaneseq
        %v10459 = vshrl.u32 %v10458, 7
        %v10460 = vsub.s32 %v10429, %v10459
        %v10461 = vrot.slane %v10366, %v10460
        %v10462 = vsel %vm10434, %v10461, %v10457
        %v10463 = vlaneseq
        %v10464 = vshrl.u32 %v10463, 7
        %v10465 = vsub.s32 %v10424, %v10464
        %v10466 = vrot.slane %v10367, %v10465
        %v10467 = vlaneseq
        %v10468 = vshrl.u32 %v10467, 7
        %v10469 = vsub.s32 %v10429, %v10468
        %v10470 = vrot.slane %v10368, %v10469
        %v10471 = vsel %vm10434, %v10470, %v10466
        %v10472 = vlaneseq
        %v10473 = vshrl.u32 %v10472, 7
        %v10474 = vsub.s32 %v10424, %v10473
        %v10475 = vrot.slane %v10369, %v10474
        %v10476 = vlaneseq
        %v10477 = vshrl.u32 %v10476, 7
        %v10478 = vsub.s32 %v10429, %v10477
        %v10479 = vrot.slane %v10370, %v10478
        %v10480 = vsel %vm10434, %v10479, %v10475
        %v10481 = vlaneseq
        %v10482 = vshrl.u32 %v10481, 7
        %v10483 = vsub.s32 %v10424, %v10482
        %v10484 = vrot.slane %v10371, %v10483
        %v10485 = vlaneseq
        %v10486 = vshrl.u32 %v10485, 7
        %v10487 = vsub.s32 %v10429, %v10486
        %v10488 = vrot.slane %v10372, %v10487
        %v10489 = vsel %vm10434, %v10488, %v10484
        %v10490 = vlaneseq
        %v10491 = vshrl.u32 %v10490, 7
        %v10492 = vsub.s32 %v10424, %v10491
        %v10493 = vrot.slane %v10373, %v10492
        %v10494 = vlaneseq
        %v10495 = vshrl.u32 %v10494, 7
        %v10496 = vsub.s32 %v10429, %v10495
        %v10497 = vrot.slane %v10374, %v10496
        %v10498 = vsel %vm10434, %v10497, %v10493
        %v10499 = vlaneseq
        %v10500 = vshrl.u32 %v10499, 7
        %v10501 = vsub.s32 %v10424, %v10500
        %v10502 = vrot.slane %v10375, %v10501
        %v10503 = vlaneseq
        %v10504 = vshrl.u32 %v10503, 7
        %v10505 = vsub.s32 %v10429, %v10504
        %v10506 = vrot.slane %v10376, %v10505
        %v10507 = vsel %vm10434, %v10506, %v10502
        %v10508 = vlaneseq
        %v10509 = vshrl.u32 %v10508, 7
        %v10510 = vsub.s32 %v10424, %v10509
        %v10511 = vrot.slane %v10377, %v10510
        %v10512 = vlaneseq
        %v10513 = vshrl.u32 %v10512, 7
        %v10514 = vsub.s32 %v10429, %v10513
        %v10515 = vrot.slane %v10378, %v10514
        %v10516 = vsel %vm10434, %v10515, %v10511
        %v10517 = vlaneseq
        %v10518 = vshrl.u32 %v10517, 7
        %v10519 = vsub.s32 %v10424, %v10518
        %v10520 = vrot.slane %v10379, %v10519
        %v10521 = vlaneseq
        %v10522 = vshrl.u32 %v10521, 7
        %v10523 = vsub.s32 %v10429, %v10522
        %v10524 = vrot.slane %v10380, %v10523
        %v10525 = vsel %vm10434, %v10524, %v10520
        %v10526 = vlaneseq
        %v10527 = vshrl.u32 %v10526, 7
        %v10528 = vsub.s32 %v10424, %v10527
        %v10529 = vrot.slane %v10381, %v10528
        %v10530 = vlaneseq
        %v10531 = vshrl.u32 %v10530, 7
        %v10532 = vsub.s32 %v10429, %v10531
        %v10533 = vrot.slane %v10382, %v10532
        %v10534 = vsel %vm10434, %v10533, %v10529
        %v10535 = vlaneseq
        %v10536 = vshrl.u32 %v10535, 7
        %v10537 = vsub.s32 %v10424, %v10536
        %v10538 = vrot.slane %v10383, %v10537
        %v10539 = vlaneseq
        %v10540 = vshrl.u32 %v10539, 7
        %v10541 = vsub.s32 %v10429, %v10540
        %v10542 = vrot.slane %v10384, %v10541
        %v10543 = vsel %vm10434, %v10542, %v10538
        %v10544 = vlaneseq
        %v10545 = vshrl.u32 %v10544, 7
        %v10546 = vsub.s32 %v10424, %v10545
        %v10547 = vrot.slane %v10385, %v10546
        %v10548 = vlaneseq
        %v10549 = vshrl.u32 %v10548, 7
        %v10550 = vsub.s32 %v10429, %v10549
        %v10551 = vrot.slane %v10386, %v10550
        %v10552 = vsel %vm10434, %v10551, %v10547
        %v10553 = vlaneseq
        %v10554 = vshrl.u32 %v10553, 7
        %v10555 = vsub.s32 %v10424, %v10554
        %v10556 = vrot.slane %v10387, %v10555
        %v10557 = vlaneseq
        %v10558 = vshrl.u32 %v10557, 7
        %v10559 = vsub.s32 %v10429, %v10558
        %v10560 = vrot.slane %v10388, %v10559
        %v10561 = vsel %vm10434, %v10560, %v10556
        %v10562 = vlaneseq
        %v10563 = vshrl.u32 %v10562, 7
        %v10564 = vsub.s32 %v10424, %v10563
        %v10565 = vrot.slane %v10389, %v10564
        %v10566 = vlaneseq
        %v10567 = vshrl.u32 %v10566, 7
        %v10568 = vsub.s32 %v10429, %v10567
        %v10569 = vrot.slane %v10390, %v10568
        %v10570 = vsel %vm10434, %v10569, %v10565
        %vm10571 = vcmask 1041409
        %v10572 = vsel %vm10571, %v10444, %v10435
        %vm10573 = vcmask 1042434
        %v10574 = vsel %vm10573, %v10453, %v10572
        %vm10575 = vcmask 1043459
        %v10576 = vsel %vm10575, %v10462, %v10574
        %vm10577 = vcmask 1044484
        %v10578 = vsel %vm10577, %v10471, %v10576
        %vm10579 = vcmask 1045509
        %v10580 = vsel %vm10579, %v10480, %v10578
        %vm10581 = vcmask 1046534
        %v10582 = vsel %vm10581, %v10489, %v10580
        %vm10583 = vcmask 1047559
        %v10584 = vsel %vm10583, %v10498, %v10582
        %v10585 = vsel %vm10571, %v10516, %v10507
        %v10586 = vsel %vm10573, %v10525, %v10585
        %v10587 = vsel %vm10575, %v10534, %v10586
        %v10588 = vsel %vm10577, %v10543, %v10587
        %v10589 = vsel %vm10579, %v10552, %v10588
        %v10590 = vsel %vm10581, %v10561, %v10589
        %v10591 = vsel %vm10583, %v10570, %v10590
        %10594 = vst.msk [vmem:[%s396] sm:$0xff] %vm2285, %v10584
        %10595 = vst.msk [vmem:[%s396 + $0x8] sm:$0xff] %vm2285, %v10591
        %s10596 = sand.u32 %s276, 1
        %s10597 = scalar_lea.sflag [#allocation6], %s10596
        %s10598 = sand.u32 %s276, 1
        %s10599 = smul.addr %s10598, 16
        %s10600 = scalar_lea.vmem [#allocation5], %s10599
        // Predicated region
        $region65: #{tpu_custom_call.1} parent=63 // pred_check
          %p10601 = pneg %p286
        $region66: #{tpu_custom_call.1} parent=63 // pred_check_branch
          %10603 = sbr.rel (%p10601) target = $region68
        $region67: #{tpu_custom_call.1} parent=63 // pred_region
          %s10605 = ssub.s32 256, 256
          %10606 = vsyncadd %s10597, %s10605
          %s10607 = smul.addr %s27, 2
          %s10608 = smul.addr %s10607, 128
          %s10609 = scalar_lea.hbm %s11, %s10608
          %s10610 = sshll.u32 %s10600, 4
          %s10611 = int_to_ptr.vmem [resolvable:$true] %s10610
          %10616 = dma.vmem_to_hbm [thread:$0]  %s10611, 256, %s10609, %s10597, 128, 128, 8
        $region68: #{tpu_custom_call.1} parent=63 // pred_fallthru
          _
      $region64: #{tpu_custom_call.1} parent=5 // pred_fallthru
        _
      %p10617 = scmp.le.s32.totalorder 2, %s22
      // Predicated region
      $region69: #{tpu_custom_call.1} parent=5 // pred_check
        %p10618 = pneg %p10617
      $region70: #{tpu_custom_call.1} parent=5 // pred_check_branch
        %10620 = sbr.rel (%p10618) target = $region72
      $region71: #{tpu_custom_call.1} parent=5 // pred_region
        %s10621 = ssub.s32 %s22, 2
        // Predicated region
        $region73: #{tpu_custom_call.1} parent=71 // pred_check
          %p10622 = pneg %p292
        $region74: #{tpu_custom_call.1} parent=71 // pred_check_branch
          %10624 = sbr.rel (%p10622) target = $region76
        $region75: #{tpu_custom_call.1} parent=71 // pred_region
          %s10625 = sand.u32 %s277, 1
          %s10626 = scalar_lea.sflag [#allocation6], %s10625
          %s10627 = sand.u32 %s277, 1
          %s10628 = smul.addr %s10627, 16
          %s10629 = scalar_lea.vmem [#allocation5], %s10628
          %10630 = dma.done %s10626, 256
        $region76: #{tpu_custom_call.1} parent=71 // pred_fallthru
          _
      $region72: #{tpu_custom_call.1} parent=5 // pred_fallthru
        _
    $region6: #{tpu_custom_call.1} parent=1 // loop_footer
      %s26 = sadd.s32 1, %s22
    $region7: #{tpu_custom_call.1} parent=1 // loop_footer_branch
      %21 = sbr.rel target = $region3
    $region8: #{tpu_custom_call.1} parent=1 // loop_exit
      _
    %10631 = vsyncpa [#allocation6], 1
    %s10632 = scalar_lea.sflag [#allocation6], 1
    %10633 = vsyncpa %s10632, 1

</llo_original>
